<compile_context>
chip_gen: v7x
topology: tpu7x:2x2x1
jax: 0.10.0
libtpu: 0.0.40
codegen_flags: <defaults>
</compile_context>

<pallas_src>
import jax
import jax.numpy as jnp
from jax.experimental import pallas as pl
from jax.experimental.pallas import tpu as pltpu

NUM_HEADS = 4                      # fixed by reshape(-1, 4, 64) in the reference forward()
KEY_SIZE = 64                      # fixed by reshape(-1, 4, 64)
OUT_DIM = NUM_HEADS * KEY_SIZE     # 256
EPS = 1e-6


def _feature_map(x):
    # F.elu(x, alpha=1) + 1  ==  x + 1 (x > 0)  |  exp(x) (x <= 0)
    return jnp.where(x > 0, x + 1.0, jnp.exp(x))


def linear_mha_kernel(q_ref, k_ref, v_ref, w_ref, mask_ref, o_ref, slab_ref):
    """One grid step: G independent linear-attention problems.

    q_ref/k_ref/v_ref : (G, T, d_in)    raw inputs for this step's problems
    w_ref             : (d_pad, 256)    lin1 weight (transposed), zero-padded, bias in row d_in
    mask_ref          : (256, 256)      block-diagonal head mask (resident across steps)
    o_ref             : (G, T, 256)     per-head outputs concatenated along lanes
    slab_ref          : (3*G*T, d_pad)  VMEM scratch: [queries | keys | values] packed rows
    """
    G, T, d_in = q_ref.shape
    GT = G * T

    # Rebuild the pad/bias lanes every step (megacore-safe; ~6 vregs of VPU work per 128 rows).
    lane = jax.lax.broadcasted_iota(jnp.int32, slab_ref.shape, 1)
    slab_ref[...] = jnp.where(lane == d_in, 1.0, 0.0).astype(slab_ref.dtype)

    # Pack Q / K / V rows (masked d_in-lane stores; lanes >= d_in keep the 1.0 / 0.0 pattern).
    slab_ref[0 * GT:1 * GT, 0:d_in] = q_ref[...].reshape(GT, d_in)
    slab_ref[1 * GT:2 * GT, 0:d_in] = k_ref[...].reshape(GT, d_in)
    slab_ref[2 * GT:3 * GT, 0:d_in] = v_ref[...].reshape(GT, d_in)

    # Fused lin1 for Q/K/V of all G problems: single weight push, bias folded into row d_in.
    proj = jnp.dot(slab_ref[...], w_ref[...],
                   preferred_element_type=jnp.float32)                      # (3GT, 256)

    fqk = _feature_map(proj[:2 * GT])     # Phi on Q and K rows; V keeps the raw projection
    mask = mask_ref[...]                  # (256, 256) block-diagonal

    for g in range(G):                    # static unroll; all slices are compile-time constants
        qf = fqk[g * T:(g + 1) * T]                        # Phi(Q)   (T, 256)
        kf = fqk[GT + g * T:GT + (g + 1) * T]              # Phi(K)   (T, 256)
        vp = proj[2 * GT + g * T:2 * GT + (g + 1) * T]     # V proj   (T, 256)

        # kv[d, k] = sum_t kf[t, d] * vp[t, k] for all heads at once (contract dim 0 of both).
        kv = jax.lax.dot_general(kf, vp, (((0,), (0,)), ((), ())),
                                 preferred_element_type=jnp.float32)        # (256, 256)
        ksum = jnp.sum(kf, axis=0, keepdims=True)                           # (1, 256)

        num = jnp.dot(qf, kv * mask, preferred_element_type=jnp.float32)    # (T, 256)
        denom = jnp.dot(qf * ksum, mask,
                        preferred_element_type=jnp.float32) + EPS           # (T, 256)
        o_ref[g] = (num / denom).astype(o_ref.dtype)                        # exact divide

    # TODO(synk): optionally fuse num/denom into one (T,256)@(256,512) matmul and cast MXU
    # operands to bf16 once the tolerance budget allows; move to a two-phase sequence-tiled grid
    # (kv/ksum accumulation pass + q-tile output pass) before T grows, sized for v7x's 64 MiB VMEM.


def _pick_problems_per_step(batch):
    for g in (8, 4, 2, 1):
        if batch % g == 0:
            return g
    return 1


@jax.jit
def _linear_mha_batched(queries, keys, values, w1, b1):
    B, T, d_in = queries.shape
    G = _pick_problems_per_step(B)
    d_pad = ((d_in + 1 + 127) // 128) * 128

    # lin1 weight (in, out) zero-padded to d_pad rows with the bias folded into row d_in
    # (the packed input slab carries a matching constant 1.0 column).
    w_pad = jnp.zeros((d_pad, OUT_DIM), jnp.float32)
    w_pad = w_pad.at[:d_in].set(w1.astype(jnp.float32)).at[d_in].set(b1.astype(jnp.float32))

    # Block-diagonal head mask, built once in the wrapper, resident in VMEM across grid steps.
    head = jnp.arange(OUT_DIM, dtype=jnp.int32) // KEY_SIZE
    mask = (head[:, None] == head[None, :]).astype(jnp.float32)

    return pl.pallas_call(
        linear_mha_kernel,
        out_shape=jax.ShapeDtypeStruct((B, T, OUT_DIM), jnp.float32),
        grid=(B // G,),
        in_specs=[
            pl.BlockSpec((G, T, d_in), lambda b: (b, 0, 0)),
            pl.BlockSpec((G, T, d_in), lambda b: (b, 0, 0)),
            pl.BlockSpec((G, T, d_in), lambda b: (b, 0, 0)),
            pl.BlockSpec((d_pad, OUT_DIM), lambda b: (0, 0)),     # weight: resident in VMEM
            pl.BlockSpec((OUT_DIM, OUT_DIM), lambda b: (0, 0)),   # mask:   resident in VMEM
        ],
        out_specs=pl.BlockSpec((G, T, OUT_DIM), lambda b: (b, 0, 0)),
        scratch_shapes=[pltpu.VMEM((3 * G * T, d_pad), jnp.float32)],
        compiler_params=pltpu.CompilerParams(
            dimension_semantics=("parallel",)),   # v7x: grid split across both TensorCores
    )(queries, keys, values, w_pad, mask)


def linear_mha(queries, keys, values, w1, b1):
    """Module-equivalent forward. Accepts (T, d_in) inputs like the PyTorch module, or a
    batched (B, T, d_in) stack of independent problems (the performance-relevant case)."""
    if queries.ndim == 2:
        out = _linear_mha_batched(queries[None], keys[None], values[None], w1, b1)
        return out[0]
    return _linear_mha_batched(queries, keys, values, w1, b1)


def linear_mha_reference(queries, keys, values, w1, b1):
    """Pure-JAX reproduction of the PyTorch forward (per problem), for verification."""
    def one(q, k, v):
        qp = q @ w1 + b1
        kp = k @ w1 + b1
        vp = v @ w1 + b1
        qh = _feature_map(qp).reshape(-1, NUM_HEADS, KEY_SIZE)
        kh = _feature_map(kp).reshape(-1, NUM_HEADS, KEY_SIZE)
        vh = vp.reshape(-1, NUM_HEADS, KEY_SIZE)
        kv = jnp.einsum('thd,thk->hkd', kh, vh)
        normalizer = 1.0 / (jnp.einsum('thd,hd->th', qh, jnp.sum(kh, axis=0)) + EPS)
        attn = jnp.einsum('thd,hkd,th->thk', qh, kv, normalizer)
        return attn.reshape(q.shape[0], -1)

    if queries.ndim == 2:
        return one(queries, keys, values)
    return jax.vmap(one)(queries, keys, values)


if __name__ == "__main__":
    # Shapes consistent with the module: n_node=8, hidden_size=32 -> d_in=40; num_heads=4 and
    # key_size=64 are hard-coded by reshape(-1, 4, 64); seq T=16. B=16 independent problems are
    # batched into one pallas_call (grid of 2 steps x 8 problems per step).
    n_node, hidden_size, T, B = 8, 32, 16, 16
    d_in = n_node + hidden_size

    key = jax.random.PRNGKey(0)
    kq, kk, kv_, kw1, kb1, kw2, kb2 = jax.random.split(key, 7)

    queries = jax.random.normal(kq, (B, T, d_in), dtype=jnp.float32)
    keys = jax.random.normal(kk, (B, T, d_in), dtype=jnp.float32)
    values = jax.random.normal(kv_, (B, T, d_in), dtype=jnp.float32)

    # lin1 parameters (PyTorch Linear weight is (out, in); stored transposed here as (in, out)).
    bound1 = 1.0 / jnp.sqrt(d_in * 1.0)
    w1 = jax.random.uniform(kw1, (d_in, OUT_DIM), minval=-bound1, maxval=bound1,
                            dtype=jnp.float32)
    b1 = jax.random.uniform(kb1, (OUT_DIM,), minval=-bound1, maxval=bound1, dtype=jnp.float32)
    # lin2 exists in __init__ but is never applied by forward(); initialized for completeness.
    bound2 = 1.0 / jnp.sqrt(OUT_DIM * 1.0)
    w2 = jax.random.uniform(kw2, (OUT_DIM, OUT_DIM), minval=-bound2, maxval=bound2,
                            dtype=jnp.float32)
    b2 = jax.random.uniform(kb2, (OUT_DIM,), minval=-bound2, maxval=bound2, dtype=jnp.float32)

    out = linear_mha(queries, keys, values, w1, b1)
    out = jax.block_until_ready(out)

    ref = linear_mha_reference(queries, keys, values, w1, b1)
    assert out.shape == (B, T, OUT_DIM)
    # Kernel math is exact (no approximate reciprocal); the tolerance only leaves headroom for
    # MXU f32 pass behaviour on real hardware.
    assert jnp.allclose(out, ref, atol=5e-3, rtol=5e-3), "mismatch vs reference"

    print("KERNEL_OK")
</pallas_src>

<mosaic_0001>
module attributes {stable_mosaic.version = 11 : i64} {
  func.func @linear_mha_kernel(%arg0: i32, %arg1: memref<8x16x40xf32, #tpu.memory_space<vmem>>, %arg2: memref<8x16x40xf32, #tpu.memory_space<vmem>>, %arg3: memref<8x16x40xf32, #tpu.memory_space<vmem>>, %arg4: memref<128x256xf32, #tpu.memory_space<vmem>>, %arg5: memref<256x256xf32, #tpu.memory_space<vmem>>, %arg6: memref<8x16x256xf32, #tpu.memory_space<vmem>>, %arg7: memref<384x128xf32, #tpu.memory_space<vmem>>) attributes {dimension_semantics = [#tpu.dimension_semantics<parallel>], iteration_bounds = array<i64: 2>, scalar_prefetch = 0 : i64, scratch_operands = 1 : i64, tpu.core_type = #tpu.core_type<tc>, window_params = [{transform_indices = @transform_0, window_bounds = array<i64: 8, 16, 40>}, {transform_indices = @transform_1, window_bounds = array<i64: 8, 16, 40>}, {transform_indices = @transform_2, window_bounds = array<i64: 8, 16, 40>}, {pipeline_mode = #tpu.pipeline_mode<synchronous>, transform_indices = @transform_3, window_bounds = array<i64: 128, 256>}, {pipeline_mode = #tpu.pipeline_mode<synchronous>, transform_indices = @transform_4, window_bounds = array<i64: 256, 256>}, {transform_indices = @transform_5, window_bounds = array<i64: 8, 16, 256>}]} {
    %0 = tpu.iota {dimensions = array<i32: 1>} : vector<384x128xi32>
    %c40_i32 = arith.constant 40 : i32
    %1 = vector.broadcast %c40_i32 : i32 to vector<384x128xi32>
    %2 = arith.cmpi eq, %0, %1 : vector<384x128xi32>
    %cst = arith.constant 1.000000e+00 : f32
    %cst_0 = arith.constant 0.000000e+00 : f32
    %3 = vector.broadcast %cst : f32 to vector<384x128xf32>
    %4 = vector.broadcast %cst_0 : f32 to vector<384x128xf32>
    %5 = arith.select %2, %3, %4 : vector<384x128xi1>, vector<384x128xf32>
    %c0 = arith.constant 0 : index
    %c0_1 = arith.constant 0 : index
    %6 = vector.load %arg7[%c0, %c0_1] : memref<384x128xf32, #tpu.memory_space<vmem>>, vector<384x128xf32>
    tpu.vector_store %arg7[%c0, %c0_1], %5 {strides = array<i32>} : memref<384x128xf32, #tpu.memory_space<vmem>>, vector<384x128xf32>,
    %c0_2 = arith.constant 0 : index
    %c0_3 = arith.constant 0 : index
    %c0_4 = arith.constant 0 : index
    %7 = vector.load %arg1[%c0_2, %c0_3, %c0_4] : memref<8x16x40xf32, #tpu.memory_space<vmem>>, vector<8x16x40xf32>
    %8 = vector.shape_cast %7 : vector<8x16x40xf32> to vector<128x40xf32>
    %c0_5 = arith.constant 0 : index
    %c0_6 = arith.constant 0 : index
    %9 = vector.load %arg7[%c0_5, %c0_6] : memref<384x128xf32, #tpu.memory_space<vmem>>, vector<128x40xf32>
    tpu.vector_store %arg7[%c0_5, %c0_6], %8 {strides = array<i32>} : memref<384x128xf32, #tpu.memory_space<vmem>>, vector<128x40xf32>,
    %c0_7 = arith.constant 0 : index
    %c0_8 = arith.constant 0 : index
    %c0_9 = arith.constant 0 : index
    %10 = vector.load %arg2[%c0_7, %c0_8, %c0_9] : memref<8x16x40xf32, #tpu.memory_space<vmem>>, vector<8x16x40xf32>
    %11 = vector.shape_cast %10 : vector<8x16x40xf32> to vector<128x40xf32>
    %c128 = arith.constant 128 : index
    %c0_10 = arith.constant 0 : index
    %12 = vector.load %arg7[%c128, %c0_10] : memref<384x128xf32, #tpu.memory_space<vmem>>, vector<128x40xf32>
    tpu.vector_store %arg7[%c128, %c0_10], %11 {strides = array<i32>} : memref<384x128xf32, #tpu.memory_space<vmem>>, vector<128x40xf32>,
    %c0_11 = arith.constant 0 : index
    %c0_12 = arith.constant 0 : index
    %c0_13 = arith.constant 0 : index
    %13 = vector.load %arg3[%c0_11, %c0_12, %c0_13] : memref<8x16x40xf32, #tpu.memory_space<vmem>>, vector<8x16x40xf32>
    %14 = vector.shape_cast %13 : vector<8x16x40xf32> to vector<128x40xf32>
    %c256 = arith.constant 256 : index
    %c0_14 = arith.constant 0 : index
    %15 = vector.load %arg7[%c256, %c0_14] : memref<384x128xf32, #tpu.memory_space<vmem>>, vector<128x40xf32>
    tpu.vector_store %arg7[%c256, %c0_14], %14 {strides = array<i32>} : memref<384x128xf32, #tpu.memory_space<vmem>>, vector<128x40xf32>,
    %c0_15 = arith.constant 0 : index
    %c0_16 = arith.constant 0 : index
    %16 = vector.load %arg7[%c0_15, %c0_16] : memref<384x128xf32, #tpu.memory_space<vmem>>, vector<384x128xf32>
    %c0_17 = arith.constant 0 : index
    %c0_18 = arith.constant 0 : index
    %17 = vector.load %arg4[%c0_17, %c0_18] : memref<128x256xf32, #tpu.memory_space<vmem>>, vector<128x256xf32>
    %cst_19 = arith.constant dense<0.000000e+00> : vector<384x256xf32>
    %18 = tpu.matmul %16, %17, %cst_19 {dimension_numbers = #tpu.dot_dimension_numbers<[1], [0], [0], [1], [0, 0, 1, 1], [], []>} : vector<384x128xf32>, vector<128x256xf32>, vector<384x256xf32> -> vector<384x256xf32>
    %19 = vector.extract_strided_slice %18 {offsets = [0, 0], sizes = [256, 256], strides = [1, 1]} : vector<384x256xf32> to vector<256x256xf32>
    %cst_20 = arith.constant 0.000000e+00 : f32
    %20 = vector.broadcast %cst_20 : f32 to vector<256x256xf32>
    %21 = arith.cmpf ogt, %19, %20 : vector<256x256xf32>
    %cst_21 = arith.constant 1.000000e+00 : f32
    %22 = vector.broadcast %cst_21 : f32 to vector<256x256xf32>
    %23 = arith.addf %19, %22 : vector<256x256xf32>
    %24 = math.exp %19 : vector<256x256xf32>
    %25 = arith.select %21, %23, %24 : vector<256x256xi1>, vector<256x256xf32>
    %c0_22 = arith.constant 0 : index
    %c0_23 = arith.constant 0 : index
    %26 = vector.load %arg5[%c0_22, %c0_23] : memref<256x256xf32, #tpu.memory_space<vmem>>, vector<256x256xf32>
    %27 = vector.extract_strided_slice %25 {offsets = [0, 0], sizes = [16, 256], strides = [1, 1]} : vector<256x256xf32> to vector<16x256xf32>
    %28 = vector.extract_strided_slice %25 {offsets = [128, 0], sizes = [16, 256], strides = [1, 1]} : vector<256x256xf32> to vector<16x256xf32>
    %29 = vector.extract_strided_slice %18 {offsets = [256, 0], sizes = [16, 256], strides = [1, 1]} : vector<384x256xf32> to vector<16x256xf32>
    %cst_24 = arith.constant dense<0.000000e+00> : vector<256x256xf32>
    %30 = tpu.matmul %28, %29, %cst_24 {dimension_numbers = #tpu.dot_dimension_numbers<[0], [0], [1], [1], [0, 1, 1, 1], [], []>} : vector<16x256xf32>, vector<16x256xf32>, vector<256x256xf32> -> vector<256x256xf32>
    %cst_25 = arith.constant dense<0.000000e+00> : vector<256xf32>
    %31 = vector.multi_reduction <add>, %28, %cst_25 [0] : vector<16x256xf32> to vector<256xf32>
    %32 = vector.shape_cast %31 : vector<256xf32> to vector<1x256xf32>
    %33 = arith.mulf %30, %26 : vector<256x256xf32>
    %cst_26 = arith.constant dense<0.000000e+00> : vector<16x256xf32>
    %34 = tpu.matmul %27, %33, %cst_26 {dimension_numbers = #tpu.dot_dimension_numbers<[1], [0], [0], [1], [0, 0, 1, 1], [], []>} : vector<16x256xf32>, vector<256x256xf32>, vector<16x256xf32> -> vector<16x256xf32>
    %35 = vector.broadcast %32 : vector<1x256xf32> to vector<16x256xf32>
    %36 = arith.mulf %27, %35 : vector<16x256xf32>
    %cst_27 = arith.constant dense<0.000000e+00> : vector<16x256xf32>
    %37 = tpu.matmul %36, %26, %cst_27 {dimension_numbers = #tpu.dot_dimension_numbers<[1], [0], [0], [1], [0, 0, 1, 1], [], []>} : vector<16x256xf32>, vector<256x256xf32>, vector<16x256xf32> -> vector<16x256xf32>
    %cst_28 = arith.constant 9.99999997E-7 : f32
    %38 = vector.broadcast %cst_28 : f32 to vector<16x256xf32>
    %39 = arith.addf %37, %38 : vector<16x256xf32>
    %40 = arith.divf %34, %39 : vector<16x256xf32>
    %c0_29 = arith.constant 0 : index
    %c0_30 = arith.constant 0 : index
    %c0_31 = arith.constant 0 : index
    %41 = vector.load %arg6[%c0_29, %c0_30, %c0_31] : memref<8x16x256xf32, #tpu.memory_space<vmem>>, vector<1x16x256xf32>
    %42 = vector.shape_cast %41 : vector<1x16x256xf32> to vector<16x256xf32>
    %43 = vector.shape_cast %40 : vector<16x256xf32> to vector<1x16x256xf32>
    tpu.vector_store %arg6[%c0_29, %c0_30, %c0_31], %43 {strides = array<i32>} : memref<8x16x256xf32, #tpu.memory_space<vmem>>, vector<1x16x256xf32>,
    %44 = vector.extract_strided_slice %25 {offsets = [16, 0], sizes = [16, 256], strides = [1, 1]} : vector<256x256xf32> to vector<16x256xf32>
    %45 = vector.extract_strided_slice %25 {offsets = [144, 0], sizes = [16, 256], strides = [1, 1]} : vector<256x256xf32> to vector<16x256xf32>
    %46 = vector.extract_strided_slice %18 {offsets = [272, 0], sizes = [16, 256], strides = [1, 1]} : vector<384x256xf32> to vector<16x256xf32>
    %cst_32 = arith.constant dense<0.000000e+00> : vector<256x256xf32>
    %47 = tpu.matmul %45, %46, %cst_32 {dimension_numbers = #tpu.dot_dimension_numbers<[0], [0], [1], [1], [0, 1, 1, 1], [], []>} : vector<16x256xf32>, vector<16x256xf32>, vector<256x256xf32> -> vector<256x256xf32>
    %cst_33 = arith.constant dense<0.000000e+00> : vector<256xf32>
    %48 = vector.multi_reduction <add>, %45, %cst_33 [0] : vector<16x256xf32> to vector<256xf32>
    %49 = vector.shape_cast %48 : vector<256xf32> to vector<1x256xf32>
    %50 = arith.mulf %47, %26 : vector<256x256xf32>
    %cst_34 = arith.constant dense<0.000000e+00> : vector<16x256xf32>
    %51 = tpu.matmul %44, %50, %cst_34 {dimension_numbers = #tpu.dot_dimension_numbers<[1], [0], [0], [1], [0, 0, 1, 1], [], []>} : vector<16x256xf32>, vector<256x256xf32>, vector<16x256xf32> -> vector<16x256xf32>
    %52 = vector.broadcast %49 : vector<1x256xf32> to vector<16x256xf32>
    %53 = arith.mulf %44, %52 : vector<16x256xf32>
    %cst_35 = arith.constant dense<0.000000e+00> : vector<16x256xf32>
    %54 = tpu.matmul %53, %26, %cst_35 {dimension_numbers = #tpu.dot_dimension_numbers<[1], [0], [0], [1], [0, 0, 1, 1], [], []>} : vector<16x256xf32>, vector<256x256xf32>, vector<16x256xf32> -> vector<16x256xf32>
    %cst_36 = arith.constant 9.99999997E-7 : f32
    %55 = vector.broadcast %cst_36 : f32 to vector<16x256xf32>
    %56 = arith.addf %54, %55 : vector<16x256xf32>
    %57 = arith.divf %51, %56 : vector<16x256xf32>
    %c1 = arith.constant 1 : index
    %c0_37 = arith.constant 0 : index
    %c0_38 = arith.constant 0 : index
    %58 = vector.load %arg6[%c1, %c0_37, %c0_38] : memref<8x16x256xf32, #tpu.memory_space<vmem>>, vector<1x16x256xf32>
    %59 = vector.shape_cast %58 : vector<1x16x256xf32> to vector<16x256xf32>
    %60 = vector.shape_cast %57 : vector<16x256xf32> to vector<1x16x256xf32>
    tpu.vector_store %arg6[%c1, %c0_37, %c0_38], %60 {strides = array<i32>} : memref<8x16x256xf32, #tpu.memory_space<vmem>>, vector<1x16x256xf32>,
    %61 = vector.extract_strided_slice %25 {offsets = [32, 0], sizes = [16, 256], strides = [1, 1]} : vector<256x256xf32> to vector<16x256xf32>
    %62 = vector.extract_strided_slice %25 {offsets = [160, 0], sizes = [16, 256], strides = [1, 1]} : vector<256x256xf32> to vector<16x256xf32>
    %63 = vector.extract_strided_slice %18 {offsets = [288, 0], sizes = [16, 256], strides = [1, 1]} : vector<384x256xf32> to vector<16x256xf32>
    %cst_39 = arith.constant dense<0.000000e+00> : vector<256x256xf32>
    %64 = tpu.matmul %62, %63, %cst_39 {dimension_numbers = #tpu.dot_dimension_numbers<[0], [0], [1], [1], [0, 1, 1, 1], [], []>} : vector<16x256xf32>, vector<16x256xf32>, vector<256x256xf32> -> vector<256x256xf32>
    %cst_40 = arith.constant dense<0.000000e+00> : vector<256xf32>
    %65 = vector.multi_reduction <add>, %62, %cst_40 [0] : vector<16x256xf32> to vector<256xf32>
    %66 = vector.shape_cast %65 : vector<256xf32> to vector<1x256xf32>
    %67 = arith.mulf %64, %26 : vector<256x256xf32>
    %cst_41 = arith.constant dense<0.000000e+00> : vector<16x256xf32>
    %68 = tpu.matmul %61, %67, %cst_41 {dimension_numbers = #tpu.dot_dimension_numbers<[1], [0], [0], [1], [0, 0, 1, 1], [], []>} : vector<16x256xf32>, vector<256x256xf32>, vector<16x256xf32> -> vector<16x256xf32>
    %69 = vector.broadcast %66 : vector<1x256xf32> to vector<16x256xf32>
    %70 = arith.mulf %61, %69 : vector<16x256xf32>
    %cst_42 = arith.constant dense<0.000000e+00> : vector<16x256xf32>
    %71 = tpu.matmul %70, %26, %cst_42 {dimension_numbers = #tpu.dot_dimension_numbers<[1], [0], [0], [1], [0, 0, 1, 1], [], []>} : vector<16x256xf32>, vector<256x256xf32>, vector<16x256xf32> -> vector<16x256xf32>
    %cst_43 = arith.constant 9.99999997E-7 : f32
    %72 = vector.broadcast %cst_43 : f32 to vector<16x256xf32>
    %73 = arith.addf %71, %72 : vector<16x256xf32>
    %74 = arith.divf %68, %73 : vector<16x256xf32>
    %c2 = arith.constant 2 : index
    %c0_44 = arith.constant 0 : index
    %c0_45 = arith.constant 0 : index
    %75 = vector.load %arg6[%c2, %c0_44, %c0_45] : memref<8x16x256xf32, #tpu.memory_space<vmem>>, vector<1x16x256xf32>
    %76 = vector.shape_cast %75 : vector<1x16x256xf32> to vector<16x256xf32>
    %77 = vector.shape_cast %74 : vector<16x256xf32> to vector<1x16x256xf32>
    tpu.vector_store %arg6[%c2, %c0_44, %c0_45], %77 {strides = array<i32>} : memref<8x16x256xf32, #tpu.memory_space<vmem>>, vector<1x16x256xf32>,
    %78 = vector.extract_strided_slice %25 {offsets = [48, 0], sizes = [16, 256], strides = [1, 1]} : vector<256x256xf32> to vector<16x256xf32>
    %79 = vector.extract_strided_slice %25 {offsets = [176, 0], sizes = [16, 256], strides = [1, 1]} : vector<256x256xf32> to vector<16x256xf32>
    %80 = vector.extract_strided_slice %18 {offsets = [304, 0], sizes = [16, 256], strides = [1, 1]} : vector<384x256xf32> to vector<16x256xf32>
    %cst_46 = arith.constant dense<0.000000e+00> : vector<256x256xf32>
    %81 = tpu.matmul %79, %80, %cst_46 {dimension_numbers = #tpu.dot_dimension_numbers<[0], [0], [1], [1], [0, 1, 1, 1], [], []>} : vector<16x256xf32>, vector<16x256xf32>, vector<256x256xf32> -> vector<256x256xf32>
    %cst_47 = arith.constant dense<0.000000e+00> : vector<256xf32>
    %82 = vector.multi_reduction <add>, %79, %cst_47 [0] : vector<16x256xf32> to vector<256xf32>
    %83 = vector.shape_cast %82 : vector<256xf32> to vector<1x256xf32>
    %84 = arith.mulf %81, %26 : vector<256x256xf32>
    %cst_48 = arith.constant dense<0.000000e+00> : vector<16x256xf32>
    %85 = tpu.matmul %78, %84, %cst_48 {dimension_numbers = #tpu.dot_dimension_numbers<[1], [0], [0], [1], [0, 0, 1, 1], [], []>} : vector<16x256xf32>, vector<256x256xf32>, vector<16x256xf32> -> vector<16x256xf32>
    %86 = vector.broadcast %83 : vector<1x256xf32> to vector<16x256xf32>
    %87 = arith.mulf %78, %86 : vector<16x256xf32>
    %cst_49 = arith.constant dense<0.000000e+00> : vector<16x256xf32>
    %88 = tpu.matmul %87, %26, %cst_49 {dimension_numbers = #tpu.dot_dimension_numbers<[1], [0], [0], [1], [0, 0, 1, 1], [], []>} : vector<16x256xf32>, vector<256x256xf32>, vector<16x256xf32> -> vector<16x256xf32>
    %cst_50 = arith.constant 9.99999997E-7 : f32
    %89 = vector.broadcast %cst_50 : f32 to vector<16x256xf32>
    %90 = arith.addf %88, %89 : vector<16x256xf32>
    %91 = arith.divf %85, %90 : vector<16x256xf32>
    %c3 = arith.constant 3 : index
    %c0_51 = arith.constant 0 : index
    %c0_52 = arith.constant 0 : index
    %92 = vector.load %arg6[%c3, %c0_51, %c0_52] : memref<8x16x256xf32, #tpu.memory_space<vmem>>, vector<1x16x256xf32>
    %93 = vector.shape_cast %92 : vector<1x16x256xf32> to vector<16x256xf32>
    %94 = vector.shape_cast %91 : vector<16x256xf32> to vector<1x16x256xf32>
    tpu.vector_store %arg6[%c3, %c0_51, %c0_52], %94 {strides = array<i32>} : memref<8x16x256xf32, #tpu.memory_space<vmem>>, vector<1x16x256xf32>,
    %95 = vector.extract_strided_slice %25 {offsets = [64, 0], sizes = [16, 256], strides = [1, 1]} : vector<256x256xf32> to vector<16x256xf32>
    %96 = vector.extract_strided_slice %25 {offsets = [192, 0], sizes = [16, 256], strides = [1, 1]} : vector<256x256xf32> to vector<16x256xf32>
    %97 = vector.extract_strided_slice %18 {offsets = [320, 0], sizes = [16, 256], strides = [1, 1]} : vector<384x256xf32> to vector<16x256xf32>
    %cst_53 = arith.constant dense<0.000000e+00> : vector<256x256xf32>
    %98 = tpu.matmul %96, %97, %cst_53 {dimension_numbers = #tpu.dot_dimension_numbers<[0], [0], [1], [1], [0, 1, 1, 1], [], []>} : vector<16x256xf32>, vector<16x256xf32>, vector<256x256xf32> -> vector<256x256xf32>
    %cst_54 = arith.constant dense<0.000000e+00> : vector<256xf32>
    %99 = vector.multi_reduction <add>, %96, %cst_54 [0] : vector<16x256xf32> to vector<256xf32>
    %100 = vector.shape_cast %99 : vector<256xf32> to vector<1x256xf32>
    %101 = arith.mulf %98, %26 : vector<256x256xf32>
    %cst_55 = arith.constant dense<0.000000e+00> : vector<16x256xf32>
    %102 = tpu.matmul %95, %101, %cst_55 {dimension_numbers = #tpu.dot_dimension_numbers<[1], [0], [0], [1], [0, 0, 1, 1], [], []>} : vector<16x256xf32>, vector<256x256xf32>, vector<16x256xf32> -> vector<16x256xf32>
    %103 = vector.broadcast %100 : vector<1x256xf32> to vector<16x256xf32>
    %104 = arith.mulf %95, %103 : vector<16x256xf32>
    %cst_56 = arith.constant dense<0.000000e+00> : vector<16x256xf32>
    %105 = tpu.matmul %104, %26, %cst_56 {dimension_numbers = #tpu.dot_dimension_numbers<[1], [0], [0], [1], [0, 0, 1, 1], [], []>} : vector<16x256xf32>, vector<256x256xf32>, vector<16x256xf32> -> vector<16x256xf32>
    %cst_57 = arith.constant 9.99999997E-7 : f32
    %106 = vector.broadcast %cst_57 : f32 to vector<16x256xf32>
    %107 = arith.addf %105, %106 : vector<16x256xf32>
    %108 = arith.divf %102, %107 : vector<16x256xf32>
    %c4 = arith.constant 4 : index
    %c0_58 = arith.constant 0 : index
    %c0_59 = arith.constant 0 : index
    %109 = vector.load %arg6[%c4, %c0_58, %c0_59] : memref<8x16x256xf32, #tpu.memory_space<vmem>>, vector<1x16x256xf32>
    %110 = vector.shape_cast %109 : vector<1x16x256xf32> to vector<16x256xf32>
    %111 = vector.shape_cast %108 : vector<16x256xf32> to vector<1x16x256xf32>
    tpu.vector_store %arg6[%c4, %c0_58, %c0_59], %111 {strides = array<i32>} : memref<8x16x256xf32, #tpu.memory_space<vmem>>, vector<1x16x256xf32>,
    %112 = vector.extract_strided_slice %25 {offsets = [80, 0], sizes = [16, 256], strides = [1, 1]} : vector<256x256xf32> to vector<16x256xf32>
    %113 = vector.extract_strided_slice %25 {offsets = [208, 0], sizes = [16, 256], strides = [1, 1]} : vector<256x256xf32> to vector<16x256xf32>
    %114 = vector.extract_strided_slice %18 {offsets = [336, 0], sizes = [16, 256], strides = [1, 1]} : vector<384x256xf32> to vector<16x256xf32>
    %cst_60 = arith.constant dense<0.000000e+00> : vector<256x256xf32>
    %115 = tpu.matmul %113, %114, %cst_60 {dimension_numbers = #tpu.dot_dimension_numbers<[0], [0], [1], [1], [0, 1, 1, 1], [], []>} : vector<16x256xf32>, vector<16x256xf32>, vector<256x256xf32> -> vector<256x256xf32>
    %cst_61 = arith.constant dense<0.000000e+00> : vector<256xf32>
    %116 = vector.multi_reduction <add>, %113, %cst_61 [0] : vector<16x256xf32> to vector<256xf32>
    %117 = vector.shape_cast %116 : vector<256xf32> to vector<1x256xf32>
    %118 = arith.mulf %115, %26 : vector<256x256xf32>
    %cst_62 = arith.constant dense<0.000000e+00> : vector<16x256xf32>
    %119 = tpu.matmul %112, %118, %cst_62 {dimension_numbers = #tpu.dot_dimension_numbers<[1], [0], [0], [1], [0, 0, 1, 1], [], []>} : vector<16x256xf32>, vector<256x256xf32>, vector<16x256xf32> -> vector<16x256xf32>
    %120 = vector.broadcast %117 : vector<1x256xf32> to vector<16x256xf32>
    %121 = arith.mulf %112, %120 : vector<16x256xf32>
    %cst_63 = arith.constant dense<0.000000e+00> : vector<16x256xf32>
    %122 = tpu.matmul %121, %26, %cst_63 {dimension_numbers = #tpu.dot_dimension_numbers<[1], [0], [0], [1], [0, 0, 1, 1], [], []>} : vector<16x256xf32>, vector<256x256xf32>, vector<16x256xf32> -> vector<16x256xf32>
    %cst_64 = arith.constant 9.99999997E-7 : f32
    %123 = vector.broadcast %cst_64 : f32 to vector<16x256xf32>
    %124 = arith.addf %122, %123 : vector<16x256xf32>
    %125 = arith.divf %119, %124 : vector<16x256xf32>
    %c5 = arith.constant 5 : index
    %c0_65 = arith.constant 0 : index
    %c0_66 = arith.constant 0 : index
    %126 = vector.load %arg6[%c5, %c0_65, %c0_66] : memref<8x16x256xf32, #tpu.memory_space<vmem>>, vector<1x16x256xf32>
    %127 = vector.shape_cast %126 : vector<1x16x256xf32> to vector<16x256xf32>
    %128 = vector.shape_cast %125 : vector<16x256xf32> to vector<1x16x256xf32>
    tpu.vector_store %arg6[%c5, %c0_65, %c0_66], %128 {strides = array<i32>} : memref<8x16x256xf32, #tpu.memory_space<vmem>>, vector<1x16x256xf32>,
    %129 = vector.extract_strided_slice %25 {offsets = [96, 0], sizes = [16, 256], strides = [1, 1]} : vector<256x256xf32> to vector<16x256xf32>
    %130 = vector.extract_strided_slice %25 {offsets = [224, 0], sizes = [16, 256], strides = [1, 1]} : vector<256x256xf32> to vector<16x256xf32>
    %131 = vector.extract_strided_slice %18 {offsets = [352, 0], sizes = [16, 256], strides = [1, 1]} : vector<384x256xf32> to vector<16x256xf32>
    %cst_67 = arith.constant dense<0.000000e+00> : vector<256x256xf32>
    %132 = tpu.matmul %130, %131, %cst_67 {dimension_numbers = #tpu.dot_dimension_numbers<[0], [0], [1], [1], [0, 1, 1, 1], [], []>} : vector<16x256xf32>, vector<16x256xf32>, vector<256x256xf32> -> vector<256x256xf32>
    %cst_68 = arith.constant dense<0.000000e+00> : vector<256xf32>
    %133 = vector.multi_reduction <add>, %130, %cst_68 [0] : vector<16x256xf32> to vector<256xf32>
    %134 = vector.shape_cast %133 : vector<256xf32> to vector<1x256xf32>
    %135 = arith.mulf %132, %26 : vector<256x256xf32>
    %cst_69 = arith.constant dense<0.000000e+00> : vector<16x256xf32>
    %136 = tpu.matmul %129, %135, %cst_69 {dimension_numbers = #tpu.dot_dimension_numbers<[1], [0], [0], [1], [0, 0, 1, 1], [], []>} : vector<16x256xf32>, vector<256x256xf32>, vector<16x256xf32> -> vector<16x256xf32>
    %137 = vector.broadcast %134 : vector<1x256xf32> to vector<16x256xf32>
    %138 = arith.mulf %129, %137 : vector<16x256xf32>
    %cst_70 = arith.constant dense<0.000000e+00> : vector<16x256xf32>
    %139 = tpu.matmul %138, %26, %cst_70 {dimension_numbers = #tpu.dot_dimension_numbers<[1], [0], [0], [1], [0, 0, 1, 1], [], []>} : vector<16x256xf32>, vector<256x256xf32>, vector<16x256xf32> -> vector<16x256xf32>
    %cst_71 = arith.constant 9.99999997E-7 : f32
    %140 = vector.broadcast %cst_71 : f32 to vector<16x256xf32>
    %141 = arith.addf %139, %140 : vector<16x256xf32>
    %142 = arith.divf %136, %141 : vector<16x256xf32>
    %c6 = arith.constant 6 : index
    %c0_72 = arith.constant 0 : index
    %c0_73 = arith.constant 0 : index
    %143 = vector.load %arg6[%c6, %c0_72, %c0_73] : memref<8x16x256xf32, #tpu.memory_space<vmem>>, vector<1x16x256xf32>
    %144 = vector.shape_cast %143 : vector<1x16x256xf32> to vector<16x256xf32>
    %145 = vector.shape_cast %142 : vector<16x256xf32> to vector<1x16x256xf32>
    tpu.vector_store %arg6[%c6, %c0_72, %c0_73], %145 {strides = array<i32>} : memref<8x16x256xf32, #tpu.memory_space<vmem>>, vector<1x16x256xf32>,
    %146 = vector.extract_strided_slice %25 {offsets = [112, 0], sizes = [16, 256], strides = [1, 1]} : vector<256x256xf32> to vector<16x256xf32>
    %147 = vector.extract_strided_slice %25 {offsets = [240, 0], sizes = [16, 256], strides = [1, 1]} : vector<256x256xf32> to vector<16x256xf32>
    %148 = vector.extract_strided_slice %18 {offsets = [368, 0], sizes = [16, 256], strides = [1, 1]} : vector<384x256xf32> to vector<16x256xf32>
    %cst_74 = arith.constant dense<0.000000e+00> : vector<256x256xf32>
    %149 = tpu.matmul %147, %148, %cst_74 {dimension_numbers = #tpu.dot_dimension_numbers<[0], [0], [1], [1], [0, 1, 1, 1], [], []>} : vector<16x256xf32>, vector<16x256xf32>, vector<256x256xf32> -> vector<256x256xf32>
    %cst_75 = arith.constant dense<0.000000e+00> : vector<256xf32>
    %150 = vector.multi_reduction <add>, %147, %cst_75 [0] : vector<16x256xf32> to vector<256xf32>
    %151 = vector.shape_cast %150 : vector<256xf32> to vector<1x256xf32>
    %152 = arith.mulf %149, %26 : vector<256x256xf32>
    %cst_76 = arith.constant dense<0.000000e+00> : vector<16x256xf32>
    %153 = tpu.matmul %146, %152, %cst_76 {dimension_numbers = #tpu.dot_dimension_numbers<[1], [0], [0], [1], [0, 0, 1, 1], [], []>} : vector<16x256xf32>, vector<256x256xf32>, vector<16x256xf32> -> vector<16x256xf32>
    %154 = vector.broadcast %151 : vector<1x256xf32> to vector<16x256xf32>
    %155 = arith.mulf %146, %154 : vector<16x256xf32>
    %cst_77 = arith.constant dense<0.000000e+00> : vector<16x256xf32>
    %156 = tpu.matmul %155, %26, %cst_77 {dimension_numbers = #tpu.dot_dimension_numbers<[1], [0], [0], [1], [0, 0, 1, 1], [], []>} : vector<16x256xf32>, vector<256x256xf32>, vector<16x256xf32> -> vector<16x256xf32>
    %cst_78 = arith.constant 9.99999997E-7 : f32
    %157 = vector.broadcast %cst_78 : f32 to vector<16x256xf32>
    %158 = arith.addf %156, %157 : vector<16x256xf32>
    %159 = arith.divf %153, %158 : vector<16x256xf32>
    %c7 = arith.constant 7 : index
    %c0_79 = arith.constant 0 : index
    %c0_80 = arith.constant 0 : index
    %160 = vector.load %arg6[%c7, %c0_79, %c0_80] : memref<8x16x256xf32, #tpu.memory_space<vmem>>, vector<1x16x256xf32>
    %161 = vector.shape_cast %160 : vector<1x16x256xf32> to vector<16x256xf32>
    %162 = vector.shape_cast %159 : vector<16x256xf32> to vector<1x16x256xf32>
    tpu.vector_store %arg6[%c7, %c0_79, %c0_80], %162 {strides = array<i32>} : memref<8x16x256xf32, #tpu.memory_space<vmem>>, vector<1x16x256xf32>,
    return
  }
  func.func @transform_0(%arg0: i32) -> (i32, i32, i32) {
    %c0_i32 = arith.constant 0 : i32
    %c0_i32_0 = arith.constant 0 : i32
    %c0_i32_1 = arith.constant 0 : i32
    return %arg0, %c0_i32, %c0_i32_0 : i32, i32, i32
  }
  func.func @transform_1(%arg0: i32) -> (i32, i32, i32) {
    %c0_i32 = arith.constant 0 : i32
    %c0_i32_0 = arith.constant 0 : i32
    %c0_i32_1 = arith.constant 0 : i32
    return %arg0, %c0_i32, %c0_i32_0 : i32, i32, i32
  }
  func.func @transform_2(%arg0: i32) -> (i32, i32, i32) {
    %c0_i32 = arith.constant 0 : i32
    %c0_i32_0 = arith.constant 0 : i32
    %c0_i32_1 = arith.constant 0 : i32
    return %arg0, %c0_i32, %c0_i32_0 : i32, i32, i32
  }
  func.func @transform_3(%arg0: i32) -> (i32, i32) {
    %c0_i32 = arith.constant 0 : i32
    %c0_i32_0 = arith.constant 0 : i32
    %c0_i32_1 = arith.constant 0 : i32
    return %c0_i32, %c0_i32_0 : i32, i32
  }
  func.func @transform_4(%arg0: i32) -> (i32, i32) {
    %c0_i32 = arith.constant 0 : i32
    %c0_i32_0 = arith.constant 0 : i32
    %c0_i32_1 = arith.constant 0 : i32
    return %c0_i32, %c0_i32_0 : i32, i32
  }
  func.func @transform_5(%arg0: i32) -> (i32, i32, i32) {
    %c0_i32 = arith.constant 0 : i32
    %c0_i32_0 = arith.constant 0 : i32
    %c0_i32_1 = arith.constant 0 : i32
    return %arg0, %c0_i32, %c0_i32_0 : i32, i32, i32
  }
}

</mosaic_0001>

<llo_original>
// kernel: _linear_mha_batched.1
$region0: #{_linear_mha_batched.1}
  #allocation0 [shape = 'u32[]', space=smem, size = 0x4, offset = 0x4, fixed_abs, tag = 'smem constant byte address 0x4 - core index']
  #allocation1 [shape = 'u32[144,128]{1,0:T(1,128)}', space=vmem, size = 0x12000, scoped, tag = 'internal scratch']
  #allocation2 [shape = 'f32[384,128]{1,0:T(8,128)}', space=vmem, size = 0x30000, scoped, tag = 'scratch operand']
  %s0 = inlined_call_operand.vmem [shape: f32[16,16,40], index: 0, kind: input, shape index: {}]
  %s1 = inlined_call_operand.vmem [shape: f32[16,16,40], index: 1, kind: input, shape index: {}]
  %s2 = inlined_call_operand.vmem [shape: f32[16,16,40], index: 2, kind: input, shape index: {}]
  %s3 = inlined_call_operand.vmem [shape: f32[128,256], index: 3, kind: input, shape index: {}]
  %s4 = inlined_call_operand.vmem [shape: f32[256,256], index: 4, kind: input, shape index: {}]
  %s5 = inlined_call_operand.hbm [shape: f32[16,16,256], index: 5, kind: output, shape index: {}]
  %s6 = sld [smem:[#allocation0]]
  $region53: #{_linear_mha_batched.1} parent=0
    _
  %s8 = ssub.s32 1, %s6
  %s9 = scalar_select 0, %s8, %s6
  $region1: #{_linear_mha_batched.1} parent=0
    #allocation3 [shape = 'u8[262144]{0}', space=vmem, size = 0x40000, scoped, tag = 'output window, operand 0']
    #allocation4 [shape = 's32[2]{0}', space=sflag, size = 0x8, scoped, tag = 'scoped memory for _linear_mha_batched.1']
    %10 = vsyncpa [#allocation4], 0
    %s11 = scalar_lea.sflag [#allocation4], 1
    %12 = vsyncpa %s11, 0
    loop: start=0, step=1, limit=4
    $region2: #{_linear_mha_batched.1} parent=1 // loop_pre_header
      _
    $region3: #{_linear_mha_batched.1} parent=1 // loop_header
      %s14 = sphi 0, %s18
      %p15 = scmp.ge.s32.totalorder %s14, 4
      %s24 = sphi 0, %s26
      %s27 = sphi 0, %s24
      %s28 = sphi 0, %s27
      %s44 = sphi 0, %s28
      %s50 = sphi 0, %s52
      %s53 = sphi 0, %s50
      %s54 = sphi 0, %s53
      %s70 = sphi 0, %s54
      %s76 = sphi 0, %s78
      %s79 = sphi 0, %s76
      %s80 = sphi 0, %s79
      %s96 = sphi 0, %s80
      %s100 = sphi 0, %s100
      %s102 = sphi 0, %s100
      %s103 = sphi 0, %s102
      %s117 = sphi 0, %s103
      %s121 = sphi 0, %s121
      %s123 = sphi 0, %s121
      %s124 = sphi 0, %s123
      %s138 = sphi 0, %s124
      %s144 = sphi 0, %s146
      %s147 = sphi 0, %s144
      %s148 = sphi 0, %s147
      %s164 = sphi 0, %s148
    $region4: #{_linear_mha_batched.1} parent=1 // loop_header_branch
      %17 = sbr.rel (%p15) target = $region8
    $region5: #{_linear_mha_batched.1} parent=1 // loop_body
      %s19 = ssub.s32 %s14, 1
      %s20 = ssub.s32 %s14, 2
      %s21 = sadd.s32 %s14, 1
      %s22 = ssub.s32 %s14, %s21
      %p23 = scmp.eq.s32.totalorder %s22, 0
      %s25 = sadd.s32 %s24, 1
      %s26 = scalar_select %p23, %s24, %s25
      %p29 = pneg %p23
      %p30 = scmp.eq.s32.totalorder %s14, 1
      %p31 = por %p29, %p30
      %p32 = scmp.ne.s32.totalorder %s24, %s27
      %p33 = scmp.eq.s32.totalorder %s14, 0
      %p34 = por %p32, %p33
      %p35 = scmp.ne.s32.totalorder %s24, %s27
      %p36 = scmp.eq.s32.totalorder %s19, 1
      %p37 = por %p35, %p36
      %p38 = scmp.ne.s32.totalorder %s27, %s28
      %p39 = scmp.eq.s32.totalorder %s19, 0
      %p40 = por %p38, %p39
      %p41 = scmp.ne.s32.totalorder %s27, %s28
      %p42 = scmp.eq.s32.totalorder %s20, 1
      %p43 = por %p41, %p42
      %p45 = scmp.ne.s32.totalorder %s28, %s44
      %p46 = scmp.eq.s32.totalorder %s20, 0
      %p47 = por %p45, %p46
      %s48 = ssub.s32 %s14, %s21
      %p49 = scmp.eq.s32.totalorder %s48, 0
      %s51 = sadd.s32 %s50, 1
      %s52 = scalar_select %p49, %s50, %s51
      %p55 = pneg %p49
      %p56 = scmp.eq.s32.totalorder %s14, 1
      %p57 = por %p55, %p56
      %p58 = scmp.ne.s32.totalorder %s50, %s53
      %p59 = scmp.eq.s32.totalorder %s14, 0
      %p60 = por %p58, %p59
      %p61 = scmp.ne.s32.totalorder %s50, %s53
      %p62 = scmp.eq.s32.totalorder %s19, 1
      %p63 = por %p61, %p62
      %p64 = scmp.ne.s32.totalorder %s53, %s54
      %p65 = scmp.eq.s32.totalorder %s19, 0
      %p66 = por %p64, %p65
      %p67 = scmp.ne.s32.totalorder %s53, %s54
      %p68 = scmp.eq.s32.totalorder %s20, 1
      %p69 = por %p67, %p68
      %p71 = scmp.ne.s32.totalorder %s54, %s70
      %p72 = scmp.eq.s32.totalorder %s20, 0
      %p73 = por %p71, %p72
      %s74 = ssub.s32 %s14, %s21
      %p75 = scmp.eq.s32.totalorder %s74, 0
      %s77 = sadd.s32 %s76, 1
      %s78 = scalar_select %p75, %s76, %s77
      %p81 = pneg %p75
      %p82 = scmp.eq.s32.totalorder %s14, 1
      %p83 = por %p81, %p82
      %p84 = scmp.ne.s32.totalorder %s76, %s79
      %p85 = scmp.eq.s32.totalorder %s14, 0
      %p86 = por %p84, %p85
      %p87 = scmp.ne.s32.totalorder %s76, %s79
      %p88 = scmp.eq.s32.totalorder %s19, 1
      %p89 = por %p87, %p88
      %p90 = scmp.ne.s32.totalorder %s79, %s80
      %p91 = scmp.eq.s32.totalorder %s19, 0
      %p92 = por %p90, %p91
      %p93 = scmp.ne.s32.totalorder %s79, %s80
      %p94 = scmp.eq.s32.totalorder %s20, 1
      %p95 = por %p93, %p94
      %p97 = scmp.ne.s32.totalorder %s80, %s96
      %p98 = scmp.eq.s32.totalorder %s20, 0
      %p99 = por %p97, %p98
      %s101 = sadd.s32 %s100, 1
      %p104 = scmp.eq.s32.totalorder %s14, 1
      %p105 = scmp.ne.s32.totalorder %s100, %s102
      %p106 = scmp.eq.s32.totalorder %s14, 0
      %p107 = por %p105, %p106
      %p108 = scmp.ne.s32.totalorder %s100, %s102
      %p109 = scmp.eq.s32.totalorder %s19, 1
      %p110 = por %p108, %p109
      %p111 = scmp.ne.s32.totalorder %s102, %s103
      %p112 = scmp.eq.s32.totalorder %s19, 0
      %p113 = por %p111, %p112
      %p114 = scmp.ne.s32.totalorder %s102, %s103
      %p115 = scmp.eq.s32.totalorder %s20, 1
      %p116 = por %p114, %p115
      %p118 = scmp.ne.s32.totalorder %s103, %s117
      %p119 = scmp.eq.s32.totalorder %s20, 0
      %p120 = por %p118, %p119
      %s122 = sadd.s32 %s121, 1
      %p125 = scmp.eq.s32.totalorder %s14, 1
      %p126 = scmp.ne.s32.totalorder %s121, %s123
      %p127 = scmp.eq.s32.totalorder %s14, 0
      %p128 = por %p126, %p127
      %p129 = scmp.ne.s32.totalorder %s121, %s123
      %p130 = scmp.eq.s32.totalorder %s19, 1
      %p131 = por %p129, %p130
      %p132 = scmp.ne.s32.totalorder %s123, %s124
      %p133 = scmp.eq.s32.totalorder %s19, 0
      %p134 = por %p132, %p133
      %p135 = scmp.ne.s32.totalorder %s123, %s124
      %p136 = scmp.eq.s32.totalorder %s20, 1
      %p137 = por %p135, %p136
      %p139 = scmp.ne.s32.totalorder %s124, %s138
      %p140 = scmp.eq.s32.totalorder %s20, 0
      %p141 = por %p139, %p140
      %s142 = ssub.s32 %s14, %s21
      %p143 = scmp.eq.s32.totalorder %s142, 0
      %s145 = sadd.s32 %s144, 1
      %s146 = scalar_select %p143, %s144, %s145
      %p149 = pneg %p143
      %p150 = scmp.eq.s32.totalorder %s14, 1
      %p151 = por %p149, %p150
      %p152 = scmp.ne.s32.totalorder %s144, %s147
      %p153 = scmp.eq.s32.totalorder %s14, 0
      %p154 = por %p152, %p153
      %p155 = scmp.ne.s32.totalorder %s144, %s147
      %p156 = scmp.eq.s32.totalorder %s19, 1
      %p157 = por %p155, %p156
      %p158 = scmp.ne.s32.totalorder %s147, %s148
      %p159 = scmp.eq.s32.totalorder %s19, 0
      %p160 = por %p158, %p159
      %p161 = scmp.ne.s32.totalorder %s147, %s148
      %p162 = scmp.eq.s32.totalorder %s20, 1
      %p163 = por %p161, %p162
      %p165 = scmp.ne.s32.totalorder %s148, %s164
      %p166 = scmp.eq.s32.totalorder %s20, 0
      %p167 = por %p165, %p166
      %p168 = scmp.le.s32.totalorder 1, %s14
      %p169 = scmp.lt.s32.totalorder %s14, 3
      %p170 = pnand %p168, %p169
      %p171 = pneg %p170
      // Predicated region
      $region9: #{_linear_mha_batched.1} parent=5 // pred_check
        _
      $region10: #{_linear_mha_batched.1} parent=5 // pred_check_branch
        %173 = sbr.rel (%p170) target = $region12
      $region11: #{_linear_mha_batched.1} parent=5 // pred_region
        %s174 = ssub.s32 %s14, 1
        // Predicated region
        $region13: #{_linear_mha_batched.1} parent=11 // pred_check
          %p175 = pneg %p113
        $region14: #{_linear_mha_batched.1} parent=11 // pred_check_branch
          %177 = sbr.rel (%p175) target = $region16
        $region15: #{_linear_mha_batched.1} parent=11 // pred_region
          _
        $region16: #{_linear_mha_batched.1} parent=11 // pred_fallthru
          _
        // Predicated region
        $region17: #{_linear_mha_batched.1} parent=11 // pred_check
          %p178 = pneg %p134
        $region18: #{_linear_mha_batched.1} parent=11 // pred_check_branch
          %180 = sbr.rel (%p178) target = $region20
        $region19: #{_linear_mha_batched.1} parent=11 // pred_region
          _
        $region20: #{_linear_mha_batched.1} parent=11 // pred_fallthru
          _
      $region12: #{_linear_mha_batched.1} parent=5 // pred_fallthru
        _
      %p181 = scmp.lt.s32.totalorder %s14, 2
      // Predicated region
      $region21: #{_linear_mha_batched.1} parent=5 // pred_check
        %p182 = pneg %p181
      $region22: #{_linear_mha_batched.1} parent=5 // pred_check_branch
        %184 = sbr.rel (%p182) target = $region24
      $region23: #{_linear_mha_batched.1} parent=5 // pred_region
        // Predicated region
        $region25: #{_linear_mha_batched.1} parent=23 // pred_check
          %p185 = pneg %p34
        $region26: #{_linear_mha_batched.1} parent=23 // pred_check_branch
          %187 = sbr.rel (%p185) target = $region28
        $region27: #{_linear_mha_batched.1} parent=23 // pred_region
          %s188 = smul.u32 8, %s14
          %p189 = scmp.lt.s32.totalorder %s188, 15
          %s190 = scalar_select %p189, %s188, 15
          %s191 = smul.addr %s190, 2
          %s192 = smul.addr %s191, 8
          %s193 = scalar_lea.vmem %s0, %s192
          %s194 = smul.u32 8, %s14
        $region28: #{_linear_mha_batched.1} parent=23 // pred_fallthru
          _
        // Predicated region
        $region29: #{_linear_mha_batched.1} parent=23 // pred_check
          %p195 = pneg %p60
        $region30: #{_linear_mha_batched.1} parent=23 // pred_check_branch
          %197 = sbr.rel (%p195) target = $region32
        $region31: #{_linear_mha_batched.1} parent=23 // pred_region
          %s198 = smul.u32 8, %s14
          %p199 = scmp.lt.s32.totalorder %s198, 15
          %s200 = scalar_select %p199, %s198, 15
          %s201 = smul.addr %s200, 2
          %s202 = smul.addr %s201, 8
          %s203 = scalar_lea.vmem %s1, %s202
          %s204 = smul.u32 8, %s14
        $region32: #{_linear_mha_batched.1} parent=23 // pred_fallthru
          _
        // Predicated region
        $region33: #{_linear_mha_batched.1} parent=23 // pred_check
          %p205 = pneg %p86
        $region34: #{_linear_mha_batched.1} parent=23 // pred_check_branch
          %207 = sbr.rel (%p205) target = $region36
        $region35: #{_linear_mha_batched.1} parent=23 // pred_region
          %s208 = smul.u32 8, %s14
          %p209 = scmp.lt.s32.totalorder %s208, 15
          %s210 = scalar_select %p209, %s208, 15
          %s211 = smul.addr %s210, 2
          %s212 = smul.addr %s211, 8
          %s213 = scalar_lea.vmem %s2, %s212
          %s214 = smul.u32 8, %s14
        $region36: #{_linear_mha_batched.1} parent=23 // pred_fallthru
          _
      $region24: #{_linear_mha_batched.1} parent=5 // pred_fallthru
        _
      %p215 = scmp.le.s32.totalorder 1, %s14
      %p216 = scmp.lt.s32.totalorder %s14, 3
      %p217 = pnand %p215, %p216
      %p218 = pneg %p217
      // Predicated region
      $region37: #{_linear_mha_batched.1} parent=5 // pred_check
        _
      $region38: #{_linear_mha_batched.1} parent=5 // pred_check_branch
        %220 = sbr.rel (%p217) target = $region40
      $region39: #{_linear_mha_batched.1} parent=5 // pred_region
        %s221 = ssub.s32 %s14, 1
        %s222 = smul.u32 8, %s19
        %p223 = scmp.lt.s32.totalorder %s222, 15
        %s224 = scalar_select %p223, %s222, 15
        %s225 = smul.addr %s224, 2
        %s226 = smul.addr %s225, 8
        %s227 = scalar_lea.vmem %s0, %s226
        %p228 = pneg %p40
        %p229 = pneg %p37
        %s230 = smul.u32 8, %s19
        %p231 = scmp.lt.s32.totalorder %s230, 15
        %s232 = scalar_select %p231, %s230, 15
        %s233 = smul.addr %s232, 2
        %s234 = smul.addr %s233, 8
        %s235 = scalar_lea.vmem %s1, %s234
        %p236 = pneg %p66
        %p237 = pneg %p63
        %s238 = smul.u32 8, %s19
        %p239 = scmp.lt.s32.totalorder %s238, 15
        %s240 = scalar_select %p239, %s238, 15
        %s241 = smul.addr %s240, 2
        %s242 = smul.addr %s241, 8
        %s243 = scalar_lea.vmem %s2, %s242
        %p244 = pneg %p92
        %p245 = pneg %p89
        %p246 = pneg %p113
        %p247 = pneg %p110
        %p248 = pneg %p134
        %p249 = pneg %p131
        %p250 = pneg %p160
        %p251 = pneg %p157
        %s252 = sand.u32 %s147, 1
        %s253 = scalar_lea.sflag [#allocation4], %s252
        %s254 = sand.u32 %s147, 1
        %s255 = smul.addr %s254, 256
        %s256 = scalar_lea.vmem [#allocation3], %s255
        %s257 = smul.u32 8, %s19
        %p258 = scmp.lt.s32.totalorder %s257, 15
        %s259 = scalar_select %p258, %s257, 15
        %s260 = smul.addr %s259, 2
        %s261 = smul.addr %s260, 8
        %s262 = scalar_lea.vmem %s0, %s261
        %s263 = smul.u32 8, %s19
        %s264 = smul.u32 8, %s19
        %p265 = scmp.lt.s32.totalorder %s264, 15
        %s266 = scalar_select %p265, %s264, 15
        %s267 = smul.addr %s266, 2
        %s268 = smul.addr %s267, 8
        %s269 = scalar_lea.vmem %s1, %s268
        %s270 = smul.u32 8, %s19
        %s271 = smul.u32 8, %s19
        %p272 = scmp.lt.s32.totalorder %s271, 15
        %s273 = scalar_select %p272, %s271, 15
        %s274 = smul.addr %s273, 2
        %s275 = smul.addr %s274, 8
        %s276 = scalar_lea.vmem %s2, %s275
        %s277 = smul.u32 8, %s19
        %s278 = smul.u32 8, %s19
        %v279 = vlaneseq
        %v280 = vand.u32 %v279, 127
        %vm281 = vcmp.eq.s32.totalorder %v280, 40
        %v282 = vsel %vm281, 1.0, 0.0
        %283 = vst [vmem:[#allocation2] sm:$0xff] %v282
        %284 = vst [vmem:[#allocation2 + $0x8] sm:$0xff] %v282
        %285 = vst [vmem:[#allocation2 + $0x10] sm:$0xff] %v282
        %286 = vst [vmem:[#allocation2 + $0x18] sm:$0xff] %v282
        %287 = vst [vmem:[#allocation2 + $0x20] sm:$0xff] %v282
        %288 = vst [vmem:[#allocation2 + $0x28] sm:$0xff] %v282
        %289 = vst [vmem:[#allocation2 + $0x30] sm:$0xff] %v282
        %290 = vst [vmem:[#allocation2 + $0x38] sm:$0xff] %v282
        %291 = vst [vmem:[#allocation2 + $0x40] sm:$0xff] %v282
        %292 = vst [vmem:[#allocation2 + $0x48] sm:$0xff] %v282
        %293 = vst [vmem:[#allocation2 + $0x50] sm:$0xff] %v282
        %294 = vst [vmem:[#allocation2 + $0x58] sm:$0xff] %v282
        %295 = vst [vmem:[#allocation2 + $0x60] sm:$0xff] %v282
        %296 = vst [vmem:[#allocation2 + $0x68] sm:$0xff] %v282
        %297 = vst [vmem:[#allocation2 + $0x70] sm:$0xff] %v282
        %298 = vst [vmem:[#allocation2 + $0x78] sm:$0xff] %v282
        %299 = vst [vmem:[#allocation2 + $0x80] sm:$0xff] %v282
        %300 = vst [vmem:[#allocation2 + $0x88] sm:$0xff] %v282
        %301 = vst [vmem:[#allocation2 + $0x90] sm:$0xff] %v282
        %302 = vst [vmem:[#allocation2 + $0x98] sm:$0xff] %v282
        %303 = vst [vmem:[#allocation2 + $0xa0] sm:$0xff] %v282
        %304 = vst [vmem:[#allocation2 + $0xa8] sm:$0xff] %v282
        %305 = vst [vmem:[#allocation2 + $0xb0] sm:$0xff] %v282
        %306 = vst [vmem:[#allocation2 + $0xb8] sm:$0xff] %v282
        %307 = vst [vmem:[#allocation2 + $0xc0] sm:$0xff] %v282
        %308 = vst [vmem:[#allocation2 + $0xc8] sm:$0xff] %v282
        %309 = vst [vmem:[#allocation2 + $0xd0] sm:$0xff] %v282
        %310 = vst [vmem:[#allocation2 + $0xd8] sm:$0xff] %v282
        %311 = vst [vmem:[#allocation2 + $0xe0] sm:$0xff] %v282
        %312 = vst [vmem:[#allocation2 + $0xe8] sm:$0xff] %v282
        %313 = vst [vmem:[#allocation2 + $0xf0] sm:$0xff] %v282
        %314 = vst [vmem:[#allocation2 + $0xf8] sm:$0xff] %v282
        %315 = vst [vmem:[#allocation2 + $0x100] sm:$0xff] %v282
        %316 = vst [vmem:[#allocation2 + $0x108] sm:$0xff] %v282
        %317 = vst [vmem:[#allocation2 + $0x110] sm:$0xff] %v282
        %318 = vst [vmem:[#allocation2 + $0x118] sm:$0xff] %v282
        %319 = vst [vmem:[#allocation2 + $0x120] sm:$0xff] %v282
        %320 = vst [vmem:[#allocation2 + $0x128] sm:$0xff] %v282
        %321 = vst [vmem:[#allocation2 + $0x130] sm:$0xff] %v282
        %322 = vst [vmem:[#allocation2 + $0x138] sm:$0xff] %v282
        %323 = vst [vmem:[#allocation2 + $0x140] sm:$0xff] %v282
        %324 = vst [vmem:[#allocation2 + $0x148] sm:$0xff] %v282
        %325 = vst [vmem:[#allocation2 + $0x150] sm:$0xff] %v282
        %326 = vst [vmem:[#allocation2 + $0x158] sm:$0xff] %v282
        %327 = vst [vmem:[#allocation2 + $0x160] sm:$0xff] %v282
        %328 = vst [vmem:[#allocation2 + $0x168] sm:$0xff] %v282
        %329 = vst [vmem:[#allocation2 + $0x170] sm:$0xff] %v282
        %330 = vst [vmem:[#allocation2 + $0x178] sm:$0xff] %v282
        %v331 = vld [vmem:[%s262] sm:$0xff]
        %v332 = vld [vmem:[%s262 + $0x8] sm:$0xff]
        %v333 = vld [vmem:[%s262 + $0x10] sm:$0xff]
        %v334 = vld [vmem:[%s262 + $0x18] sm:$0xff]
        %v335 = vld [vmem:[%s262 + $0x20] sm:$0xff]
        %v336 = vld [vmem:[%s262 + $0x28] sm:$0xff]
        %v337 = vld [vmem:[%s262 + $0x30] sm:$0xff]
        %v338 = vld [vmem:[%s262 + $0x38] sm:$0xff]
        %v339 = vld [vmem:[%s262 + $0x40] sm:$0xff]
        %v340 = vld [vmem:[%s262 + $0x48] sm:$0xff]
        %v341 = vld [vmem:[%s262 + $0x50] sm:$0xff]
        %v342 = vld [vmem:[%s262 + $0x58] sm:$0xff]
        %v343 = vld [vmem:[%s262 + $0x60] sm:$0xff]
        %v344 = vld [vmem:[%s262 + $0x68] sm:$0xff]
        %v345 = vld [vmem:[%s262 + $0x70] sm:$0xff]
        %v346 = vld [vmem:[%s262 + $0x78] sm:$0xff]
        %vm347 = vcmask 326656
        %348 = vst.msk [vmem:[#allocation2] sm:$0xff] %vm347, %v331
        %349 = vst.msk [vmem:[#allocation2 + $0x8] sm:$0xff] %vm347, %v332
        %350 = vst.msk [vmem:[#allocation2 + $0x10] sm:$0xff] %vm347, %v333
        %351 = vst.msk [vmem:[#allocation2 + $0x18] sm:$0xff] %vm347, %v334
        %352 = vst.msk [vmem:[#allocation2 + $0x20] sm:$0xff] %vm347, %v335
        %353 = vst.msk [vmem:[#allocation2 + $0x28] sm:$0xff] %vm347, %v336
        %354 = vst.msk [vmem:[#allocation2 + $0x30] sm:$0xff] %vm347, %v337
        %355 = vst.msk [vmem:[#allocation2 + $0x38] sm:$0xff] %vm347, %v338
        %356 = vst.msk [vmem:[#allocation2 + $0x40] sm:$0xff] %vm347, %v339
        %357 = vst.msk [vmem:[#allocation2 + $0x48] sm:$0xff] %vm347, %v340
        %358 = vst.msk [vmem:[#allocation2 + $0x50] sm:$0xff] %vm347, %v341
        %359 = vst.msk [vmem:[#allocation2 + $0x58] sm:$0xff] %vm347, %v342
        %360 = vst.msk [vmem:[#allocation2 + $0x60] sm:$0xff] %vm347, %v343
        %361 = vst.msk [vmem:[#allocation2 + $0x68] sm:$0xff] %vm347, %v344
        %362 = vst.msk [vmem:[#allocation2 + $0x70] sm:$0xff] %vm347, %v345
        %363 = vst.msk [vmem:[#allocation2 + $0x78] sm:$0xff] %vm347, %v346
        %v364 = vld [vmem:[%s269] sm:$0xff]
        %v365 = vld [vmem:[%s269 + $0x8] sm:$0xff]
        %v366 = vld [vmem:[%s269 + $0x10] sm:$0xff]
        %v367 = vld [vmem:[%s269 + $0x18] sm:$0xff]
        %v368 = vld [vmem:[%s269 + $0x20] sm:$0xff]
        %v369 = vld [vmem:[%s269 + $0x28] sm:$0xff]
        %v370 = vld [vmem:[%s269 + $0x30] sm:$0xff]
        %v371 = vld [vmem:[%s269 + $0x38] sm:$0xff]
        %v372 = vld [vmem:[%s269 + $0x40] sm:$0xff]
        %v373 = vld [vmem:[%s269 + $0x48] sm:$0xff]
        %v374 = vld [vmem:[%s269 + $0x50] sm:$0xff]
        %v375 = vld [vmem:[%s269 + $0x58] sm:$0xff]
        %v376 = vld [vmem:[%s269 + $0x60] sm:$0xff]
        %v377 = vld [vmem:[%s269 + $0x68] sm:$0xff]
        %v378 = vld [vmem:[%s269 + $0x70] sm:$0xff]
        %v379 = vld [vmem:[%s269 + $0x78] sm:$0xff]
        %380 = vst.msk [vmem:[#allocation2 + $0x80] sm:$0xff] %vm347, %v364
        %381 = vst.msk [vmem:[#allocation2 + $0x88] sm:$0xff] %vm347, %v365
        %382 = vst.msk [vmem:[#allocation2 + $0x90] sm:$0xff] %vm347, %v366
        %383 = vst.msk [vmem:[#allocation2 + $0x98] sm:$0xff] %vm347, %v367
        %384 = vst.msk [vmem:[#allocation2 + $0xa0] sm:$0xff] %vm347, %v368
        %385 = vst.msk [vmem:[#allocation2 + $0xa8] sm:$0xff] %vm347, %v369
        %386 = vst.msk [vmem:[#allocation2 + $0xb0] sm:$0xff] %vm347, %v370
        %387 = vst.msk [vmem:[#allocation2 + $0xb8] sm:$0xff] %vm347, %v371
        %388 = vst.msk [vmem:[#allocation2 + $0xc0] sm:$0xff] %vm347, %v372
        %389 = vst.msk [vmem:[#allocation2 + $0xc8] sm:$0xff] %vm347, %v373
        %390 = vst.msk [vmem:[#allocation2 + $0xd0] sm:$0xff] %vm347, %v374
        %391 = vst.msk [vmem:[#allocation2 + $0xd8] sm:$0xff] %vm347, %v375
        %392 = vst.msk [vmem:[#allocation2 + $0xe0] sm:$0xff] %vm347, %v376
        %393 = vst.msk [vmem:[#allocation2 + $0xe8] sm:$0xff] %vm347, %v377
        %394 = vst.msk [vmem:[#allocation2 + $0xf0] sm:$0xff] %vm347, %v378
        %395 = vst.msk [vmem:[#allocation2 + $0xf8] sm:$0xff] %vm347, %v379
        %v396 = vld [vmem:[%s276] sm:$0xff]
        %v397 = vld [vmem:[%s276 + $0x8] sm:$0xff]
        %v398 = vld [vmem:[%s276 + $0x10] sm:$0xff]
        %v399 = vld [vmem:[%s276 + $0x18] sm:$0xff]
        %v400 = vld [vmem:[%s276 + $0x20] sm:$0xff]
        %v401 = vld [vmem:[%s276 + $0x28] sm:$0xff]
        %v402 = vld [vmem:[%s276 + $0x30] sm:$0xff]
        %v403 = vld [vmem:[%s276 + $0x38] sm:$0xff]
        %v404 = vld [vmem:[%s276 + $0x40] sm:$0xff]
        %v405 = vld [vmem:[%s276 + $0x48] sm:$0xff]
        %v406 = vld [vmem:[%s276 + $0x50] sm:$0xff]
        %v407 = vld [vmem:[%s276 + $0x58] sm:$0xff]
        %v408 = vld [vmem:[%s276 + $0x60] sm:$0xff]
        %v409 = vld [vmem:[%s276 + $0x68] sm:$0xff]
        %v410 = vld [vmem:[%s276 + $0x70] sm:$0xff]
        %v411 = vld [vmem:[%s276 + $0x78] sm:$0xff]
        %412 = vst.msk [vmem:[#allocation2 + $0x100] sm:$0xff] %vm347, %v396
        %413 = vst.msk [vmem:[#allocation2 + $0x108] sm:$0xff] %vm347, %v397
        %414 = vst.msk [vmem:[#allocation2 + $0x110] sm:$0xff] %vm347, %v398
        %415 = vst.msk [vmem:[#allocation2 + $0x118] sm:$0xff] %vm347, %v399
        %416 = vst.msk [vmem:[#allocation2 + $0x120] sm:$0xff] %vm347, %v400
        %417 = vst.msk [vmem:[#allocation2 + $0x128] sm:$0xff] %vm347, %v401
        %418 = vst.msk [vmem:[#allocation2 + $0x130] sm:$0xff] %vm347, %v402
        %419 = vst.msk [vmem:[#allocation2 + $0x138] sm:$0xff] %vm347, %v403
        %420 = vst.msk [vmem:[#allocation2 + $0x140] sm:$0xff] %vm347, %v404
        %421 = vst.msk [vmem:[#allocation2 + $0x148] sm:$0xff] %vm347, %v405
        %422 = vst.msk [vmem:[#allocation2 + $0x150] sm:$0xff] %vm347, %v406
        %423 = vst.msk [vmem:[#allocation2 + $0x158] sm:$0xff] %vm347, %v407
        %424 = vst.msk [vmem:[#allocation2 + $0x160] sm:$0xff] %vm347, %v408
        %425 = vst.msk [vmem:[#allocation2 + $0x168] sm:$0xff] %vm347, %v409
        %426 = vst.msk [vmem:[#allocation2 + $0x170] sm:$0xff] %vm347, %v410
        %427 = vst.msk [vmem:[#allocation2 + $0x178] sm:$0xff] %vm347, %v411
        %v428 = vld [vmem:[#allocation2] sm:$0xff]
        %v429 = vld [vmem:[#allocation2 + $0x8] sm:$0xff]
        %v430 = vld [vmem:[#allocation2 + $0x10] sm:$0xff]
        %v431 = vld [vmem:[#allocation2 + $0x18] sm:$0xff]
        %v432 = vld [vmem:[#allocation2 + $0x20] sm:$0xff]
        %v433 = vld [vmem:[#allocation2 + $0x28] sm:$0xff]
        %v434 = vld [vmem:[#allocation2 + $0x30] sm:$0xff]
        %v435 = vld [vmem:[#allocation2 + $0x38] sm:$0xff]
        %v436 = vld [vmem:[#allocation2 + $0x40] sm:$0xff]
        %v437 = vld [vmem:[#allocation2 + $0x48] sm:$0xff]
        %v438 = vld [vmem:[#allocation2 + $0x50] sm:$0xff]
        %v439 = vld [vmem:[#allocation2 + $0x58] sm:$0xff]
        %v440 = vld [vmem:[#allocation2 + $0x60] sm:$0xff]
        %v441 = vld [vmem:[#allocation2 + $0x68] sm:$0xff]
        %v442 = vld [vmem:[#allocation2 + $0x70] sm:$0xff]
        %v443 = vld [vmem:[#allocation2 + $0x78] sm:$0xff]
        %v444 = vld [vmem:[#allocation2 + $0x80] sm:$0xff]
        %v445 = vld [vmem:[#allocation2 + $0x88] sm:$0xff]
        %v446 = vld [vmem:[#allocation2 + $0x90] sm:$0xff]
        %v447 = vld [vmem:[#allocation2 + $0x98] sm:$0xff]
        %v448 = vld [vmem:[#allocation2 + $0xa0] sm:$0xff]
        %v449 = vld [vmem:[#allocation2 + $0xa8] sm:$0xff]
        %v450 = vld [vmem:[#allocation2 + $0xb0] sm:$0xff]
        %v451 = vld [vmem:[#allocation2 + $0xb8] sm:$0xff]
        %v452 = vld [vmem:[#allocation2 + $0xc0] sm:$0xff]
        %v453 = vld [vmem:[#allocation2 + $0xc8] sm:$0xff]
        %v454 = vld [vmem:[#allocation2 + $0xd0] sm:$0xff]
        %v455 = vld [vmem:[#allocation2 + $0xd8] sm:$0xff]
        %v456 = vld [vmem:[#allocation2 + $0xe0] sm:$0xff]
        %v457 = vld [vmem:[#allocation2 + $0xe8] sm:$0xff]
        %v458 = vld [vmem:[#allocation2 + $0xf0] sm:$0xff]
        %v459 = vld [vmem:[#allocation2 + $0xf8] sm:$0xff]
        %v460 = vld [vmem:[#allocation2 + $0x100] sm:$0xff]
        %v461 = vld [vmem:[#allocation2 + $0x108] sm:$0xff]
        %v462 = vld [vmem:[#allocation2 + $0x110] sm:$0xff]
        %v463 = vld [vmem:[#allocation2 + $0x118] sm:$0xff]
        %v464 = vld [vmem:[#allocation2 + $0x120] sm:$0xff]
        %v465 = vld [vmem:[#allocation2 + $0x128] sm:$0xff]
        %v466 = vld [vmem:[#allocation2 + $0x130] sm:$0xff]
        %v467 = vld [vmem:[#allocation2 + $0x138] sm:$0xff]
        %v468 = vld [vmem:[#allocation2 + $0x140] sm:$0xff]
        %v469 = vld [vmem:[#allocation2 + $0x148] sm:$0xff]
        %v470 = vld [vmem:[#allocation2 + $0x150] sm:$0xff]
        %v471 = vld [vmem:[#allocation2 + $0x158] sm:$0xff]
        %v472 = vld [vmem:[#allocation2 + $0x160] sm:$0xff]
        %v473 = vld [vmem:[#allocation2 + $0x168] sm:$0xff]
        %v474 = vld [vmem:[#allocation2 + $0x170] sm:$0xff]
        %v475 = vld [vmem:[#allocation2 + $0x178] sm:$0xff]
        %v476 = vld [vmem:[%s3] sm:$0xff]
        %v477 = vld [vmem:[%s3 + $0x8] sm:$0xff]
        %v478 = vld [vmem:[%s3 + $0x10] sm:$0xff]
        %v479 = vld [vmem:[%s3 + $0x18] sm:$0xff]
        %v480 = vld [vmem:[%s3 + $0x20] sm:$0xff]
        %v481 = vld [vmem:[%s3 + $0x28] sm:$0xff]
        %v482 = vld [vmem:[%s3 + $0x30] sm:$0xff]
        %v483 = vld [vmem:[%s3 + $0x38] sm:$0xff]
        %v484 = vld [vmem:[%s3 + $0x40] sm:$0xff]
        %v485 = vld [vmem:[%s3 + $0x48] sm:$0xff]
        %v486 = vld [vmem:[%s3 + $0x50] sm:$0xff]
        %v487 = vld [vmem:[%s3 + $0x58] sm:$0xff]
        %v488 = vld [vmem:[%s3 + $0x60] sm:$0xff]
        %v489 = vld [vmem:[%s3 + $0x68] sm:$0xff]
        %v490 = vld [vmem:[%s3 + $0x70] sm:$0xff]
        %v491 = vld [vmem:[%s3 + $0x78] sm:$0xff]
        %v492 = vld [vmem:[%s3 + $0x80] sm:$0xff]
        %v493 = vld [vmem:[%s3 + $0x88] sm:$0xff]
        %v494 = vld [vmem:[%s3 + $0x90] sm:$0xff]
        %v495 = vld [vmem:[%s3 + $0x98] sm:$0xff]
        %v496 = vld [vmem:[%s3 + $0xa0] sm:$0xff]
        %v497 = vld [vmem:[%s3 + $0xa8] sm:$0xff]
        %v498 = vld [vmem:[%s3 + $0xb0] sm:$0xff]
        %v499 = vld [vmem:[%s3 + $0xb8] sm:$0xff]
        %v500 = vld [vmem:[%s3 + $0xc0] sm:$0xff]
        %v501 = vld [vmem:[%s3 + $0xc8] sm:$0xff]
        %v502 = vld [vmem:[%s3 + $0xd0] sm:$0xff]
        %v503 = vld [vmem:[%s3 + $0xd8] sm:$0xff]
        %v504 = vld [vmem:[%s3 + $0xe0] sm:$0xff]
        %v505 = vld [vmem:[%s3 + $0xe8] sm:$0xff]
        %v506 = vld [vmem:[%s3 + $0xf0] sm:$0xff]
        %v507 = vld [vmem:[%s3 + $0xf8] sm:$0xff]
        %508 = vmatprep.subr.mxu0 %v477
        %509 = vmatpush1.msra.mxu0 %v476
        %510 = vmatprep.subr.mxu0 %v479
        %511 = vmatpush1.msra.mxu0 %v478
        %512 = vmatprep.subr.mxu0 %v481
        %513 = vmatpush1.msra.mxu0 %v480
        %514 = vmatprep.subr.mxu0 %v483
        %515 = vmatpush1.msra.mxu0 %v482
        %516 = vmatprep.subr.mxu0 %v485
        %517 = vmatpush1.msra.mxu0 %v484
        %518 = vmatprep.subr.mxu0 %v487
        %519 = vmatpush1.msra.mxu0 %v486
        %520 = vmatprep.subr.mxu0 %v489
        %521 = vmatpush1.msra.mxu0 %v488
        %522 = vmatprep.subr.mxu0 %v491
        %523 = vmatpush1.msra.mxu0 %v490
        %524 = vmatprep.subr.mxu0 %v493
        %525 = vmatpush1.msra.mxu0 %v492
        %526 = vmatprep.subr.mxu0 %v495
        %527 = vmatpush1.msra.mxu0 %v494
        %528 = vmatprep.subr.mxu0 %v497
        %529 = vmatpush1.msra.mxu0 %v496
        %530 = vmatprep.subr.mxu0 %v499
        %531 = vmatpush1.msra.mxu0 %v498
        %532 = vmatprep.subr.mxu0 %v501
        %533 = vmatpush1.msra.mxu0 %v500
        %534 = vmatprep.subr.mxu0 %v503
        %535 = vmatpush1.msra.mxu0 %v502
        %536 = vmatprep.subr.mxu0 %v505
        %537 = vmatpush1.msra.mxu0 %v504
        %538 = vmatprep.subr.mxu0 %v507
        %539 = vmatpush1.msra.mxu0 %v506
        %540 = vmatprep.subr.mxu0 0.0
        %541 = vmatpush1.msra.mxu0 0.0
        %542 = vmatprep.subr.mxu0 0.0
        %543 = vmatpush1.msra.mxu0 0.0
        %544 = vmatprep.subr.mxu0 0.0
        %545 = vmatpush1.msra.mxu0 0.0
        %546 = vmatprep.subr.mxu0 0.0
        %547 = vmatpush1.msra.mxu0 0.0
        %548 = vmatprep.subr.mxu0 0.0
        %549 = vmatpush1.msra.mxu0 0.0
        %550 = vmatprep.subr.mxu0 0.0
        %551 = vmatpush1.msra.mxu0 0.0
        %552 = vmatprep.subr.mxu0 0.0
        %553 = vmatpush1.msra.mxu0 0.0
        %554 = vmatprep.subr.mxu0 0.0
        %555 = vmatpush1.msra.mxu0 0.0
        %556 = vmatprep.subr.mxu0 0.0
        %557 = vmatpush1.msra.mxu0 0.0
        %558 = vmatprep.subr.mxu0 0.0
        %559 = vmatpush1.msra.mxu0 0.0
        %560 = vmatprep.subr.mxu0 0.0
        %561 = vmatpush1.msra.mxu0 0.0
        %562 = vmatprep.subr.mxu0 0.0
        %563 = vmatpush1.msra.mxu0 0.0
        %564 = vmatprep.subr.mxu0 0.0
        %565 = vmatpush1.msra.mxu0 0.0
        %566 = vmatprep.subr.mxu0 0.0
        %567 = vmatpush1.msra.mxu0 0.0
        %568 = vmatprep.subr.mxu0 0.0
        %569 = vmatpush1.msra.mxu0 0.0
        %570 = vmatprep.subr.mxu0 0.0
        %571 = vmatpush1.msra.mxu0 0.0
        %572 = vmatprep.mubr.f32.mxu0 0.0
        %573 = vmatmul.mubr.f32.gmra.mrb[0].mxu0 %v428
        %v574 = vpop.f32.mrb[0].mxu0
        %v575 = vadd.f32 0.0, %v574
        %v576 = vpop.f32.mrb[0].mxu0
        %v577 = vadd.f32 0.0, %v576
        %578 = vmatprep.mubr.f32.mxu0 0.0
        %579 = vmatmul.mubr.f32.gmra.mrb[0].mxu0 %v429
        %v580 = vpop.f32.mrb[0].mxu0
        %v581 = vadd.f32 0.0, %v580
        %v582 = vpop.f32.mrb[0].mxu0
        %v583 = vadd.f32 0.0, %v582
        %584 = vmatprep.mubr.f32.mxu0 0.0
        %585 = vmatmul.mubr.f32.gmra.mrb[0].mxu0 %v430
        %v586 = vpop.f32.mrb[0].mxu0
        %v587 = vadd.f32 0.0, %v586
        %v588 = vpop.f32.mrb[0].mxu0
        %v589 = vadd.f32 0.0, %v588
        %590 = vmatprep.mubr.f32.mxu0 0.0
        %591 = vmatmul.mubr.f32.gmra.mrb[0].mxu0 %v431
        %v592 = vpop.f32.mrb[0].mxu0
        %v593 = vadd.f32 0.0, %v592
        %v594 = vpop.f32.mrb[0].mxu0
        %v595 = vadd.f32 0.0, %v594
        %596 = vmatprep.mubr.f32.mxu0 0.0
        %597 = vmatmul.mubr.f32.gmra.mrb[0].mxu0 %v432
        %v598 = vpop.f32.mrb[0].mxu0
        %v599 = vadd.f32 0.0, %v598
        %v600 = vpop.f32.mrb[0].mxu0
        %v601 = vadd.f32 0.0, %v600
        %602 = vmatprep.mubr.f32.mxu0 0.0
        %603 = vmatmul.mubr.f32.gmra.mrb[0].mxu0 %v433
        %v604 = vpop.f32.mrb[0].mxu0
        %v605 = vadd.f32 0.0, %v604
        %v606 = vpop.f32.mrb[0].mxu0
        %v607 = vadd.f32 0.0, %v606
        %608 = vmatprep.mubr.f32.mxu0 0.0
        %609 = vmatmul.mubr.f32.gmra.mrb[0].mxu0 %v434
        %v610 = vpop.f32.mrb[0].mxu0
        %v611 = vadd.f32 0.0, %v610
        %v612 = vpop.f32.mrb[0].mxu0
        %v613 = vadd.f32 0.0, %v612
        %614 = vmatprep.mubr.f32.mxu0 0.0
        %615 = vmatmul.mubr.f32.gmra.mrb[0].mxu0 %v435
        %v616 = vpop.f32.mrb[0].mxu0
        %v617 = vadd.f32 0.0, %v616
        %v618 = vpop.f32.mrb[0].mxu0
        %v619 = vadd.f32 0.0, %v618
        %620 = vmatprep.mubr.f32.mxu0 0.0
        %621 = vmatmul.mubr.f32.gmra.mrb[0].mxu0 %v436
        %v622 = vpop.f32.mrb[0].mxu0
        %v623 = vadd.f32 0.0, %v622
        %v624 = vpop.f32.mrb[0].mxu0
        %v625 = vadd.f32 0.0, %v624
        %626 = vmatprep.mubr.f32.mxu0 0.0
        %627 = vmatmul.mubr.f32.gmra.mrb[0].mxu0 %v437
        %v628 = vpop.f32.mrb[0].mxu0
        %v629 = vadd.f32 0.0, %v628
        %v630 = vpop.f32.mrb[0].mxu0
        %v631 = vadd.f32 0.0, %v630
        %632 = vmatprep.mubr.f32.mxu0 0.0
        %633 = vmatmul.mubr.f32.gmra.mrb[0].mxu0 %v438
        %v634 = vpop.f32.mrb[0].mxu0
        %v635 = vadd.f32 0.0, %v634
        %v636 = vpop.f32.mrb[0].mxu0
        %v637 = vadd.f32 0.0, %v636
        %638 = vmatprep.mubr.f32.mxu0 0.0
        %639 = vmatmul.mubr.f32.gmra.mrb[0].mxu0 %v439
        %v640 = vpop.f32.mrb[0].mxu0
        %v641 = vadd.f32 0.0, %v640
        %v642 = vpop.f32.mrb[0].mxu0
        %v643 = vadd.f32 0.0, %v642
        %644 = vmatprep.mubr.f32.mxu0 0.0
        %645 = vmatmul.mubr.f32.gmra.mrb[0].mxu0 %v440
        %v646 = vpop.f32.mrb[0].mxu0
        %v647 = vadd.f32 0.0, %v646
        %v648 = vpop.f32.mrb[0].mxu0
        %v649 = vadd.f32 0.0, %v648
        %650 = vmatprep.mubr.f32.mxu0 0.0
        %651 = vmatmul.mubr.f32.gmra.mrb[0].mxu0 %v441
        %v652 = vpop.f32.mrb[0].mxu0
        %v653 = vadd.f32 0.0, %v652
        %v654 = vpop.f32.mrb[0].mxu0
        %v655 = vadd.f32 0.0, %v654
        %656 = vmatprep.mubr.f32.mxu0 0.0
        %657 = vmatmul.mubr.f32.gmra.mrb[0].mxu0 %v442
        %v658 = vpop.f32.mrb[0].mxu0
        %v659 = vadd.f32 0.0, %v658
        %v660 = vpop.f32.mrb[0].mxu0
        %v661 = vadd.f32 0.0, %v660
        %662 = vmatprep.mubr.f32.mxu0 0.0
        %663 = vmatmul.mubr.f32.gmra.mrb[0].mxu0 %v443
        %v664 = vpop.f32.mrb[0].mxu0
        %v665 = vadd.f32 0.0, %v664
        %v666 = vpop.f32.mrb[0].mxu0
        %v667 = vadd.f32 0.0, %v666
        %668 = vmatprep.mubr.f32.mxu0 0.0
        %669 = vmatmul.mubr.f32.gmra.mrb[0].mxu0 %v444
        %v670 = vpop.f32.mrb[0].mxu0
        %v671 = vadd.f32 0.0, %v670
        %v672 = vpop.f32.mrb[0].mxu0
        %v673 = vadd.f32 0.0, %v672
        %674 = vmatprep.mubr.f32.mxu0 0.0
        %675 = vmatmul.mubr.f32.gmra.mrb[0].mxu0 %v445
        %v676 = vpop.f32.mrb[0].mxu0
        %v677 = vadd.f32 0.0, %v676
        %v678 = vpop.f32.mrb[0].mxu0
        %v679 = vadd.f32 0.0, %v678
        %680 = vmatprep.mubr.f32.mxu0 0.0
        %681 = vmatmul.mubr.f32.gmra.mrb[0].mxu0 %v446
        %v682 = vpop.f32.mrb[0].mxu0
        %v683 = vadd.f32 0.0, %v682
        %v684 = vpop.f32.mrb[0].mxu0
        %v685 = vadd.f32 0.0, %v684
        %686 = vmatprep.mubr.f32.mxu0 0.0
        %687 = vmatmul.mubr.f32.gmra.mrb[0].mxu0 %v447
        %v688 = vpop.f32.mrb[0].mxu0
        %v689 = vadd.f32 0.0, %v688
        %v690 = vpop.f32.mrb[0].mxu0
        %v691 = vadd.f32 0.0, %v690
        %692 = vmatprep.mubr.f32.mxu0 0.0
        %693 = vmatmul.mubr.f32.gmra.mrb[0].mxu0 %v448
        %v694 = vpop.f32.mrb[0].mxu0
        %v695 = vadd.f32 0.0, %v694
        %v696 = vpop.f32.mrb[0].mxu0
        %v697 = vadd.f32 0.0, %v696
        %698 = vmatprep.mubr.f32.mxu0 0.0
        %699 = vmatmul.mubr.f32.gmra.mrb[0].mxu0 %v449
        %v700 = vpop.f32.mrb[0].mxu0
        %v701 = vadd.f32 0.0, %v700
        %v702 = vpop.f32.mrb[0].mxu0
        %v703 = vadd.f32 0.0, %v702
        %704 = vmatprep.mubr.f32.mxu0 0.0
        %705 = vmatmul.mubr.f32.gmra.mrb[0].mxu0 %v450
        %v706 = vpop.f32.mrb[0].mxu0
        %v707 = vadd.f32 0.0, %v706
        %v708 = vpop.f32.mrb[0].mxu0
        %v709 = vadd.f32 0.0, %v708
        %710 = vmatprep.mubr.f32.mxu0 0.0
        %711 = vmatmul.mubr.f32.gmra.mrb[0].mxu0 %v451
        %v712 = vpop.f32.mrb[0].mxu0
        %v713 = vadd.f32 0.0, %v712
        %v714 = vpop.f32.mrb[0].mxu0
        %v715 = vadd.f32 0.0, %v714
        %716 = vmatprep.mubr.f32.mxu0 0.0
        %717 = vmatmul.mubr.f32.gmra.mrb[0].mxu0 %v452
        %v718 = vpop.f32.mrb[0].mxu0
        %v719 = vadd.f32 0.0, %v718
        %v720 = vpop.f32.mrb[0].mxu0
        %v721 = vadd.f32 0.0, %v720
        %722 = vmatprep.mubr.f32.mxu0 0.0
        %723 = vmatmul.mubr.f32.gmra.mrb[0].mxu0 %v453
        %v724 = vpop.f32.mrb[0].mxu0
        %v725 = vadd.f32 0.0, %v724
        %v726 = vpop.f32.mrb[0].mxu0
        %v727 = vadd.f32 0.0, %v726
        %728 = vmatprep.mubr.f32.mxu0 0.0
        %729 = vmatmul.mubr.f32.gmra.mrb[0].mxu0 %v454
        %v730 = vpop.f32.mrb[0].mxu0
        %v731 = vadd.f32 0.0, %v730
        %v732 = vpop.f32.mrb[0].mxu0
        %v733 = vadd.f32 0.0, %v732
        %734 = vmatprep.mubr.f32.mxu0 0.0
        %735 = vmatmul.mubr.f32.gmra.mrb[0].mxu0 %v455
        %v736 = vpop.f32.mrb[0].mxu0
        %v737 = vadd.f32 0.0, %v736
        %v738 = vpop.f32.mrb[0].mxu0
        %v739 = vadd.f32 0.0, %v738
        %740 = vmatprep.mubr.f32.mxu0 0.0
        %741 = vmatmul.mubr.f32.gmra.mrb[0].mxu0 %v456
        %v742 = vpop.f32.mrb[0].mxu0
        %v743 = vadd.f32 0.0, %v742
        %v744 = vpop.f32.mrb[0].mxu0
        %v745 = vadd.f32 0.0, %v744
        %746 = vmatprep.mubr.f32.mxu0 0.0
        %747 = vmatmul.mubr.f32.gmra.mrb[0].mxu0 %v457
        %v748 = vpop.f32.mrb[0].mxu0
        %v749 = vadd.f32 0.0, %v748
        %v750 = vpop.f32.mrb[0].mxu0
        %v751 = vadd.f32 0.0, %v750
        %752 = vmatprep.mubr.f32.mxu0 0.0
        %753 = vmatmul.mubr.f32.gmra.mrb[0].mxu0 %v458
        %v754 = vpop.f32.mrb[0].mxu0
        %v755 = vadd.f32 0.0, %v754
        %v756 = vpop.f32.mrb[0].mxu0
        %v757 = vadd.f32 0.0, %v756
        %758 = vmatprep.mubr.f32.mxu0 0.0
        %759 = vmatmul.mubr.f32.gmra.mrb[0].mxu0 %v459
        %v760 = vpop.f32.mrb[0].mxu0
        %v761 = vadd.f32 0.0, %v760
        %v762 = vpop.f32.mrb[0].mxu0
        %v763 = vadd.f32 0.0, %v762
        %764 = vmatprep.mubr.f32.mxu0 0.0
        %765 = vmatmul.mubr.f32.gmra.mrb[0].mxu0 %v460
        %v766 = vpop.f32.mrb[0].mxu0
        %v767 = vadd.f32 0.0, %v766
        %v768 = vpop.f32.mrb[0].mxu0
        %v769 = vadd.f32 0.0, %v768
        %770 = vmatprep.mubr.f32.mxu0 0.0
        %771 = vmatmul.mubr.f32.gmra.mrb[0].mxu0 %v461
        %v772 = vpop.f32.mrb[0].mxu0
        %v773 = vadd.f32 0.0, %v772
        %v774 = vpop.f32.mrb[0].mxu0
        %v775 = vadd.f32 0.0, %v774
        %776 = vmatprep.mubr.f32.mxu0 0.0
        %777 = vmatmul.mubr.f32.gmra.mrb[0].mxu0 %v462
        %v778 = vpop.f32.mrb[0].mxu0
        %v779 = vadd.f32 0.0, %v778
        %v780 = vpop.f32.mrb[0].mxu0
        %v781 = vadd.f32 0.0, %v780
        %782 = vmatprep.mubr.f32.mxu0 0.0
        %783 = vmatmul.mubr.f32.gmra.mrb[0].mxu0 %v463
        %v784 = vpop.f32.mrb[0].mxu0
        %v785 = vadd.f32 0.0, %v784
        %v786 = vpop.f32.mrb[0].mxu0
        %v787 = vadd.f32 0.0, %v786
        %788 = vmatprep.mubr.f32.mxu0 0.0
        %789 = vmatmul.mubr.f32.gmra.mrb[0].mxu0 %v464
        %v790 = vpop.f32.mrb[0].mxu0
        %v791 = vadd.f32 0.0, %v790
        %v792 = vpop.f32.mrb[0].mxu0
        %v793 = vadd.f32 0.0, %v792
        %794 = vmatprep.mubr.f32.mxu0 0.0
        %795 = vmatmul.mubr.f32.gmra.mrb[0].mxu0 %v465
        %v796 = vpop.f32.mrb[0].mxu0
        %v797 = vadd.f32 0.0, %v796
        %v798 = vpop.f32.mrb[0].mxu0
        %v799 = vadd.f32 0.0, %v798
        %800 = vmatprep.mubr.f32.mxu0 0.0
        %801 = vmatmul.mubr.f32.gmra.mrb[0].mxu0 %v466
        %v802 = vpop.f32.mrb[0].mxu0
        %v803 = vadd.f32 0.0, %v802
        %v804 = vpop.f32.mrb[0].mxu0
        %v805 = vadd.f32 0.0, %v804
        %806 = vmatprep.mubr.f32.mxu0 0.0
        %807 = vmatmul.mubr.f32.gmra.mrb[0].mxu0 %v467
        %v808 = vpop.f32.mrb[0].mxu0
        %v809 = vadd.f32 0.0, %v808
        %v810 = vpop.f32.mrb[0].mxu0
        %v811 = vadd.f32 0.0, %v810
        %812 = vmatprep.mubr.f32.mxu0 0.0
        %813 = vmatmul.mubr.f32.gmra.mrb[0].mxu0 %v468
        %v814 = vpop.f32.mrb[0].mxu0
        %v815 = vadd.f32 0.0, %v814
        %v816 = vpop.f32.mrb[0].mxu0
        %v817 = vadd.f32 0.0, %v816
        %818 = vmatprep.mubr.f32.mxu0 0.0
        %819 = vmatmul.mubr.f32.gmra.mrb[0].mxu0 %v469
        %v820 = vpop.f32.mrb[0].mxu0
        %v821 = vadd.f32 0.0, %v820
        %v822 = vpop.f32.mrb[0].mxu0
        %v823 = vadd.f32 0.0, %v822
        %824 = vmatprep.mubr.f32.mxu0 0.0
        %825 = vmatmul.mubr.f32.gmra.mrb[0].mxu0 %v470
        %v826 = vpop.f32.mrb[0].mxu0
        %v827 = vadd.f32 0.0, %v826
        %v828 = vpop.f32.mrb[0].mxu0
        %v829 = vadd.f32 0.0, %v828
        %830 = vmatprep.mubr.f32.mxu0 0.0
        %831 = vmatmul.mubr.f32.gmra.mrb[0].mxu0 %v471
        %v832 = vpop.f32.mrb[0].mxu0
        %v833 = vadd.f32 0.0, %v832
        %v834 = vpop.f32.mrb[0].mxu0
        %v835 = vadd.f32 0.0, %v834
        %836 = vmatprep.mubr.f32.mxu0 0.0
        %837 = vmatmul.mubr.f32.gmra.mrb[0].mxu0 %v472
        %v838 = vpop.f32.mrb[0].mxu0
        %v839 = vadd.f32 0.0, %v838
        %v840 = vpop.f32.mrb[0].mxu0
        %v841 = vadd.f32 0.0, %v840
        %842 = vmatprep.mubr.f32.mxu0 0.0
        %843 = vmatmul.mubr.f32.gmra.mrb[0].mxu0 %v473
        %v844 = vpop.f32.mrb[0].mxu0
        %v845 = vadd.f32 0.0, %v844
        %v846 = vpop.f32.mrb[0].mxu0
        %v847 = vadd.f32 0.0, %v846
        %848 = vmatprep.mubr.f32.mxu0 0.0
        %849 = vmatmul.mubr.f32.gmra.mrb[0].mxu0 %v474
        %v850 = vpop.f32.mrb[0].mxu0
        %v851 = vadd.f32 0.0, %v850
        %v852 = vpop.f32.mrb[0].mxu0
        %v853 = vadd.f32 0.0, %v852
        %854 = vmatprep.mubr.f32.mxu0 0.0
        %855 = vmatmul.mubr.f32.gmra.mrb[0].mxu0 %v475
        %v856 = vpop.f32.mrb[0].mxu0
        %v857 = vadd.f32 0.0, %v856
        %v858 = vpop.f32.mrb[0].mxu0
        %v859 = vadd.f32 0.0, %v858
        %860 = vdwg.mxu0
        %vm861 = vcmp.gt.f32.partialorder %v575, 0.0
        %vm862 = vcmp.gt.f32.partialorder %v577, 0.0
        %vm863 = vcmp.gt.f32.partialorder %v581, 0.0
        %vm864 = vcmp.gt.f32.partialorder %v583, 0.0
        %vm865 = vcmp.gt.f32.partialorder %v587, 0.0
        %vm866 = vcmp.gt.f32.partialorder %v589, 0.0
        %vm867 = vcmp.gt.f32.partialorder %v593, 0.0
        %vm868 = vcmp.gt.f32.partialorder %v595, 0.0
        %vm869 = vcmp.gt.f32.partialorder %v599, 0.0
        %vm870 = vcmp.gt.f32.partialorder %v601, 0.0
        %vm871 = vcmp.gt.f32.partialorder %v605, 0.0
        %vm872 = vcmp.gt.f32.partialorder %v607, 0.0
        %vm873 = vcmp.gt.f32.partialorder %v611, 0.0
        %vm874 = vcmp.gt.f32.partialorder %v613, 0.0
        %vm875 = vcmp.gt.f32.partialorder %v617, 0.0
        %vm876 = vcmp.gt.f32.partialorder %v619, 0.0
        %vm877 = vcmp.gt.f32.partialorder %v623, 0.0
        %vm878 = vcmp.gt.f32.partialorder %v625, 0.0
        %vm879 = vcmp.gt.f32.partialorder %v629, 0.0
        %vm880 = vcmp.gt.f32.partialorder %v631, 0.0
        %vm881 = vcmp.gt.f32.partialorder %v635, 0.0
        %vm882 = vcmp.gt.f32.partialorder %v637, 0.0
        %vm883 = vcmp.gt.f32.partialorder %v641, 0.0
        %vm884 = vcmp.gt.f32.partialorder %v643, 0.0
        %vm885 = vcmp.gt.f32.partialorder %v647, 0.0
        %vm886 = vcmp.gt.f32.partialorder %v649, 0.0
        %vm887 = vcmp.gt.f32.partialorder %v653, 0.0
        %vm888 = vcmp.gt.f32.partialorder %v655, 0.0
        %vm889 = vcmp.gt.f32.partialorder %v659, 0.0
        %vm890 = vcmp.gt.f32.partialorder %v661, 0.0
        %vm891 = vcmp.gt.f32.partialorder %v665, 0.0
        %vm892 = vcmp.gt.f32.partialorder %v667, 0.0
        %vm893 = vcmp.gt.f32.partialorder %v671, 0.0
        %vm894 = vcmp.gt.f32.partialorder %v673, 0.0
        %vm895 = vcmp.gt.f32.partialorder %v677, 0.0
        %vm896 = vcmp.gt.f32.partialorder %v679, 0.0
        %vm897 = vcmp.gt.f32.partialorder %v683, 0.0
        %vm898 = vcmp.gt.f32.partialorder %v685, 0.0
        %vm899 = vcmp.gt.f32.partialorder %v689, 0.0
        %vm900 = vcmp.gt.f32.partialorder %v691, 0.0
        %vm901 = vcmp.gt.f32.partialorder %v695, 0.0
        %vm902 = vcmp.gt.f32.partialorder %v697, 0.0
        %vm903 = vcmp.gt.f32.partialorder %v701, 0.0
        %vm904 = vcmp.gt.f32.partialorder %v703, 0.0
        %vm905 = vcmp.gt.f32.partialorder %v707, 0.0
        %vm906 = vcmp.gt.f32.partialorder %v709, 0.0
        %vm907 = vcmp.gt.f32.partialorder %v713, 0.0
        %vm908 = vcmp.gt.f32.partialorder %v715, 0.0
        %vm909 = vcmp.gt.f32.partialorder %v719, 0.0
        %vm910 = vcmp.gt.f32.partialorder %v721, 0.0
        %vm911 = vcmp.gt.f32.partialorder %v725, 0.0
        %vm912 = vcmp.gt.f32.partialorder %v727, 0.0
        %vm913 = vcmp.gt.f32.partialorder %v731, 0.0
        %vm914 = vcmp.gt.f32.partialorder %v733, 0.0
        %vm915 = vcmp.gt.f32.partialorder %v737, 0.0
        %vm916 = vcmp.gt.f32.partialorder %v739, 0.0
        %vm917 = vcmp.gt.f32.partialorder %v743, 0.0
        %vm918 = vcmp.gt.f32.partialorder %v745, 0.0
        %vm919 = vcmp.gt.f32.partialorder %v749, 0.0
        %vm920 = vcmp.gt.f32.partialorder %v751, 0.0
        %vm921 = vcmp.gt.f32.partialorder %v755, 0.0
        %vm922 = vcmp.gt.f32.partialorder %v757, 0.0
        %vm923 = vcmp.gt.f32.partialorder %v761, 0.0
        %vm924 = vcmp.gt.f32.partialorder %v763, 0.0
        %v925 = vadd.f32 %v575, 1.0
        %v926 = vadd.f32 %v577, 1.0
        %v927 = vadd.f32 %v581, 1.0
        %v928 = vadd.f32 %v583, 1.0
        %v929 = vadd.f32 %v587, 1.0
        %v930 = vadd.f32 %v589, 1.0
        %v931 = vadd.f32 %v593, 1.0
        %v932 = vadd.f32 %v595, 1.0
        %v933 = vadd.f32 %v599, 1.0
        %v934 = vadd.f32 %v601, 1.0
        %v935 = vadd.f32 %v605, 1.0
        %v936 = vadd.f32 %v607, 1.0
        %v937 = vadd.f32 %v611, 1.0
        %v938 = vadd.f32 %v613, 1.0
        %v939 = vadd.f32 %v617, 1.0
        %v940 = vadd.f32 %v619, 1.0
        %v941 = vadd.f32 %v623, 1.0
        %v942 = vadd.f32 %v625, 1.0
        %v943 = vadd.f32 %v629, 1.0
        %v944 = vadd.f32 %v631, 1.0
        %v945 = vadd.f32 %v635, 1.0
        %v946 = vadd.f32 %v637, 1.0
        %v947 = vadd.f32 %v641, 1.0
        %v948 = vadd.f32 %v643, 1.0
        %v949 = vadd.f32 %v647, 1.0
        %v950 = vadd.f32 %v649, 1.0
        %v951 = vadd.f32 %v653, 1.0
        %v952 = vadd.f32 %v655, 1.0
        %v953 = vadd.f32 %v659, 1.0
        %v954 = vadd.f32 %v661, 1.0
        %v955 = vadd.f32 %v665, 1.0
        %v956 = vadd.f32 %v667, 1.0
        %v957 = vadd.f32 %v671, 1.0
        %v958 = vadd.f32 %v673, 1.0
        %v959 = vadd.f32 %v677, 1.0
        %v960 = vadd.f32 %v679, 1.0
        %v961 = vadd.f32 %v683, 1.0
        %v962 = vadd.f32 %v685, 1.0
        %v963 = vadd.f32 %v689, 1.0
        %v964 = vadd.f32 %v691, 1.0
        %v965 = vadd.f32 %v695, 1.0
        %v966 = vadd.f32 %v697, 1.0
        %v967 = vadd.f32 %v701, 1.0
        %v968 = vadd.f32 %v703, 1.0
        %v969 = vadd.f32 %v707, 1.0
        %v970 = vadd.f32 %v709, 1.0
        %v971 = vadd.f32 %v713, 1.0
        %v972 = vadd.f32 %v715, 1.0
        %v973 = vadd.f32 %v719, 1.0
        %v974 = vadd.f32 %v721, 1.0
        %v975 = vadd.f32 %v725, 1.0
        %v976 = vadd.f32 %v727, 1.0
        %v977 = vadd.f32 %v731, 1.0
        %v978 = vadd.f32 %v733, 1.0
        %v979 = vadd.f32 %v737, 1.0
        %v980 = vadd.f32 %v739, 1.0
        %v981 = vadd.f32 %v743, 1.0
        %v982 = vadd.f32 %v745, 1.0
        %v983 = vadd.f32 %v749, 1.0
        %v984 = vadd.f32 %v751, 1.0
        %v985 = vadd.f32 %v755, 1.0
        %v986 = vadd.f32 %v757, 1.0
        %v987 = vadd.f32 %v761, 1.0
        %v988 = vadd.f32 %v763, 1.0
        %v989 = vmul.f32 %v575, 1.442695
        %v990 = vpow.pop %v989
        %v991 = vmul.f32 %v577, 1.442695
        %v992 = vpow.pop %v991
        %v993 = vmul.f32 %v581, 1.442695
        %v994 = vpow.pop %v993
        %v995 = vmul.f32 %v583, 1.442695
        %v996 = vpow.pop %v995
        %v997 = vmul.f32 %v587, 1.442695
        %v998 = vpow.pop %v997
        %v999 = vmul.f32 %v589, 1.442695
        %v1000 = vpow.pop %v999
        %v1001 = vmul.f32 %v593, 1.442695
        %v1002 = vpow.pop %v1001
        %v1003 = vmul.f32 %v595, 1.442695
        %v1004 = vpow.pop %v1003
        %v1005 = vmul.f32 %v599, 1.442695
        %v1006 = vpow.pop %v1005
        %v1007 = vmul.f32 %v601, 1.442695
        %v1008 = vpow.pop %v1007
        %v1009 = vmul.f32 %v605, 1.442695
        %v1010 = vpow.pop %v1009
        %v1011 = vmul.f32 %v607, 1.442695
        %v1012 = vpow.pop %v1011
        %v1013 = vmul.f32 %v611, 1.442695
        %v1014 = vpow.pop %v1013
        %v1015 = vmul.f32 %v613, 1.442695
        %v1016 = vpow.pop %v1015
        %v1017 = vmul.f32 %v617, 1.442695
        %v1018 = vpow.pop %v1017
        %v1019 = vmul.f32 %v619, 1.442695
        %v1020 = vpow.pop %v1019
        %v1021 = vmul.f32 %v623, 1.442695
        %v1022 = vpow.pop %v1021
        %v1023 = vmul.f32 %v625, 1.442695
        %v1024 = vpow.pop %v1023
        %v1025 = vmul.f32 %v629, 1.442695
        %v1026 = vpow.pop %v1025
        %v1027 = vmul.f32 %v631, 1.442695
        %v1028 = vpow.pop %v1027
        %v1029 = vmul.f32 %v635, 1.442695
        %v1030 = vpow.pop %v1029
        %v1031 = vmul.f32 %v637, 1.442695
        %v1032 = vpow.pop %v1031
        %v1033 = vmul.f32 %v641, 1.442695
        %v1034 = vpow.pop %v1033
        %v1035 = vmul.f32 %v643, 1.442695
        %v1036 = vpow.pop %v1035
        %v1037 = vmul.f32 %v647, 1.442695
        %v1038 = vpow.pop %v1037
        %v1039 = vmul.f32 %v649, 1.442695
        %v1040 = vpow.pop %v1039
        %v1041 = vmul.f32 %v653, 1.442695
        %v1042 = vpow.pop %v1041
        %v1043 = vmul.f32 %v655, 1.442695
        %v1044 = vpow.pop %v1043
        %v1045 = vmul.f32 %v659, 1.442695
        %v1046 = vpow.pop %v1045
        %v1047 = vmul.f32 %v661, 1.442695
        %v1048 = vpow.pop %v1047
        %v1049 = vmul.f32 %v665, 1.442695
        %v1050 = vpow.pop %v1049
        %v1051 = vmul.f32 %v667, 1.442695
        %v1052 = vpow.pop %v1051
        %v1053 = vmul.f32 %v671, 1.442695
        %v1054 = vpow.pop %v1053
        %v1055 = vmul.f32 %v673, 1.442695
        %v1056 = vpow.pop %v1055
        %v1057 = vmul.f32 %v677, 1.442695
        %v1058 = vpow.pop %v1057
        %v1059 = vmul.f32 %v679, 1.442695
        %v1060 = vpow.pop %v1059
        %v1061 = vmul.f32 %v683, 1.442695
        %v1062 = vpow.pop %v1061
        %v1063 = vmul.f32 %v685, 1.442695
        %v1064 = vpow.pop %v1063
        %v1065 = vmul.f32 %v689, 1.442695
        %v1066 = vpow.pop %v1065
        %v1067 = vmul.f32 %v691, 1.442695
        %v1068 = vpow.pop %v1067
        %v1069 = vmul.f32 %v695, 1.442695
        %v1070 = vpow.pop %v1069
        %v1071 = vmul.f32 %v697, 1.442695
        %v1072 = vpow.pop %v1071
        %v1073 = vmul.f32 %v701, 1.442695
        %v1074 = vpow.pop %v1073
        %v1075 = vmul.f32 %v703, 1.442695
        %v1076 = vpow.pop %v1075
        %v1077 = vmul.f32 %v707, 1.442695
        %v1078 = vpow.pop %v1077
        %v1079 = vmul.f32 %v709, 1.442695
        %v1080 = vpow.pop %v1079
        %v1081 = vmul.f32 %v713, 1.442695
        %v1082 = vpow.pop %v1081
        %v1083 = vmul.f32 %v715, 1.442695
        %v1084 = vpow.pop %v1083
        %v1085 = vmul.f32 %v719, 1.442695
        %v1086 = vpow.pop %v1085
        %v1087 = vmul.f32 %v721, 1.442695
        %v1088 = vpow.pop %v1087
        %v1089 = vmul.f32 %v725, 1.442695
        %v1090 = vpow.pop %v1089
        %v1091 = vmul.f32 %v727, 1.442695
        %v1092 = vpow.pop %v1091
        %v1093 = vmul.f32 %v731, 1.442695
        %v1094 = vpow.pop %v1093
        %v1095 = vmul.f32 %v733, 1.442695
        %v1096 = vpow.pop %v1095
        %v1097 = vmul.f32 %v737, 1.442695
        %v1098 = vpow.pop %v1097
        %v1099 = vmul.f32 %v739, 1.442695
        %v1100 = vpow.pop %v1099
        %v1101 = vmul.f32 %v743, 1.442695
        %v1102 = vpow.pop %v1101
        %v1103 = vmul.f32 %v745, 1.442695
        %v1104 = vpow.pop %v1103
        %v1105 = vmul.f32 %v749, 1.442695
        %v1106 = vpow.pop %v1105
        %v1107 = vmul.f32 %v751, 1.442695
        %v1108 = vpow.pop %v1107
        %v1109 = vmul.f32 %v755, 1.442695
        %v1110 = vpow.pop %v1109
        %v1111 = vmul.f32 %v757, 1.442695
        %v1112 = vpow.pop %v1111
        %v1113 = vmul.f32 %v761, 1.442695
        %v1114 = vpow.pop %v1113
        %v1115 = vmul.f32 %v763, 1.442695
        %v1116 = vpow.pop %v1115
        %v1117 = vsel %vm861, %v925, %v990
        %v1118 = vsel %vm862, %v926, %v992
        %v1119 = vsel %vm863, %v927, %v994
        %v1120 = vsel %vm864, %v928, %v996
        %v1121 = vsel %vm865, %v929, %v998
        %v1122 = vsel %vm866, %v930, %v1000
        %v1123 = vsel %vm867, %v931, %v1002
        %v1124 = vsel %vm868, %v932, %v1004
        %v1125 = vsel %vm869, %v933, %v1006
        %v1126 = vsel %vm870, %v934, %v1008
        %v1127 = vsel %vm871, %v935, %v1010
        %v1128 = vsel %vm872, %v936, %v1012
        %v1129 = vsel %vm873, %v937, %v1014
        %v1130 = vsel %vm874, %v938, %v1016
        %v1131 = vsel %vm875, %v939, %v1018
        %v1132 = vsel %vm876, %v940, %v1020
        %v1133 = vsel %vm877, %v941, %v1022
        %v1134 = vsel %vm878, %v942, %v1024
        %v1135 = vsel %vm879, %v943, %v1026
        %v1136 = vsel %vm880, %v944, %v1028
        %v1137 = vsel %vm881, %v945, %v1030
        %v1138 = vsel %vm882, %v946, %v1032
        %v1139 = vsel %vm883, %v947, %v1034
        %v1140 = vsel %vm884, %v948, %v1036
        %v1141 = vsel %vm885, %v949, %v1038
        %v1142 = vsel %vm886, %v950, %v1040
        %v1143 = vsel %vm887, %v951, %v1042
        %v1144 = vsel %vm888, %v952, %v1044
        %v1145 = vsel %vm889, %v953, %v1046
        %v1146 = vsel %vm890, %v954, %v1048
        %v1147 = vsel %vm891, %v955, %v1050
        %v1148 = vsel %vm892, %v956, %v1052
        %v1149 = vsel %vm893, %v957, %v1054
        %v1150 = vsel %vm894, %v958, %v1056
        %v1151 = vsel %vm895, %v959, %v1058
        %v1152 = vsel %vm896, %v960, %v1060
        %v1153 = vsel %vm897, %v961, %v1062
        %v1154 = vsel %vm898, %v962, %v1064
        %v1155 = vsel %vm899, %v963, %v1066
        %v1156 = vsel %vm900, %v964, %v1068
        %v1157 = vsel %vm901, %v965, %v1070
        %v1158 = vsel %vm902, %v966, %v1072
        %v1159 = vsel %vm903, %v967, %v1074
        %v1160 = vsel %vm904, %v968, %v1076
        %v1161 = vsel %vm905, %v969, %v1078
        %v1162 = vsel %vm906, %v970, %v1080
        %v1163 = vsel %vm907, %v971, %v1082
        %v1164 = vsel %vm908, %v972, %v1084
        %v1165 = vsel %vm909, %v973, %v1086
        %v1166 = vsel %vm910, %v974, %v1088
        %v1167 = vsel %vm911, %v975, %v1090
        %v1168 = vsel %vm912, %v976, %v1092
        %v1169 = vsel %vm913, %v977, %v1094
        %v1170 = vsel %vm914, %v978, %v1096
        %v1171 = vsel %vm915, %v979, %v1098
        %v1172 = vsel %vm916, %v980, %v1100
        %v1173 = vsel %vm917, %v981, %v1102
        %v1174 = vsel %vm918, %v982, %v1104
        %v1175 = vsel %vm919, %v983, %v1106
        %v1176 = vsel %vm920, %v984, %v1108
        %v1177 = vsel %vm921, %v985, %v1110
        %v1178 = vsel %vm922, %v986, %v1112
        %v1179 = vsel %vm923, %v987, %v1114
        %v1180 = vsel %vm924, %v988, %v1116
        %v1181 = vld [vmem:[%s4] sm:$0xff]
        %v1182 = vld [vmem:[%s4 + $0x8] sm:$0xff]
        %v1183 = vld [vmem:[%s4 + $0x10] sm:$0xff]
        %v1184 = vld [vmem:[%s4 + $0x18] sm:$0xff]
        %v1185 = vld [vmem:[%s4 + $0x20] sm:$0xff]
        %v1186 = vld [vmem:[%s4 + $0x28] sm:$0xff]
        %v1187 = vld [vmem:[%s4 + $0x30] sm:$0xff]
        %v1188 = vld [vmem:[%s4 + $0x38] sm:$0xff]
        %v1189 = vld [vmem:[%s4 + $0x40] sm:$0xff]
        %v1190 = vld [vmem:[%s4 + $0x48] sm:$0xff]
        %v1191 = vld [vmem:[%s4 + $0x50] sm:$0xff]
        %v1192 = vld [vmem:[%s4 + $0x58] sm:$0xff]
        %v1193 = vld [vmem:[%s4 + $0x60] sm:$0xff]
        %v1194 = vld [vmem:[%s4 + $0x68] sm:$0xff]
        %v1195 = vld [vmem:[%s4 + $0x70] sm:$0xff]
        %v1196 = vld [vmem:[%s4 + $0x78] sm:$0xff]
        %v1197 = vld [vmem:[%s4 + $0x80] sm:$0xff]
        %v1198 = vld [vmem:[%s4 + $0x88] sm:$0xff]
        %v1199 = vld [vmem:[%s4 + $0x90] sm:$0xff]
        %v1200 = vld [vmem:[%s4 + $0x98] sm:$0xff]
        %v1201 = vld [vmem:[%s4 + $0xa0] sm:$0xff]
        %v1202 = vld [vmem:[%s4 + $0xa8] sm:$0xff]
        %v1203 = vld [vmem:[%s4 + $0xb0] sm:$0xff]
        %v1204 = vld [vmem:[%s4 + $0xb8] sm:$0xff]
        %v1205 = vld [vmem:[%s4 + $0xc0] sm:$0xff]
        %v1206 = vld [vmem:[%s4 + $0xc8] sm:$0xff]
        %v1207 = vld [vmem:[%s4 + $0xd0] sm:$0xff]
        %v1208 = vld [vmem:[%s4 + $0xd8] sm:$0xff]
        %v1209 = vld [vmem:[%s4 + $0xe0] sm:$0xff]
        %v1210 = vld [vmem:[%s4 + $0xe8] sm:$0xff]
        %v1211 = vld [vmem:[%s4 + $0xf0] sm:$0xff]
        %v1212 = vld [vmem:[%s4 + $0xf8] sm:$0xff]
        %v1213 = vld [vmem:[%s4 + $0x100] sm:$0xff]
        %v1214 = vld [vmem:[%s4 + $0x108] sm:$0xff]
        %v1215 = vld [vmem:[%s4 + $0x110] sm:$0xff]
        %v1216 = vld [vmem:[%s4 + $0x118] sm:$0xff]
        %v1217 = vld [vmem:[%s4 + $0x120] sm:$0xff]
        %v1218 = vld [vmem:[%s4 + $0x128] sm:$0xff]
        %v1219 = vld [vmem:[%s4 + $0x130] sm:$0xff]
        %v1220 = vld [vmem:[%s4 + $0x138] sm:$0xff]
        %v1221 = vld [vmem:[%s4 + $0x140] sm:$0xff]
        %v1222 = vld [vmem:[%s4 + $0x148] sm:$0xff]
        %v1223 = vld [vmem:[%s4 + $0x150] sm:$0xff]
        %v1224 = vld [vmem:[%s4 + $0x158] sm:$0xff]
        %v1225 = vld [vmem:[%s4 + $0x160] sm:$0xff]
        %v1226 = vld [vmem:[%s4 + $0x168] sm:$0xff]
        %v1227 = vld [vmem:[%s4 + $0x170] sm:$0xff]
        %v1228 = vld [vmem:[%s4 + $0x178] sm:$0xff]
        %v1229 = vld [vmem:[%s4 + $0x180] sm:$0xff]
        %v1230 = vld [vmem:[%s4 + $0x188] sm:$0xff]
        %v1231 = vld [vmem:[%s4 + $0x190] sm:$0xff]
        %v1232 = vld [vmem:[%s4 + $0x198] sm:$0xff]
        %v1233 = vld [vmem:[%s4 + $0x1a0] sm:$0xff]
        %v1234 = vld [vmem:[%s4 + $0x1a8] sm:$0xff]
        %v1235 = vld [vmem:[%s4 + $0x1b0] sm:$0xff]
        %v1236 = vld [vmem:[%s4 + $0x1b8] sm:$0xff]
        %v1237 = vld [vmem:[%s4 + $0x1c0] sm:$0xff]
        %v1238 = vld [vmem:[%s4 + $0x1c8] sm:$0xff]
        %v1239 = vld [vmem:[%s4 + $0x1d0] sm:$0xff]
        %v1240 = vld [vmem:[%s4 + $0x1d8] sm:$0xff]
        %v1241 = vld [vmem:[%s4 + $0x1e0] sm:$0xff]
        %v1242 = vld [vmem:[%s4 + $0x1e8] sm:$0xff]
        %v1243 = vld [vmem:[%s4 + $0x1f0] sm:$0xff]
        %v1244 = vld [vmem:[%s4 + $0x1f8] sm:$0xff]
        %1245 = vxpose.xlu0.b32.start [1/16] %v1149, 128
        %1246 = vxpose.xlu0.b32.cont [2/16] %v1151, 128
        %1247 = vxpose.xlu0.b32.cont [3/16] 0.0, 128
        %1248 = vxpose.xlu0.b32.cont [4/16] 0.0, 128
        %1249 = vxpose.xlu0.b32.cont [5/16] 0.0, 128
        %1250 = vxpose.xlu0.b32.cont [6/16] 0.0, 128
        %1251 = vxpose.xlu0.b32.cont [7/16] 0.0, 128
        %1252 = vxpose.xlu0.b32.cont [8/16] 0.0, 128
        %1253 = vxpose.xlu0.b32.cont [9/16] 0.0, 128
        %1254 = vxpose.xlu0.b32.cont [10/16] 0.0, 128
        %1255 = vxpose.xlu0.b32.cont [11/16] 0.0, 128
        %1256 = vxpose.xlu0.b32.cont [12/16] 0.0, 128
        %1257 = vxpose.xlu0.b32.cont [13/16] 0.0, 128
        %1258 = vxpose.xlu0.b32.cont [14/16] 0.0, 128
        %1259 = vxpose.xlu0.b32.cont [15/16] 0.0, 128
        %1260 = vxpose.xlu0.b32.end [16/16] 0.0, 128
        %v1261 = vpop.trf.xlu0
        %v1262 = vpop.trf.xlu0
        %v1263 = vpop.trf.xlu0
        %v1264 = vpop.trf.xlu0
        %v1265 = vpop.trf.xlu0
        %v1266 = vpop.trf.xlu0
        %v1267 = vpop.trf.xlu0
        %v1268 = vpop.trf.xlu0
        %v1269 = vpop.trf.xlu0
        %v1270 = vpop.trf.xlu0
        %v1271 = vpop.trf.xlu0
        %v1272 = vpop.trf.xlu0
        %v1273 = vpop.trf.xlu0
        %v1274 = vpop.trf.xlu0
        %v1275 = vpop.trf.xlu0
        %v1276 = vpop.trf.xlu0
        %1277 = vxpose.xlu0.b32.start [1/16] %v1150, 128
        %1278 = vxpose.xlu0.b32.cont [2/16] %v1152, 128
        %1279 = vxpose.xlu0.b32.cont [3/16] 0.0, 128
        %1280 = vxpose.xlu0.b32.cont [4/16] 0.0, 128
        %1281 = vxpose.xlu0.b32.cont [5/16] 0.0, 128
        %1282 = vxpose.xlu0.b32.cont [6/16] 0.0, 128
        %1283 = vxpose.xlu0.b32.cont [7/16] 0.0, 128
        %1284 = vxpose.xlu0.b32.cont [8/16] 0.0, 128
        %1285 = vxpose.xlu0.b32.cont [9/16] 0.0, 128
        %1286 = vxpose.xlu0.b32.cont [10/16] 0.0, 128
        %1287 = vxpose.xlu0.b32.cont [11/16] 0.0, 128
        %1288 = vxpose.xlu0.b32.cont [12/16] 0.0, 128
        %1289 = vxpose.xlu0.b32.cont [13/16] 0.0, 128
        %1290 = vxpose.xlu0.b32.cont [14/16] 0.0, 128
        %1291 = vxpose.xlu0.b32.cont [15/16] 0.0, 128
        %1292 = vxpose.xlu0.b32.end [16/16] 0.0, 128
        %v1293 = vpop.trf.xlu0
        %v1294 = vpop.trf.xlu0
        %v1295 = vpop.trf.xlu0
        %v1296 = vpop.trf.xlu0
        %v1297 = vpop.trf.xlu0
        %v1298 = vpop.trf.xlu0
        %v1299 = vpop.trf.xlu0
        %v1300 = vpop.trf.xlu0
        %v1301 = vpop.trf.xlu0
        %v1302 = vpop.trf.xlu0
        %v1303 = vpop.trf.xlu0
        %v1304 = vpop.trf.xlu0
        %v1305 = vpop.trf.xlu0
        %v1306 = vpop.trf.xlu0
        %v1307 = vpop.trf.xlu0
        %v1308 = vpop.trf.xlu0
        %vm1309 = vcmask 130048
        %v1311 = vsel %vm1309, %v1261, 0
        %v1314 = vsel %vm1309, %v1262, 0
        %v1317 = vsel %vm1309, %v1263, 0
        %v1320 = vsel %vm1309, %v1264, 0
        %v1323 = vsel %vm1309, %v1265, 0
        %v1326 = vsel %vm1309, %v1266, 0
        %v1329 = vsel %vm1309, %v1267, 0
        %v1332 = vsel %vm1309, %v1268, 0
        %v1335 = vsel %vm1309, %v1269, 0
        %v1338 = vsel %vm1309, %v1270, 0
        %v1341 = vsel %vm1309, %v1271, 0
        %v1344 = vsel %vm1309, %v1272, 0
        %v1347 = vsel %vm1309, %v1273, 0
        %v1350 = vsel %vm1309, %v1274, 0
        %v1353 = vsel %vm1309, %v1275, 0
        %v1356 = vsel %vm1309, %v1276, 0
        %v1359 = vsel %vm1309, %v1293, 0
        %v1362 = vsel %vm1309, %v1294, 0
        %v1365 = vsel %vm1309, %v1295, 0
        %v1368 = vsel %vm1309, %v1296, 0
        %v1371 = vsel %vm1309, %v1297, 0
        %v1374 = vsel %vm1309, %v1298, 0
        %v1377 = vsel %vm1309, %v1299, 0
        %v1380 = vsel %vm1309, %v1300, 0
        %v1383 = vsel %vm1309, %v1301, 0
        %v1386 = vsel %vm1309, %v1302, 0
        %v1389 = vsel %vm1309, %v1303, 0
        %v1392 = vsel %vm1309, %v1304, 0
        %v1395 = vsel %vm1309, %v1305, 0
        %v1398 = vsel %vm1309, %v1306, 0
        %v1401 = vsel %vm1309, %v1307, 0
        %v1404 = vsel %vm1309, %v1308, 0
        %1406 = vmatprep.subr.mxu0 %v769
        %1407 = vmatpush1.msra.mxu0 %v767
        %1408 = vmatprep.subr.mxu0 %v775
        %1409 = vmatpush1.msra.mxu0 %v773
        %1410 = vmatprep.subr.mxu0 0.0
        %1411 = vmatpush1.msra.mxu0 0.0
        %1412 = vmatprep.subr.mxu0 0.0
        %1413 = vmatpush1.msra.mxu0 0.0
        %1414 = vmatprep.subr.mxu0 0.0
        %1415 = vmatpush1.msra.mxu0 0.0
        %1416 = vmatprep.subr.mxu0 0.0
        %1417 = vmatpush1.msra.mxu0 0.0
        %1418 = vmatprep.subr.mxu0 0.0
        %1419 = vmatpush1.msra.mxu0 0.0
        %1420 = vmatprep.subr.mxu0 0.0
        %1421 = vmatpush1.msra.mxu0 0.0
        %1422 = vmatprep.subr.mxu0 0.0
        %1423 = vmatpush1.msra.mxu0 0.0
        %1424 = vmatprep.subr.mxu0 0.0
        %1425 = vmatpush1.msra.mxu0 0.0
        %1426 = vmatprep.subr.mxu0 0.0
        %1427 = vmatpush1.msra.mxu0 0.0
        %1428 = vmatprep.subr.mxu0 0.0
        %1429 = vmatpush1.msra.mxu0 0.0
        %1430 = vmatprep.subr.mxu0 0.0
        %1431 = vmatpush1.msra.mxu0 0.0
        %1432 = vmatprep.subr.mxu0 0.0
        %1433 = vmatpush1.msra.mxu0 0.0
        %1434 = vmatprep.subr.mxu0 0.0
        %1435 = vmatpush1.msra.mxu0 0.0
        %1436 = vmatprep.subr.mxu0 0.0
        %1437 = vmatpush1.msra.mxu0 0.0
        %1438 = vmatprep.subr.mxu0 0.0
        %1439 = vmatpush1.msra.mxu0 0.0
        %1440 = vmatprep.subr.mxu0 0.0
        %1441 = vmatpush1.msra.mxu0 0.0
        %1442 = vmatprep.subr.mxu0 0.0
        %1443 = vmatpush1.msra.mxu0 0.0
        %1444 = vmatprep.subr.mxu0 0.0
        %1445 = vmatpush1.msra.mxu0 0.0
        %1446 = vmatprep.subr.mxu0 0.0
        %1447 = vmatpush1.msra.mxu0 0.0
        %1448 = vmatprep.subr.mxu0 0.0
        %1449 = vmatpush1.msra.mxu0 0.0
        %1450 = vmatprep.subr.mxu0 0.0
        %1451 = vmatpush1.msra.mxu0 0.0
        %1452 = vmatprep.subr.mxu0 0.0
        %1453 = vmatpush1.msra.mxu0 0.0
        %1454 = vmatprep.subr.mxu0 0.0
        %1455 = vmatpush1.msra.mxu0 0.0
        %1456 = vmatprep.subr.mxu0 0.0
        %1457 = vmatpush1.msra.mxu0 0.0
        %1458 = vmatprep.subr.mxu0 0.0
        %1459 = vmatpush1.msra.mxu0 0.0
        %1460 = vmatprep.subr.mxu0 0.0
        %1461 = vmatpush1.msra.mxu0 0.0
        %1462 = vmatprep.subr.mxu0 0.0
        %1463 = vmatpush1.msra.mxu0 0.0
        %1464 = vmatprep.subr.mxu0 0.0
        %1465 = vmatpush1.msra.mxu0 0.0
        %1466 = vmatprep.subr.mxu0 0.0
        %1467 = vmatpush1.msra.mxu0 0.0
        %1468 = vmatprep.subr.mxu0 0.0
        %1469 = vmatpush1.msra.mxu0 0.0
        %1470 = vmatprep.mubr.f32.mxu0 0.0
        %1471 = vmatmul.mubr.f32.gmra.mrb[0].mxu0 %v1311
        %v1472 = vpop.f32.mrb[0].mxu0
        %v1473 = vadd.f32 0.0, %v1472
        %v1474 = vpop.f32.mrb[0].mxu0
        %v1475 = vadd.f32 0.0, %v1474
        %1476 = vmatprep.mubr.f32.mxu0 0.0
        %1477 = vmatmul.mubr.f32.gmra.mrb[0].mxu0 %v1314
        %v1478 = vpop.f32.mrb[0].mxu0
        %v1479 = vadd.f32 0.0, %v1478
        %v1480 = vpop.f32.mrb[0].mxu0
        %v1481 = vadd.f32 0.0, %v1480
        %1482 = vmatprep.mubr.f32.mxu0 0.0
        %1483 = vmatmul.mubr.f32.gmra.mrb[0].mxu0 %v1317
        %v1484 = vpop.f32.mrb[0].mxu0
        %v1485 = vadd.f32 0.0, %v1484
        %v1486 = vpop.f32.mrb[0].mxu0
        %v1487 = vadd.f32 0.0, %v1486
        %1488 = vmatprep.mubr.f32.mxu0 0.0
        %1489 = vmatmul.mubr.f32.gmra.mrb[0].mxu0 %v1320
        %v1490 = vpop.f32.mrb[0].mxu0
        %v1491 = vadd.f32 0.0, %v1490
        %v1492 = vpop.f32.mrb[0].mxu0
        %v1493 = vadd.f32 0.0, %v1492
        %1494 = vmatprep.mubr.f32.mxu0 0.0
        %1495 = vmatmul.mubr.f32.gmra.mrb[0].mxu0 %v1323
        %v1496 = vpop.f32.mrb[0].mxu0
        %v1497 = vadd.f32 0.0, %v1496
        %v1498 = vpop.f32.mrb[0].mxu0
        %v1499 = vadd.f32 0.0, %v1498
        %1500 = vmatprep.mubr.f32.mxu0 0.0
        %1501 = vmatmul.mubr.f32.gmra.mrb[0].mxu0 %v1326
        %v1502 = vpop.f32.mrb[0].mxu0
        %v1503 = vadd.f32 0.0, %v1502
        %v1504 = vpop.f32.mrb[0].mxu0
        %v1505 = vadd.f32 0.0, %v1504
        %1506 = vmatprep.mubr.f32.mxu0 0.0
        %1507 = vmatmul.mubr.f32.gmra.mrb[0].mxu0 %v1329
        %v1508 = vpop.f32.mrb[0].mxu0
        %v1509 = vadd.f32 0.0, %v1508
        %v1510 = vpop.f32.mrb[0].mxu0
        %v1511 = vadd.f32 0.0, %v1510
        %1512 = vmatprep.mubr.f32.mxu0 0.0
        %1513 = vmatmul.mubr.f32.gmra.mrb[0].mxu0 %v1332
        %v1514 = vpop.f32.mrb[0].mxu0
        %v1515 = vadd.f32 0.0, %v1514
        %v1516 = vpop.f32.mrb[0].mxu0
        %v1517 = vadd.f32 0.0, %v1516
        %1518 = vmatprep.mubr.f32.mxu0 0.0
        %1519 = vmatmul.mubr.f32.gmra.mrb[0].mxu0 %v1335
        %v1520 = vpop.f32.mrb[0].mxu0
        %v1521 = vadd.f32 0.0, %v1520
        %v1522 = vpop.f32.mrb[0].mxu0
        %v1523 = vadd.f32 0.0, %v1522
        %1524 = vmatprep.mubr.f32.mxu0 0.0
        %1525 = vmatmul.mubr.f32.gmra.mrb[0].mxu0 %v1338
        %v1526 = vpop.f32.mrb[0].mxu0
        %v1527 = vadd.f32 0.0, %v1526
        %v1528 = vpop.f32.mrb[0].mxu0
        %v1529 = vadd.f32 0.0, %v1528
        %1530 = vmatprep.mubr.f32.mxu0 0.0
        %1531 = vmatmul.mubr.f32.gmra.mrb[0].mxu0 %v1341
        %v1532 = vpop.f32.mrb[0].mxu0
        %v1533 = vadd.f32 0.0, %v1532
        %v1534 = vpop.f32.mrb[0].mxu0
        %v1535 = vadd.f32 0.0, %v1534
        %1536 = vmatprep.mubr.f32.mxu0 0.0
        %1537 = vmatmul.mubr.f32.gmra.mrb[0].mxu0 %v1344
        %v1538 = vpop.f32.mrb[0].mxu0
        %v1539 = vadd.f32 0.0, %v1538
        %v1540 = vpop.f32.mrb[0].mxu0
        %v1541 = vadd.f32 0.0, %v1540
        %1542 = vmatprep.mubr.f32.mxu0 0.0
        %1543 = vmatmul.mubr.f32.gmra.mrb[0].mxu0 %v1347
        %v1544 = vpop.f32.mrb[0].mxu0
        %v1545 = vadd.f32 0.0, %v1544
        %v1546 = vpop.f32.mrb[0].mxu0
        %v1547 = vadd.f32 0.0, %v1546
        %1548 = vmatprep.mubr.f32.mxu0 0.0
        %1549 = vmatmul.mubr.f32.gmra.mrb[0].mxu0 %v1350
        %v1550 = vpop.f32.mrb[0].mxu0
        %v1551 = vadd.f32 0.0, %v1550
        %v1552 = vpop.f32.mrb[0].mxu0
        %v1553 = vadd.f32 0.0, %v1552
        %1554 = vmatprep.mubr.f32.mxu0 0.0
        %1555 = vmatmul.mubr.f32.gmra.mrb[0].mxu0 %v1353
        %v1556 = vpop.f32.mrb[0].mxu0
        %v1557 = vadd.f32 0.0, %v1556
        %v1558 = vpop.f32.mrb[0].mxu0
        %v1559 = vadd.f32 0.0, %v1558
        %1560 = vmatprep.mubr.f32.mxu0 0.0
        %1561 = vmatmul.mubr.f32.gmra.mrb[0].mxu0 %v1356
        %v1562 = vpop.f32.mrb[0].mxu0
        %v1563 = vadd.f32 0.0, %v1562
        %v1564 = vpop.f32.mrb[0].mxu0
        %v1565 = vadd.f32 0.0, %v1564
        %1566 = vmatprep.mubr.f32.mxu0 0.0
        %1567 = vmatmul.mubr.f32.gmra.mrb[0].mxu0 %v1359
        %v1568 = vpop.f32.mrb[0].mxu0
        %v1569 = vadd.f32 0.0, %v1568
        %v1570 = vpop.f32.mrb[0].mxu0
        %v1571 = vadd.f32 0.0, %v1570
        %1572 = vmatprep.mubr.f32.mxu0 0.0
        %1573 = vmatmul.mubr.f32.gmra.mrb[0].mxu0 %v1362
        %v1574 = vpop.f32.mrb[0].mxu0
        %v1575 = vadd.f32 0.0, %v1574
        %v1576 = vpop.f32.mrb[0].mxu0
        %v1577 = vadd.f32 0.0, %v1576
        %1578 = vmatprep.mubr.f32.mxu0 0.0
        %1579 = vmatmul.mubr.f32.gmra.mrb[0].mxu0 %v1365
        %v1580 = vpop.f32.mrb[0].mxu0
        %v1581 = vadd.f32 0.0, %v1580
        %v1582 = vpop.f32.mrb[0].mxu0
        %v1583 = vadd.f32 0.0, %v1582
        %1584 = vmatprep.mubr.f32.mxu0 0.0
        %1585 = vmatmul.mubr.f32.gmra.mrb[0].mxu0 %v1368
        %v1586 = vpop.f32.mrb[0].mxu0
        %v1587 = vadd.f32 0.0, %v1586
        %v1588 = vpop.f32.mrb[0].mxu0
        %v1589 = vadd.f32 0.0, %v1588
        %1590 = vmatprep.mubr.f32.mxu0 0.0
        %1591 = vmatmul.mubr.f32.gmra.mrb[0].mxu0 %v1371
        %v1592 = vpop.f32.mrb[0].mxu0
        %v1593 = vadd.f32 0.0, %v1592
        %v1594 = vpop.f32.mrb[0].mxu0
        %v1595 = vadd.f32 0.0, %v1594
        %1596 = vmatprep.mubr.f32.mxu0 0.0
        %1597 = vmatmul.mubr.f32.gmra.mrb[0].mxu0 %v1374
        %v1598 = vpop.f32.mrb[0].mxu0
        %v1599 = vadd.f32 0.0, %v1598
        %v1600 = vpop.f32.mrb[0].mxu0
        %v1601 = vadd.f32 0.0, %v1600
        %1602 = vmatprep.mubr.f32.mxu0 0.0
        %1603 = vmatmul.mubr.f32.gmra.mrb[0].mxu0 %v1377
        %v1604 = vpop.f32.mrb[0].mxu0
        %v1605 = vadd.f32 0.0, %v1604
        %v1606 = vpop.f32.mrb[0].mxu0
        %v1607 = vadd.f32 0.0, %v1606
        %1608 = vmatprep.mubr.f32.mxu0 0.0
        %1609 = vmatmul.mubr.f32.gmra.mrb[0].mxu0 %v1380
        %v1610 = vpop.f32.mrb[0].mxu0
        %v1611 = vadd.f32 0.0, %v1610
        %v1612 = vpop.f32.mrb[0].mxu0
        %v1613 = vadd.f32 0.0, %v1612
        %1614 = vmatprep.mubr.f32.mxu0 0.0
        %1615 = vmatmul.mubr.f32.gmra.mrb[0].mxu0 %v1383
        %v1616 = vpop.f32.mrb[0].mxu0
        %v1617 = vadd.f32 0.0, %v1616
        %v1618 = vpop.f32.mrb[0].mxu0
        %v1619 = vadd.f32 0.0, %v1618
        %1620 = vmatprep.mubr.f32.mxu0 0.0
        %1621 = vmatmul.mubr.f32.gmra.mrb[0].mxu0 %v1386
        %v1622 = vpop.f32.mrb[0].mxu0
        %v1623 = vadd.f32 0.0, %v1622
        %v1624 = vpop.f32.mrb[0].mxu0
        %v1625 = vadd.f32 0.0, %v1624
        %1626 = vmatprep.mubr.f32.mxu0 0.0
        %1627 = vmatmul.mubr.f32.gmra.mrb[0].mxu0 %v1389
        %v1628 = vpop.f32.mrb[0].mxu0
        %v1629 = vadd.f32 0.0, %v1628
        %v1630 = vpop.f32.mrb[0].mxu0
        %v1631 = vadd.f32 0.0, %v1630
        %1632 = vmatprep.mubr.f32.mxu0 0.0
        %1633 = vmatmul.mubr.f32.gmra.mrb[0].mxu0 %v1392
        %v1634 = vpop.f32.mrb[0].mxu0
        %v1635 = vadd.f32 0.0, %v1634
        %v1636 = vpop.f32.mrb[0].mxu0
        %v1637 = vadd.f32 0.0, %v1636
        %1638 = vmatprep.mubr.f32.mxu0 0.0
        %1639 = vmatmul.mubr.f32.gmra.mrb[0].mxu0 %v1395
        %v1640 = vpop.f32.mrb[0].mxu0
        %v1641 = vadd.f32 0.0, %v1640
        %v1642 = vpop.f32.mrb[0].mxu0
        %v1643 = vadd.f32 0.0, %v1642
        %1644 = vmatprep.mubr.f32.mxu0 0.0
        %1645 = vmatmul.mubr.f32.gmra.mrb[0].mxu0 %v1398
        %v1646 = vpop.f32.mrb[0].mxu0
        %v1647 = vadd.f32 0.0, %v1646
        %v1648 = vpop.f32.mrb[0].mxu0
        %v1649 = vadd.f32 0.0, %v1648
        %1650 = vmatprep.mubr.f32.mxu0 0.0
        %1651 = vmatmul.mubr.f32.gmra.mrb[0].mxu0 %v1401
        %v1652 = vpop.f32.mrb[0].mxu0
        %v1653 = vadd.f32 0.0, %v1652
        %v1654 = vpop.f32.mrb[0].mxu0
        %v1655 = vadd.f32 0.0, %v1654
        %1656 = vmatprep.mubr.f32.mxu0 0.0
        %1657 = vmatmul.mubr.f32.gmra.mrb[0].mxu0 %v1404
        %v1658 = vpop.f32.mrb[0].mxu0
        %v1659 = vadd.f32 0.0, %v1658
        %v1660 = vpop.f32.mrb[0].mxu0
        %v1661 = vadd.f32 0.0, %v1660
        %1662 = vdwg.mxu0
        %v1663 = vadd.f32 %v1149, %v1151
        %v1664 = vrot.slane %v1663, 4
        %v1665 = vadd.f32 %v1663, %v1664
        %v1666 = vrot.slane %v1665, 2
        %v1667 = vadd.f32 %v1665, %v1666
        %v1668 = vrot.slane %v1667, 1
        %v1669 = vadd.f32 %v1667, %v1668
        %v1670 = vadd.f32 %v1150, %v1152
        %v1671 = vrot.slane %v1670, 4
        %v1672 = vadd.f32 %v1670, %v1671
        %v1673 = vrot.slane %v1672, 2
        %v1674 = vadd.f32 %v1672, %v1673
        %v1675 = vrot.slane %v1674, 1
        %v1676 = vadd.f32 %v1674, %v1675
        %v1677 = vmul.f32 %v1473, %v1181
        %v1678 = vmul.f32 %v1475, %v1182
        %v1679 = vmul.f32 %v1479, %v1183
        %v1680 = vmul.f32 %v1481, %v1184
        %v1681 = vmul.f32 %v1485, %v1185
        %v1682 = vmul.f32 %v1487, %v1186
        %v1683 = vmul.f32 %v1491, %v1187
        %v1684 = vmul.f32 %v1493, %v1188
        %v1685 = vmul.f32 %v1497, %v1189
        %v1686 = vmul.f32 %v1499, %v1190
        %v1687 = vmul.f32 %v1503, %v1191
        %v1688 = vmul.f32 %v1505, %v1192
        %v1689 = vmul.f32 %v1509, %v1193
        %v1690 = vmul.f32 %v1511, %v1194
        %v1691 = vmul.f32 %v1515, %v1195
        %v1692 = vmul.f32 %v1517, %v1196
        %v1693 = vmul.f32 %v1521, %v1197
        %v1694 = vmul.f32 %v1523, %v1198
        %v1695 = vmul.f32 %v1527, %v1199
        %v1696 = vmul.f32 %v1529, %v1200
        %v1697 = vmul.f32 %v1533, %v1201
        %v1698 = vmul.f32 %v1535, %v1202
        %v1699 = vmul.f32 %v1539, %v1203
        %v1700 = vmul.f32 %v1541, %v1204
        %v1701 = vmul.f32 %v1545, %v1205
        %v1702 = vmul.f32 %v1547, %v1206
        %v1703 = vmul.f32 %v1551, %v1207
        %v1704 = vmul.f32 %v1553, %v1208
        %v1705 = vmul.f32 %v1557, %v1209
        %v1706 = vmul.f32 %v1559, %v1210
        %v1707 = vmul.f32 %v1563, %v1211
        %v1708 = vmul.f32 %v1565, %v1212
        %v1709 = vmul.f32 %v1569, %v1213
        %v1710 = vmul.f32 %v1571, %v1214
        %v1711 = vmul.f32 %v1575, %v1215
        %v1712 = vmul.f32 %v1577, %v1216
        %v1713 = vmul.f32 %v1581, %v1217
        %v1714 = vmul.f32 %v1583, %v1218
        %v1715 = vmul.f32 %v1587, %v1219
        %v1716 = vmul.f32 %v1589, %v1220
        %v1717 = vmul.f32 %v1593, %v1221
        %v1718 = vmul.f32 %v1595, %v1222
        %v1719 = vmul.f32 %v1599, %v1223
        %v1720 = vmul.f32 %v1601, %v1224
        %v1721 = vmul.f32 %v1605, %v1225
        %v1722 = vmul.f32 %v1607, %v1226
        %v1723 = vmul.f32 %v1611, %v1227
        %v1724 = vmul.f32 %v1613, %v1228
        %v1725 = vmul.f32 %v1617, %v1229
        %v1726 = vmul.f32 %v1619, %v1230
        %v1727 = vmul.f32 %v1623, %v1231
        %v1728 = vmul.f32 %v1625, %v1232
        %v1729 = vmul.f32 %v1629, %v1233
        %v1730 = vmul.f32 %v1631, %v1234
        %v1731 = vmul.f32 %v1635, %v1235
        %v1732 = vmul.f32 %v1637, %v1236
        %v1733 = vmul.f32 %v1641, %v1237
        %v1734 = vmul.f32 %v1643, %v1238
        %v1735 = vmul.f32 %v1647, %v1239
        %v1736 = vmul.f32 %v1649, %v1240
        %v1737 = vmul.f32 %v1653, %v1241
        %v1738 = vmul.f32 %v1655, %v1242
        %v1739 = vmul.f32 %v1659, %v1243
        %v1740 = vmul.f32 %v1661, %v1244
        %1741 = vmatprep.subr.mxu0 %v1678
        %1742 = vmatpush1.msra.mxu0 %v1677
        %1743 = vmatprep.subr.mxu0 %v1680
        %1744 = vmatpush1.msra.mxu0 %v1679
        %1745 = vmatprep.subr.mxu0 %v1682
        %1746 = vmatpush1.msra.mxu0 %v1681
        %1747 = vmatprep.subr.mxu0 %v1684
        %1748 = vmatpush1.msra.mxu0 %v1683
        %1749 = vmatprep.subr.mxu0 %v1686
        %1750 = vmatpush1.msra.mxu0 %v1685
        %1751 = vmatprep.subr.mxu0 %v1688
        %1752 = vmatpush1.msra.mxu0 %v1687
        %1753 = vmatprep.subr.mxu0 %v1690
        %1754 = vmatpush1.msra.mxu0 %v1689
        %1755 = vmatprep.subr.mxu0 %v1692
        %1756 = vmatpush1.msra.mxu0 %v1691
        %1757 = vmatprep.subr.mxu0 %v1694
        %1758 = vmatpush1.msra.mxu0 %v1693
        %1759 = vmatprep.subr.mxu0 %v1696
        %1760 = vmatpush1.msra.mxu0 %v1695
        %1761 = vmatprep.subr.mxu0 %v1698
        %1762 = vmatpush1.msra.mxu0 %v1697
        %1763 = vmatprep.subr.mxu0 %v1700
        %1764 = vmatpush1.msra.mxu0 %v1699
        %1765 = vmatprep.subr.mxu0 %v1702
        %1766 = vmatpush1.msra.mxu0 %v1701
        %1767 = vmatprep.subr.mxu0 %v1704
        %1768 = vmatpush1.msra.mxu0 %v1703
        %1769 = vmatprep.subr.mxu0 %v1706
        %1770 = vmatpush1.msra.mxu0 %v1705
        %1771 = vmatprep.subr.mxu0 %v1708
        %1772 = vmatpush1.msra.mxu0 %v1707
        %1773 = vmatprep.subr.mxu0 %v1710
        %1774 = vmatpush1.msra.mxu0 %v1709
        %1775 = vmatprep.subr.mxu0 %v1712
        %1776 = vmatpush1.msra.mxu0 %v1711
        %1777 = vmatprep.subr.mxu0 %v1714
        %1778 = vmatpush1.msra.mxu0 %v1713
        %1779 = vmatprep.subr.mxu0 %v1716
        %1780 = vmatpush1.msra.mxu0 %v1715
        %1781 = vmatprep.subr.mxu0 %v1718
        %1782 = vmatpush1.msra.mxu0 %v1717
        %1783 = vmatprep.subr.mxu0 %v1720
        %1784 = vmatpush1.msra.mxu0 %v1719
        %1785 = vmatprep.subr.mxu0 %v1722
        %1786 = vmatpush1.msra.mxu0 %v1721
        %1787 = vmatprep.subr.mxu0 %v1724
        %1788 = vmatpush1.msra.mxu0 %v1723
        %1789 = vmatprep.subr.mxu0 %v1726
        %1790 = vmatpush1.msra.mxu0 %v1725
        %1791 = vmatprep.subr.mxu0 %v1728
        %1792 = vmatpush1.msra.mxu0 %v1727
        %1793 = vmatprep.subr.mxu0 %v1730
        %1794 = vmatpush1.msra.mxu0 %v1729
        %1795 = vmatprep.subr.mxu0 %v1732
        %1796 = vmatpush1.msra.mxu0 %v1731
        %1797 = vmatprep.subr.mxu0 %v1734
        %1798 = vmatpush1.msra.mxu0 %v1733
        %1799 = vmatprep.subr.mxu0 %v1736
        %1800 = vmatpush1.msra.mxu0 %v1735
        %1801 = vmatprep.subr.mxu0 %v1738
        %1802 = vmatpush1.msra.mxu0 %v1737
        %1803 = vmatprep.subr.mxu0 %v1740
        %1804 = vmatpush1.msra.mxu0 %v1739
        %1805 = vmatprep.mubr.f32.mxu0 %v1118
        %1806 = vmatmul.mubr.f32.gmra.mrb[0].mxu0 %v1117
        %v1807 = vpop.f32.mrb[0].mxu0
        %v1808 = vadd.f32 0.0, %v1807
        %v1809 = vpop.f32.mrb[0].mxu0
        %v1810 = vadd.f32 0.0, %v1809
        %1811 = vmatprep.mubr.f32.mxu0 %v1120
        %1812 = vmatmul.mubr.f32.gmra.mrb[0].mxu0 %v1119
        %v1813 = vpop.f32.mrb[0].mxu0
        %v1814 = vadd.f32 0.0, %v1813
        %v1815 = vpop.f32.mrb[0].mxu0
        %v1816 = vadd.f32 0.0, %v1815
        %1817 = vdwg.mxu0
        %v1818 = vmul.f32 %v1117, %v1669
        %v1819 = vmul.f32 %v1118, %v1676
        %v1820 = vmul.f32 %v1119, %v1669
        %v1821 = vmul.f32 %v1120, %v1676
        %1822 = vmatprep.subr.mxu0 %v1182
        %1823 = vmatpush1.msra.mxu0 %v1181
        %1824 = vmatprep.subr.mxu0 %v1184
        %1825 = vmatpush1.msra.mxu0 %v1183
        %1826 = vmatprep.subr.mxu0 %v1186
        %1827 = vmatpush1.msra.mxu0 %v1185
        %1828 = vmatprep.subr.mxu0 %v1188
        %1829 = vmatpush1.msra.mxu0 %v1187
        %1830 = vmatprep.subr.mxu0 %v1190
        %1831 = vmatpush1.msra.mxu0 %v1189
        %1832 = vmatprep.subr.mxu0 %v1192
        %1833 = vmatpush1.msra.mxu0 %v1191
        %1834 = vmatprep.subr.mxu0 %v1194
        %1835 = vmatpush1.msra.mxu0 %v1193
        %1836 = vmatprep.subr.mxu0 %v1196
        %1837 = vmatpush1.msra.mxu0 %v1195
        %1838 = vmatprep.subr.mxu0 %v1198
        %1839 = vmatpush1.msra.mxu0 %v1197
        %1840 = vmatprep.subr.mxu0 %v1200
        %1841 = vmatpush1.msra.mxu0 %v1199
        %1842 = vmatprep.subr.mxu0 %v1202
        %1843 = vmatpush1.msra.mxu0 %v1201
        %1844 = vmatprep.subr.mxu0 %v1204
        %1845 = vmatpush1.msra.mxu0 %v1203
        %1846 = vmatprep.subr.mxu0 %v1206
        %1847 = vmatpush1.msra.mxu0 %v1205
        %1848 = vmatprep.subr.mxu0 %v1208
        %1849 = vmatpush1.msra.mxu0 %v1207
        %1850 = vmatprep.subr.mxu0 %v1210
        %1851 = vmatpush1.msra.mxu0 %v1209
        %1852 = vmatprep.subr.mxu0 %v1212
        %1853 = vmatpush1.msra.mxu0 %v1211
        %1854 = vmatprep.subr.mxu0 %v1214
        %1855 = vmatpush1.msra.mxu0 %v1213
        %1856 = vmatprep.subr.mxu0 %v1216
        %1857 = vmatpush1.msra.mxu0 %v1215
        %1858 = vmatprep.subr.mxu0 %v1218
        %1859 = vmatpush1.msra.mxu0 %v1217
        %1860 = vmatprep.subr.mxu0 %v1220
        %1861 = vmatpush1.msra.mxu0 %v1219
        %1862 = vmatprep.subr.mxu0 %v1222
        %1863 = vmatpush1.msra.mxu0 %v1221
        %1864 = vmatprep.subr.mxu0 %v1224
        %1865 = vmatpush1.msra.mxu0 %v1223
        %1866 = vmatprep.subr.mxu0 %v1226
        %1867 = vmatpush1.msra.mxu0 %v1225
        %1868 = vmatprep.subr.mxu0 %v1228
        %1869 = vmatpush1.msra.mxu0 %v1227
        %1870 = vmatprep.subr.mxu0 %v1230
        %1871 = vmatpush1.msra.mxu0 %v1229
        %1872 = vmatprep.subr.mxu0 %v1232
        %1873 = vmatpush1.msra.mxu0 %v1231
        %1874 = vmatprep.subr.mxu0 %v1234
        %1875 = vmatpush1.msra.mxu0 %v1233
        %1876 = vmatprep.subr.mxu0 %v1236
        %1877 = vmatpush1.msra.mxu0 %v1235
        %1878 = vmatprep.subr.mxu0 %v1238
        %1879 = vmatpush1.msra.mxu0 %v1237
        %1880 = vmatprep.subr.mxu0 %v1240
        %1881 = vmatpush1.msra.mxu0 %v1239
        %1882 = vmatprep.subr.mxu0 %v1242
        %1883 = vmatpush1.msra.mxu0 %v1241
        %1884 = vmatprep.subr.mxu0 %v1244
        %1885 = vmatpush1.msra.mxu0 %v1243
        %1886 = vmatprep.mubr.f32.mxu0 %v1819
        %1887 = vmatmul.mubr.f32.gmra.mrb[0].mxu0 %v1818
        %v1888 = vpop.f32.mrb[0].mxu0
        %v1889 = vadd.f32 1e-06, %v1888
        %v1890 = vpop.f32.mrb[0].mxu0
        %v1891 = vadd.f32 1e-06, %v1890
        %1892 = vmatprep.mubr.f32.mxu0 %v1821
        %1893 = vmatmul.mubr.f32.gmra.mrb[0].mxu0 %v1820
        %v1894 = vpop.f32.mrb[0].mxu0
        %v1895 = vadd.f32 1e-06, %v1894
        %v1896 = vpop.f32.mrb[0].mxu0
        %v1897 = vadd.f32 1e-06, %v1896
        %1898 = vdwg.mxu0
        %v1899 = vrcp.pop %v1889
        %v1900 = vmul.f32 %v1808, %v1899
        %v1901 = vrcp.pop %v1891
        %v1902 = vmul.f32 %v1810, %v1901
        %v1903 = vrcp.pop %v1895
        %v1904 = vmul.f32 %v1814, %v1903
        %v1905 = vrcp.pop %v1897
        %v1906 = vmul.f32 %v1816, %v1905
        %1907 = vst [vmem:[%s256] sm:$0xff] %v1900
        %1908 = vst [vmem:[%s256 + $0x8] sm:$0xff] %v1902
        %1909 = vst [vmem:[%s256 + $0x10] sm:$0xff] %v1904
        %1910 = vst [vmem:[%s256 + $0x18] sm:$0xff] %v1906
        %1911 = vxpose.xlu0.b32.start [1/16] %v1153, 128
        %1912 = vxpose.xlu0.b32.cont [2/16] %v1155, 128
        %1913 = vxpose.xlu0.b32.cont [3/16] 0.0, 128
        %1914 = vxpose.xlu0.b32.cont [4/16] 0.0, 128
        %1915 = vxpose.xlu0.b32.cont [5/16] 0.0, 128
        %1916 = vxpose.xlu0.b32.cont [6/16] 0.0, 128
        %1917 = vxpose.xlu0.b32.cont [7/16] 0.0, 128
        %1918 = vxpose.xlu0.b32.cont [8/16] 0.0, 128
        %1919 = vxpose.xlu0.b32.cont [9/16] 0.0, 128
        %1920 = vxpose.xlu0.b32.cont [10/16] 0.0, 128
        %1921 = vxpose.xlu0.b32.cont [11/16] 0.0, 128
        %1922 = vxpose.xlu0.b32.cont [12/16] 0.0, 128
        %1923 = vxpose.xlu0.b32.cont [13/16] 0.0, 128
        %1924 = vxpose.xlu0.b32.cont [14/16] 0.0, 128
        %1925 = vxpose.xlu0.b32.cont [15/16] 0.0, 128
        %1926 = vxpose.xlu0.b32.end [16/16] 0.0, 128
        %v1927 = vpop.trf.xlu0
        %v1928 = vpop.trf.xlu0
        %v1929 = vpop.trf.xlu0
        %v1930 = vpop.trf.xlu0
        %v1931 = vpop.trf.xlu0
        %v1932 = vpop.trf.xlu0
        %v1933 = vpop.trf.xlu0
        %v1934 = vpop.trf.xlu0
        %v1935 = vpop.trf.xlu0
        %v1936 = vpop.trf.xlu0
        %v1937 = vpop.trf.xlu0
        %v1938 = vpop.trf.xlu0
        %v1939 = vpop.trf.xlu0
        %v1940 = vpop.trf.xlu0
        %v1941 = vpop.trf.xlu0
        %v1942 = vpop.trf.xlu0
        %1943 = vxpose.xlu0.b32.start [1/16] %v1154, 128
        %1944 = vxpose.xlu0.b32.cont [2/16] %v1156, 128
        %1945 = vxpose.xlu0.b32.cont [3/16] 0.0, 128
        %1946 = vxpose.xlu0.b32.cont [4/16] 0.0, 128
        %1947 = vxpose.xlu0.b32.cont [5/16] 0.0, 128
        %1948 = vxpose.xlu0.b32.cont [6/16] 0.0, 128
        %1949 = vxpose.xlu0.b32.cont [7/16] 0.0, 128
        %1950 = vxpose.xlu0.b32.cont [8/16] 0.0, 128
        %1951 = vxpose.xlu0.b32.cont [9/16] 0.0, 128
        %1952 = vxpose.xlu0.b32.cont [10/16] 0.0, 128
        %1953 = vxpose.xlu0.b32.cont [11/16] 0.0, 128
        %1954 = vxpose.xlu0.b32.cont [12/16] 0.0, 128
        %1955 = vxpose.xlu0.b32.cont [13/16] 0.0, 128
        %1956 = vxpose.xlu0.b32.cont [14/16] 0.0, 128
        %1957 = vxpose.xlu0.b32.cont [15/16] 0.0, 128
        %1958 = vxpose.xlu0.b32.end [16/16] 0.0, 128
        %v1959 = vpop.trf.xlu0
        %v1960 = vpop.trf.xlu0
        %v1961 = vpop.trf.xlu0
        %v1962 = vpop.trf.xlu0
        %v1963 = vpop.trf.xlu0
        %v1964 = vpop.trf.xlu0
        %v1965 = vpop.trf.xlu0
        %v1966 = vpop.trf.xlu0
        %v1967 = vpop.trf.xlu0
        %v1968 = vpop.trf.xlu0
        %v1969 = vpop.trf.xlu0
        %v1970 = vpop.trf.xlu0
        %v1971 = vpop.trf.xlu0
        %v1972 = vpop.trf.xlu0
        %v1973 = vpop.trf.xlu0
        %v1974 = vpop.trf.xlu0
        %v1976 = vsel %vm1309, %v1927, 0
        %v1979 = vsel %vm1309, %v1928, 0
        %v1982 = vsel %vm1309, %v1929, 0
        %v1985 = vsel %vm1309, %v1930, 0
        %v1988 = vsel %vm1309, %v1931, 0
        %v1991 = vsel %vm1309, %v1932, 0
        %v1994 = vsel %vm1309, %v1933, 0
        %v1997 = vsel %vm1309, %v1934, 0
        %v2000 = vsel %vm1309, %v1935, 0
        %v2003 = vsel %vm1309, %v1936, 0
        %v2006 = vsel %vm1309, %v1937, 0
        %v2009 = vsel %vm1309, %v1938, 0
        %v2012 = vsel %vm1309, %v1939, 0
        %v2015 = vsel %vm1309, %v1940, 0
        %v2018 = vsel %vm1309, %v1941, 0
        %v2021 = vsel %vm1309, %v1942, 0
        %v2024 = vsel %vm1309, %v1959, 0
        %v2027 = vsel %vm1309, %v1960, 0
        %v2030 = vsel %vm1309, %v1961, 0
        %v2033 = vsel %vm1309, %v1962, 0
        %v2036 = vsel %vm1309, %v1963, 0
        %v2039 = vsel %vm1309, %v1964, 0
        %v2042 = vsel %vm1309, %v1965, 0
        %v2045 = vsel %vm1309, %v1966, 0
        %v2048 = vsel %vm1309, %v1967, 0
        %v2051 = vsel %vm1309, %v1968, 0
        %v2054 = vsel %vm1309, %v1969, 0
        %v2057 = vsel %vm1309, %v1970, 0
        %v2060 = vsel %vm1309, %v1971, 0
        %v2063 = vsel %vm1309, %v1972, 0
        %v2066 = vsel %vm1309, %v1973, 0
        %v2069 = vsel %vm1309, %v1974, 0
        %2071 = vmatprep.subr.mxu0 %v781
        %2072 = vmatpush1.msra.mxu0 %v779
        %2073 = vmatprep.subr.mxu0 %v787
        %2074 = vmatpush1.msra.mxu0 %v785
        %2075 = vmatprep.subr.mxu0 0.0
        %2076 = vmatpush1.msra.mxu0 0.0
        %2077 = vmatprep.subr.mxu0 0.0
        %2078 = vmatpush1.msra.mxu0 0.0
        %2079 = vmatprep.subr.mxu0 0.0
        %2080 = vmatpush1.msra.mxu0 0.0
        %2081 = vmatprep.subr.mxu0 0.0
        %2082 = vmatpush1.msra.mxu0 0.0
        %2083 = vmatprep.subr.mxu0 0.0
        %2084 = vmatpush1.msra.mxu0 0.0
        %2085 = vmatprep.subr.mxu0 0.0
        %2086 = vmatpush1.msra.mxu0 0.0
        %2087 = vmatprep.subr.mxu0 0.0
        %2088 = vmatpush1.msra.mxu0 0.0
        %2089 = vmatprep.subr.mxu0 0.0
        %2090 = vmatpush1.msra.mxu0 0.0
        %2091 = vmatprep.subr.mxu0 0.0
        %2092 = vmatpush1.msra.mxu0 0.0
        %2093 = vmatprep.subr.mxu0 0.0
        %2094 = vmatpush1.msra.mxu0 0.0
        %2095 = vmatprep.subr.mxu0 0.0
        %2096 = vmatpush1.msra.mxu0 0.0
        %2097 = vmatprep.subr.mxu0 0.0
        %2098 = vmatpush1.msra.mxu0 0.0
        %2099 = vmatprep.subr.mxu0 0.0
        %2100 = vmatpush1.msra.mxu0 0.0
        %2101 = vmatprep.subr.mxu0 0.0
        %2102 = vmatpush1.msra.mxu0 0.0
        %2103 = vmatprep.subr.mxu0 0.0
        %2104 = vmatpush1.msra.mxu0 0.0
        %2105 = vmatprep.subr.mxu0 0.0
        %2106 = vmatpush1.msra.mxu0 0.0
        %2107 = vmatprep.subr.mxu0 0.0
        %2108 = vmatpush1.msra.mxu0 0.0
        %2109 = vmatprep.subr.mxu0 0.0
        %2110 = vmatpush1.msra.mxu0 0.0
        %2111 = vmatprep.subr.mxu0 0.0
        %2112 = vmatpush1.msra.mxu0 0.0
        %2113 = vmatprep.subr.mxu0 0.0
        %2114 = vmatpush1.msra.mxu0 0.0
        %2115 = vmatprep.subr.mxu0 0.0
        %2116 = vmatpush1.msra.mxu0 0.0
        %2117 = vmatprep.subr.mxu0 0.0
        %2118 = vmatpush1.msra.mxu0 0.0
        %2119 = vmatprep.subr.mxu0 0.0
        %2120 = vmatpush1.msra.mxu0 0.0
        %2121 = vmatprep.subr.mxu0 0.0
        %2122 = vmatpush1.msra.mxu0 0.0
        %2123 = vmatprep.subr.mxu0 0.0
        %2124 = vmatpush1.msra.mxu0 0.0
        %2125 = vmatprep.subr.mxu0 0.0
        %2126 = vmatpush1.msra.mxu0 0.0
        %2127 = vmatprep.subr.mxu0 0.0
        %2128 = vmatpush1.msra.mxu0 0.0
        %2129 = vmatprep.subr.mxu0 0.0
        %2130 = vmatpush1.msra.mxu0 0.0
        %2131 = vmatprep.subr.mxu0 0.0
        %2132 = vmatpush1.msra.mxu0 0.0
        %2133 = vmatprep.subr.mxu0 0.0
        %2134 = vmatpush1.msra.mxu0 0.0
        %2135 = vmatprep.mubr.f32.mxu0 0.0
        %2136 = vmatmul.mubr.f32.gmra.mrb[0].mxu0 %v1976
        %v2137 = vpop.f32.mrb[0].mxu0
        %v2138 = vadd.f32 0.0, %v2137
        %v2139 = vpop.f32.mrb[0].mxu0
        %v2140 = vadd.f32 0.0, %v2139
        %2141 = vmatprep.mubr.f32.mxu0 0.0
        %2142 = vmatmul.mubr.f32.gmra.mrb[0].mxu0 %v1979
        %v2143 = vpop.f32.mrb[0].mxu0
        %v2144 = vadd.f32 0.0, %v2143
        %v2145 = vpop.f32.mrb[0].mxu0
        %v2146 = vadd.f32 0.0, %v2145
        %2147 = vmatprep.mubr.f32.mxu0 0.0
        %2148 = vmatmul.mubr.f32.gmra.mrb[0].mxu0 %v1982
        %v2149 = vpop.f32.mrb[0].mxu0
        %v2150 = vadd.f32 0.0, %v2149
        %v2151 = vpop.f32.mrb[0].mxu0
        %v2152 = vadd.f32 0.0, %v2151
        %2153 = vmatprep.mubr.f32.mxu0 0.0
        %2154 = vmatmul.mubr.f32.gmra.mrb[0].mxu0 %v1985
        %v2155 = vpop.f32.mrb[0].mxu0
        %v2156 = vadd.f32 0.0, %v2155
        %v2157 = vpop.f32.mrb[0].mxu0
        %v2158 = vadd.f32 0.0, %v2157
        %2159 = vmatprep.mubr.f32.mxu0 0.0
        %2160 = vmatmul.mubr.f32.gmra.mrb[0].mxu0 %v1988
        %v2161 = vpop.f32.mrb[0].mxu0
        %v2162 = vadd.f32 0.0, %v2161
        %v2163 = vpop.f32.mrb[0].mxu0
        %v2164 = vadd.f32 0.0, %v2163
        %2165 = vmatprep.mubr.f32.mxu0 0.0
        %2166 = vmatmul.mubr.f32.gmra.mrb[0].mxu0 %v1991
        %v2167 = vpop.f32.mrb[0].mxu0
        %v2168 = vadd.f32 0.0, %v2167
        %v2169 = vpop.f32.mrb[0].mxu0
        %v2170 = vadd.f32 0.0, %v2169
        %2171 = vmatprep.mubr.f32.mxu0 0.0
        %2172 = vmatmul.mubr.f32.gmra.mrb[0].mxu0 %v1994
        %v2173 = vpop.f32.mrb[0].mxu0
        %v2174 = vadd.f32 0.0, %v2173
        %v2175 = vpop.f32.mrb[0].mxu0
        %v2176 = vadd.f32 0.0, %v2175
        %2177 = vmatprep.mubr.f32.mxu0 0.0
        %2178 = vmatmul.mubr.f32.gmra.mrb[0].mxu0 %v1997
        %v2179 = vpop.f32.mrb[0].mxu0
        %v2180 = vadd.f32 0.0, %v2179
        %v2181 = vpop.f32.mrb[0].mxu0
        %v2182 = vadd.f32 0.0, %v2181
        %2183 = vmatprep.mubr.f32.mxu0 0.0
        %2184 = vmatmul.mubr.f32.gmra.mrb[0].mxu0 %v2000
        %v2185 = vpop.f32.mrb[0].mxu0
        %v2186 = vadd.f32 0.0, %v2185
        %v2187 = vpop.f32.mrb[0].mxu0
        %v2188 = vadd.f32 0.0, %v2187
        %2189 = vmatprep.mubr.f32.mxu0 0.0
        %2190 = vmatmul.mubr.f32.gmra.mrb[0].mxu0 %v2003
        %v2191 = vpop.f32.mrb[0].mxu0
        %v2192 = vadd.f32 0.0, %v2191
        %v2193 = vpop.f32.mrb[0].mxu0
        %v2194 = vadd.f32 0.0, %v2193
        %2195 = vmatprep.mubr.f32.mxu0 0.0
        %2196 = vmatmul.mubr.f32.gmra.mrb[0].mxu0 %v2006
        %v2197 = vpop.f32.mrb[0].mxu0
        %v2198 = vadd.f32 0.0, %v2197
        %v2199 = vpop.f32.mrb[0].mxu0
        %v2200 = vadd.f32 0.0, %v2199
        %2201 = vmatprep.mubr.f32.mxu0 0.0
        %2202 = vmatmul.mubr.f32.gmra.mrb[0].mxu0 %v2009
        %v2203 = vpop.f32.mrb[0].mxu0
        %v2204 = vadd.f32 0.0, %v2203
        %v2205 = vpop.f32.mrb[0].mxu0
        %v2206 = vadd.f32 0.0, %v2205
        %2207 = vmatprep.mubr.f32.mxu0 0.0
        %2208 = vmatmul.mubr.f32.gmra.mrb[0].mxu0 %v2012
        %v2209 = vpop.f32.mrb[0].mxu0
        %v2210 = vadd.f32 0.0, %v2209
        %v2211 = vpop.f32.mrb[0].mxu0
        %v2212 = vadd.f32 0.0, %v2211
        %2213 = vmatprep.mubr.f32.mxu0 0.0
        %2214 = vmatmul.mubr.f32.gmra.mrb[0].mxu0 %v2015
        %v2215 = vpop.f32.mrb[0].mxu0
        %v2216 = vadd.f32 0.0, %v2215
        %v2217 = vpop.f32.mrb[0].mxu0
        %v2218 = vadd.f32 0.0, %v2217
        %2219 = vmatprep.mubr.f32.mxu0 0.0
        %2220 = vmatmul.mubr.f32.gmra.mrb[0].mxu0 %v2018
        %v2221 = vpop.f32.mrb[0].mxu0
        %v2222 = vadd.f32 0.0, %v2221
        %v2223 = vpop.f32.mrb[0].mxu0
        %v2224 = vadd.f32 0.0, %v2223
        %2225 = vmatprep.mubr.f32.mxu0 0.0
        %2226 = vmatmul.mubr.f32.gmra.mrb[0].mxu0 %v2021
        %v2227 = vpop.f32.mrb[0].mxu0
        %v2228 = vadd.f32 0.0, %v2227
        %v2229 = vpop.f32.mrb[0].mxu0
        %v2230 = vadd.f32 0.0, %v2229
        %2231 = vmatprep.mubr.f32.mxu0 0.0
        %2232 = vmatmul.mubr.f32.gmra.mrb[0].mxu0 %v2024
        %v2233 = vpop.f32.mrb[0].mxu0
        %v2234 = vadd.f32 0.0, %v2233
        %v2235 = vpop.f32.mrb[0].mxu0
        %v2236 = vadd.f32 0.0, %v2235
        %2237 = vmatprep.mubr.f32.mxu0 0.0
        %2238 = vmatmul.mubr.f32.gmra.mrb[0].mxu0 %v2027
        %v2239 = vpop.f32.mrb[0].mxu0
        %v2240 = vadd.f32 0.0, %v2239
        %v2241 = vpop.f32.mrb[0].mxu0
        %v2242 = vadd.f32 0.0, %v2241
        %2243 = vmatprep.mubr.f32.mxu0 0.0
        %2244 = vmatmul.mubr.f32.gmra.mrb[0].mxu0 %v2030
        %v2245 = vpop.f32.mrb[0].mxu0
        %v2246 = vadd.f32 0.0, %v2245
        %v2247 = vpop.f32.mrb[0].mxu0
        %v2248 = vadd.f32 0.0, %v2247
        %2249 = vmatprep.mubr.f32.mxu0 0.0
        %2250 = vmatmul.mubr.f32.gmra.mrb[0].mxu0 %v2033
        %v2251 = vpop.f32.mrb[0].mxu0
        %v2252 = vadd.f32 0.0, %v2251
        %v2253 = vpop.f32.mrb[0].mxu0
        %v2254 = vadd.f32 0.0, %v2253
        %2255 = vmatprep.mubr.f32.mxu0 0.0
        %2256 = vmatmul.mubr.f32.gmra.mrb[0].mxu0 %v2036
        %v2257 = vpop.f32.mrb[0].mxu0
        %v2258 = vadd.f32 0.0, %v2257
        %v2259 = vpop.f32.mrb[0].mxu0
        %v2260 = vadd.f32 0.0, %v2259
        %2261 = vmatprep.mubr.f32.mxu0 0.0
        %2262 = vmatmul.mubr.f32.gmra.mrb[0].mxu0 %v2039
        %v2263 = vpop.f32.mrb[0].mxu0
        %v2264 = vadd.f32 0.0, %v2263
        %v2265 = vpop.f32.mrb[0].mxu0
        %v2266 = vadd.f32 0.0, %v2265
        %2267 = vmatprep.mubr.f32.mxu0 0.0
        %2268 = vmatmul.mubr.f32.gmra.mrb[0].mxu0 %v2042
        %v2269 = vpop.f32.mrb[0].mxu0
        %v2270 = vadd.f32 0.0, %v2269
        %v2271 = vpop.f32.mrb[0].mxu0
        %v2272 = vadd.f32 0.0, %v2271
        %2273 = vmatprep.mubr.f32.mxu0 0.0
        %2274 = vmatmul.mubr.f32.gmra.mrb[0].mxu0 %v2045
        %v2275 = vpop.f32.mrb[0].mxu0
        %v2276 = vadd.f32 0.0, %v2275
        %v2277 = vpop.f32.mrb[0].mxu0
        %v2278 = vadd.f32 0.0, %v2277
        %2279 = vmatprep.mubr.f32.mxu0 0.0
        %2280 = vmatmul.mubr.f32.gmra.mrb[0].mxu0 %v2048
        %v2281 = vpop.f32.mrb[0].mxu0
        %v2282 = vadd.f32 0.0, %v2281
        %v2283 = vpop.f32.mrb[0].mxu0
        %v2284 = vadd.f32 0.0, %v2283
        %2285 = vmatprep.mubr.f32.mxu0 0.0
        %2286 = vmatmul.mubr.f32.gmra.mrb[0].mxu0 %v2051
        %v2287 = vpop.f32.mrb[0].mxu0
        %v2288 = vadd.f32 0.0, %v2287
        %v2289 = vpop.f32.mrb[0].mxu0
        %v2290 = vadd.f32 0.0, %v2289
        %2291 = vmatprep.mubr.f32.mxu0 0.0
        %2292 = vmatmul.mubr.f32.gmra.mrb[0].mxu0 %v2054
        %v2293 = vpop.f32.mrb[0].mxu0
        %v2294 = vadd.f32 0.0, %v2293
        %v2295 = vpop.f32.mrb[0].mxu0
        %v2296 = vadd.f32 0.0, %v2295
        %2297 = vmatprep.mubr.f32.mxu0 0.0
        %2298 = vmatmul.mubr.f32.gmra.mrb[0].mxu0 %v2057
        %v2299 = vpop.f32.mrb[0].mxu0
        %v2300 = vadd.f32 0.0, %v2299
        %v2301 = vpop.f32.mrb[0].mxu0
        %v2302 = vadd.f32 0.0, %v2301
        %2303 = vmatprep.mubr.f32.mxu0 0.0
        %2304 = vmatmul.mubr.f32.gmra.mrb[0].mxu0 %v2060
        %v2305 = vpop.f32.mrb[0].mxu0
        %v2306 = vadd.f32 0.0, %v2305
        %v2307 = vpop.f32.mrb[0].mxu0
        %v2308 = vadd.f32 0.0, %v2307
        %2309 = vmatprep.mubr.f32.mxu0 0.0
        %2310 = vmatmul.mubr.f32.gmra.mrb[0].mxu0 %v2063
        %v2311 = vpop.f32.mrb[0].mxu0
        %v2312 = vadd.f32 0.0, %v2311
        %v2313 = vpop.f32.mrb[0].mxu0
        %v2314 = vadd.f32 0.0, %v2313
        %2315 = vmatprep.mubr.f32.mxu0 0.0
        %2316 = vmatmul.mubr.f32.gmra.mrb[0].mxu0 %v2066
        %v2317 = vpop.f32.mrb[0].mxu0
        %v2318 = vadd.f32 0.0, %v2317
        %v2319 = vpop.f32.mrb[0].mxu0
        %v2320 = vadd.f32 0.0, %v2319
        %2321 = vmatprep.mubr.f32.mxu0 0.0
        %2322 = vmatmul.mubr.f32.gmra.mrb[0].mxu0 %v2069
        %v2323 = vpop.f32.mrb[0].mxu0
        %v2324 = vadd.f32 0.0, %v2323
        %v2325 = vpop.f32.mrb[0].mxu0
        %v2326 = vadd.f32 0.0, %v2325
        %2327 = vdwg.mxu0
        %v2328 = vadd.f32 %v1153, %v1155
        %v2329 = vrot.slane %v2328, 4
        %v2330 = vadd.f32 %v2328, %v2329
        %v2331 = vrot.slane %v2330, 2
        %v2332 = vadd.f32 %v2330, %v2331
        %v2333 = vrot.slane %v2332, 1
        %v2334 = vadd.f32 %v2332, %v2333
        %v2335 = vadd.f32 %v1154, %v1156
        %v2336 = vrot.slane %v2335, 4
        %v2337 = vadd.f32 %v2335, %v2336
        %v2338 = vrot.slane %v2337, 2
        %v2339 = vadd.f32 %v2337, %v2338
        %v2340 = vrot.slane %v2339, 1
        %v2341 = vadd.f32 %v2339, %v2340
        %v2342 = vmul.f32 %v2138, %v1181
        %v2343 = vmul.f32 %v2140, %v1182
        %v2344 = vmul.f32 %v2144, %v1183
        %v2345 = vmul.f32 %v2146, %v1184
        %v2346 = vmul.f32 %v2150, %v1185
        %v2347 = vmul.f32 %v2152, %v1186
        %v2348 = vmul.f32 %v2156, %v1187
        %v2349 = vmul.f32 %v2158, %v1188
        %v2350 = vmul.f32 %v2162, %v1189
        %v2351 = vmul.f32 %v2164, %v1190
        %v2352 = vmul.f32 %v2168, %v1191
        %v2353 = vmul.f32 %v2170, %v1192
        %v2354 = vmul.f32 %v2174, %v1193
        %v2355 = vmul.f32 %v2176, %v1194
        %v2356 = vmul.f32 %v2180, %v1195
        %v2357 = vmul.f32 %v2182, %v1196
        %v2358 = vmul.f32 %v2186, %v1197
        %v2359 = vmul.f32 %v2188, %v1198
        %v2360 = vmul.f32 %v2192, %v1199
        %v2361 = vmul.f32 %v2194, %v1200
        %v2362 = vmul.f32 %v2198, %v1201
        %v2363 = vmul.f32 %v2200, %v1202
        %v2364 = vmul.f32 %v2204, %v1203
        %v2365 = vmul.f32 %v2206, %v1204
        %v2366 = vmul.f32 %v2210, %v1205
        %v2367 = vmul.f32 %v2212, %v1206
        %v2368 = vmul.f32 %v2216, %v1207
        %v2369 = vmul.f32 %v2218, %v1208
        %v2370 = vmul.f32 %v2222, %v1209
        %v2371 = vmul.f32 %v2224, %v1210
        %v2372 = vmul.f32 %v2228, %v1211
        %v2373 = vmul.f32 %v2230, %v1212
        %v2374 = vmul.f32 %v2234, %v1213
        %v2375 = vmul.f32 %v2236, %v1214
        %v2376 = vmul.f32 %v2240, %v1215
        %v2377 = vmul.f32 %v2242, %v1216
        %v2378 = vmul.f32 %v2246, %v1217
        %v2379 = vmul.f32 %v2248, %v1218
        %v2380 = vmul.f32 %v2252, %v1219
        %v2381 = vmul.f32 %v2254, %v1220
        %v2382 = vmul.f32 %v2258, %v1221
        %v2383 = vmul.f32 %v2260, %v1222
        %v2384 = vmul.f32 %v2264, %v1223
        %v2385 = vmul.f32 %v2266, %v1224
        %v2386 = vmul.f32 %v2270, %v1225
        %v2387 = vmul.f32 %v2272, %v1226
        %v2388 = vmul.f32 %v2276, %v1227
        %v2389 = vmul.f32 %v2278, %v1228
        %v2390 = vmul.f32 %v2282, %v1229
        %v2391 = vmul.f32 %v2284, %v1230
        %v2392 = vmul.f32 %v2288, %v1231
        %v2393 = vmul.f32 %v2290, %v1232
        %v2394 = vmul.f32 %v2294, %v1233
        %v2395 = vmul.f32 %v2296, %v1234
        %v2396 = vmul.f32 %v2300, %v1235
        %v2397 = vmul.f32 %v2302, %v1236
        %v2398 = vmul.f32 %v2306, %v1237
        %v2399 = vmul.f32 %v2308, %v1238
        %v2400 = vmul.f32 %v2312, %v1239
        %v2401 = vmul.f32 %v2314, %v1240
        %v2402 = vmul.f32 %v2318, %v1241
        %v2403 = vmul.f32 %v2320, %v1242
        %v2404 = vmul.f32 %v2324, %v1243
        %v2405 = vmul.f32 %v2326, %v1244
        %2406 = vmatprep.subr.mxu0 %v2343
        %2407 = vmatpush1.msra.mxu0 %v2342
        %2408 = vmatprep.subr.mxu0 %v2345
        %2409 = vmatpush1.msra.mxu0 %v2344
        %2410 = vmatprep.subr.mxu0 %v2347
        %2411 = vmatpush1.msra.mxu0 %v2346
        %2412 = vmatprep.subr.mxu0 %v2349
        %2413 = vmatpush1.msra.mxu0 %v2348
        %2414 = vmatprep.subr.mxu0 %v2351
        %2415 = vmatpush1.msra.mxu0 %v2350
        %2416 = vmatprep.subr.mxu0 %v2353
        %2417 = vmatpush1.msra.mxu0 %v2352
        %2418 = vmatprep.subr.mxu0 %v2355
        %2419 = vmatpush1.msra.mxu0 %v2354
        %2420 = vmatprep.subr.mxu0 %v2357
        %2421 = vmatpush1.msra.mxu0 %v2356
        %2422 = vmatprep.subr.mxu0 %v2359
        %2423 = vmatpush1.msra.mxu0 %v2358
        %2424 = vmatprep.subr.mxu0 %v2361
        %2425 = vmatpush1.msra.mxu0 %v2360
        %2426 = vmatprep.subr.mxu0 %v2363
        %2427 = vmatpush1.msra.mxu0 %v2362
        %2428 = vmatprep.subr.mxu0 %v2365
        %2429 = vmatpush1.msra.mxu0 %v2364
        %2430 = vmatprep.subr.mxu0 %v2367
        %2431 = vmatpush1.msra.mxu0 %v2366
        %2432 = vmatprep.subr.mxu0 %v2369
        %2433 = vmatpush1.msra.mxu0 %v2368
        %2434 = vmatprep.subr.mxu0 %v2371
        %2435 = vmatpush1.msra.mxu0 %v2370
        %2436 = vmatprep.subr.mxu0 %v2373
        %2437 = vmatpush1.msra.mxu0 %v2372
        %2438 = vmatprep.subr.mxu0 %v2375
        %2439 = vmatpush1.msra.mxu0 %v2374
        %2440 = vmatprep.subr.mxu0 %v2377
        %2441 = vmatpush1.msra.mxu0 %v2376
        %2442 = vmatprep.subr.mxu0 %v2379
        %2443 = vmatpush1.msra.mxu0 %v2378
        %2444 = vmatprep.subr.mxu0 %v2381
        %2445 = vmatpush1.msra.mxu0 %v2380
        %2446 = vmatprep.subr.mxu0 %v2383
        %2447 = vmatpush1.msra.mxu0 %v2382
        %2448 = vmatprep.subr.mxu0 %v2385
        %2449 = vmatpush1.msra.mxu0 %v2384
        %2450 = vmatprep.subr.mxu0 %v2387
        %2451 = vmatpush1.msra.mxu0 %v2386
        %2452 = vmatprep.subr.mxu0 %v2389
        %2453 = vmatpush1.msra.mxu0 %v2388
        %2454 = vmatprep.subr.mxu0 %v2391
        %2455 = vmatpush1.msra.mxu0 %v2390
        %2456 = vmatprep.subr.mxu0 %v2393
        %2457 = vmatpush1.msra.mxu0 %v2392
        %2458 = vmatprep.subr.mxu0 %v2395
        %2459 = vmatpush1.msra.mxu0 %v2394
        %2460 = vmatprep.subr.mxu0 %v2397
        %2461 = vmatpush1.msra.mxu0 %v2396
        %2462 = vmatprep.subr.mxu0 %v2399
        %2463 = vmatpush1.msra.mxu0 %v2398
        %2464 = vmatprep.subr.mxu0 %v2401
        %2465 = vmatpush1.msra.mxu0 %v2400
        %2466 = vmatprep.subr.mxu0 %v2403
        %2467 = vmatpush1.msra.mxu0 %v2402
        %2468 = vmatprep.subr.mxu0 %v2405
        %2469 = vmatpush1.msra.mxu0 %v2404
        %2470 = vmatprep.mubr.f32.mxu0 %v1122
        %2471 = vmatmul.mubr.f32.gmra.mrb[0].mxu0 %v1121
        %v2472 = vpop.f32.mrb[0].mxu0
        %v2473 = vadd.f32 0.0, %v2472
        %v2474 = vpop.f32.mrb[0].mxu0
        %v2475 = vadd.f32 0.0, %v2474
        %2476 = vmatprep.mubr.f32.mxu0 %v1124
        %2477 = vmatmul.mubr.f32.gmra.mrb[0].mxu0 %v1123
        %v2478 = vpop.f32.mrb[0].mxu0
        %v2479 = vadd.f32 0.0, %v2478
        %v2480 = vpop.f32.mrb[0].mxu0
        %v2481 = vadd.f32 0.0, %v2480
        %2482 = vdwg.mxu0
        %v2483 = vmul.f32 %v1121, %v2334
        %v2484 = vmul.f32 %v1122, %v2341
        %v2485 = vmul.f32 %v1123, %v2334
        %v2486 = vmul.f32 %v1124, %v2341
        %2487 = vmatprep.subr.mxu0 %v1182
        %2488 = vmatpush1.msra.mxu0 %v1181
        %2489 = vmatprep.subr.mxu0 %v1184
        %2490 = vmatpush1.msra.mxu0 %v1183
        %2491 = vmatprep.subr.mxu0 %v1186
        %2492 = vmatpush1.msra.mxu0 %v1185
        %2493 = vmatprep.subr.mxu0 %v1188
        %2494 = vmatpush1.msra.mxu0 %v1187
        %2495 = vmatprep.subr.mxu0 %v1190
        %2496 = vmatpush1.msra.mxu0 %v1189
        %2497 = vmatprep.subr.mxu0 %v1192
        %2498 = vmatpush1.msra.mxu0 %v1191
        %2499 = vmatprep.subr.mxu0 %v1194
        %2500 = vmatpush1.msra.mxu0 %v1193
        %2501 = vmatprep.subr.mxu0 %v1196
        %2502 = vmatpush1.msra.mxu0 %v1195
        %2503 = vmatprep.subr.mxu0 %v1198
        %2504 = vmatpush1.msra.mxu0 %v1197
        %2505 = vmatprep.subr.mxu0 %v1200
        %2506 = vmatpush1.msra.mxu0 %v1199
        %2507 = vmatprep.subr.mxu0 %v1202
        %2508 = vmatpush1.msra.mxu0 %v1201
        %2509 = vmatprep.subr.mxu0 %v1204
        %2510 = vmatpush1.msra.mxu0 %v1203
        %2511 = vmatprep.subr.mxu0 %v1206
        %2512 = vmatpush1.msra.mxu0 %v1205
        %2513 = vmatprep.subr.mxu0 %v1208
        %2514 = vmatpush1.msra.mxu0 %v1207
        %2515 = vmatprep.subr.mxu0 %v1210
        %2516 = vmatpush1.msra.mxu0 %v1209
        %2517 = vmatprep.subr.mxu0 %v1212
        %2518 = vmatpush1.msra.mxu0 %v1211
        %2519 = vmatprep.subr.mxu0 %v1214
        %2520 = vmatpush1.msra.mxu0 %v1213
        %2521 = vmatprep.subr.mxu0 %v1216
        %2522 = vmatpush1.msra.mxu0 %v1215
        %2523 = vmatprep.subr.mxu0 %v1218
        %2524 = vmatpush1.msra.mxu0 %v1217
        %2525 = vmatprep.subr.mxu0 %v1220
        %2526 = vmatpush1.msra.mxu0 %v1219
        %2527 = vmatprep.subr.mxu0 %v1222
        %2528 = vmatpush1.msra.mxu0 %v1221
        %2529 = vmatprep.subr.mxu0 %v1224
        %2530 = vmatpush1.msra.mxu0 %v1223
        %2531 = vmatprep.subr.mxu0 %v1226
        %2532 = vmatpush1.msra.mxu0 %v1225
        %2533 = vmatprep.subr.mxu0 %v1228
        %2534 = vmatpush1.msra.mxu0 %v1227
        %2535 = vmatprep.subr.mxu0 %v1230
        %2536 = vmatpush1.msra.mxu0 %v1229
        %2537 = vmatprep.subr.mxu0 %v1232
        %2538 = vmatpush1.msra.mxu0 %v1231
        %2539 = vmatprep.subr.mxu0 %v1234
        %2540 = vmatpush1.msra.mxu0 %v1233
        %2541 = vmatprep.subr.mxu0 %v1236
        %2542 = vmatpush1.msra.mxu0 %v1235
        %2543 = vmatprep.subr.mxu0 %v1238
        %2544 = vmatpush1.msra.mxu0 %v1237
        %2545 = vmatprep.subr.mxu0 %v1240
        %2546 = vmatpush1.msra.mxu0 %v1239
        %2547 = vmatprep.subr.mxu0 %v1242
        %2548 = vmatpush1.msra.mxu0 %v1241
        %2549 = vmatprep.subr.mxu0 %v1244
        %2550 = vmatpush1.msra.mxu0 %v1243
        %2551 = vmatprep.mubr.f32.mxu0 %v2484
        %2552 = vmatmul.mubr.f32.gmra.mrb[0].mxu0 %v2483
        %v2553 = vpop.f32.mrb[0].mxu0
        %v2554 = vadd.f32 1e-06, %v2553
        %v2555 = vpop.f32.mrb[0].mxu0
        %v2556 = vadd.f32 1e-06, %v2555
        %2557 = vmatprep.mubr.f32.mxu0 %v2486
        %2558 = vmatmul.mubr.f32.gmra.mrb[0].mxu0 %v2485
        %v2559 = vpop.f32.mrb[0].mxu0
        %v2560 = vadd.f32 1e-06, %v2559
        %v2561 = vpop.f32.mrb[0].mxu0
        %v2562 = vadd.f32 1e-06, %v2561
        %2563 = vdwg.mxu0
        %v2564 = vrcp.pop %v2554
        %v2565 = vmul.f32 %v2473, %v2564
        %v2566 = vrcp.pop %v2556
        %v2567 = vmul.f32 %v2475, %v2566
        %v2568 = vrcp.pop %v2560
        %v2569 = vmul.f32 %v2479, %v2568
        %v2570 = vrcp.pop %v2562
        %v2571 = vmul.f32 %v2481, %v2570
        %s2572 = scalar_lea.vmem %s256, 32 [#allocation3]
        %2573 = vst [vmem:[%s2572] sm:$0xff] %v2565
        %2574 = vst [vmem:[%s2572 + $0x8] sm:$0xff] %v2567
        %2575 = vst [vmem:[%s2572 + $0x10] sm:$0xff] %v2569
        %2576 = vst [vmem:[%s2572 + $0x18] sm:$0xff] %v2571
        %2577 = vxpose.xlu0.b32.start [1/16] %v1157, 128
        %2578 = vxpose.xlu0.b32.cont [2/16] %v1159, 128
        %2579 = vxpose.xlu0.b32.cont [3/16] 0.0, 128
        %2580 = vxpose.xlu0.b32.cont [4/16] 0.0, 128
        %2581 = vxpose.xlu0.b32.cont [5/16] 0.0, 128
        %2582 = vxpose.xlu0.b32.cont [6/16] 0.0, 128
        %2583 = vxpose.xlu0.b32.cont [7/16] 0.0, 128
        %2584 = vxpose.xlu0.b32.cont [8/16] 0.0, 128
        %2585 = vxpose.xlu0.b32.cont [9/16] 0.0, 128
        %2586 = vxpose.xlu0.b32.cont [10/16] 0.0, 128
        %2587 = vxpose.xlu0.b32.cont [11/16] 0.0, 128
        %2588 = vxpose.xlu0.b32.cont [12/16] 0.0, 128
        %2589 = vxpose.xlu0.b32.cont [13/16] 0.0, 128
        %2590 = vxpose.xlu0.b32.cont [14/16] 0.0, 128
        %2591 = vxpose.xlu0.b32.cont [15/16] 0.0, 128
        %2592 = vxpose.xlu0.b32.end [16/16] 0.0, 128
        %v2593 = vpop.trf.xlu0
        %v2594 = vpop.trf.xlu0
        %v2595 = vpop.trf.xlu0
        %v2596 = vpop.trf.xlu0
        %v2597 = vpop.trf.xlu0
        %v2598 = vpop.trf.xlu0
        %v2599 = vpop.trf.xlu0
        %v2600 = vpop.trf.xlu0
        %v2601 = vpop.trf.xlu0
        %v2602 = vpop.trf.xlu0
        %v2603 = vpop.trf.xlu0
        %v2604 = vpop.trf.xlu0
        %v2605 = vpop.trf.xlu0
        %v2606 = vpop.trf.xlu0
        %v2607 = vpop.trf.xlu0
        %v2608 = vpop.trf.xlu0
        %2609 = vxpose.xlu0.b32.start [1/16] %v1158, 128
        %2610 = vxpose.xlu0.b32.cont [2/16] %v1160, 128
        %2611 = vxpose.xlu0.b32.cont [3/16] 0.0, 128
        %2612 = vxpose.xlu0.b32.cont [4/16] 0.0, 128
        %2613 = vxpose.xlu0.b32.cont [5/16] 0.0, 128
        %2614 = vxpose.xlu0.b32.cont [6/16] 0.0, 128
        %2615 = vxpose.xlu0.b32.cont [7/16] 0.0, 128
        %2616 = vxpose.xlu0.b32.cont [8/16] 0.0, 128
        %2617 = vxpose.xlu0.b32.cont [9/16] 0.0, 128
        %2618 = vxpose.xlu0.b32.cont [10/16] 0.0, 128
        %2619 = vxpose.xlu0.b32.cont [11/16] 0.0, 128
        %2620 = vxpose.xlu0.b32.cont [12/16] 0.0, 128
        %2621 = vxpose.xlu0.b32.cont [13/16] 0.0, 128
        %2622 = vxpose.xlu0.b32.cont [14/16] 0.0, 128
        %2623 = vxpose.xlu0.b32.cont [15/16] 0.0, 128
        %2624 = vxpose.xlu0.b32.end [16/16] 0.0, 128
        %v2625 = vpop.trf.xlu0
        %v2626 = vpop.trf.xlu0
        %v2627 = vpop.trf.xlu0
        %v2628 = vpop.trf.xlu0
        %v2629 = vpop.trf.xlu0
        %v2630 = vpop.trf.xlu0
        %v2631 = vpop.trf.xlu0
        %v2632 = vpop.trf.xlu0
        %v2633 = vpop.trf.xlu0
        %v2634 = vpop.trf.xlu0
        %v2635 = vpop.trf.xlu0
        %v2636 = vpop.trf.xlu0
        %v2637 = vpop.trf.xlu0
        %v2638 = vpop.trf.xlu0
        %v2639 = vpop.trf.xlu0
        %v2640 = vpop.trf.xlu0
        %v2642 = vsel %vm1309, %v2593, 0
        %v2645 = vsel %vm1309, %v2594, 0
        %v2648 = vsel %vm1309, %v2595, 0
        %v2651 = vsel %vm1309, %v2596, 0
        %v2654 = vsel %vm1309, %v2597, 0
        %v2657 = vsel %vm1309, %v2598, 0
        %v2660 = vsel %vm1309, %v2599, 0
        %v2663 = vsel %vm1309, %v2600, 0
        %v2666 = vsel %vm1309, %v2601, 0
        %v2669 = vsel %vm1309, %v2602, 0
        %v2672 = vsel %vm1309, %v2603, 0
        %v2675 = vsel %vm1309, %v2604, 0
        %v2678 = vsel %vm1309, %v2605, 0
        %v2681 = vsel %vm1309, %v2606, 0
        %v2684 = vsel %vm1309, %v2607, 0
        %v2687 = vsel %vm1309, %v2608, 0
        %v2690 = vsel %vm1309, %v2625, 0
        %v2693 = vsel %vm1309, %v2626, 0
        %v2696 = vsel %vm1309, %v2627, 0
        %v2699 = vsel %vm1309, %v2628, 0
        %v2702 = vsel %vm1309, %v2629, 0
        %v2705 = vsel %vm1309, %v2630, 0
        %v2708 = vsel %vm1309, %v2631, 0
        %v2711 = vsel %vm1309, %v2632, 0
        %v2714 = vsel %vm1309, %v2633, 0
        %v2717 = vsel %vm1309, %v2634, 0
        %v2720 = vsel %vm1309, %v2635, 0
        %v2723 = vsel %vm1309, %v2636, 0
        %v2726 = vsel %vm1309, %v2637, 0
        %v2729 = vsel %vm1309, %v2638, 0
        %v2732 = vsel %vm1309, %v2639, 0
        %v2735 = vsel %vm1309, %v2640, 0
        %2737 = vmatprep.subr.mxu0 %v793
        %2738 = vmatpush1.msra.mxu0 %v791
        %2739 = vmatprep.subr.mxu0 %v799
        %2740 = vmatpush1.msra.mxu0 %v797
        %2741 = vmatprep.subr.mxu0 0.0
        %2742 = vmatpush1.msra.mxu0 0.0
        %2743 = vmatprep.subr.mxu0 0.0
        %2744 = vmatpush1.msra.mxu0 0.0
        %2745 = vmatprep.subr.mxu0 0.0
        %2746 = vmatpush1.msra.mxu0 0.0
        %2747 = vmatprep.subr.mxu0 0.0
        %2748 = vmatpush1.msra.mxu0 0.0
        %2749 = vmatprep.subr.mxu0 0.0
        %2750 = vmatpush1.msra.mxu0 0.0
        %2751 = vmatprep.subr.mxu0 0.0
        %2752 = vmatpush1.msra.mxu0 0.0
        %2753 = vmatprep.subr.mxu0 0.0
        %2754 = vmatpush1.msra.mxu0 0.0
        %2755 = vmatprep.subr.mxu0 0.0
        %2756 = vmatpush1.msra.mxu0 0.0
        %2757 = vmatprep.subr.mxu0 0.0
        %2758 = vmatpush1.msra.mxu0 0.0
        %2759 = vmatprep.subr.mxu0 0.0
        %2760 = vmatpush1.msra.mxu0 0.0
        %2761 = vmatprep.subr.mxu0 0.0
        %2762 = vmatpush1.msra.mxu0 0.0
        %2763 = vmatprep.subr.mxu0 0.0
        %2764 = vmatpush1.msra.mxu0 0.0
        %2765 = vmatprep.subr.mxu0 0.0
        %2766 = vmatpush1.msra.mxu0 0.0
        %2767 = vmatprep.subr.mxu0 0.0
        %2768 = vmatpush1.msra.mxu0 0.0
        %2769 = vmatprep.subr.mxu0 0.0
        %2770 = vmatpush1.msra.mxu0 0.0
        %2771 = vmatprep.subr.mxu0 0.0
        %2772 = vmatpush1.msra.mxu0 0.0
        %2773 = vmatprep.subr.mxu0 0.0
        %2774 = vmatpush1.msra.mxu0 0.0
        %2775 = vmatprep.subr.mxu0 0.0
        %2776 = vmatpush1.msra.mxu0 0.0
        %2777 = vmatprep.subr.mxu0 0.0
        %2778 = vmatpush1.msra.mxu0 0.0
        %2779 = vmatprep.subr.mxu0 0.0
        %2780 = vmatpush1.msra.mxu0 0.0
        %2781 = vmatprep.subr.mxu0 0.0
        %2782 = vmatpush1.msra.mxu0 0.0
        %2783 = vmatprep.subr.mxu0 0.0
        %2784 = vmatpush1.msra.mxu0 0.0
        %2785 = vmatprep.subr.mxu0 0.0
        %2786 = vmatpush1.msra.mxu0 0.0
        %2787 = vmatprep.subr.mxu0 0.0
        %2788 = vmatpush1.msra.mxu0 0.0
        %2789 = vmatprep.subr.mxu0 0.0
        %2790 = vmatpush1.msra.mxu0 0.0
        %2791 = vmatprep.subr.mxu0 0.0
        %2792 = vmatpush1.msra.mxu0 0.0
        %2793 = vmatprep.subr.mxu0 0.0
        %2794 = vmatpush1.msra.mxu0 0.0
        %2795 = vmatprep.subr.mxu0 0.0
        %2796 = vmatpush1.msra.mxu0 0.0
        %2797 = vmatprep.subr.mxu0 0.0
        %2798 = vmatpush1.msra.mxu0 0.0
        %2799 = vmatprep.subr.mxu0 0.0
        %2800 = vmatpush1.msra.mxu0 0.0
        %2801 = vmatprep.mubr.f32.mxu0 0.0
        %2802 = vmatmul.mubr.f32.gmra.mrb[0].mxu0 %v2642
        %v2803 = vpop.f32.mrb[0].mxu0
        %v2804 = vadd.f32 0.0, %v2803
        %v2805 = vpop.f32.mrb[0].mxu0
        %v2806 = vadd.f32 0.0, %v2805
        %2807 = vmatprep.mubr.f32.mxu0 0.0
        %2808 = vmatmul.mubr.f32.gmra.mrb[0].mxu0 %v2645
        %v2809 = vpop.f32.mrb[0].mxu0
        %v2810 = vadd.f32 0.0, %v2809
        %v2811 = vpop.f32.mrb[0].mxu0
        %v2812 = vadd.f32 0.0, %v2811
        %2813 = vmatprep.mubr.f32.mxu0 0.0
        %2814 = vmatmul.mubr.f32.gmra.mrb[0].mxu0 %v2648
        %v2815 = vpop.f32.mrb[0].mxu0
        %v2816 = vadd.f32 0.0, %v2815
        %v2817 = vpop.f32.mrb[0].mxu0
        %v2818 = vadd.f32 0.0, %v2817
        %2819 = vmatprep.mubr.f32.mxu0 0.0
        %2820 = vmatmul.mubr.f32.gmra.mrb[0].mxu0 %v2651
        %v2821 = vpop.f32.mrb[0].mxu0
        %v2822 = vadd.f32 0.0, %v2821
        %v2823 = vpop.f32.mrb[0].mxu0
        %v2824 = vadd.f32 0.0, %v2823
        %2825 = vmatprep.mubr.f32.mxu0 0.0
        %2826 = vmatmul.mubr.f32.gmra.mrb[0].mxu0 %v2654
        %v2827 = vpop.f32.mrb[0].mxu0
        %v2828 = vadd.f32 0.0, %v2827
        %v2829 = vpop.f32.mrb[0].mxu0
        %v2830 = vadd.f32 0.0, %v2829
        %2831 = vmatprep.mubr.f32.mxu0 0.0
        %2832 = vmatmul.mubr.f32.gmra.mrb[0].mxu0 %v2657
        %v2833 = vpop.f32.mrb[0].mxu0
        %v2834 = vadd.f32 0.0, %v2833
        %v2835 = vpop.f32.mrb[0].mxu0
        %v2836 = vadd.f32 0.0, %v2835
        %2837 = vmatprep.mubr.f32.mxu0 0.0
        %2838 = vmatmul.mubr.f32.gmra.mrb[0].mxu0 %v2660
        %v2839 = vpop.f32.mrb[0].mxu0
        %v2840 = vadd.f32 0.0, %v2839
        %v2841 = vpop.f32.mrb[0].mxu0
        %v2842 = vadd.f32 0.0, %v2841
        %2843 = vmatprep.mubr.f32.mxu0 0.0
        %2844 = vmatmul.mubr.f32.gmra.mrb[0].mxu0 %v2663
        %v2845 = vpop.f32.mrb[0].mxu0
        %v2846 = vadd.f32 0.0, %v2845
        %v2847 = vpop.f32.mrb[0].mxu0
        %v2848 = vadd.f32 0.0, %v2847
        %2849 = vmatprep.mubr.f32.mxu0 0.0
        %2850 = vmatmul.mubr.f32.gmra.mrb[0].mxu0 %v2666
        %v2851 = vpop.f32.mrb[0].mxu0
        %v2852 = vadd.f32 0.0, %v2851
        %v2853 = vpop.f32.mrb[0].mxu0
        %v2854 = vadd.f32 0.0, %v2853
        %2855 = vmatprep.mubr.f32.mxu0 0.0
        %2856 = vmatmul.mubr.f32.gmra.mrb[0].mxu0 %v2669
        %v2857 = vpop.f32.mrb[0].mxu0
        %v2858 = vadd.f32 0.0, %v2857
        %v2859 = vpop.f32.mrb[0].mxu0
        %v2860 = vadd.f32 0.0, %v2859
        %2861 = vmatprep.mubr.f32.mxu0 0.0
        %2862 = vmatmul.mubr.f32.gmra.mrb[0].mxu0 %v2672
        %v2863 = vpop.f32.mrb[0].mxu0
        %v2864 = vadd.f32 0.0, %v2863
        %v2865 = vpop.f32.mrb[0].mxu0
        %v2866 = vadd.f32 0.0, %v2865
        %2867 = vmatprep.mubr.f32.mxu0 0.0
        %2868 = vmatmul.mubr.f32.gmra.mrb[0].mxu0 %v2675
        %v2869 = vpop.f32.mrb[0].mxu0
        %v2870 = vadd.f32 0.0, %v2869
        %v2871 = vpop.f32.mrb[0].mxu0
        %v2872 = vadd.f32 0.0, %v2871
        %2873 = vmatprep.mubr.f32.mxu0 0.0
        %2874 = vmatmul.mubr.f32.gmra.mrb[0].mxu0 %v2678
        %v2875 = vpop.f32.mrb[0].mxu0
        %v2876 = vadd.f32 0.0, %v2875
        %v2877 = vpop.f32.mrb[0].mxu0
        %v2878 = vadd.f32 0.0, %v2877
        %2879 = vmatprep.mubr.f32.mxu0 0.0
        %2880 = vmatmul.mubr.f32.gmra.mrb[0].mxu0 %v2681
        %v2881 = vpop.f32.mrb[0].mxu0
        %v2882 = vadd.f32 0.0, %v2881
        %v2883 = vpop.f32.mrb[0].mxu0
        %v2884 = vadd.f32 0.0, %v2883
        %2885 = vmatprep.mubr.f32.mxu0 0.0
        %2886 = vmatmul.mubr.f32.gmra.mrb[0].mxu0 %v2684
        %v2887 = vpop.f32.mrb[0].mxu0
        %v2888 = vadd.f32 0.0, %v2887
        %v2889 = vpop.f32.mrb[0].mxu0
        %v2890 = vadd.f32 0.0, %v2889
        %2891 = vmatprep.mubr.f32.mxu0 0.0
        %2892 = vmatmul.mubr.f32.gmra.mrb[0].mxu0 %v2687
        %v2893 = vpop.f32.mrb[0].mxu0
        %v2894 = vadd.f32 0.0, %v2893
        %v2895 = vpop.f32.mrb[0].mxu0
        %v2896 = vadd.f32 0.0, %v2895
        %2897 = vmatprep.mubr.f32.mxu0 0.0
        %2898 = vmatmul.mubr.f32.gmra.mrb[0].mxu0 %v2690
        %v2899 = vpop.f32.mrb[0].mxu0
        %v2900 = vadd.f32 0.0, %v2899
        %v2901 = vpop.f32.mrb[0].mxu0
        %v2902 = vadd.f32 0.0, %v2901
        %2903 = vmatprep.mubr.f32.mxu0 0.0
        %2904 = vmatmul.mubr.f32.gmra.mrb[0].mxu0 %v2693
        %v2905 = vpop.f32.mrb[0].mxu0
        %v2906 = vadd.f32 0.0, %v2905
        %v2907 = vpop.f32.mrb[0].mxu0
        %v2908 = vadd.f32 0.0, %v2907
        %2909 = vmatprep.mubr.f32.mxu0 0.0
        %2910 = vmatmul.mubr.f32.gmra.mrb[0].mxu0 %v2696
        %v2911 = vpop.f32.mrb[0].mxu0
        %v2912 = vadd.f32 0.0, %v2911
        %v2913 = vpop.f32.mrb[0].mxu0
        %v2914 = vadd.f32 0.0, %v2913
        %2915 = vmatprep.mubr.f32.mxu0 0.0
        %2916 = vmatmul.mubr.f32.gmra.mrb[0].mxu0 %v2699
        %v2917 = vpop.f32.mrb[0].mxu0
        %v2918 = vadd.f32 0.0, %v2917
        %v2919 = vpop.f32.mrb[0].mxu0
        %v2920 = vadd.f32 0.0, %v2919
        %2921 = vmatprep.mubr.f32.mxu0 0.0
        %2922 = vmatmul.mubr.f32.gmra.mrb[0].mxu0 %v2702
        %v2923 = vpop.f32.mrb[0].mxu0
        %v2924 = vadd.f32 0.0, %v2923
        %v2925 = vpop.f32.mrb[0].mxu0
        %v2926 = vadd.f32 0.0, %v2925
        %2927 = vmatprep.mubr.f32.mxu0 0.0
        %2928 = vmatmul.mubr.f32.gmra.mrb[0].mxu0 %v2705
        %v2929 = vpop.f32.mrb[0].mxu0
        %v2930 = vadd.f32 0.0, %v2929
        %v2931 = vpop.f32.mrb[0].mxu0
        %v2932 = vadd.f32 0.0, %v2931
        %2933 = vmatprep.mubr.f32.mxu0 0.0
        %2934 = vmatmul.mubr.f32.gmra.mrb[0].mxu0 %v2708
        %v2935 = vpop.f32.mrb[0].mxu0
        %v2936 = vadd.f32 0.0, %v2935
        %v2937 = vpop.f32.mrb[0].mxu0
        %v2938 = vadd.f32 0.0, %v2937
        %2939 = vmatprep.mubr.f32.mxu0 0.0
        %2940 = vmatmul.mubr.f32.gmra.mrb[0].mxu0 %v2711
        %v2941 = vpop.f32.mrb[0].mxu0
        %v2942 = vadd.f32 0.0, %v2941
        %v2943 = vpop.f32.mrb[0].mxu0
        %v2944 = vadd.f32 0.0, %v2943
        %2945 = vmatprep.mubr.f32.mxu0 0.0
        %2946 = vmatmul.mubr.f32.gmra.mrb[0].mxu0 %v2714
        %v2947 = vpop.f32.mrb[0].mxu0
        %v2948 = vadd.f32 0.0, %v2947
        %v2949 = vpop.f32.mrb[0].mxu0
        %v2950 = vadd.f32 0.0, %v2949
        %2951 = vmatprep.mubr.f32.mxu0 0.0
        %2952 = vmatmul.mubr.f32.gmra.mrb[0].mxu0 %v2717
        %v2953 = vpop.f32.mrb[0].mxu0
        %v2954 = vadd.f32 0.0, %v2953
        %v2955 = vpop.f32.mrb[0].mxu0
        %v2956 = vadd.f32 0.0, %v2955
        %2957 = vmatprep.mubr.f32.mxu0 0.0
        %2958 = vmatmul.mubr.f32.gmra.mrb[0].mxu0 %v2720
        %v2959 = vpop.f32.mrb[0].mxu0
        %v2960 = vadd.f32 0.0, %v2959
        %v2961 = vpop.f32.mrb[0].mxu0
        %v2962 = vadd.f32 0.0, %v2961
        %2963 = vmatprep.mubr.f32.mxu0 0.0
        %2964 = vmatmul.mubr.f32.gmra.mrb[0].mxu0 %v2723
        %v2965 = vpop.f32.mrb[0].mxu0
        %v2966 = vadd.f32 0.0, %v2965
        %v2967 = vpop.f32.mrb[0].mxu0
        %v2968 = vadd.f32 0.0, %v2967
        %2969 = vmatprep.mubr.f32.mxu0 0.0
        %2970 = vmatmul.mubr.f32.gmra.mrb[0].mxu0 %v2726
        %v2971 = vpop.f32.mrb[0].mxu0
        %v2972 = vadd.f32 0.0, %v2971
        %v2973 = vpop.f32.mrb[0].mxu0
        %v2974 = vadd.f32 0.0, %v2973
        %2975 = vmatprep.mubr.f32.mxu0 0.0
        %2976 = vmatmul.mubr.f32.gmra.mrb[0].mxu0 %v2729
        %v2977 = vpop.f32.mrb[0].mxu0
        %v2978 = vadd.f32 0.0, %v2977
        %v2979 = vpop.f32.mrb[0].mxu0
        %v2980 = vadd.f32 0.0, %v2979
        %2981 = vmatprep.mubr.f32.mxu0 0.0
        %2982 = vmatmul.mubr.f32.gmra.mrb[0].mxu0 %v2732
        %v2983 = vpop.f32.mrb[0].mxu0
        %v2984 = vadd.f32 0.0, %v2983
        %v2985 = vpop.f32.mrb[0].mxu0
        %v2986 = vadd.f32 0.0, %v2985
        %2987 = vmatprep.mubr.f32.mxu0 0.0
        %2988 = vmatmul.mubr.f32.gmra.mrb[0].mxu0 %v2735
        %v2989 = vpop.f32.mrb[0].mxu0
        %v2990 = vadd.f32 0.0, %v2989
        %v2991 = vpop.f32.mrb[0].mxu0
        %v2992 = vadd.f32 0.0, %v2991
        %2993 = vdwg.mxu0
        %v2994 = vadd.f32 %v1157, %v1159
        %v2995 = vrot.slane %v2994, 4
        %v2996 = vadd.f32 %v2994, %v2995
        %v2997 = vrot.slane %v2996, 2
        %v2998 = vadd.f32 %v2996, %v2997
        %v2999 = vrot.slane %v2998, 1
        %v3000 = vadd.f32 %v2998, %v2999
        %v3001 = vadd.f32 %v1158, %v1160
        %v3002 = vrot.slane %v3001, 4
        %v3003 = vadd.f32 %v3001, %v3002
        %v3004 = vrot.slane %v3003, 2
        %v3005 = vadd.f32 %v3003, %v3004
        %v3006 = vrot.slane %v3005, 1
        %v3007 = vadd.f32 %v3005, %v3006
        %v3008 = vmul.f32 %v2804, %v1181
        %v3009 = vmul.f32 %v2806, %v1182
        %v3010 = vmul.f32 %v2810, %v1183
        %v3011 = vmul.f32 %v2812, %v1184
        %v3012 = vmul.f32 %v2816, %v1185
        %v3013 = vmul.f32 %v2818, %v1186
        %v3014 = vmul.f32 %v2822, %v1187
        %v3015 = vmul.f32 %v2824, %v1188
        %v3016 = vmul.f32 %v2828, %v1189
        %v3017 = vmul.f32 %v2830, %v1190
        %v3018 = vmul.f32 %v2834, %v1191
        %v3019 = vmul.f32 %v2836, %v1192
        %v3020 = vmul.f32 %v2840, %v1193
        %v3021 = vmul.f32 %v2842, %v1194
        %v3022 = vmul.f32 %v2846, %v1195
        %v3023 = vmul.f32 %v2848, %v1196
        %v3024 = vmul.f32 %v2852, %v1197
        %v3025 = vmul.f32 %v2854, %v1198
        %v3026 = vmul.f32 %v2858, %v1199
        %v3027 = vmul.f32 %v2860, %v1200
        %v3028 = vmul.f32 %v2864, %v1201
        %v3029 = vmul.f32 %v2866, %v1202
        %v3030 = vmul.f32 %v2870, %v1203
        %v3031 = vmul.f32 %v2872, %v1204
        %v3032 = vmul.f32 %v2876, %v1205
        %v3033 = vmul.f32 %v2878, %v1206
        %v3034 = vmul.f32 %v2882, %v1207
        %v3035 = vmul.f32 %v2884, %v1208
        %v3036 = vmul.f32 %v2888, %v1209
        %v3037 = vmul.f32 %v2890, %v1210
        %v3038 = vmul.f32 %v2894, %v1211
        %v3039 = vmul.f32 %v2896, %v1212
        %v3040 = vmul.f32 %v2900, %v1213
        %v3041 = vmul.f32 %v2902, %v1214
        %v3042 = vmul.f32 %v2906, %v1215
        %v3043 = vmul.f32 %v2908, %v1216
        %v3044 = vmul.f32 %v2912, %v1217
        %v3045 = vmul.f32 %v2914, %v1218
        %v3046 = vmul.f32 %v2918, %v1219
        %v3047 = vmul.f32 %v2920, %v1220
        %v3048 = vmul.f32 %v2924, %v1221
        %v3049 = vmul.f32 %v2926, %v1222
        %v3050 = vmul.f32 %v2930, %v1223
        %v3051 = vmul.f32 %v2932, %v1224
        %v3052 = vmul.f32 %v2936, %v1225
        %v3053 = vmul.f32 %v2938, %v1226
        %v3054 = vmul.f32 %v2942, %v1227
        %v3055 = vmul.f32 %v2944, %v1228
        %v3056 = vmul.f32 %v2948, %v1229
        %v3057 = vmul.f32 %v2950, %v1230
        %v3058 = vmul.f32 %v2954, %v1231
        %v3059 = vmul.f32 %v2956, %v1232
        %v3060 = vmul.f32 %v2960, %v1233
        %v3061 = vmul.f32 %v2962, %v1234
        %v3062 = vmul.f32 %v2966, %v1235
        %v3063 = vmul.f32 %v2968, %v1236
        %v3064 = vmul.f32 %v2972, %v1237
        %v3065 = vmul.f32 %v2974, %v1238
        %v3066 = vmul.f32 %v2978, %v1239
        %v3067 = vmul.f32 %v2980, %v1240
        %v3068 = vmul.f32 %v2984, %v1241
        %v3069 = vmul.f32 %v2986, %v1242
        %v3070 = vmul.f32 %v2990, %v1243
        %v3071 = vmul.f32 %v2992, %v1244
        %3072 = vmatprep.subr.mxu0 %v3009
        %3073 = vmatpush1.msra.mxu0 %v3008
        %3074 = vmatprep.subr.mxu0 %v3011
        %3075 = vmatpush1.msra.mxu0 %v3010
        %3076 = vmatprep.subr.mxu0 %v3013
        %3077 = vmatpush1.msra.mxu0 %v3012
        %3078 = vmatprep.subr.mxu0 %v3015
        %3079 = vmatpush1.msra.mxu0 %v3014
        %3080 = vmatprep.subr.mxu0 %v3017
        %3081 = vmatpush1.msra.mxu0 %v3016
        %3082 = vmatprep.subr.mxu0 %v3019
        %3083 = vmatpush1.msra.mxu0 %v3018
        %3084 = vmatprep.subr.mxu0 %v3021
        %3085 = vmatpush1.msra.mxu0 %v3020
        %3086 = vmatprep.subr.mxu0 %v3023
        %3087 = vmatpush1.msra.mxu0 %v3022
        %3088 = vmatprep.subr.mxu0 %v3025
        %3089 = vmatpush1.msra.mxu0 %v3024
        %3090 = vmatprep.subr.mxu0 %v3027
        %3091 = vmatpush1.msra.mxu0 %v3026
        %3092 = vmatprep.subr.mxu0 %v3029
        %3093 = vmatpush1.msra.mxu0 %v3028
        %3094 = vmatprep.subr.mxu0 %v3031
        %3095 = vmatpush1.msra.mxu0 %v3030
        %3096 = vmatprep.subr.mxu0 %v3033
        %3097 = vmatpush1.msra.mxu0 %v3032
        %3098 = vmatprep.subr.mxu0 %v3035
        %3099 = vmatpush1.msra.mxu0 %v3034
        %3100 = vmatprep.subr.mxu0 %v3037
        %3101 = vmatpush1.msra.mxu0 %v3036
        %3102 = vmatprep.subr.mxu0 %v3039
        %3103 = vmatpush1.msra.mxu0 %v3038
        %3104 = vmatprep.subr.mxu0 %v3041
        %3105 = vmatpush1.msra.mxu0 %v3040
        %3106 = vmatprep.subr.mxu0 %v3043
        %3107 = vmatpush1.msra.mxu0 %v3042
        %3108 = vmatprep.subr.mxu0 %v3045
        %3109 = vmatpush1.msra.mxu0 %v3044
        %3110 = vmatprep.subr.mxu0 %v3047
        %3111 = vmatpush1.msra.mxu0 %v3046
        %3112 = vmatprep.subr.mxu0 %v3049
        %3113 = vmatpush1.msra.mxu0 %v3048
        %3114 = vmatprep.subr.mxu0 %v3051
        %3115 = vmatpush1.msra.mxu0 %v3050
        %3116 = vmatprep.subr.mxu0 %v3053
        %3117 = vmatpush1.msra.mxu0 %v3052
        %3118 = vmatprep.subr.mxu0 %v3055
        %3119 = vmatpush1.msra.mxu0 %v3054
        %3120 = vmatprep.subr.mxu0 %v3057
        %3121 = vmatpush1.msra.mxu0 %v3056
        %3122 = vmatprep.subr.mxu0 %v3059
        %3123 = vmatpush1.msra.mxu0 %v3058
        %3124 = vmatprep.subr.mxu0 %v3061
        %3125 = vmatpush1.msra.mxu0 %v3060
        %3126 = vmatprep.subr.mxu0 %v3063
        %3127 = vmatpush1.msra.mxu0 %v3062
        %3128 = vmatprep.subr.mxu0 %v3065
        %3129 = vmatpush1.msra.mxu0 %v3064
        %3130 = vmatprep.subr.mxu0 %v3067
        %3131 = vmatpush1.msra.mxu0 %v3066
        %3132 = vmatprep.subr.mxu0 %v3069
        %3133 = vmatpush1.msra.mxu0 %v3068
        %3134 = vmatprep.subr.mxu0 %v3071
        %3135 = vmatpush1.msra.mxu0 %v3070
        %3136 = vmatprep.mubr.f32.mxu0 %v1126
        %3137 = vmatmul.mubr.f32.gmra.mrb[0].mxu0 %v1125
        %v3138 = vpop.f32.mrb[0].mxu0
        %v3139 = vadd.f32 0.0, %v3138
        %v3140 = vpop.f32.mrb[0].mxu0
        %v3141 = vadd.f32 0.0, %v3140
        %3142 = vmatprep.mubr.f32.mxu0 %v1128
        %3143 = vmatmul.mubr.f32.gmra.mrb[0].mxu0 %v1127
        %v3144 = vpop.f32.mrb[0].mxu0
        %v3145 = vadd.f32 0.0, %v3144
        %v3146 = vpop.f32.mrb[0].mxu0
        %v3147 = vadd.f32 0.0, %v3146
        %3148 = vdwg.mxu0
        %v3149 = vmul.f32 %v1125, %v3000
        %v3150 = vmul.f32 %v1126, %v3007
        %v3151 = vmul.f32 %v1127, %v3000
        %v3152 = vmul.f32 %v1128, %v3007
        %3153 = vmatprep.subr.mxu0 %v1182
        %3154 = vmatpush1.msra.mxu0 %v1181
        %3155 = vmatprep.subr.mxu0 %v1184
        %3156 = vmatpush1.msra.mxu0 %v1183
        %3157 = vmatprep.subr.mxu0 %v1186
        %3158 = vmatpush1.msra.mxu0 %v1185
        %3159 = vmatprep.subr.mxu0 %v1188
        %3160 = vmatpush1.msra.mxu0 %v1187
        %3161 = vmatprep.subr.mxu0 %v1190
        %3162 = vmatpush1.msra.mxu0 %v1189
        %3163 = vmatprep.subr.mxu0 %v1192
        %3164 = vmatpush1.msra.mxu0 %v1191
        %3165 = vmatprep.subr.mxu0 %v1194
        %3166 = vmatpush1.msra.mxu0 %v1193
        %3167 = vmatprep.subr.mxu0 %v1196
        %3168 = vmatpush1.msra.mxu0 %v1195
        %3169 = vmatprep.subr.mxu0 %v1198
        %3170 = vmatpush1.msra.mxu0 %v1197
        %3171 = vmatprep.subr.mxu0 %v1200
        %3172 = vmatpush1.msra.mxu0 %v1199
        %3173 = vmatprep.subr.mxu0 %v1202
        %3174 = vmatpush1.msra.mxu0 %v1201
        %3175 = vmatprep.subr.mxu0 %v1204
        %3176 = vmatpush1.msra.mxu0 %v1203
        %3177 = vmatprep.subr.mxu0 %v1206
        %3178 = vmatpush1.msra.mxu0 %v1205
        %3179 = vmatprep.subr.mxu0 %v1208
        %3180 = vmatpush1.msra.mxu0 %v1207
        %3181 = vmatprep.subr.mxu0 %v1210
        %3182 = vmatpush1.msra.mxu0 %v1209
        %3183 = vmatprep.subr.mxu0 %v1212
        %3184 = vmatpush1.msra.mxu0 %v1211
        %3185 = vmatprep.subr.mxu0 %v1214
        %3186 = vmatpush1.msra.mxu0 %v1213
        %3187 = vmatprep.subr.mxu0 %v1216
        %3188 = vmatpush1.msra.mxu0 %v1215
        %3189 = vmatprep.subr.mxu0 %v1218
        %3190 = vmatpush1.msra.mxu0 %v1217
        %3191 = vmatprep.subr.mxu0 %v1220
        %3192 = vmatpush1.msra.mxu0 %v1219
        %3193 = vmatprep.subr.mxu0 %v1222
        %3194 = vmatpush1.msra.mxu0 %v1221
        %3195 = vmatprep.subr.mxu0 %v1224
        %3196 = vmatpush1.msra.mxu0 %v1223
        %3197 = vmatprep.subr.mxu0 %v1226
        %3198 = vmatpush1.msra.mxu0 %v1225
        %3199 = vmatprep.subr.mxu0 %v1228
        %3200 = vmatpush1.msra.mxu0 %v1227
        %3201 = vmatprep.subr.mxu0 %v1230
        %3202 = vmatpush1.msra.mxu0 %v1229
        %3203 = vmatprep.subr.mxu0 %v1232
        %3204 = vmatpush1.msra.mxu0 %v1231
        %3205 = vmatprep.subr.mxu0 %v1234
        %3206 = vmatpush1.msra.mxu0 %v1233
        %3207 = vmatprep.subr.mxu0 %v1236
        %3208 = vmatpush1.msra.mxu0 %v1235
        %3209 = vmatprep.subr.mxu0 %v1238
        %3210 = vmatpush1.msra.mxu0 %v1237
        %3211 = vmatprep.subr.mxu0 %v1240
        %3212 = vmatpush1.msra.mxu0 %v1239
        %3213 = vmatprep.subr.mxu0 %v1242
        %3214 = vmatpush1.msra.mxu0 %v1241
        %3215 = vmatprep.subr.mxu0 %v1244
        %3216 = vmatpush1.msra.mxu0 %v1243
        %3217 = vmatprep.mubr.f32.mxu0 %v3150
        %3218 = vmatmul.mubr.f32.gmra.mrb[0].mxu0 %v3149
        %v3219 = vpop.f32.mrb[0].mxu0
        %v3220 = vadd.f32 1e-06, %v3219
        %v3221 = vpop.f32.mrb[0].mxu0
        %v3222 = vadd.f32 1e-06, %v3221
        %3223 = vmatprep.mubr.f32.mxu0 %v3152
        %3224 = vmatmul.mubr.f32.gmra.mrb[0].mxu0 %v3151
        %v3225 = vpop.f32.mrb[0].mxu0
        %v3226 = vadd.f32 1e-06, %v3225
        %v3227 = vpop.f32.mrb[0].mxu0
        %v3228 = vadd.f32 1e-06, %v3227
        %3229 = vdwg.mxu0
        %v3230 = vrcp.pop %v3220
        %v3231 = vmul.f32 %v3139, %v3230
        %v3232 = vrcp.pop %v3222
        %v3233 = vmul.f32 %v3141, %v3232
        %v3234 = vrcp.pop %v3226
        %v3235 = vmul.f32 %v3145, %v3234
        %v3236 = vrcp.pop %v3228
        %v3237 = vmul.f32 %v3147, %v3236
        %s3238 = scalar_lea.vmem %s256, 64 [#allocation3]
        %3239 = vst [vmem:[%s3238] sm:$0xff] %v3231
        %3240 = vst [vmem:[%s3238 + $0x8] sm:$0xff] %v3233
        %3241 = vst [vmem:[%s3238 + $0x10] sm:$0xff] %v3235
        %3242 = vst [vmem:[%s3238 + $0x18] sm:$0xff] %v3237
        %3243 = vxpose.xlu0.b32.start [1/16] %v1161, 128
        %3244 = vxpose.xlu0.b32.cont [2/16] %v1163, 128
        %3245 = vxpose.xlu0.b32.cont [3/16] 0.0, 128
        %3246 = vxpose.xlu0.b32.cont [4/16] 0.0, 128
        %3247 = vxpose.xlu0.b32.cont [5/16] 0.0, 128
        %3248 = vxpose.xlu0.b32.cont [6/16] 0.0, 128
        %3249 = vxpose.xlu0.b32.cont [7/16] 0.0, 128
        %3250 = vxpose.xlu0.b32.cont [8/16] 0.0, 128
        %3251 = vxpose.xlu0.b32.cont [9/16] 0.0, 128
        %3252 = vxpose.xlu0.b32.cont [10/16] 0.0, 128
        %3253 = vxpose.xlu0.b32.cont [11/16] 0.0, 128
        %3254 = vxpose.xlu0.b32.cont [12/16] 0.0, 128
        %3255 = vxpose.xlu0.b32.cont [13/16] 0.0, 128
        %3256 = vxpose.xlu0.b32.cont [14/16] 0.0, 128
        %3257 = vxpose.xlu0.b32.cont [15/16] 0.0, 128
        %3258 = vxpose.xlu0.b32.end [16/16] 0.0, 128
        %v3259 = vpop.trf.xlu0
        %v3260 = vpop.trf.xlu0
        %v3261 = vpop.trf.xlu0
        %v3262 = vpop.trf.xlu0
        %v3263 = vpop.trf.xlu0
        %v3264 = vpop.trf.xlu0
        %v3265 = vpop.trf.xlu0
        %v3266 = vpop.trf.xlu0
        %v3267 = vpop.trf.xlu0
        %v3268 = vpop.trf.xlu0
        %v3269 = vpop.trf.xlu0
        %v3270 = vpop.trf.xlu0
        %v3271 = vpop.trf.xlu0
        %v3272 = vpop.trf.xlu0
        %v3273 = vpop.trf.xlu0
        %v3274 = vpop.trf.xlu0
        %3275 = vxpose.xlu0.b32.start [1/16] %v1162, 128
        %3276 = vxpose.xlu0.b32.cont [2/16] %v1164, 128
        %3277 = vxpose.xlu0.b32.cont [3/16] 0.0, 128
        %3278 = vxpose.xlu0.b32.cont [4/16] 0.0, 128
        %3279 = vxpose.xlu0.b32.cont [5/16] 0.0, 128
        %3280 = vxpose.xlu0.b32.cont [6/16] 0.0, 128
        %3281 = vxpose.xlu0.b32.cont [7/16] 0.0, 128
        %3282 = vxpose.xlu0.b32.cont [8/16] 0.0, 128
        %3283 = vxpose.xlu0.b32.cont [9/16] 0.0, 128
        %3284 = vxpose.xlu0.b32.cont [10/16] 0.0, 128
        %3285 = vxpose.xlu0.b32.cont [11/16] 0.0, 128
        %3286 = vxpose.xlu0.b32.cont [12/16] 0.0, 128
        %3287 = vxpose.xlu0.b32.cont [13/16] 0.0, 128
        %3288 = vxpose.xlu0.b32.cont [14/16] 0.0, 128
        %3289 = vxpose.xlu0.b32.cont [15/16] 0.0, 128
        %3290 = vxpose.xlu0.b32.end [16/16] 0.0, 128
        %v3291 = vpop.trf.xlu0
        %v3292 = vpop.trf.xlu0
        %v3293 = vpop.trf.xlu0
        %v3294 = vpop.trf.xlu0
        %v3295 = vpop.trf.xlu0
        %v3296 = vpop.trf.xlu0
        %v3297 = vpop.trf.xlu0
        %v3298 = vpop.trf.xlu0
        %v3299 = vpop.trf.xlu0
        %v3300 = vpop.trf.xlu0
        %v3301 = vpop.trf.xlu0
        %v3302 = vpop.trf.xlu0
        %v3303 = vpop.trf.xlu0
        %v3304 = vpop.trf.xlu0
        %v3305 = vpop.trf.xlu0
        %v3306 = vpop.trf.xlu0
        %v3308 = vsel %vm1309, %v3259, 0
        %v3311 = vsel %vm1309, %v3260, 0
        %v3314 = vsel %vm1309, %v3261, 0
        %v3317 = vsel %vm1309, %v3262, 0
        %v3320 = vsel %vm1309, %v3263, 0
        %v3323 = vsel %vm1309, %v3264, 0
        %v3326 = vsel %vm1309, %v3265, 0
        %v3329 = vsel %vm1309, %v3266, 0
        %v3332 = vsel %vm1309, %v3267, 0
        %v3335 = vsel %vm1309, %v3268, 0
        %v3338 = vsel %vm1309, %v3269, 0
        %v3341 = vsel %vm1309, %v3270, 0
        %v3344 = vsel %vm1309, %v3271, 0
        %v3347 = vsel %vm1309, %v3272, 0
        %v3350 = vsel %vm1309, %v3273, 0
        %v3353 = vsel %vm1309, %v3274, 0
        %v3356 = vsel %vm1309, %v3291, 0
        %v3359 = vsel %vm1309, %v3292, 0
        %v3362 = vsel %vm1309, %v3293, 0
        %v3365 = vsel %vm1309, %v3294, 0
        %v3368 = vsel %vm1309, %v3295, 0
        %v3371 = vsel %vm1309, %v3296, 0
        %v3374 = vsel %vm1309, %v3297, 0
        %v3377 = vsel %vm1309, %v3298, 0
        %v3380 = vsel %vm1309, %v3299, 0
        %v3383 = vsel %vm1309, %v3300, 0
        %v3386 = vsel %vm1309, %v3301, 0
        %v3389 = vsel %vm1309, %v3302, 0
        %v3392 = vsel %vm1309, %v3303, 0
        %v3395 = vsel %vm1309, %v3304, 0
        %v3398 = vsel %vm1309, %v3305, 0
        %v3401 = vsel %vm1309, %v3306, 0
        %3403 = vmatprep.subr.mxu0 %v805
        %3404 = vmatpush1.msra.mxu0 %v803
        %3405 = vmatprep.subr.mxu0 %v811
        %3406 = vmatpush1.msra.mxu0 %v809
        %3407 = vmatprep.subr.mxu0 0.0
        %3408 = vmatpush1.msra.mxu0 0.0
        %3409 = vmatprep.subr.mxu0 0.0
        %3410 = vmatpush1.msra.mxu0 0.0
        %3411 = vmatprep.subr.mxu0 0.0
        %3412 = vmatpush1.msra.mxu0 0.0
        %3413 = vmatprep.subr.mxu0 0.0
        %3414 = vmatpush1.msra.mxu0 0.0
        %3415 = vmatprep.subr.mxu0 0.0
        %3416 = vmatpush1.msra.mxu0 0.0
        %3417 = vmatprep.subr.mxu0 0.0
        %3418 = vmatpush1.msra.mxu0 0.0
        %3419 = vmatprep.subr.mxu0 0.0
        %3420 = vmatpush1.msra.mxu0 0.0
        %3421 = vmatprep.subr.mxu0 0.0
        %3422 = vmatpush1.msra.mxu0 0.0
        %3423 = vmatprep.subr.mxu0 0.0
        %3424 = vmatpush1.msra.mxu0 0.0
        %3425 = vmatprep.subr.mxu0 0.0
        %3426 = vmatpush1.msra.mxu0 0.0
        %3427 = vmatprep.subr.mxu0 0.0
        %3428 = vmatpush1.msra.mxu0 0.0
        %3429 = vmatprep.subr.mxu0 0.0
        %3430 = vmatpush1.msra.mxu0 0.0
        %3431 = vmatprep.subr.mxu0 0.0
        %3432 = vmatpush1.msra.mxu0 0.0
        %3433 = vmatprep.subr.mxu0 0.0
        %3434 = vmatpush1.msra.mxu0 0.0
        %3435 = vmatprep.subr.mxu0 0.0
        %3436 = vmatpush1.msra.mxu0 0.0
        %3437 = vmatprep.subr.mxu0 0.0
        %3438 = vmatpush1.msra.mxu0 0.0
        %3439 = vmatprep.subr.mxu0 0.0
        %3440 = vmatpush1.msra.mxu0 0.0
        %3441 = vmatprep.subr.mxu0 0.0
        %3442 = vmatpush1.msra.mxu0 0.0
        %3443 = vmatprep.subr.mxu0 0.0
        %3444 = vmatpush1.msra.mxu0 0.0
        %3445 = vmatprep.subr.mxu0 0.0
        %3446 = vmatpush1.msra.mxu0 0.0
        %3447 = vmatprep.subr.mxu0 0.0
        %3448 = vmatpush1.msra.mxu0 0.0
        %3449 = vmatprep.subr.mxu0 0.0
        %3450 = vmatpush1.msra.mxu0 0.0
        %3451 = vmatprep.subr.mxu0 0.0
        %3452 = vmatpush1.msra.mxu0 0.0
        %3453 = vmatprep.subr.mxu0 0.0
        %3454 = vmatpush1.msra.mxu0 0.0
        %3455 = vmatprep.subr.mxu0 0.0
        %3456 = vmatpush1.msra.mxu0 0.0
        %3457 = vmatprep.subr.mxu0 0.0
        %3458 = vmatpush1.msra.mxu0 0.0
        %3459 = vmatprep.subr.mxu0 0.0
        %3460 = vmatpush1.msra.mxu0 0.0
        %3461 = vmatprep.subr.mxu0 0.0
        %3462 = vmatpush1.msra.mxu0 0.0
        %3463 = vmatprep.subr.mxu0 0.0
        %3464 = vmatpush1.msra.mxu0 0.0
        %3465 = vmatprep.subr.mxu0 0.0
        %3466 = vmatpush1.msra.mxu0 0.0
        %3467 = vmatprep.mubr.f32.mxu0 0.0
        %3468 = vmatmul.mubr.f32.gmra.mrb[0].mxu0 %v3308
        %v3469 = vpop.f32.mrb[0].mxu0
        %v3470 = vadd.f32 0.0, %v3469
        %v3471 = vpop.f32.mrb[0].mxu0
        %v3472 = vadd.f32 0.0, %v3471
        %3473 = vmatprep.mubr.f32.mxu0 0.0
        %3474 = vmatmul.mubr.f32.gmra.mrb[0].mxu0 %v3311
        %v3475 = vpop.f32.mrb[0].mxu0
        %v3476 = vadd.f32 0.0, %v3475
        %v3477 = vpop.f32.mrb[0].mxu0
        %v3478 = vadd.f32 0.0, %v3477
        %3479 = vmatprep.mubr.f32.mxu0 0.0
        %3480 = vmatmul.mubr.f32.gmra.mrb[0].mxu0 %v3314
        %v3481 = vpop.f32.mrb[0].mxu0
        %v3482 = vadd.f32 0.0, %v3481
        %v3483 = vpop.f32.mrb[0].mxu0
        %v3484 = vadd.f32 0.0, %v3483
        %3485 = vmatprep.mubr.f32.mxu0 0.0
        %3486 = vmatmul.mubr.f32.gmra.mrb[0].mxu0 %v3317
        %v3487 = vpop.f32.mrb[0].mxu0
        %v3488 = vadd.f32 0.0, %v3487
        %v3489 = vpop.f32.mrb[0].mxu0
        %v3490 = vadd.f32 0.0, %v3489
        %3491 = vmatprep.mubr.f32.mxu0 0.0
        %3492 = vmatmul.mubr.f32.gmra.mrb[0].mxu0 %v3320
        %v3493 = vpop.f32.mrb[0].mxu0
        %v3494 = vadd.f32 0.0, %v3493
        %v3495 = vpop.f32.mrb[0].mxu0
        %v3496 = vadd.f32 0.0, %v3495
        %3497 = vmatprep.mubr.f32.mxu0 0.0
        %3498 = vmatmul.mubr.f32.gmra.mrb[0].mxu0 %v3323
        %v3499 = vpop.f32.mrb[0].mxu0
        %v3500 = vadd.f32 0.0, %v3499
        %v3501 = vpop.f32.mrb[0].mxu0
        %v3502 = vadd.f32 0.0, %v3501
        %3503 = vmatprep.mubr.f32.mxu0 0.0
        %3504 = vmatmul.mubr.f32.gmra.mrb[0].mxu0 %v3326
        %v3505 = vpop.f32.mrb[0].mxu0
        %v3506 = vadd.f32 0.0, %v3505
        %v3507 = vpop.f32.mrb[0].mxu0
        %v3508 = vadd.f32 0.0, %v3507
        %3509 = vmatprep.mubr.f32.mxu0 0.0
        %3510 = vmatmul.mubr.f32.gmra.mrb[0].mxu0 %v3329
        %v3511 = vpop.f32.mrb[0].mxu0
        %v3512 = vadd.f32 0.0, %v3511
        %v3513 = vpop.f32.mrb[0].mxu0
        %v3514 = vadd.f32 0.0, %v3513
        %3515 = vmatprep.mubr.f32.mxu0 0.0
        %3516 = vmatmul.mubr.f32.gmra.mrb[0].mxu0 %v3332
        %v3517 = vpop.f32.mrb[0].mxu0
        %v3518 = vadd.f32 0.0, %v3517
        %v3519 = vpop.f32.mrb[0].mxu0
        %v3520 = vadd.f32 0.0, %v3519
        %3521 = vmatprep.mubr.f32.mxu0 0.0
        %3522 = vmatmul.mubr.f32.gmra.mrb[0].mxu0 %v3335
        %v3523 = vpop.f32.mrb[0].mxu0
        %v3524 = vadd.f32 0.0, %v3523
        %v3525 = vpop.f32.mrb[0].mxu0
        %v3526 = vadd.f32 0.0, %v3525
        %3527 = vmatprep.mubr.f32.mxu0 0.0
        %3528 = vmatmul.mubr.f32.gmra.mrb[0].mxu0 %v3338
        %v3529 = vpop.f32.mrb[0].mxu0
        %v3530 = vadd.f32 0.0, %v3529
        %v3531 = vpop.f32.mrb[0].mxu0
        %v3532 = vadd.f32 0.0, %v3531
        %3533 = vmatprep.mubr.f32.mxu0 0.0
        %3534 = vmatmul.mubr.f32.gmra.mrb[0].mxu0 %v3341
        %v3535 = vpop.f32.mrb[0].mxu0
        %v3536 = vadd.f32 0.0, %v3535
        %v3537 = vpop.f32.mrb[0].mxu0
        %v3538 = vadd.f32 0.0, %v3537
        %3539 = vmatprep.mubr.f32.mxu0 0.0
        %3540 = vmatmul.mubr.f32.gmra.mrb[0].mxu0 %v3344
        %v3541 = vpop.f32.mrb[0].mxu0
        %v3542 = vadd.f32 0.0, %v3541
        %v3543 = vpop.f32.mrb[0].mxu0
        %v3544 = vadd.f32 0.0, %v3543
        %3545 = vmatprep.mubr.f32.mxu0 0.0
        %3546 = vmatmul.mubr.f32.gmra.mrb[0].mxu0 %v3347
        %v3547 = vpop.f32.mrb[0].mxu0
        %v3548 = vadd.f32 0.0, %v3547
        %v3549 = vpop.f32.mrb[0].mxu0
        %v3550 = vadd.f32 0.0, %v3549
        %3551 = vmatprep.mubr.f32.mxu0 0.0
        %3552 = vmatmul.mubr.f32.gmra.mrb[0].mxu0 %v3350
        %v3553 = vpop.f32.mrb[0].mxu0
        %v3554 = vadd.f32 0.0, %v3553
        %v3555 = vpop.f32.mrb[0].mxu0
        %v3556 = vadd.f32 0.0, %v3555
        %3557 = vmatprep.mubr.f32.mxu0 0.0
        %3558 = vmatmul.mubr.f32.gmra.mrb[0].mxu0 %v3353
        %v3559 = vpop.f32.mrb[0].mxu0
        %v3560 = vadd.f32 0.0, %v3559
        %v3561 = vpop.f32.mrb[0].mxu0
        %v3562 = vadd.f32 0.0, %v3561
        %3563 = vmatprep.mubr.f32.mxu0 0.0
        %3564 = vmatmul.mubr.f32.gmra.mrb[0].mxu0 %v3356
        %v3565 = vpop.f32.mrb[0].mxu0
        %v3566 = vadd.f32 0.0, %v3565
        %v3567 = vpop.f32.mrb[0].mxu0
        %v3568 = vadd.f32 0.0, %v3567
        %3569 = vmatprep.mubr.f32.mxu0 0.0
        %3570 = vmatmul.mubr.f32.gmra.mrb[0].mxu0 %v3359
        %v3571 = vpop.f32.mrb[0].mxu0
        %v3572 = vadd.f32 0.0, %v3571
        %v3573 = vpop.f32.mrb[0].mxu0
        %v3574 = vadd.f32 0.0, %v3573
        %3575 = vmatprep.mubr.f32.mxu0 0.0
        %3576 = vmatmul.mubr.f32.gmra.mrb[0].mxu0 %v3362
        %v3577 = vpop.f32.mrb[0].mxu0
        %v3578 = vadd.f32 0.0, %v3577
        %v3579 = vpop.f32.mrb[0].mxu0
        %v3580 = vadd.f32 0.0, %v3579
        %3581 = vmatprep.mubr.f32.mxu0 0.0
        %3582 = vmatmul.mubr.f32.gmra.mrb[0].mxu0 %v3365
        %v3583 = vpop.f32.mrb[0].mxu0
        %v3584 = vadd.f32 0.0, %v3583
        %v3585 = vpop.f32.mrb[0].mxu0
        %v3586 = vadd.f32 0.0, %v3585
        %3587 = vmatprep.mubr.f32.mxu0 0.0
        %3588 = vmatmul.mubr.f32.gmra.mrb[0].mxu0 %v3368
        %v3589 = vpop.f32.mrb[0].mxu0
        %v3590 = vadd.f32 0.0, %v3589
        %v3591 = vpop.f32.mrb[0].mxu0
        %v3592 = vadd.f32 0.0, %v3591
        %3593 = vmatprep.mubr.f32.mxu0 0.0
        %3594 = vmatmul.mubr.f32.gmra.mrb[0].mxu0 %v3371
        %v3595 = vpop.f32.mrb[0].mxu0
        %v3596 = vadd.f32 0.0, %v3595
        %v3597 = vpop.f32.mrb[0].mxu0
        %v3598 = vadd.f32 0.0, %v3597
        %3599 = vmatprep.mubr.f32.mxu0 0.0
        %3600 = vmatmul.mubr.f32.gmra.mrb[0].mxu0 %v3374
        %v3601 = vpop.f32.mrb[0].mxu0
        %v3602 = vadd.f32 0.0, %v3601
        %v3603 = vpop.f32.mrb[0].mxu0
        %v3604 = vadd.f32 0.0, %v3603
        %3605 = vmatprep.mubr.f32.mxu0 0.0
        %3606 = vmatmul.mubr.f32.gmra.mrb[0].mxu0 %v3377
        %v3607 = vpop.f32.mrb[0].mxu0
        %v3608 = vadd.f32 0.0, %v3607
        %v3609 = vpop.f32.mrb[0].mxu0
        %v3610 = vadd.f32 0.0, %v3609
        %3611 = vmatprep.mubr.f32.mxu0 0.0
        %3612 = vmatmul.mubr.f32.gmra.mrb[0].mxu0 %v3380
        %v3613 = vpop.f32.mrb[0].mxu0
        %v3614 = vadd.f32 0.0, %v3613
        %v3615 = vpop.f32.mrb[0].mxu0
        %v3616 = vadd.f32 0.0, %v3615
        %3617 = vmatprep.mubr.f32.mxu0 0.0
        %3618 = vmatmul.mubr.f32.gmra.mrb[0].mxu0 %v3383
        %v3619 = vpop.f32.mrb[0].mxu0
        %v3620 = vadd.f32 0.0, %v3619
        %v3621 = vpop.f32.mrb[0].mxu0
        %v3622 = vadd.f32 0.0, %v3621
        %3623 = vmatprep.mubr.f32.mxu0 0.0
        %3624 = vmatmul.mubr.f32.gmra.mrb[0].mxu0 %v3386
        %v3625 = vpop.f32.mrb[0].mxu0
        %v3626 = vadd.f32 0.0, %v3625
        %v3627 = vpop.f32.mrb[0].mxu0
        %v3628 = vadd.f32 0.0, %v3627
        %3629 = vmatprep.mubr.f32.mxu0 0.0
        %3630 = vmatmul.mubr.f32.gmra.mrb[0].mxu0 %v3389
        %v3631 = vpop.f32.mrb[0].mxu0
        %v3632 = vadd.f32 0.0, %v3631
        %v3633 = vpop.f32.mrb[0].mxu0
        %v3634 = vadd.f32 0.0, %v3633
        %3635 = vmatprep.mubr.f32.mxu0 0.0
        %3636 = vmatmul.mubr.f32.gmra.mrb[0].mxu0 %v3392
        %v3637 = vpop.f32.mrb[0].mxu0
        %v3638 = vadd.f32 0.0, %v3637
        %v3639 = vpop.f32.mrb[0].mxu0
        %v3640 = vadd.f32 0.0, %v3639
        %3641 = vmatprep.mubr.f32.mxu0 0.0
        %3642 = vmatmul.mubr.f32.gmra.mrb[0].mxu0 %v3395
        %v3643 = vpop.f32.mrb[0].mxu0
        %v3644 = vadd.f32 0.0, %v3643
        %v3645 = vpop.f32.mrb[0].mxu0
        %v3646 = vadd.f32 0.0, %v3645
        %3647 = vmatprep.mubr.f32.mxu0 0.0
        %3648 = vmatmul.mubr.f32.gmra.mrb[0].mxu0 %v3398
        %v3649 = vpop.f32.mrb[0].mxu0
        %v3650 = vadd.f32 0.0, %v3649
        %v3651 = vpop.f32.mrb[0].mxu0
        %v3652 = vadd.f32 0.0, %v3651
        %3653 = vmatprep.mubr.f32.mxu0 0.0
        %3654 = vmatmul.mubr.f32.gmra.mrb[0].mxu0 %v3401
        %v3655 = vpop.f32.mrb[0].mxu0
        %v3656 = vadd.f32 0.0, %v3655
        %v3657 = vpop.f32.mrb[0].mxu0
        %v3658 = vadd.f32 0.0, %v3657
        %3659 = vdwg.mxu0
        %v3660 = vadd.f32 %v1161, %v1163
        %v3661 = vrot.slane %v3660, 4
        %v3662 = vadd.f32 %v3660, %v3661
        %v3663 = vrot.slane %v3662, 2
        %v3664 = vadd.f32 %v3662, %v3663
        %v3665 = vrot.slane %v3664, 1
        %v3666 = vadd.f32 %v3664, %v3665
        %v3667 = vadd.f32 %v1162, %v1164
        %v3668 = vrot.slane %v3667, 4
        %v3669 = vadd.f32 %v3667, %v3668
        %v3670 = vrot.slane %v3669, 2
        %v3671 = vadd.f32 %v3669, %v3670
        %v3672 = vrot.slane %v3671, 1
        %v3673 = vadd.f32 %v3671, %v3672
        %v3674 = vmul.f32 %v3470, %v1181
        %v3675 = vmul.f32 %v3472, %v1182
        %v3676 = vmul.f32 %v3476, %v1183
        %v3677 = vmul.f32 %v3478, %v1184
        %v3678 = vmul.f32 %v3482, %v1185
        %v3679 = vmul.f32 %v3484, %v1186
        %v3680 = vmul.f32 %v3488, %v1187
        %v3681 = vmul.f32 %v3490, %v1188
        %v3682 = vmul.f32 %v3494, %v1189
        %v3683 = vmul.f32 %v3496, %v1190
        %v3684 = vmul.f32 %v3500, %v1191
        %v3685 = vmul.f32 %v3502, %v1192
        %v3686 = vmul.f32 %v3506, %v1193
        %v3687 = vmul.f32 %v3508, %v1194
        %v3688 = vmul.f32 %v3512, %v1195
        %v3689 = vmul.f32 %v3514, %v1196
        %v3690 = vmul.f32 %v3518, %v1197
        %v3691 = vmul.f32 %v3520, %v1198
        %v3692 = vmul.f32 %v3524, %v1199
        %v3693 = vmul.f32 %v3526, %v1200
        %v3694 = vmul.f32 %v3530, %v1201
        %v3695 = vmul.f32 %v3532, %v1202
        %v3696 = vmul.f32 %v3536, %v1203
        %v3697 = vmul.f32 %v3538, %v1204
        %v3698 = vmul.f32 %v3542, %v1205
        %v3699 = vmul.f32 %v3544, %v1206
        %v3700 = vmul.f32 %v3548, %v1207
        %v3701 = vmul.f32 %v3550, %v1208
        %v3702 = vmul.f32 %v3554, %v1209
        %v3703 = vmul.f32 %v3556, %v1210
        %v3704 = vmul.f32 %v3560, %v1211
        %v3705 = vmul.f32 %v3562, %v1212
        %v3706 = vmul.f32 %v3566, %v1213
        %v3707 = vmul.f32 %v3568, %v1214
        %v3708 = vmul.f32 %v3572, %v1215
        %v3709 = vmul.f32 %v3574, %v1216
        %v3710 = vmul.f32 %v3578, %v1217
        %v3711 = vmul.f32 %v3580, %v1218
        %v3712 = vmul.f32 %v3584, %v1219
        %v3713 = vmul.f32 %v3586, %v1220
        %v3714 = vmul.f32 %v3590, %v1221
        %v3715 = vmul.f32 %v3592, %v1222
        %v3716 = vmul.f32 %v3596, %v1223
        %v3717 = vmul.f32 %v3598, %v1224
        %v3718 = vmul.f32 %v3602, %v1225
        %v3719 = vmul.f32 %v3604, %v1226
        %v3720 = vmul.f32 %v3608, %v1227
        %v3721 = vmul.f32 %v3610, %v1228
        %v3722 = vmul.f32 %v3614, %v1229
        %v3723 = vmul.f32 %v3616, %v1230
        %v3724 = vmul.f32 %v3620, %v1231
        %v3725 = vmul.f32 %v3622, %v1232
        %v3726 = vmul.f32 %v3626, %v1233
        %v3727 = vmul.f32 %v3628, %v1234
        %v3728 = vmul.f32 %v3632, %v1235
        %v3729 = vmul.f32 %v3634, %v1236
        %v3730 = vmul.f32 %v3638, %v1237
        %v3731 = vmul.f32 %v3640, %v1238
        %v3732 = vmul.f32 %v3644, %v1239
        %v3733 = vmul.f32 %v3646, %v1240
        %v3734 = vmul.f32 %v3650, %v1241
        %v3735 = vmul.f32 %v3652, %v1242
        %v3736 = vmul.f32 %v3656, %v1243
        %v3737 = vmul.f32 %v3658, %v1244
        %3738 = vmatprep.subr.mxu0 %v3675
        %3739 = vmatpush1.msra.mxu0 %v3674
        %3740 = vmatprep.subr.mxu0 %v3677
        %3741 = vmatpush1.msra.mxu0 %v3676
        %3742 = vmatprep.subr.mxu0 %v3679
        %3743 = vmatpush1.msra.mxu0 %v3678
        %3744 = vmatprep.subr.mxu0 %v3681
        %3745 = vmatpush1.msra.mxu0 %v3680
        %3746 = vmatprep.subr.mxu0 %v3683
        %3747 = vmatpush1.msra.mxu0 %v3682
        %3748 = vmatprep.subr.mxu0 %v3685
        %3749 = vmatpush1.msra.mxu0 %v3684
        %3750 = vmatprep.subr.mxu0 %v3687
        %3751 = vmatpush1.msra.mxu0 %v3686
        %3752 = vmatprep.subr.mxu0 %v3689
        %3753 = vmatpush1.msra.mxu0 %v3688
        %3754 = vmatprep.subr.mxu0 %v3691
        %3755 = vmatpush1.msra.mxu0 %v3690
        %3756 = vmatprep.subr.mxu0 %v3693
        %3757 = vmatpush1.msra.mxu0 %v3692
        %3758 = vmatprep.subr.mxu0 %v3695
        %3759 = vmatpush1.msra.mxu0 %v3694
        %3760 = vmatprep.subr.mxu0 %v3697
        %3761 = vmatpush1.msra.mxu0 %v3696
        %3762 = vmatprep.subr.mxu0 %v3699
        %3763 = vmatpush1.msra.mxu0 %v3698
        %3764 = vmatprep.subr.mxu0 %v3701
        %3765 = vmatpush1.msra.mxu0 %v3700
        %3766 = vmatprep.subr.mxu0 %v3703
        %3767 = vmatpush1.msra.mxu0 %v3702
        %3768 = vmatprep.subr.mxu0 %v3705
        %3769 = vmatpush1.msra.mxu0 %v3704
        %3770 = vmatprep.subr.mxu0 %v3707
        %3771 = vmatpush1.msra.mxu0 %v3706
        %3772 = vmatprep.subr.mxu0 %v3709
        %3773 = vmatpush1.msra.mxu0 %v3708
        %3774 = vmatprep.subr.mxu0 %v3711
        %3775 = vmatpush1.msra.mxu0 %v3710
        %3776 = vmatprep.subr.mxu0 %v3713
        %3777 = vmatpush1.msra.mxu0 %v3712
        %3778 = vmatprep.subr.mxu0 %v3715
        %3779 = vmatpush1.msra.mxu0 %v3714
        %3780 = vmatprep.subr.mxu0 %v3717
        %3781 = vmatpush1.msra.mxu0 %v3716
        %3782 = vmatprep.subr.mxu0 %v3719
        %3783 = vmatpush1.msra.mxu0 %v3718
        %3784 = vmatprep.subr.mxu0 %v3721
        %3785 = vmatpush1.msra.mxu0 %v3720
        %3786 = vmatprep.subr.mxu0 %v3723
        %3787 = vmatpush1.msra.mxu0 %v3722
        %3788 = vmatprep.subr.mxu0 %v3725
        %3789 = vmatpush1.msra.mxu0 %v3724
        %3790 = vmatprep.subr.mxu0 %v3727
        %3791 = vmatpush1.msra.mxu0 %v3726
        %3792 = vmatprep.subr.mxu0 %v3729
        %3793 = vmatpush1.msra.mxu0 %v3728
        %3794 = vmatprep.subr.mxu0 %v3731
        %3795 = vmatpush1.msra.mxu0 %v3730
        %3796 = vmatprep.subr.mxu0 %v3733
        %3797 = vmatpush1.msra.mxu0 %v3732
        %3798 = vmatprep.subr.mxu0 %v3735
        %3799 = vmatpush1.msra.mxu0 %v3734
        %3800 = vmatprep.subr.mxu0 %v3737
        %3801 = vmatpush1.msra.mxu0 %v3736
        %3802 = vmatprep.mubr.f32.mxu0 %v1130
        %3803 = vmatmul.mubr.f32.gmra.mrb[0].mxu0 %v1129
        %v3804 = vpop.f32.mrb[0].mxu0
        %v3805 = vadd.f32 0.0, %v3804
        %v3806 = vpop.f32.mrb[0].mxu0
        %v3807 = vadd.f32 0.0, %v3806
        %3808 = vmatprep.mubr.f32.mxu0 %v1132
        %3809 = vmatmul.mubr.f32.gmra.mrb[0].mxu0 %v1131
        %v3810 = vpop.f32.mrb[0].mxu0
        %v3811 = vadd.f32 0.0, %v3810
        %v3812 = vpop.f32.mrb[0].mxu0
        %v3813 = vadd.f32 0.0, %v3812
        %3814 = vdwg.mxu0
        %v3815 = vmul.f32 %v1129, %v3666
        %v3816 = vmul.f32 %v1130, %v3673
        %v3817 = vmul.f32 %v1131, %v3666
        %v3818 = vmul.f32 %v1132, %v3673
        %3819 = vmatprep.subr.mxu0 %v1182
        %3820 = vmatpush1.msra.mxu0 %v1181
        %3821 = vmatprep.subr.mxu0 %v1184
        %3822 = vmatpush1.msra.mxu0 %v1183
        %3823 = vmatprep.subr.mxu0 %v1186
        %3824 = vmatpush1.msra.mxu0 %v1185
        %3825 = vmatprep.subr.mxu0 %v1188
        %3826 = vmatpush1.msra.mxu0 %v1187
        %3827 = vmatprep.subr.mxu0 %v1190
        %3828 = vmatpush1.msra.mxu0 %v1189
        %3829 = vmatprep.subr.mxu0 %v1192
        %3830 = vmatpush1.msra.mxu0 %v1191
        %3831 = vmatprep.subr.mxu0 %v1194
        %3832 = vmatpush1.msra.mxu0 %v1193
        %3833 = vmatprep.subr.mxu0 %v1196
        %3834 = vmatpush1.msra.mxu0 %v1195
        %3835 = vmatprep.subr.mxu0 %v1198
        %3836 = vmatpush1.msra.mxu0 %v1197
        %3837 = vmatprep.subr.mxu0 %v1200
        %3838 = vmatpush1.msra.mxu0 %v1199
        %3839 = vmatprep.subr.mxu0 %v1202
        %3840 = vmatpush1.msra.mxu0 %v1201
        %3841 = vmatprep.subr.mxu0 %v1204
        %3842 = vmatpush1.msra.mxu0 %v1203
        %3843 = vmatprep.subr.mxu0 %v1206
        %3844 = vmatpush1.msra.mxu0 %v1205
        %3845 = vmatprep.subr.mxu0 %v1208
        %3846 = vmatpush1.msra.mxu0 %v1207
        %3847 = vmatprep.subr.mxu0 %v1210
        %3848 = vmatpush1.msra.mxu0 %v1209
        %3849 = vmatprep.subr.mxu0 %v1212
        %3850 = vmatpush1.msra.mxu0 %v1211
        %3851 = vmatprep.subr.mxu0 %v1214
        %3852 = vmatpush1.msra.mxu0 %v1213
        %3853 = vmatprep.subr.mxu0 %v1216
        %3854 = vmatpush1.msra.mxu0 %v1215
        %3855 = vmatprep.subr.mxu0 %v1218
        %3856 = vmatpush1.msra.mxu0 %v1217
        %3857 = vmatprep.subr.mxu0 %v1220
        %3858 = vmatpush1.msra.mxu0 %v1219
        %3859 = vmatprep.subr.mxu0 %v1222
        %3860 = vmatpush1.msra.mxu0 %v1221
        %3861 = vmatprep.subr.mxu0 %v1224
        %3862 = vmatpush1.msra.mxu0 %v1223
        %3863 = vmatprep.subr.mxu0 %v1226
        %3864 = vmatpush1.msra.mxu0 %v1225
        %3865 = vmatprep.subr.mxu0 %v1228
        %3866 = vmatpush1.msra.mxu0 %v1227
        %3867 = vmatprep.subr.mxu0 %v1230
        %3868 = vmatpush1.msra.mxu0 %v1229
        %3869 = vmatprep.subr.mxu0 %v1232
        %3870 = vmatpush1.msra.mxu0 %v1231
        %3871 = vmatprep.subr.mxu0 %v1234
        %3872 = vmatpush1.msra.mxu0 %v1233
        %3873 = vmatprep.subr.mxu0 %v1236
        %3874 = vmatpush1.msra.mxu0 %v1235
        %3875 = vmatprep.subr.mxu0 %v1238
        %3876 = vmatpush1.msra.mxu0 %v1237
        %3877 = vmatprep.subr.mxu0 %v1240
        %3878 = vmatpush1.msra.mxu0 %v1239
        %3879 = vmatprep.subr.mxu0 %v1242
        %3880 = vmatpush1.msra.mxu0 %v1241
        %3881 = vmatprep.subr.mxu0 %v1244
        %3882 = vmatpush1.msra.mxu0 %v1243
        %3883 = vmatprep.mubr.f32.mxu0 %v3816
        %3884 = vmatmul.mubr.f32.gmra.mrb[0].mxu0 %v3815
        %v3885 = vpop.f32.mrb[0].mxu0
        %v3886 = vadd.f32 1e-06, %v3885
        %v3887 = vpop.f32.mrb[0].mxu0
        %v3888 = vadd.f32 1e-06, %v3887
        %3889 = vmatprep.mubr.f32.mxu0 %v3818
        %3890 = vmatmul.mubr.f32.gmra.mrb[0].mxu0 %v3817
        %v3891 = vpop.f32.mrb[0].mxu0
        %v3892 = vadd.f32 1e-06, %v3891
        %v3893 = vpop.f32.mrb[0].mxu0
        %v3894 = vadd.f32 1e-06, %v3893
        %3895 = vdwg.mxu0
        %v3896 = vrcp.pop %v3886
        %v3897 = vmul.f32 %v3805, %v3896
        %v3898 = vrcp.pop %v3888
        %v3899 = vmul.f32 %v3807, %v3898
        %v3900 = vrcp.pop %v3892
        %v3901 = vmul.f32 %v3811, %v3900
        %v3902 = vrcp.pop %v3894
        %v3903 = vmul.f32 %v3813, %v3902
        %s3904 = scalar_lea.vmem %s256, 96 [#allocation3]
        %3905 = vst [vmem:[%s3904] sm:$0xff] %v3897
        %3906 = vst [vmem:[%s3904 + $0x8] sm:$0xff] %v3899
        %3907 = vst [vmem:[%s3904 + $0x10] sm:$0xff] %v3901
        %3908 = vst [vmem:[%s3904 + $0x18] sm:$0xff] %v3903
        %3909 = vxpose.xlu0.b32.start [1/16] %v1165, 128
        %3910 = vxpose.xlu0.b32.cont [2/16] %v1167, 128
        %3911 = vxpose.xlu0.b32.cont [3/16] 0.0, 128
        %3912 = vxpose.xlu0.b32.cont [4/16] 0.0, 128
        %3913 = vxpose.xlu0.b32.cont [5/16] 0.0, 128
        %3914 = vxpose.xlu0.b32.cont [6/16] 0.0, 128
        %3915 = vxpose.xlu0.b32.cont [7/16] 0.0, 128
        %3916 = vxpose.xlu0.b32.cont [8/16] 0.0, 128
        %3917 = vxpose.xlu0.b32.cont [9/16] 0.0, 128
        %3918 = vxpose.xlu0.b32.cont [10/16] 0.0, 128
        %3919 = vxpose.xlu0.b32.cont [11/16] 0.0, 128
        %3920 = vxpose.xlu0.b32.cont [12/16] 0.0, 128
        %3921 = vxpose.xlu0.b32.cont [13/16] 0.0, 128
        %3922 = vxpose.xlu0.b32.cont [14/16] 0.0, 128
        %3923 = vxpose.xlu0.b32.cont [15/16] 0.0, 128
        %3924 = vxpose.xlu0.b32.end [16/16] 0.0, 128
        %v3925 = vpop.trf.xlu0
        %v3926 = vpop.trf.xlu0
        %v3927 = vpop.trf.xlu0
        %v3928 = vpop.trf.xlu0
        %v3929 = vpop.trf.xlu0
        %v3930 = vpop.trf.xlu0
        %v3931 = vpop.trf.xlu0
        %v3932 = vpop.trf.xlu0
        %v3933 = vpop.trf.xlu0
        %v3934 = vpop.trf.xlu0
        %v3935 = vpop.trf.xlu0
        %v3936 = vpop.trf.xlu0
        %v3937 = vpop.trf.xlu0
        %v3938 = vpop.trf.xlu0
        %v3939 = vpop.trf.xlu0
        %v3940 = vpop.trf.xlu0
        %3941 = vxpose.xlu0.b32.start [1/16] %v1166, 128
        %3942 = vxpose.xlu0.b32.cont [2/16] %v1168, 128
        %3943 = vxpose.xlu0.b32.cont [3/16] 0.0, 128
        %3944 = vxpose.xlu0.b32.cont [4/16] 0.0, 128
        %3945 = vxpose.xlu0.b32.cont [5/16] 0.0, 128
        %3946 = vxpose.xlu0.b32.cont [6/16] 0.0, 128
        %3947 = vxpose.xlu0.b32.cont [7/16] 0.0, 128
        %3948 = vxpose.xlu0.b32.cont [8/16] 0.0, 128
        %3949 = vxpose.xlu0.b32.cont [9/16] 0.0, 128
        %3950 = vxpose.xlu0.b32.cont [10/16] 0.0, 128
        %3951 = vxpose.xlu0.b32.cont [11/16] 0.0, 128
        %3952 = vxpose.xlu0.b32.cont [12/16] 0.0, 128
        %3953 = vxpose.xlu0.b32.cont [13/16] 0.0, 128
        %3954 = vxpose.xlu0.b32.cont [14/16] 0.0, 128
        %3955 = vxpose.xlu0.b32.cont [15/16] 0.0, 128
        %3956 = vxpose.xlu0.b32.end [16/16] 0.0, 128
        %v3957 = vpop.trf.xlu0
        %v3958 = vpop.trf.xlu0
        %v3959 = vpop.trf.xlu0
        %v3960 = vpop.trf.xlu0
        %v3961 = vpop.trf.xlu0
        %v3962 = vpop.trf.xlu0
        %v3963 = vpop.trf.xlu0
        %v3964 = vpop.trf.xlu0
        %v3965 = vpop.trf.xlu0
        %v3966 = vpop.trf.xlu0
        %v3967 = vpop.trf.xlu0
        %v3968 = vpop.trf.xlu0
        %v3969 = vpop.trf.xlu0
        %v3970 = vpop.trf.xlu0
        %v3971 = vpop.trf.xlu0
        %v3972 = vpop.trf.xlu0
        %v3974 = vsel %vm1309, %v3925, 0
        %v3977 = vsel %vm1309, %v3926, 0
        %v3980 = vsel %vm1309, %v3927, 0
        %v3983 = vsel %vm1309, %v3928, 0
        %v3986 = vsel %vm1309, %v3929, 0
        %v3989 = vsel %vm1309, %v3930, 0
        %v3992 = vsel %vm1309, %v3931, 0
        %v3995 = vsel %vm1309, %v3932, 0
        %v3998 = vsel %vm1309, %v3933, 0
        %v4001 = vsel %vm1309, %v3934, 0
        %v4004 = vsel %vm1309, %v3935, 0
        %v4007 = vsel %vm1309, %v3936, 0
        %v4010 = vsel %vm1309, %v3937, 0
        %v4013 = vsel %vm1309, %v3938, 0
        %v4016 = vsel %vm1309, %v3939, 0
        %v4019 = vsel %vm1309, %v3940, 0
        %v4022 = vsel %vm1309, %v3957, 0
        %v4025 = vsel %vm1309, %v3958, 0
        %v4028 = vsel %vm1309, %v3959, 0
        %v4031 = vsel %vm1309, %v3960, 0
        %v4034 = vsel %vm1309, %v3961, 0
        %v4037 = vsel %vm1309, %v3962, 0
        %v4040 = vsel %vm1309, %v3963, 0
        %v4043 = vsel %vm1309, %v3964, 0
        %v4046 = vsel %vm1309, %v3965, 0
        %v4049 = vsel %vm1309, %v3966, 0
        %v4052 = vsel %vm1309, %v3967, 0
        %v4055 = vsel %vm1309, %v3968, 0
        %v4058 = vsel %vm1309, %v3969, 0
        %v4061 = vsel %vm1309, %v3970, 0
        %v4064 = vsel %vm1309, %v3971, 0
        %v4067 = vsel %vm1309, %v3972, 0
        %4069 = vmatprep.subr.mxu0 %v817
        %4070 = vmatpush1.msra.mxu0 %v815
        %4071 = vmatprep.subr.mxu0 %v823
        %4072 = vmatpush1.msra.mxu0 %v821
        %4073 = vmatprep.subr.mxu0 0.0
        %4074 = vmatpush1.msra.mxu0 0.0
        %4075 = vmatprep.subr.mxu0 0.0
        %4076 = vmatpush1.msra.mxu0 0.0
        %4077 = vmatprep.subr.mxu0 0.0
        %4078 = vmatpush1.msra.mxu0 0.0
        %4079 = vmatprep.subr.mxu0 0.0
        %4080 = vmatpush1.msra.mxu0 0.0
        %4081 = vmatprep.subr.mxu0 0.0
        %4082 = vmatpush1.msra.mxu0 0.0
        %4083 = vmatprep.subr.mxu0 0.0
        %4084 = vmatpush1.msra.mxu0 0.0
        %4085 = vmatprep.subr.mxu0 0.0
        %4086 = vmatpush1.msra.mxu0 0.0
        %4087 = vmatprep.subr.mxu0 0.0
        %4088 = vmatpush1.msra.mxu0 0.0
        %4089 = vmatprep.subr.mxu0 0.0
        %4090 = vmatpush1.msra.mxu0 0.0
        %4091 = vmatprep.subr.mxu0 0.0
        %4092 = vmatpush1.msra.mxu0 0.0
        %4093 = vmatprep.subr.mxu0 0.0
        %4094 = vmatpush1.msra.mxu0 0.0
        %4095 = vmatprep.subr.mxu0 0.0
        %4096 = vmatpush1.msra.mxu0 0.0
        %4097 = vmatprep.subr.mxu0 0.0
        %4098 = vmatpush1.msra.mxu0 0.0
        %4099 = vmatprep.subr.mxu0 0.0
        %4100 = vmatpush1.msra.mxu0 0.0
        %4101 = vmatprep.subr.mxu0 0.0
        %4102 = vmatpush1.msra.mxu0 0.0
        %4103 = vmatprep.subr.mxu0 0.0
        %4104 = vmatpush1.msra.mxu0 0.0
        %4105 = vmatprep.subr.mxu0 0.0
        %4106 = vmatpush1.msra.mxu0 0.0
        %4107 = vmatprep.subr.mxu0 0.0
        %4108 = vmatpush1.msra.mxu0 0.0
        %4109 = vmatprep.subr.mxu0 0.0
        %4110 = vmatpush1.msra.mxu0 0.0
        %4111 = vmatprep.subr.mxu0 0.0
        %4112 = vmatpush1.msra.mxu0 0.0
        %4113 = vmatprep.subr.mxu0 0.0
        %4114 = vmatpush1.msra.mxu0 0.0
        %4115 = vmatprep.subr.mxu0 0.0
        %4116 = vmatpush1.msra.mxu0 0.0
        %4117 = vmatprep.subr.mxu0 0.0
        %4118 = vmatpush1.msra.mxu0 0.0
        %4119 = vmatprep.subr.mxu0 0.0
        %4120 = vmatpush1.msra.mxu0 0.0
        %4121 = vmatprep.subr.mxu0 0.0
        %4122 = vmatpush1.msra.mxu0 0.0
        %4123 = vmatprep.subr.mxu0 0.0
        %4124 = vmatpush1.msra.mxu0 0.0
        %4125 = vmatprep.subr.mxu0 0.0
        %4126 = vmatpush1.msra.mxu0 0.0
        %4127 = vmatprep.subr.mxu0 0.0
        %4128 = vmatpush1.msra.mxu0 0.0
        %4129 = vmatprep.subr.mxu0 0.0
        %4130 = vmatpush1.msra.mxu0 0.0
        %4131 = vmatprep.subr.mxu0 0.0
        %4132 = vmatpush1.msra.mxu0 0.0
        %4133 = vmatprep.mubr.f32.mxu0 0.0
        %4134 = vmatmul.mubr.f32.gmra.mrb[0].mxu0 %v3974
        %v4135 = vpop.f32.mrb[0].mxu0
        %v4136 = vadd.f32 0.0, %v4135
        %v4137 = vpop.f32.mrb[0].mxu0
        %v4138 = vadd.f32 0.0, %v4137
        %4139 = vmatprep.mubr.f32.mxu0 0.0
        %4140 = vmatmul.mubr.f32.gmra.mrb[0].mxu0 %v3977
        %v4141 = vpop.f32.mrb[0].mxu0
        %v4142 = vadd.f32 0.0, %v4141
        %v4143 = vpop.f32.mrb[0].mxu0
        %v4144 = vadd.f32 0.0, %v4143
        %4145 = vmatprep.mubr.f32.mxu0 0.0
        %4146 = vmatmul.mubr.f32.gmra.mrb[0].mxu0 %v3980
        %v4147 = vpop.f32.mrb[0].mxu0
        %v4148 = vadd.f32 0.0, %v4147
        %v4149 = vpop.f32.mrb[0].mxu0
        %v4150 = vadd.f32 0.0, %v4149
        %4151 = vmatprep.mubr.f32.mxu0 0.0
        %4152 = vmatmul.mubr.f32.gmra.mrb[0].mxu0 %v3983
        %v4153 = vpop.f32.mrb[0].mxu0
        %v4154 = vadd.f32 0.0, %v4153
        %v4155 = vpop.f32.mrb[0].mxu0
        %v4156 = vadd.f32 0.0, %v4155
        %4157 = vmatprep.mubr.f32.mxu0 0.0
        %4158 = vmatmul.mubr.f32.gmra.mrb[0].mxu0 %v3986
        %v4159 = vpop.f32.mrb[0].mxu0
        %v4160 = vadd.f32 0.0, %v4159
        %v4161 = vpop.f32.mrb[0].mxu0
        %v4162 = vadd.f32 0.0, %v4161
        %4163 = vmatprep.mubr.f32.mxu0 0.0
        %4164 = vmatmul.mubr.f32.gmra.mrb[0].mxu0 %v3989
        %v4165 = vpop.f32.mrb[0].mxu0
        %v4166 = vadd.f32 0.0, %v4165
        %v4167 = vpop.f32.mrb[0].mxu0
        %v4168 = vadd.f32 0.0, %v4167
        %4169 = vmatprep.mubr.f32.mxu0 0.0
        %4170 = vmatmul.mubr.f32.gmra.mrb[0].mxu0 %v3992
        %v4171 = vpop.f32.mrb[0].mxu0
        %v4172 = vadd.f32 0.0, %v4171
        %v4173 = vpop.f32.mrb[0].mxu0
        %v4174 = vadd.f32 0.0, %v4173
        %4175 = vmatprep.mubr.f32.mxu0 0.0
        %4176 = vmatmul.mubr.f32.gmra.mrb[0].mxu0 %v3995
        %v4177 = vpop.f32.mrb[0].mxu0
        %v4178 = vadd.f32 0.0, %v4177
        %v4179 = vpop.f32.mrb[0].mxu0
        %v4180 = vadd.f32 0.0, %v4179
        %4181 = vmatprep.mubr.f32.mxu0 0.0
        %4182 = vmatmul.mubr.f32.gmra.mrb[0].mxu0 %v3998
        %v4183 = vpop.f32.mrb[0].mxu0
        %v4184 = vadd.f32 0.0, %v4183
        %v4185 = vpop.f32.mrb[0].mxu0
        %v4186 = vadd.f32 0.0, %v4185
        %4187 = vmatprep.mubr.f32.mxu0 0.0
        %4188 = vmatmul.mubr.f32.gmra.mrb[0].mxu0 %v4001
        %v4189 = vpop.f32.mrb[0].mxu0
        %v4190 = vadd.f32 0.0, %v4189
        %v4191 = vpop.f32.mrb[0].mxu0
        %v4192 = vadd.f32 0.0, %v4191
        %4193 = vmatprep.mubr.f32.mxu0 0.0
        %4194 = vmatmul.mubr.f32.gmra.mrb[0].mxu0 %v4004
        %v4195 = vpop.f32.mrb[0].mxu0
        %v4196 = vadd.f32 0.0, %v4195
        %v4197 = vpop.f32.mrb[0].mxu0
        %v4198 = vadd.f32 0.0, %v4197
        %4199 = vmatprep.mubr.f32.mxu0 0.0
        %4200 = vmatmul.mubr.f32.gmra.mrb[0].mxu0 %v4007
        %v4201 = vpop.f32.mrb[0].mxu0
        %v4202 = vadd.f32 0.0, %v4201
        %v4203 = vpop.f32.mrb[0].mxu0
        %v4204 = vadd.f32 0.0, %v4203
        %4205 = vmatprep.mubr.f32.mxu0 0.0
        %4206 = vmatmul.mubr.f32.gmra.mrb[0].mxu0 %v4010
        %v4207 = vpop.f32.mrb[0].mxu0
        %v4208 = vadd.f32 0.0, %v4207
        %v4209 = vpop.f32.mrb[0].mxu0
        %v4210 = vadd.f32 0.0, %v4209
        %4211 = vmatprep.mubr.f32.mxu0 0.0
        %4212 = vmatmul.mubr.f32.gmra.mrb[0].mxu0 %v4013
        %v4213 = vpop.f32.mrb[0].mxu0
        %v4214 = vadd.f32 0.0, %v4213
        %v4215 = vpop.f32.mrb[0].mxu0
        %v4216 = vadd.f32 0.0, %v4215
        %4217 = vmatprep.mubr.f32.mxu0 0.0
        %4218 = vmatmul.mubr.f32.gmra.mrb[0].mxu0 %v4016
        %v4219 = vpop.f32.mrb[0].mxu0
        %v4220 = vadd.f32 0.0, %v4219
        %v4221 = vpop.f32.mrb[0].mxu0
        %v4222 = vadd.f32 0.0, %v4221
        %4223 = vmatprep.mubr.f32.mxu0 0.0
        %4224 = vmatmul.mubr.f32.gmra.mrb[0].mxu0 %v4019
        %v4225 = vpop.f32.mrb[0].mxu0
        %v4226 = vadd.f32 0.0, %v4225
        %v4227 = vpop.f32.mrb[0].mxu0
        %v4228 = vadd.f32 0.0, %v4227
        %4229 = vmatprep.mubr.f32.mxu0 0.0
        %4230 = vmatmul.mubr.f32.gmra.mrb[0].mxu0 %v4022
        %v4231 = vpop.f32.mrb[0].mxu0
        %v4232 = vadd.f32 0.0, %v4231
        %v4233 = vpop.f32.mrb[0].mxu0
        %v4234 = vadd.f32 0.0, %v4233
        %4235 = vmatprep.mubr.f32.mxu0 0.0
        %4236 = vmatmul.mubr.f32.gmra.mrb[0].mxu0 %v4025
        %v4237 = vpop.f32.mrb[0].mxu0
        %v4238 = vadd.f32 0.0, %v4237
        %v4239 = vpop.f32.mrb[0].mxu0
        %v4240 = vadd.f32 0.0, %v4239
        %4241 = vmatprep.mubr.f32.mxu0 0.0
        %4242 = vmatmul.mubr.f32.gmra.mrb[0].mxu0 %v4028
        %v4243 = vpop.f32.mrb[0].mxu0
        %v4244 = vadd.f32 0.0, %v4243
        %v4245 = vpop.f32.mrb[0].mxu0
        %v4246 = vadd.f32 0.0, %v4245
        %4247 = vmatprep.mubr.f32.mxu0 0.0
        %4248 = vmatmul.mubr.f32.gmra.mrb[0].mxu0 %v4031
        %v4249 = vpop.f32.mrb[0].mxu0
        %v4250 = vadd.f32 0.0, %v4249
        %v4251 = vpop.f32.mrb[0].mxu0
        %v4252 = vadd.f32 0.0, %v4251
        %4253 = vmatprep.mubr.f32.mxu0 0.0
        %4254 = vmatmul.mubr.f32.gmra.mrb[0].mxu0 %v4034
        %v4255 = vpop.f32.mrb[0].mxu0
        %v4256 = vadd.f32 0.0, %v4255
        %v4257 = vpop.f32.mrb[0].mxu0
        %v4258 = vadd.f32 0.0, %v4257
        %4259 = vmatprep.mubr.f32.mxu0 0.0
        %4260 = vmatmul.mubr.f32.gmra.mrb[0].mxu0 %v4037
        %v4261 = vpop.f32.mrb[0].mxu0
        %v4262 = vadd.f32 0.0, %v4261
        %v4263 = vpop.f32.mrb[0].mxu0
        %v4264 = vadd.f32 0.0, %v4263
        %4265 = vmatprep.mubr.f32.mxu0 0.0
        %4266 = vmatmul.mubr.f32.gmra.mrb[0].mxu0 %v4040
        %v4267 = vpop.f32.mrb[0].mxu0
        %v4268 = vadd.f32 0.0, %v4267
        %v4269 = vpop.f32.mrb[0].mxu0
        %v4270 = vadd.f32 0.0, %v4269
        %4271 = vmatprep.mubr.f32.mxu0 0.0
        %4272 = vmatmul.mubr.f32.gmra.mrb[0].mxu0 %v4043
        %v4273 = vpop.f32.mrb[0].mxu0
        %v4274 = vadd.f32 0.0, %v4273
        %v4275 = vpop.f32.mrb[0].mxu0
        %v4276 = vadd.f32 0.0, %v4275
        %4277 = vmatprep.mubr.f32.mxu0 0.0
        %4278 = vmatmul.mubr.f32.gmra.mrb[0].mxu0 %v4046
        %v4279 = vpop.f32.mrb[0].mxu0
        %v4280 = vadd.f32 0.0, %v4279
        %v4281 = vpop.f32.mrb[0].mxu0
        %v4282 = vadd.f32 0.0, %v4281
        %4283 = vmatprep.mubr.f32.mxu0 0.0
        %4284 = vmatmul.mubr.f32.gmra.mrb[0].mxu0 %v4049
        %v4285 = vpop.f32.mrb[0].mxu0
        %v4286 = vadd.f32 0.0, %v4285
        %v4287 = vpop.f32.mrb[0].mxu0
        %v4288 = vadd.f32 0.0, %v4287
        %4289 = vmatprep.mubr.f32.mxu0 0.0
        %4290 = vmatmul.mubr.f32.gmra.mrb[0].mxu0 %v4052
        %v4291 = vpop.f32.mrb[0].mxu0
        %v4292 = vadd.f32 0.0, %v4291
        %v4293 = vpop.f32.mrb[0].mxu0
        %v4294 = vadd.f32 0.0, %v4293
        %4295 = vmatprep.mubr.f32.mxu0 0.0
        %4296 = vmatmul.mubr.f32.gmra.mrb[0].mxu0 %v4055
        %v4297 = vpop.f32.mrb[0].mxu0
        %v4298 = vadd.f32 0.0, %v4297
        %v4299 = vpop.f32.mrb[0].mxu0
        %v4300 = vadd.f32 0.0, %v4299
        %4301 = vmatprep.mubr.f32.mxu0 0.0
        %4302 = vmatmul.mubr.f32.gmra.mrb[0].mxu0 %v4058
        %v4303 = vpop.f32.mrb[0].mxu0
        %v4304 = vadd.f32 0.0, %v4303
        %v4305 = vpop.f32.mrb[0].mxu0
        %v4306 = vadd.f32 0.0, %v4305
        %4307 = vmatprep.mubr.f32.mxu0 0.0
        %4308 = vmatmul.mubr.f32.gmra.mrb[0].mxu0 %v4061
        %v4309 = vpop.f32.mrb[0].mxu0
        %v4310 = vadd.f32 0.0, %v4309
        %v4311 = vpop.f32.mrb[0].mxu0
        %v4312 = vadd.f32 0.0, %v4311
        %4313 = vmatprep.mubr.f32.mxu0 0.0
        %4314 = vmatmul.mubr.f32.gmra.mrb[0].mxu0 %v4064
        %v4315 = vpop.f32.mrb[0].mxu0
        %v4316 = vadd.f32 0.0, %v4315
        %v4317 = vpop.f32.mrb[0].mxu0
        %v4318 = vadd.f32 0.0, %v4317
        %4319 = vmatprep.mubr.f32.mxu0 0.0
        %4320 = vmatmul.mubr.f32.gmra.mrb[0].mxu0 %v4067
        %v4321 = vpop.f32.mrb[0].mxu0
        %v4322 = vadd.f32 0.0, %v4321
        %v4323 = vpop.f32.mrb[0].mxu0
        %v4324 = vadd.f32 0.0, %v4323
        %4325 = vdwg.mxu0
        %v4326 = vadd.f32 %v1165, %v1167
        %v4327 = vrot.slane %v4326, 4
        %v4328 = vadd.f32 %v4326, %v4327
        %v4329 = vrot.slane %v4328, 2
        %v4330 = vadd.f32 %v4328, %v4329
        %v4331 = vrot.slane %v4330, 1
        %v4332 = vadd.f32 %v4330, %v4331
        %v4333 = vadd.f32 %v1166, %v1168
        %v4334 = vrot.slane %v4333, 4
        %v4335 = vadd.f32 %v4333, %v4334
        %v4336 = vrot.slane %v4335, 2
        %v4337 = vadd.f32 %v4335, %v4336
        %v4338 = vrot.slane %v4337, 1
        %v4339 = vadd.f32 %v4337, %v4338
        %v4340 = vmul.f32 %v4136, %v1181
        %v4341 = vmul.f32 %v4138, %v1182
        %v4342 = vmul.f32 %v4142, %v1183
        %v4343 = vmul.f32 %v4144, %v1184
        %v4344 = vmul.f32 %v4148, %v1185
        %v4345 = vmul.f32 %v4150, %v1186
        %v4346 = vmul.f32 %v4154, %v1187
        %v4347 = vmul.f32 %v4156, %v1188
        %v4348 = vmul.f32 %v4160, %v1189
        %v4349 = vmul.f32 %v4162, %v1190
        %v4350 = vmul.f32 %v4166, %v1191
        %v4351 = vmul.f32 %v4168, %v1192
        %v4352 = vmul.f32 %v4172, %v1193
        %v4353 = vmul.f32 %v4174, %v1194
        %v4354 = vmul.f32 %v4178, %v1195
        %v4355 = vmul.f32 %v4180, %v1196
        %v4356 = vmul.f32 %v4184, %v1197
        %v4357 = vmul.f32 %v4186, %v1198
        %v4358 = vmul.f32 %v4190, %v1199
        %v4359 = vmul.f32 %v4192, %v1200
        %v4360 = vmul.f32 %v4196, %v1201
        %v4361 = vmul.f32 %v4198, %v1202
        %v4362 = vmul.f32 %v4202, %v1203
        %v4363 = vmul.f32 %v4204, %v1204
        %v4364 = vmul.f32 %v4208, %v1205
        %v4365 = vmul.f32 %v4210, %v1206
        %v4366 = vmul.f32 %v4214, %v1207
        %v4367 = vmul.f32 %v4216, %v1208
        %v4368 = vmul.f32 %v4220, %v1209
        %v4369 = vmul.f32 %v4222, %v1210
        %v4370 = vmul.f32 %v4226, %v1211
        %v4371 = vmul.f32 %v4228, %v1212
        %v4372 = vmul.f32 %v4232, %v1213
        %v4373 = vmul.f32 %v4234, %v1214
        %v4374 = vmul.f32 %v4238, %v1215
        %v4375 = vmul.f32 %v4240, %v1216
        %v4376 = vmul.f32 %v4244, %v1217
        %v4377 = vmul.f32 %v4246, %v1218
        %v4378 = vmul.f32 %v4250, %v1219
        %v4379 = vmul.f32 %v4252, %v1220
        %v4380 = vmul.f32 %v4256, %v1221
        %v4381 = vmul.f32 %v4258, %v1222
        %v4382 = vmul.f32 %v4262, %v1223
        %v4383 = vmul.f32 %v4264, %v1224
        %v4384 = vmul.f32 %v4268, %v1225
        %v4385 = vmul.f32 %v4270, %v1226
        %v4386 = vmul.f32 %v4274, %v1227
        %v4387 = vmul.f32 %v4276, %v1228
        %v4388 = vmul.f32 %v4280, %v1229
        %v4389 = vmul.f32 %v4282, %v1230
        %v4390 = vmul.f32 %v4286, %v1231
        %v4391 = vmul.f32 %v4288, %v1232
        %v4392 = vmul.f32 %v4292, %v1233
        %v4393 = vmul.f32 %v4294, %v1234
        %v4394 = vmul.f32 %v4298, %v1235
        %v4395 = vmul.f32 %v4300, %v1236
        %v4396 = vmul.f32 %v4304, %v1237
        %v4397 = vmul.f32 %v4306, %v1238
        %v4398 = vmul.f32 %v4310, %v1239
        %v4399 = vmul.f32 %v4312, %v1240
        %v4400 = vmul.f32 %v4316, %v1241
        %v4401 = vmul.f32 %v4318, %v1242
        %v4402 = vmul.f32 %v4322, %v1243
        %v4403 = vmul.f32 %v4324, %v1244
        %4404 = vmatprep.subr.mxu0 %v4341
        %4405 = vmatpush1.msra.mxu0 %v4340
        %4406 = vmatprep.subr.mxu0 %v4343
        %4407 = vmatpush1.msra.mxu0 %v4342
        %4408 = vmatprep.subr.mxu0 %v4345
        %4409 = vmatpush1.msra.mxu0 %v4344
        %4410 = vmatprep.subr.mxu0 %v4347
        %4411 = vmatpush1.msra.mxu0 %v4346
        %4412 = vmatprep.subr.mxu0 %v4349
        %4413 = vmatpush1.msra.mxu0 %v4348
        %4414 = vmatprep.subr.mxu0 %v4351
        %4415 = vmatpush1.msra.mxu0 %v4350
        %4416 = vmatprep.subr.mxu0 %v4353
        %4417 = vmatpush1.msra.mxu0 %v4352
        %4418 = vmatprep.subr.mxu0 %v4355
        %4419 = vmatpush1.msra.mxu0 %v4354
        %4420 = vmatprep.subr.mxu0 %v4357
        %4421 = vmatpush1.msra.mxu0 %v4356
        %4422 = vmatprep.subr.mxu0 %v4359
        %4423 = vmatpush1.msra.mxu0 %v4358
        %4424 = vmatprep.subr.mxu0 %v4361
        %4425 = vmatpush1.msra.mxu0 %v4360
        %4426 = vmatprep.subr.mxu0 %v4363
        %4427 = vmatpush1.msra.mxu0 %v4362
        %4428 = vmatprep.subr.mxu0 %v4365
        %4429 = vmatpush1.msra.mxu0 %v4364
        %4430 = vmatprep.subr.mxu0 %v4367
        %4431 = vmatpush1.msra.mxu0 %v4366
        %4432 = vmatprep.subr.mxu0 %v4369
        %4433 = vmatpush1.msra.mxu0 %v4368
        %4434 = vmatprep.subr.mxu0 %v4371
        %4435 = vmatpush1.msra.mxu0 %v4370
        %4436 = vmatprep.subr.mxu0 %v4373
        %4437 = vmatpush1.msra.mxu0 %v4372
        %4438 = vmatprep.subr.mxu0 %v4375
        %4439 = vmatpush1.msra.mxu0 %v4374
        %4440 = vmatprep.subr.mxu0 %v4377
        %4441 = vmatpush1.msra.mxu0 %v4376
        %4442 = vmatprep.subr.mxu0 %v4379
        %4443 = vmatpush1.msra.mxu0 %v4378
        %4444 = vmatprep.subr.mxu0 %v4381
        %4445 = vmatpush1.msra.mxu0 %v4380
        %4446 = vmatprep.subr.mxu0 %v4383
        %4447 = vmatpush1.msra.mxu0 %v4382
        %4448 = vmatprep.subr.mxu0 %v4385
        %4449 = vmatpush1.msra.mxu0 %v4384
        %4450 = vmatprep.subr.mxu0 %v4387
        %4451 = vmatpush1.msra.mxu0 %v4386
        %4452 = vmatprep.subr.mxu0 %v4389
        %4453 = vmatpush1.msra.mxu0 %v4388
        %4454 = vmatprep.subr.mxu0 %v4391
        %4455 = vmatpush1.msra.mxu0 %v4390
        %4456 = vmatprep.subr.mxu0 %v4393
        %4457 = vmatpush1.msra.mxu0 %v4392
        %4458 = vmatprep.subr.mxu0 %v4395
        %4459 = vmatpush1.msra.mxu0 %v4394
        %4460 = vmatprep.subr.mxu0 %v4397
        %4461 = vmatpush1.msra.mxu0 %v4396
        %4462 = vmatprep.subr.mxu0 %v4399
        %4463 = vmatpush1.msra.mxu0 %v4398
        %4464 = vmatprep.subr.mxu0 %v4401
        %4465 = vmatpush1.msra.mxu0 %v4400
        %4466 = vmatprep.subr.mxu0 %v4403
        %4467 = vmatpush1.msra.mxu0 %v4402
        %4468 = vmatprep.mubr.f32.mxu0 %v1134
        %4469 = vmatmul.mubr.f32.gmra.mrb[0].mxu0 %v1133
        %v4470 = vpop.f32.mrb[0].mxu0
        %v4471 = vadd.f32 0.0, %v4470
        %v4472 = vpop.f32.mrb[0].mxu0
        %v4473 = vadd.f32 0.0, %v4472
        %4474 = vmatprep.mubr.f32.mxu0 %v1136
        %4475 = vmatmul.mubr.f32.gmra.mrb[0].mxu0 %v1135
        %v4476 = vpop.f32.mrb[0].mxu0
        %v4477 = vadd.f32 0.0, %v4476
        %v4478 = vpop.f32.mrb[0].mxu0
        %v4479 = vadd.f32 0.0, %v4478
        %4480 = vdwg.mxu0
        %v4481 = vmul.f32 %v1133, %v4332
        %v4482 = vmul.f32 %v1134, %v4339
        %v4483 = vmul.f32 %v1135, %v4332
        %v4484 = vmul.f32 %v1136, %v4339
        %4485 = vmatprep.subr.mxu0 %v1182
        %4486 = vmatpush1.msra.mxu0 %v1181
        %4487 = vmatprep.subr.mxu0 %v1184
        %4488 = vmatpush1.msra.mxu0 %v1183
        %4489 = vmatprep.subr.mxu0 %v1186
        %4490 = vmatpush1.msra.mxu0 %v1185
        %4491 = vmatprep.subr.mxu0 %v1188
        %4492 = vmatpush1.msra.mxu0 %v1187
        %4493 = vmatprep.subr.mxu0 %v1190
        %4494 = vmatpush1.msra.mxu0 %v1189
        %4495 = vmatprep.subr.mxu0 %v1192
        %4496 = vmatpush1.msra.mxu0 %v1191
        %4497 = vmatprep.subr.mxu0 %v1194
        %4498 = vmatpush1.msra.mxu0 %v1193
        %4499 = vmatprep.subr.mxu0 %v1196
        %4500 = vmatpush1.msra.mxu0 %v1195
        %4501 = vmatprep.subr.mxu0 %v1198
        %4502 = vmatpush1.msra.mxu0 %v1197
        %4503 = vmatprep.subr.mxu0 %v1200
        %4504 = vmatpush1.msra.mxu0 %v1199
        %4505 = vmatprep.subr.mxu0 %v1202
        %4506 = vmatpush1.msra.mxu0 %v1201
        %4507 = vmatprep.subr.mxu0 %v1204
        %4508 = vmatpush1.msra.mxu0 %v1203
        %4509 = vmatprep.subr.mxu0 %v1206
        %4510 = vmatpush1.msra.mxu0 %v1205
        %4511 = vmatprep.subr.mxu0 %v1208
        %4512 = vmatpush1.msra.mxu0 %v1207
        %4513 = vmatprep.subr.mxu0 %v1210
        %4514 = vmatpush1.msra.mxu0 %v1209
        %4515 = vmatprep.subr.mxu0 %v1212
        %4516 = vmatpush1.msra.mxu0 %v1211
        %4517 = vmatprep.subr.mxu0 %v1214
        %4518 = vmatpush1.msra.mxu0 %v1213
        %4519 = vmatprep.subr.mxu0 %v1216
        %4520 = vmatpush1.msra.mxu0 %v1215
        %4521 = vmatprep.subr.mxu0 %v1218
        %4522 = vmatpush1.msra.mxu0 %v1217
        %4523 = vmatprep.subr.mxu0 %v1220
        %4524 = vmatpush1.msra.mxu0 %v1219
        %4525 = vmatprep.subr.mxu0 %v1222
        %4526 = vmatpush1.msra.mxu0 %v1221
        %4527 = vmatprep.subr.mxu0 %v1224
        %4528 = vmatpush1.msra.mxu0 %v1223
        %4529 = vmatprep.subr.mxu0 %v1226
        %4530 = vmatpush1.msra.mxu0 %v1225
        %4531 = vmatprep.subr.mxu0 %v1228
        %4532 = vmatpush1.msra.mxu0 %v1227
        %4533 = vmatprep.subr.mxu0 %v1230
        %4534 = vmatpush1.msra.mxu0 %v1229
        %4535 = vmatprep.subr.mxu0 %v1232
        %4536 = vmatpush1.msra.mxu0 %v1231
        %4537 = vmatprep.subr.mxu0 %v1234
        %4538 = vmatpush1.msra.mxu0 %v1233
        %4539 = vmatprep.subr.mxu0 %v1236
        %4540 = vmatpush1.msra.mxu0 %v1235
        %4541 = vmatprep.subr.mxu0 %v1238
        %4542 = vmatpush1.msra.mxu0 %v1237
        %4543 = vmatprep.subr.mxu0 %v1240
        %4544 = vmatpush1.msra.mxu0 %v1239
        %4545 = vmatprep.subr.mxu0 %v1242
        %4546 = vmatpush1.msra.mxu0 %v1241
        %4547 = vmatprep.subr.mxu0 %v1244
        %4548 = vmatpush1.msra.mxu0 %v1243
        %4549 = vmatprep.mubr.f32.mxu0 %v4482
        %4550 = vmatmul.mubr.f32.gmra.mrb[0].mxu0 %v4481
        %v4551 = vpop.f32.mrb[0].mxu0
        %v4552 = vadd.f32 1e-06, %v4551
        %v4553 = vpop.f32.mrb[0].mxu0
        %v4554 = vadd.f32 1e-06, %v4553
        %4555 = vmatprep.mubr.f32.mxu0 %v4484
        %4556 = vmatmul.mubr.f32.gmra.mrb[0].mxu0 %v4483
        %v4557 = vpop.f32.mrb[0].mxu0
        %v4558 = vadd.f32 1e-06, %v4557
        %v4559 = vpop.f32.mrb[0].mxu0
        %v4560 = vadd.f32 1e-06, %v4559
        %4561 = vdwg.mxu0
        %v4562 = vrcp.pop %v4552
        %v4563 = vmul.f32 %v4471, %v4562
        %v4564 = vrcp.pop %v4554
        %v4565 = vmul.f32 %v4473, %v4564
        %v4566 = vrcp.pop %v4558
        %v4567 = vmul.f32 %v4477, %v4566
        %v4568 = vrcp.pop %v4560
        %v4569 = vmul.f32 %v4479, %v4568
        %s4570 = scalar_lea.vmem %s256, 128 [#allocation3]
        %4571 = vst [vmem:[%s4570] sm:$0xff] %v4563
        %4572 = vst [vmem:[%s4570 + $0x8] sm:$0xff] %v4565
        %4573 = vst [vmem:[%s4570 + $0x10] sm:$0xff] %v4567
        %4574 = vst [vmem:[%s4570 + $0x18] sm:$0xff] %v4569
        %4575 = vxpose.xlu0.b32.start [1/16] %v1169, 128
        %4576 = vxpose.xlu0.b32.cont [2/16] %v1171, 128
        %4577 = vxpose.xlu0.b32.cont [3/16] 0.0, 128
        %4578 = vxpose.xlu0.b32.cont [4/16] 0.0, 128
        %4579 = vxpose.xlu0.b32.cont [5/16] 0.0, 128
        %4580 = vxpose.xlu0.b32.cont [6/16] 0.0, 128
        %4581 = vxpose.xlu0.b32.cont [7/16] 0.0, 128
        %4582 = vxpose.xlu0.b32.cont [8/16] 0.0, 128
        %4583 = vxpose.xlu0.b32.cont [9/16] 0.0, 128
        %4584 = vxpose.xlu0.b32.cont [10/16] 0.0, 128
        %4585 = vxpose.xlu0.b32.cont [11/16] 0.0, 128
        %4586 = vxpose.xlu0.b32.cont [12/16] 0.0, 128
        %4587 = vxpose.xlu0.b32.cont [13/16] 0.0, 128
        %4588 = vxpose.xlu0.b32.cont [14/16] 0.0, 128
        %4589 = vxpose.xlu0.b32.cont [15/16] 0.0, 128
        %4590 = vxpose.xlu0.b32.end [16/16] 0.0, 128
        %v4591 = vpop.trf.xlu0
        %v4592 = vpop.trf.xlu0
        %v4593 = vpop.trf.xlu0
        %v4594 = vpop.trf.xlu0
        %v4595 = vpop.trf.xlu0
        %v4596 = vpop.trf.xlu0
        %v4597 = vpop.trf.xlu0
        %v4598 = vpop.trf.xlu0
        %v4599 = vpop.trf.xlu0
        %v4600 = vpop.trf.xlu0
        %v4601 = vpop.trf.xlu0
        %v4602 = vpop.trf.xlu0
        %v4603 = vpop.trf.xlu0
        %v4604 = vpop.trf.xlu0
        %v4605 = vpop.trf.xlu0
        %v4606 = vpop.trf.xlu0
        %4607 = vxpose.xlu0.b32.start [1/16] %v1170, 128
        %4608 = vxpose.xlu0.b32.cont [2/16] %v1172, 128
        %4609 = vxpose.xlu0.b32.cont [3/16] 0.0, 128
        %4610 = vxpose.xlu0.b32.cont [4/16] 0.0, 128
        %4611 = vxpose.xlu0.b32.cont [5/16] 0.0, 128
        %4612 = vxpose.xlu0.b32.cont [6/16] 0.0, 128
        %4613 = vxpose.xlu0.b32.cont [7/16] 0.0, 128
        %4614 = vxpose.xlu0.b32.cont [8/16] 0.0, 128
        %4615 = vxpose.xlu0.b32.cont [9/16] 0.0, 128
        %4616 = vxpose.xlu0.b32.cont [10/16] 0.0, 128
        %4617 = vxpose.xlu0.b32.cont [11/16] 0.0, 128
        %4618 = vxpose.xlu0.b32.cont [12/16] 0.0, 128
        %4619 = vxpose.xlu0.b32.cont [13/16] 0.0, 128
        %4620 = vxpose.xlu0.b32.cont [14/16] 0.0, 128
        %4621 = vxpose.xlu0.b32.cont [15/16] 0.0, 128
        %4622 = vxpose.xlu0.b32.end [16/16] 0.0, 128
        %v4623 = vpop.trf.xlu0
        %v4624 = vpop.trf.xlu0
        %v4625 = vpop.trf.xlu0
        %v4626 = vpop.trf.xlu0
        %v4627 = vpop.trf.xlu0
        %v4628 = vpop.trf.xlu0
        %v4629 = vpop.trf.xlu0
        %v4630 = vpop.trf.xlu0
        %v4631 = vpop.trf.xlu0
        %v4632 = vpop.trf.xlu0
        %v4633 = vpop.trf.xlu0
        %v4634 = vpop.trf.xlu0
        %v4635 = vpop.trf.xlu0
        %v4636 = vpop.trf.xlu0
        %v4637 = vpop.trf.xlu0
        %v4638 = vpop.trf.xlu0
        %v4640 = vsel %vm1309, %v4591, 0
        %v4643 = vsel %vm1309, %v4592, 0
        %v4646 = vsel %vm1309, %v4593, 0
        %v4649 = vsel %vm1309, %v4594, 0
        %v4652 = vsel %vm1309, %v4595, 0
        %v4655 = vsel %vm1309, %v4596, 0
        %v4658 = vsel %vm1309, %v4597, 0
        %v4661 = vsel %vm1309, %v4598, 0
        %v4664 = vsel %vm1309, %v4599, 0
        %v4667 = vsel %vm1309, %v4600, 0
        %v4670 = vsel %vm1309, %v4601, 0
        %v4673 = vsel %vm1309, %v4602, 0
        %v4676 = vsel %vm1309, %v4603, 0
        %v4679 = vsel %vm1309, %v4604, 0
        %v4682 = vsel %vm1309, %v4605, 0
        %v4685 = vsel %vm1309, %v4606, 0
        %v4688 = vsel %vm1309, %v4623, 0
        %v4691 = vsel %vm1309, %v4624, 0
        %v4694 = vsel %vm1309, %v4625, 0
        %v4697 = vsel %vm1309, %v4626, 0
        %v4700 = vsel %vm1309, %v4627, 0
        %v4703 = vsel %vm1309, %v4628, 0
        %v4706 = vsel %vm1309, %v4629, 0
        %v4709 = vsel %vm1309, %v4630, 0
        %v4712 = vsel %vm1309, %v4631, 0
        %v4715 = vsel %vm1309, %v4632, 0
        %v4718 = vsel %vm1309, %v4633, 0
        %v4721 = vsel %vm1309, %v4634, 0
        %v4724 = vsel %vm1309, %v4635, 0
        %v4727 = vsel %vm1309, %v4636, 0
        %v4730 = vsel %vm1309, %v4637, 0
        %v4733 = vsel %vm1309, %v4638, 0
        %4735 = vmatprep.subr.mxu0 %v829
        %4736 = vmatpush1.msra.mxu0 %v827
        %4737 = vmatprep.subr.mxu0 %v835
        %4738 = vmatpush1.msra.mxu0 %v833
        %4739 = vmatprep.subr.mxu0 0.0
        %4740 = vmatpush1.msra.mxu0 0.0
        %4741 = vmatprep.subr.mxu0 0.0
        %4742 = vmatpush1.msra.mxu0 0.0
        %4743 = vmatprep.subr.mxu0 0.0
        %4744 = vmatpush1.msra.mxu0 0.0
        %4745 = vmatprep.subr.mxu0 0.0
        %4746 = vmatpush1.msra.mxu0 0.0
        %4747 = vmatprep.subr.mxu0 0.0
        %4748 = vmatpush1.msra.mxu0 0.0
        %4749 = vmatprep.subr.mxu0 0.0
        %4750 = vmatpush1.msra.mxu0 0.0
        %4751 = vmatprep.subr.mxu0 0.0
        %4752 = vmatpush1.msra.mxu0 0.0
        %4753 = vmatprep.subr.mxu0 0.0
        %4754 = vmatpush1.msra.mxu0 0.0
        %4755 = vmatprep.subr.mxu0 0.0
        %4756 = vmatpush1.msra.mxu0 0.0
        %4757 = vmatprep.subr.mxu0 0.0
        %4758 = vmatpush1.msra.mxu0 0.0
        %4759 = vmatprep.subr.mxu0 0.0
        %4760 = vmatpush1.msra.mxu0 0.0
        %4761 = vmatprep.subr.mxu0 0.0
        %4762 = vmatpush1.msra.mxu0 0.0
        %4763 = vmatprep.subr.mxu0 0.0
        %4764 = vmatpush1.msra.mxu0 0.0
        %4765 = vmatprep.subr.mxu0 0.0
        %4766 = vmatpush1.msra.mxu0 0.0
        %4767 = vmatprep.subr.mxu0 0.0
        %4768 = vmatpush1.msra.mxu0 0.0
        %4769 = vmatprep.subr.mxu0 0.0
        %4770 = vmatpush1.msra.mxu0 0.0
        %4771 = vmatprep.subr.mxu0 0.0
        %4772 = vmatpush1.msra.mxu0 0.0
        %4773 = vmatprep.subr.mxu0 0.0
        %4774 = vmatpush1.msra.mxu0 0.0
        %4775 = vmatprep.subr.mxu0 0.0
        %4776 = vmatpush1.msra.mxu0 0.0
        %4777 = vmatprep.subr.mxu0 0.0
        %4778 = vmatpush1.msra.mxu0 0.0
        %4779 = vmatprep.subr.mxu0 0.0
        %4780 = vmatpush1.msra.mxu0 0.0
        %4781 = vmatprep.subr.mxu0 0.0
        %4782 = vmatpush1.msra.mxu0 0.0
        %4783 = vmatprep.subr.mxu0 0.0
        %4784 = vmatpush1.msra.mxu0 0.0
        %4785 = vmatprep.subr.mxu0 0.0
        %4786 = vmatpush1.msra.mxu0 0.0
        %4787 = vmatprep.subr.mxu0 0.0
        %4788 = vmatpush1.msra.mxu0 0.0
        %4789 = vmatprep.subr.mxu0 0.0
        %4790 = vmatpush1.msra.mxu0 0.0
        %4791 = vmatprep.subr.mxu0 0.0
        %4792 = vmatpush1.msra.mxu0 0.0
        %4793 = vmatprep.subr.mxu0 0.0
        %4794 = vmatpush1.msra.mxu0 0.0
        %4795 = vmatprep.subr.mxu0 0.0
        %4796 = vmatpush1.msra.mxu0 0.0
        %4797 = vmatprep.subr.mxu0 0.0
        %4798 = vmatpush1.msra.mxu0 0.0
        %4799 = vmatprep.mubr.f32.mxu0 0.0
        %4800 = vmatmul.mubr.f32.gmra.mrb[0].mxu0 %v4640
        %v4801 = vpop.f32.mrb[0].mxu0
        %v4802 = vadd.f32 0.0, %v4801
        %v4803 = vpop.f32.mrb[0].mxu0
        %v4804 = vadd.f32 0.0, %v4803
        %4805 = vmatprep.mubr.f32.mxu0 0.0
        %4806 = vmatmul.mubr.f32.gmra.mrb[0].mxu0 %v4643
        %v4807 = vpop.f32.mrb[0].mxu0
        %v4808 = vadd.f32 0.0, %v4807
        %v4809 = vpop.f32.mrb[0].mxu0
        %v4810 = vadd.f32 0.0, %v4809
        %4811 = vmatprep.mubr.f32.mxu0 0.0
        %4812 = vmatmul.mubr.f32.gmra.mrb[0].mxu0 %v4646
        %v4813 = vpop.f32.mrb[0].mxu0
        %v4814 = vadd.f32 0.0, %v4813
        %v4815 = vpop.f32.mrb[0].mxu0
        %v4816 = vadd.f32 0.0, %v4815
        %4817 = vmatprep.mubr.f32.mxu0 0.0
        %4818 = vmatmul.mubr.f32.gmra.mrb[0].mxu0 %v4649
        %v4819 = vpop.f32.mrb[0].mxu0
        %v4820 = vadd.f32 0.0, %v4819
        %v4821 = vpop.f32.mrb[0].mxu0
        %v4822 = vadd.f32 0.0, %v4821
        %4823 = vmatprep.mubr.f32.mxu0 0.0
        %4824 = vmatmul.mubr.f32.gmra.mrb[0].mxu0 %v4652
        %v4825 = vpop.f32.mrb[0].mxu0
        %v4826 = vadd.f32 0.0, %v4825
        %v4827 = vpop.f32.mrb[0].mxu0
        %v4828 = vadd.f32 0.0, %v4827
        %4829 = vmatprep.mubr.f32.mxu0 0.0
        %4830 = vmatmul.mubr.f32.gmra.mrb[0].mxu0 %v4655
        %v4831 = vpop.f32.mrb[0].mxu0
        %v4832 = vadd.f32 0.0, %v4831
        %v4833 = vpop.f32.mrb[0].mxu0
        %v4834 = vadd.f32 0.0, %v4833
        %4835 = vmatprep.mubr.f32.mxu0 0.0
        %4836 = vmatmul.mubr.f32.gmra.mrb[0].mxu0 %v4658
        %v4837 = vpop.f32.mrb[0].mxu0
        %v4838 = vadd.f32 0.0, %v4837
        %v4839 = vpop.f32.mrb[0].mxu0
        %v4840 = vadd.f32 0.0, %v4839
        %4841 = vmatprep.mubr.f32.mxu0 0.0
        %4842 = vmatmul.mubr.f32.gmra.mrb[0].mxu0 %v4661
        %v4843 = vpop.f32.mrb[0].mxu0
        %v4844 = vadd.f32 0.0, %v4843
        %v4845 = vpop.f32.mrb[0].mxu0
        %v4846 = vadd.f32 0.0, %v4845
        %4847 = vmatprep.mubr.f32.mxu0 0.0
        %4848 = vmatmul.mubr.f32.gmra.mrb[0].mxu0 %v4664
        %v4849 = vpop.f32.mrb[0].mxu0
        %v4850 = vadd.f32 0.0, %v4849
        %v4851 = vpop.f32.mrb[0].mxu0
        %v4852 = vadd.f32 0.0, %v4851
        %4853 = vmatprep.mubr.f32.mxu0 0.0
        %4854 = vmatmul.mubr.f32.gmra.mrb[0].mxu0 %v4667
        %v4855 = vpop.f32.mrb[0].mxu0
        %v4856 = vadd.f32 0.0, %v4855
        %v4857 = vpop.f32.mrb[0].mxu0
        %v4858 = vadd.f32 0.0, %v4857
        %4859 = vmatprep.mubr.f32.mxu0 0.0
        %4860 = vmatmul.mubr.f32.gmra.mrb[0].mxu0 %v4670
        %v4861 = vpop.f32.mrb[0].mxu0
        %v4862 = vadd.f32 0.0, %v4861
        %v4863 = vpop.f32.mrb[0].mxu0
        %v4864 = vadd.f32 0.0, %v4863
        %4865 = vmatprep.mubr.f32.mxu0 0.0
        %4866 = vmatmul.mubr.f32.gmra.mrb[0].mxu0 %v4673
        %v4867 = vpop.f32.mrb[0].mxu0
        %v4868 = vadd.f32 0.0, %v4867
        %v4869 = vpop.f32.mrb[0].mxu0
        %v4870 = vadd.f32 0.0, %v4869
        %4871 = vmatprep.mubr.f32.mxu0 0.0
        %4872 = vmatmul.mubr.f32.gmra.mrb[0].mxu0 %v4676
        %v4873 = vpop.f32.mrb[0].mxu0
        %v4874 = vadd.f32 0.0, %v4873
        %v4875 = vpop.f32.mrb[0].mxu0
        %v4876 = vadd.f32 0.0, %v4875
        %4877 = vmatprep.mubr.f32.mxu0 0.0
        %4878 = vmatmul.mubr.f32.gmra.mrb[0].mxu0 %v4679
        %v4879 = vpop.f32.mrb[0].mxu0
        %v4880 = vadd.f32 0.0, %v4879
        %v4881 = vpop.f32.mrb[0].mxu0
        %v4882 = vadd.f32 0.0, %v4881
        %4883 = vmatprep.mubr.f32.mxu0 0.0
        %4884 = vmatmul.mubr.f32.gmra.mrb[0].mxu0 %v4682
        %v4885 = vpop.f32.mrb[0].mxu0
        %v4886 = vadd.f32 0.0, %v4885
        %v4887 = vpop.f32.mrb[0].mxu0
        %v4888 = vadd.f32 0.0, %v4887
        %4889 = vmatprep.mubr.f32.mxu0 0.0
        %4890 = vmatmul.mubr.f32.gmra.mrb[0].mxu0 %v4685
        %v4891 = vpop.f32.mrb[0].mxu0
        %v4892 = vadd.f32 0.0, %v4891
        %v4893 = vpop.f32.mrb[0].mxu0
        %v4894 = vadd.f32 0.0, %v4893
        %4895 = vmatprep.mubr.f32.mxu0 0.0
        %4896 = vmatmul.mubr.f32.gmra.mrb[0].mxu0 %v4688
        %v4897 = vpop.f32.mrb[0].mxu0
        %v4898 = vadd.f32 0.0, %v4897
        %v4899 = vpop.f32.mrb[0].mxu0
        %v4900 = vadd.f32 0.0, %v4899
        %4901 = vmatprep.mubr.f32.mxu0 0.0
        %4902 = vmatmul.mubr.f32.gmra.mrb[0].mxu0 %v4691
        %v4903 = vpop.f32.mrb[0].mxu0
        %v4904 = vadd.f32 0.0, %v4903
        %v4905 = vpop.f32.mrb[0].mxu0
        %v4906 = vadd.f32 0.0, %v4905
        %4907 = vmatprep.mubr.f32.mxu0 0.0
        %4908 = vmatmul.mubr.f32.gmra.mrb[0].mxu0 %v4694
        %v4909 = vpop.f32.mrb[0].mxu0
        %v4910 = vadd.f32 0.0, %v4909
        %v4911 = vpop.f32.mrb[0].mxu0
        %v4912 = vadd.f32 0.0, %v4911
        %4913 = vmatprep.mubr.f32.mxu0 0.0
        %4914 = vmatmul.mubr.f32.gmra.mrb[0].mxu0 %v4697
        %v4915 = vpop.f32.mrb[0].mxu0
        %v4916 = vadd.f32 0.0, %v4915
        %v4917 = vpop.f32.mrb[0].mxu0
        %v4918 = vadd.f32 0.0, %v4917
        %4919 = vmatprep.mubr.f32.mxu0 0.0
        %4920 = vmatmul.mubr.f32.gmra.mrb[0].mxu0 %v4700
        %v4921 = vpop.f32.mrb[0].mxu0
        %v4922 = vadd.f32 0.0, %v4921
        %v4923 = vpop.f32.mrb[0].mxu0
        %v4924 = vadd.f32 0.0, %v4923
        %4925 = vmatprep.mubr.f32.mxu0 0.0
        %4926 = vmatmul.mubr.f32.gmra.mrb[0].mxu0 %v4703
        %v4927 = vpop.f32.mrb[0].mxu0
        %v4928 = vadd.f32 0.0, %v4927
        %v4929 = vpop.f32.mrb[0].mxu0
        %v4930 = vadd.f32 0.0, %v4929
        %4931 = vmatprep.mubr.f32.mxu0 0.0
        %4932 = vmatmul.mubr.f32.gmra.mrb[0].mxu0 %v4706
        %v4933 = vpop.f32.mrb[0].mxu0
        %v4934 = vadd.f32 0.0, %v4933
        %v4935 = vpop.f32.mrb[0].mxu0
        %v4936 = vadd.f32 0.0, %v4935
        %4937 = vmatprep.mubr.f32.mxu0 0.0
        %4938 = vmatmul.mubr.f32.gmra.mrb[0].mxu0 %v4709
        %v4939 = vpop.f32.mrb[0].mxu0
        %v4940 = vadd.f32 0.0, %v4939
        %v4941 = vpop.f32.mrb[0].mxu0
        %v4942 = vadd.f32 0.0, %v4941
        %4943 = vmatprep.mubr.f32.mxu0 0.0
        %4944 = vmatmul.mubr.f32.gmra.mrb[0].mxu0 %v4712
        %v4945 = vpop.f32.mrb[0].mxu0
        %v4946 = vadd.f32 0.0, %v4945
        %v4947 = vpop.f32.mrb[0].mxu0
        %v4948 = vadd.f32 0.0, %v4947
        %4949 = vmatprep.mubr.f32.mxu0 0.0
        %4950 = vmatmul.mubr.f32.gmra.mrb[0].mxu0 %v4715
        %v4951 = vpop.f32.mrb[0].mxu0
        %v4952 = vadd.f32 0.0, %v4951
        %v4953 = vpop.f32.mrb[0].mxu0
        %v4954 = vadd.f32 0.0, %v4953
        %4955 = vmatprep.mubr.f32.mxu0 0.0
        %4956 = vmatmul.mubr.f32.gmra.mrb[0].mxu0 %v4718
        %v4957 = vpop.f32.mrb[0].mxu0
        %v4958 = vadd.f32 0.0, %v4957
        %v4959 = vpop.f32.mrb[0].mxu0
        %v4960 = vadd.f32 0.0, %v4959
        %4961 = vmatprep.mubr.f32.mxu0 0.0
        %4962 = vmatmul.mubr.f32.gmra.mrb[0].mxu0 %v4721
        %v4963 = vpop.f32.mrb[0].mxu0
        %v4964 = vadd.f32 0.0, %v4963
        %v4965 = vpop.f32.mrb[0].mxu0
        %v4966 = vadd.f32 0.0, %v4965
        %4967 = vmatprep.mubr.f32.mxu0 0.0
        %4968 = vmatmul.mubr.f32.gmra.mrb[0].mxu0 %v4724
        %v4969 = vpop.f32.mrb[0].mxu0
        %v4970 = vadd.f32 0.0, %v4969
        %v4971 = vpop.f32.mrb[0].mxu0
        %v4972 = vadd.f32 0.0, %v4971
        %4973 = vmatprep.mubr.f32.mxu0 0.0
        %4974 = vmatmul.mubr.f32.gmra.mrb[0].mxu0 %v4727
        %v4975 = vpop.f32.mrb[0].mxu0
        %v4976 = vadd.f32 0.0, %v4975
        %v4977 = vpop.f32.mrb[0].mxu0
        %v4978 = vadd.f32 0.0, %v4977
        %4979 = vmatprep.mubr.f32.mxu0 0.0
        %4980 = vmatmul.mubr.f32.gmra.mrb[0].mxu0 %v4730
        %v4981 = vpop.f32.mrb[0].mxu0
        %v4982 = vadd.f32 0.0, %v4981
        %v4983 = vpop.f32.mrb[0].mxu0
        %v4984 = vadd.f32 0.0, %v4983
        %4985 = vmatprep.mubr.f32.mxu0 0.0
        %4986 = vmatmul.mubr.f32.gmra.mrb[0].mxu0 %v4733
        %v4987 = vpop.f32.mrb[0].mxu0
        %v4988 = vadd.f32 0.0, %v4987
        %v4989 = vpop.f32.mrb[0].mxu0
        %v4990 = vadd.f32 0.0, %v4989
        %4991 = vdwg.mxu0
        %v4992 = vadd.f32 %v1169, %v1171
        %v4993 = vrot.slane %v4992, 4
        %v4994 = vadd.f32 %v4992, %v4993
        %v4995 = vrot.slane %v4994, 2
        %v4996 = vadd.f32 %v4994, %v4995
        %v4997 = vrot.slane %v4996, 1
        %v4998 = vadd.f32 %v4996, %v4997
        %v4999 = vadd.f32 %v1170, %v1172
        %v5000 = vrot.slane %v4999, 4
        %v5001 = vadd.f32 %v4999, %v5000
        %v5002 = vrot.slane %v5001, 2
        %v5003 = vadd.f32 %v5001, %v5002
        %v5004 = vrot.slane %v5003, 1
        %v5005 = vadd.f32 %v5003, %v5004
        %v5006 = vmul.f32 %v4802, %v1181
        %v5007 = vmul.f32 %v4804, %v1182
        %v5008 = vmul.f32 %v4808, %v1183
        %v5009 = vmul.f32 %v4810, %v1184
        %v5010 = vmul.f32 %v4814, %v1185
        %v5011 = vmul.f32 %v4816, %v1186
        %v5012 = vmul.f32 %v4820, %v1187
        %v5013 = vmul.f32 %v4822, %v1188
        %v5014 = vmul.f32 %v4826, %v1189
        %v5015 = vmul.f32 %v4828, %v1190
        %v5016 = vmul.f32 %v4832, %v1191
        %v5017 = vmul.f32 %v4834, %v1192
        %v5018 = vmul.f32 %v4838, %v1193
        %v5019 = vmul.f32 %v4840, %v1194
        %v5020 = vmul.f32 %v4844, %v1195
        %v5021 = vmul.f32 %v4846, %v1196
        %v5022 = vmul.f32 %v4850, %v1197
        %v5023 = vmul.f32 %v4852, %v1198
        %v5024 = vmul.f32 %v4856, %v1199
        %v5025 = vmul.f32 %v4858, %v1200
        %v5026 = vmul.f32 %v4862, %v1201
        %v5027 = vmul.f32 %v4864, %v1202
        %v5028 = vmul.f32 %v4868, %v1203
        %v5029 = vmul.f32 %v4870, %v1204
        %v5030 = vmul.f32 %v4874, %v1205
        %v5031 = vmul.f32 %v4876, %v1206
        %v5032 = vmul.f32 %v4880, %v1207
        %v5033 = vmul.f32 %v4882, %v1208
        %v5034 = vmul.f32 %v4886, %v1209
        %v5035 = vmul.f32 %v4888, %v1210
        %v5036 = vmul.f32 %v4892, %v1211
        %v5037 = vmul.f32 %v4894, %v1212
        %v5038 = vmul.f32 %v4898, %v1213
        %v5039 = vmul.f32 %v4900, %v1214
        %v5040 = vmul.f32 %v4904, %v1215
        %v5041 = vmul.f32 %v4906, %v1216
        %v5042 = vmul.f32 %v4910, %v1217
        %v5043 = vmul.f32 %v4912, %v1218
        %v5044 = vmul.f32 %v4916, %v1219
        %v5045 = vmul.f32 %v4918, %v1220
        %v5046 = vmul.f32 %v4922, %v1221
        %v5047 = vmul.f32 %v4924, %v1222
        %v5048 = vmul.f32 %v4928, %v1223
        %v5049 = vmul.f32 %v4930, %v1224
        %v5050 = vmul.f32 %v4934, %v1225
        %v5051 = vmul.f32 %v4936, %v1226
        %v5052 = vmul.f32 %v4940, %v1227
        %v5053 = vmul.f32 %v4942, %v1228
        %v5054 = vmul.f32 %v4946, %v1229
        %v5055 = vmul.f32 %v4948, %v1230
        %v5056 = vmul.f32 %v4952, %v1231
        %v5057 = vmul.f32 %v4954, %v1232
        %v5058 = vmul.f32 %v4958, %v1233
        %v5059 = vmul.f32 %v4960, %v1234
        %v5060 = vmul.f32 %v4964, %v1235
        %v5061 = vmul.f32 %v4966, %v1236
        %v5062 = vmul.f32 %v4970, %v1237
        %v5063 = vmul.f32 %v4972, %v1238
        %v5064 = vmul.f32 %v4976, %v1239
        %v5065 = vmul.f32 %v4978, %v1240
        %v5066 = vmul.f32 %v4982, %v1241
        %v5067 = vmul.f32 %v4984, %v1242
        %v5068 = vmul.f32 %v4988, %v1243
        %v5069 = vmul.f32 %v4990, %v1244
        %5070 = vmatprep.subr.mxu0 %v5007
        %5071 = vmatpush1.msra.mxu0 %v5006
        %5072 = vmatprep.subr.mxu0 %v5009
        %5073 = vmatpush1.msra.mxu0 %v5008
        %5074 = vmatprep.subr.mxu0 %v5011
        %5075 = vmatpush1.msra.mxu0 %v5010
        %5076 = vmatprep.subr.mxu0 %v5013
        %5077 = vmatpush1.msra.mxu0 %v5012
        %5078 = vmatprep.subr.mxu0 %v5015
        %5079 = vmatpush1.msra.mxu0 %v5014
        %5080 = vmatprep.subr.mxu0 %v5017
        %5081 = vmatpush1.msra.mxu0 %v5016
        %5082 = vmatprep.subr.mxu0 %v5019
        %5083 = vmatpush1.msra.mxu0 %v5018
        %5084 = vmatprep.subr.mxu0 %v5021
        %5085 = vmatpush1.msra.mxu0 %v5020
        %5086 = vmatprep.subr.mxu0 %v5023
        %5087 = vmatpush1.msra.mxu0 %v5022
        %5088 = vmatprep.subr.mxu0 %v5025
        %5089 = vmatpush1.msra.mxu0 %v5024
        %5090 = vmatprep.subr.mxu0 %v5027
        %5091 = vmatpush1.msra.mxu0 %v5026
        %5092 = vmatprep.subr.mxu0 %v5029
        %5093 = vmatpush1.msra.mxu0 %v5028
        %5094 = vmatprep.subr.mxu0 %v5031
        %5095 = vmatpush1.msra.mxu0 %v5030
        %5096 = vmatprep.subr.mxu0 %v5033
        %5097 = vmatpush1.msra.mxu0 %v5032
        %5098 = vmatprep.subr.mxu0 %v5035
        %5099 = vmatpush1.msra.mxu0 %v5034
        %5100 = vmatprep.subr.mxu0 %v5037
        %5101 = vmatpush1.msra.mxu0 %v5036
        %5102 = vmatprep.subr.mxu0 %v5039
        %5103 = vmatpush1.msra.mxu0 %v5038
        %5104 = vmatprep.subr.mxu0 %v5041
        %5105 = vmatpush1.msra.mxu0 %v5040
        %5106 = vmatprep.subr.mxu0 %v5043
        %5107 = vmatpush1.msra.mxu0 %v5042
        %5108 = vmatprep.subr.mxu0 %v5045
        %5109 = vmatpush1.msra.mxu0 %v5044
        %5110 = vmatprep.subr.mxu0 %v5047
        %5111 = vmatpush1.msra.mxu0 %v5046
        %5112 = vmatprep.subr.mxu0 %v5049
        %5113 = vmatpush1.msra.mxu0 %v5048
        %5114 = vmatprep.subr.mxu0 %v5051
        %5115 = vmatpush1.msra.mxu0 %v5050
        %5116 = vmatprep.subr.mxu0 %v5053
        %5117 = vmatpush1.msra.mxu0 %v5052
        %5118 = vmatprep.subr.mxu0 %v5055
        %5119 = vmatpush1.msra.mxu0 %v5054
        %5120 = vmatprep.subr.mxu0 %v5057
        %5121 = vmatpush1.msra.mxu0 %v5056
        %5122 = vmatprep.subr.mxu0 %v5059
        %5123 = vmatpush1.msra.mxu0 %v5058
        %5124 = vmatprep.subr.mxu0 %v5061
        %5125 = vmatpush1.msra.mxu0 %v5060
        %5126 = vmatprep.subr.mxu0 %v5063
        %5127 = vmatpush1.msra.mxu0 %v5062
        %5128 = vmatprep.subr.mxu0 %v5065
        %5129 = vmatpush1.msra.mxu0 %v5064
        %5130 = vmatprep.subr.mxu0 %v5067
        %5131 = vmatpush1.msra.mxu0 %v5066
        %5132 = vmatprep.subr.mxu0 %v5069
        %5133 = vmatpush1.msra.mxu0 %v5068
        %5134 = vmatprep.mubr.f32.mxu0 %v1138
        %5135 = vmatmul.mubr.f32.gmra.mrb[0].mxu0 %v1137
        %v5136 = vpop.f32.mrb[0].mxu0
        %v5137 = vadd.f32 0.0, %v5136
        %v5138 = vpop.f32.mrb[0].mxu0
        %v5139 = vadd.f32 0.0, %v5138
        %5140 = vmatprep.mubr.f32.mxu0 %v1140
        %5141 = vmatmul.mubr.f32.gmra.mrb[0].mxu0 %v1139
        %v5142 = vpop.f32.mrb[0].mxu0
        %v5143 = vadd.f32 0.0, %v5142
        %v5144 = vpop.f32.mrb[0].mxu0
        %v5145 = vadd.f32 0.0, %v5144
        %5146 = vdwg.mxu0
        %v5147 = vmul.f32 %v1137, %v4998
        %v5148 = vmul.f32 %v1138, %v5005
        %v5149 = vmul.f32 %v1139, %v4998
        %v5150 = vmul.f32 %v1140, %v5005
        %5151 = vmatprep.subr.mxu0 %v1182
        %5152 = vmatpush1.msra.mxu0 %v1181
        %5153 = vmatprep.subr.mxu0 %v1184
        %5154 = vmatpush1.msra.mxu0 %v1183
        %5155 = vmatprep.subr.mxu0 %v1186
        %5156 = vmatpush1.msra.mxu0 %v1185
        %5157 = vmatprep.subr.mxu0 %v1188
        %5158 = vmatpush1.msra.mxu0 %v1187
        %5159 = vmatprep.subr.mxu0 %v1190
        %5160 = vmatpush1.msra.mxu0 %v1189
        %5161 = vmatprep.subr.mxu0 %v1192
        %5162 = vmatpush1.msra.mxu0 %v1191
        %5163 = vmatprep.subr.mxu0 %v1194
        %5164 = vmatpush1.msra.mxu0 %v1193
        %5165 = vmatprep.subr.mxu0 %v1196
        %5166 = vmatpush1.msra.mxu0 %v1195
        %5167 = vmatprep.subr.mxu0 %v1198
        %5168 = vmatpush1.msra.mxu0 %v1197
        %5169 = vmatprep.subr.mxu0 %v1200
        %5170 = vmatpush1.msra.mxu0 %v1199
        %5171 = vmatprep.subr.mxu0 %v1202
        %5172 = vmatpush1.msra.mxu0 %v1201
        %5173 = vmatprep.subr.mxu0 %v1204
        %5174 = vmatpush1.msra.mxu0 %v1203
        %5175 = vmatprep.subr.mxu0 %v1206
        %5176 = vmatpush1.msra.mxu0 %v1205
        %5177 = vmatprep.subr.mxu0 %v1208
        %5178 = vmatpush1.msra.mxu0 %v1207
        %5179 = vmatprep.subr.mxu0 %v1210
        %5180 = vmatpush1.msra.mxu0 %v1209
        %5181 = vmatprep.subr.mxu0 %v1212
        %5182 = vmatpush1.msra.mxu0 %v1211
        %5183 = vmatprep.subr.mxu0 %v1214
        %5184 = vmatpush1.msra.mxu0 %v1213
        %5185 = vmatprep.subr.mxu0 %v1216
        %5186 = vmatpush1.msra.mxu0 %v1215
        %5187 = vmatprep.subr.mxu0 %v1218
        %5188 = vmatpush1.msra.mxu0 %v1217
        %5189 = vmatprep.subr.mxu0 %v1220
        %5190 = vmatpush1.msra.mxu0 %v1219
        %5191 = vmatprep.subr.mxu0 %v1222
        %5192 = vmatpush1.msra.mxu0 %v1221
        %5193 = vmatprep.subr.mxu0 %v1224
        %5194 = vmatpush1.msra.mxu0 %v1223
        %5195 = vmatprep.subr.mxu0 %v1226
        %5196 = vmatpush1.msra.mxu0 %v1225
        %5197 = vmatprep.subr.mxu0 %v1228
        %5198 = vmatpush1.msra.mxu0 %v1227
        %5199 = vmatprep.subr.mxu0 %v1230
        %5200 = vmatpush1.msra.mxu0 %v1229
        %5201 = vmatprep.subr.mxu0 %v1232
        %5202 = vmatpush1.msra.mxu0 %v1231
        %5203 = vmatprep.subr.mxu0 %v1234
        %5204 = vmatpush1.msra.mxu0 %v1233
        %5205 = vmatprep.subr.mxu0 %v1236
        %5206 = vmatpush1.msra.mxu0 %v1235
        %5207 = vmatprep.subr.mxu0 %v1238
        %5208 = vmatpush1.msra.mxu0 %v1237
        %5209 = vmatprep.subr.mxu0 %v1240
        %5210 = vmatpush1.msra.mxu0 %v1239
        %5211 = vmatprep.subr.mxu0 %v1242
        %5212 = vmatpush1.msra.mxu0 %v1241
        %5213 = vmatprep.subr.mxu0 %v1244
        %5214 = vmatpush1.msra.mxu0 %v1243
        %5215 = vmatprep.mubr.f32.mxu0 %v5148
        %5216 = vmatmul.mubr.f32.gmra.mrb[0].mxu0 %v5147
        %v5217 = vpop.f32.mrb[0].mxu0
        %v5218 = vadd.f32 1e-06, %v5217
        %v5219 = vpop.f32.mrb[0].mxu0
        %v5220 = vadd.f32 1e-06, %v5219
        %5221 = vmatprep.mubr.f32.mxu0 %v5150
        %5222 = vmatmul.mubr.f32.gmra.mrb[0].mxu0 %v5149
        %v5223 = vpop.f32.mrb[0].mxu0
        %v5224 = vadd.f32 1e-06, %v5223
        %v5225 = vpop.f32.mrb[0].mxu0
        %v5226 = vadd.f32 1e-06, %v5225
        %5227 = vdwg.mxu0
        %v5228 = vrcp.pop %v5218
        %v5229 = vmul.f32 %v5137, %v5228
        %v5230 = vrcp.pop %v5220
        %v5231 = vmul.f32 %v5139, %v5230
        %v5232 = vrcp.pop %v5224
        %v5233 = vmul.f32 %v5143, %v5232
        %v5234 = vrcp.pop %v5226
        %v5235 = vmul.f32 %v5145, %v5234
        %s5236 = scalar_lea.vmem %s256, 160 [#allocation3]
        %5237 = vst [vmem:[%s5236] sm:$0xff] %v5229
        %5238 = vst [vmem:[%s5236 + $0x8] sm:$0xff] %v5231
        %5239 = vst [vmem:[%s5236 + $0x10] sm:$0xff] %v5233
        %5240 = vst [vmem:[%s5236 + $0x18] sm:$0xff] %v5235
        %5241 = vxpose.xlu0.b32.start [1/16] %v1173, 128
        %5242 = vxpose.xlu0.b32.cont [2/16] %v1175, 128
        %5243 = vxpose.xlu0.b32.cont [3/16] 0.0, 128
        %5244 = vxpose.xlu0.b32.cont [4/16] 0.0, 128
        %5245 = vxpose.xlu0.b32.cont [5/16] 0.0, 128
        %5246 = vxpose.xlu0.b32.cont [6/16] 0.0, 128
        %5247 = vxpose.xlu0.b32.cont [7/16] 0.0, 128
        %5248 = vxpose.xlu0.b32.cont [8/16] 0.0, 128
        %5249 = vxpose.xlu0.b32.cont [9/16] 0.0, 128
        %5250 = vxpose.xlu0.b32.cont [10/16] 0.0, 128
        %5251 = vxpose.xlu0.b32.cont [11/16] 0.0, 128
        %5252 = vxpose.xlu0.b32.cont [12/16] 0.0, 128
        %5253 = vxpose.xlu0.b32.cont [13/16] 0.0, 128
        %5254 = vxpose.xlu0.b32.cont [14/16] 0.0, 128
        %5255 = vxpose.xlu0.b32.cont [15/16] 0.0, 128
        %5256 = vxpose.xlu0.b32.end [16/16] 0.0, 128
        %v5257 = vpop.trf.xlu0
        %v5258 = vpop.trf.xlu0
        %v5259 = vpop.trf.xlu0
        %v5260 = vpop.trf.xlu0
        %v5261 = vpop.trf.xlu0
        %v5262 = vpop.trf.xlu0
        %v5263 = vpop.trf.xlu0
        %v5264 = vpop.trf.xlu0
        %v5265 = vpop.trf.xlu0
        %v5266 = vpop.trf.xlu0
        %v5267 = vpop.trf.xlu0
        %v5268 = vpop.trf.xlu0
        %v5269 = vpop.trf.xlu0
        %v5270 = vpop.trf.xlu0
        %v5271 = vpop.trf.xlu0
        %v5272 = vpop.trf.xlu0
        %5273 = vxpose.xlu0.b32.start [1/16] %v1174, 128
        %5274 = vxpose.xlu0.b32.cont [2/16] %v1176, 128
        %5275 = vxpose.xlu0.b32.cont [3/16] 0.0, 128
        %5276 = vxpose.xlu0.b32.cont [4/16] 0.0, 128
        %5277 = vxpose.xlu0.b32.cont [5/16] 0.0, 128
        %5278 = vxpose.xlu0.b32.cont [6/16] 0.0, 128
        %5279 = vxpose.xlu0.b32.cont [7/16] 0.0, 128
        %5280 = vxpose.xlu0.b32.cont [8/16] 0.0, 128
        %5281 = vxpose.xlu0.b32.cont [9/16] 0.0, 128
        %5282 = vxpose.xlu0.b32.cont [10/16] 0.0, 128
        %5283 = vxpose.xlu0.b32.cont [11/16] 0.0, 128
        %5284 = vxpose.xlu0.b32.cont [12/16] 0.0, 128
        %5285 = vxpose.xlu0.b32.cont [13/16] 0.0, 128
        %5286 = vxpose.xlu0.b32.cont [14/16] 0.0, 128
        %5287 = vxpose.xlu0.b32.cont [15/16] 0.0, 128
        %5288 = vxpose.xlu0.b32.end [16/16] 0.0, 128
        %v5289 = vpop.trf.xlu0
        %v5290 = vpop.trf.xlu0
        %v5291 = vpop.trf.xlu0
        %v5292 = vpop.trf.xlu0
        %v5293 = vpop.trf.xlu0
        %v5294 = vpop.trf.xlu0
        %v5295 = vpop.trf.xlu0
        %v5296 = vpop.trf.xlu0
        %v5297 = vpop.trf.xlu0
        %v5298 = vpop.trf.xlu0
        %v5299 = vpop.trf.xlu0
        %v5300 = vpop.trf.xlu0
        %v5301 = vpop.trf.xlu0
        %v5302 = vpop.trf.xlu0
        %v5303 = vpop.trf.xlu0
        %v5304 = vpop.trf.xlu0
        %v5306 = vsel %vm1309, %v5257, 0
        %v5309 = vsel %vm1309, %v5258, 0
        %v5312 = vsel %vm1309, %v5259, 0
        %v5315 = vsel %vm1309, %v5260, 0
        %v5318 = vsel %vm1309, %v5261, 0
        %v5321 = vsel %vm1309, %v5262, 0
        %v5324 = vsel %vm1309, %v5263, 0
        %v5327 = vsel %vm1309, %v5264, 0
        %v5330 = vsel %vm1309, %v5265, 0
        %v5333 = vsel %vm1309, %v5266, 0
        %v5336 = vsel %vm1309, %v5267, 0
        %v5339 = vsel %vm1309, %v5268, 0
        %v5342 = vsel %vm1309, %v5269, 0
        %v5345 = vsel %vm1309, %v5270, 0
        %v5348 = vsel %vm1309, %v5271, 0
        %v5351 = vsel %vm1309, %v5272, 0
        %v5354 = vsel %vm1309, %v5289, 0
        %v5357 = vsel %vm1309, %v5290, 0
        %v5360 = vsel %vm1309, %v5291, 0
        %v5363 = vsel %vm1309, %v5292, 0
        %v5366 = vsel %vm1309, %v5293, 0
        %v5369 = vsel %vm1309, %v5294, 0
        %v5372 = vsel %vm1309, %v5295, 0
        %v5375 = vsel %vm1309, %v5296, 0
        %v5378 = vsel %vm1309, %v5297, 0
        %v5381 = vsel %vm1309, %v5298, 0
        %v5384 = vsel %vm1309, %v5299, 0
        %v5387 = vsel %vm1309, %v5300, 0
        %v5390 = vsel %vm1309, %v5301, 0
        %v5393 = vsel %vm1309, %v5302, 0
        %v5396 = vsel %vm1309, %v5303, 0
        %v5399 = vsel %vm1309, %v5304, 0
        %5401 = vmatprep.subr.mxu0 %v841
        %5402 = vmatpush1.msra.mxu0 %v839
        %5403 = vmatprep.subr.mxu0 %v847
        %5404 = vmatpush1.msra.mxu0 %v845
        %5405 = vmatprep.subr.mxu0 0.0
        %5406 = vmatpush1.msra.mxu0 0.0
        %5407 = vmatprep.subr.mxu0 0.0
        %5408 = vmatpush1.msra.mxu0 0.0
        %5409 = vmatprep.subr.mxu0 0.0
        %5410 = vmatpush1.msra.mxu0 0.0
        %5411 = vmatprep.subr.mxu0 0.0
        %5412 = vmatpush1.msra.mxu0 0.0
        %5413 = vmatprep.subr.mxu0 0.0
        %5414 = vmatpush1.msra.mxu0 0.0
        %5415 = vmatprep.subr.mxu0 0.0
        %5416 = vmatpush1.msra.mxu0 0.0
        %5417 = vmatprep.subr.mxu0 0.0
        %5418 = vmatpush1.msra.mxu0 0.0
        %5419 = vmatprep.subr.mxu0 0.0
        %5420 = vmatpush1.msra.mxu0 0.0
        %5421 = vmatprep.subr.mxu0 0.0
        %5422 = vmatpush1.msra.mxu0 0.0
        %5423 = vmatprep.subr.mxu0 0.0
        %5424 = vmatpush1.msra.mxu0 0.0
        %5425 = vmatprep.subr.mxu0 0.0
        %5426 = vmatpush1.msra.mxu0 0.0
        %5427 = vmatprep.subr.mxu0 0.0
        %5428 = vmatpush1.msra.mxu0 0.0
        %5429 = vmatprep.subr.mxu0 0.0
        %5430 = vmatpush1.msra.mxu0 0.0
        %5431 = vmatprep.subr.mxu0 0.0
        %5432 = vmatpush1.msra.mxu0 0.0
        %5433 = vmatprep.subr.mxu0 0.0
        %5434 = vmatpush1.msra.mxu0 0.0
        %5435 = vmatprep.subr.mxu0 0.0
        %5436 = vmatpush1.msra.mxu0 0.0
        %5437 = vmatprep.subr.mxu0 0.0
        %5438 = vmatpush1.msra.mxu0 0.0
        %5439 = vmatprep.subr.mxu0 0.0
        %5440 = vmatpush1.msra.mxu0 0.0
        %5441 = vmatprep.subr.mxu0 0.0
        %5442 = vmatpush1.msra.mxu0 0.0
        %5443 = vmatprep.subr.mxu0 0.0
        %5444 = vmatpush1.msra.mxu0 0.0
        %5445 = vmatprep.subr.mxu0 0.0
        %5446 = vmatpush1.msra.mxu0 0.0
        %5447 = vmatprep.subr.mxu0 0.0
        %5448 = vmatpush1.msra.mxu0 0.0
        %5449 = vmatprep.subr.mxu0 0.0
        %5450 = vmatpush1.msra.mxu0 0.0
        %5451 = vmatprep.subr.mxu0 0.0
        %5452 = vmatpush1.msra.mxu0 0.0
        %5453 = vmatprep.subr.mxu0 0.0
        %5454 = vmatpush1.msra.mxu0 0.0
        %5455 = vmatprep.subr.mxu0 0.0
        %5456 = vmatpush1.msra.mxu0 0.0
        %5457 = vmatprep.subr.mxu0 0.0
        %5458 = vmatpush1.msra.mxu0 0.0
        %5459 = vmatprep.subr.mxu0 0.0
        %5460 = vmatpush1.msra.mxu0 0.0
        %5461 = vmatprep.subr.mxu0 0.0
        %5462 = vmatpush1.msra.mxu0 0.0
        %5463 = vmatprep.subr.mxu0 0.0
        %5464 = vmatpush1.msra.mxu0 0.0
        %5465 = vmatprep.mubr.f32.mxu0 0.0
        %5466 = vmatmul.mubr.f32.gmra.mrb[0].mxu0 %v5306
        %v5467 = vpop.f32.mrb[0].mxu0
        %v5468 = vadd.f32 0.0, %v5467
        %v5469 = vpop.f32.mrb[0].mxu0
        %v5470 = vadd.f32 0.0, %v5469
        %5471 = vmatprep.mubr.f32.mxu0 0.0
        %5472 = vmatmul.mubr.f32.gmra.mrb[0].mxu0 %v5309
        %v5473 = vpop.f32.mrb[0].mxu0
        %v5474 = vadd.f32 0.0, %v5473
        %v5475 = vpop.f32.mrb[0].mxu0
        %v5476 = vadd.f32 0.0, %v5475
        %5477 = vmatprep.mubr.f32.mxu0 0.0
        %5478 = vmatmul.mubr.f32.gmra.mrb[0].mxu0 %v5312
        %v5479 = vpop.f32.mrb[0].mxu0
        %v5480 = vadd.f32 0.0, %v5479
        %v5481 = vpop.f32.mrb[0].mxu0
        %v5482 = vadd.f32 0.0, %v5481
        %5483 = vmatprep.mubr.f32.mxu0 0.0
        %5484 = vmatmul.mubr.f32.gmra.mrb[0].mxu0 %v5315
        %v5485 = vpop.f32.mrb[0].mxu0
        %v5486 = vadd.f32 0.0, %v5485
        %v5487 = vpop.f32.mrb[0].mxu0
        %v5488 = vadd.f32 0.0, %v5487
        %5489 = vmatprep.mubr.f32.mxu0 0.0
        %5490 = vmatmul.mubr.f32.gmra.mrb[0].mxu0 %v5318
        %v5491 = vpop.f32.mrb[0].mxu0
        %v5492 = vadd.f32 0.0, %v5491
        %v5493 = vpop.f32.mrb[0].mxu0
        %v5494 = vadd.f32 0.0, %v5493
        %5495 = vmatprep.mubr.f32.mxu0 0.0
        %5496 = vmatmul.mubr.f32.gmra.mrb[0].mxu0 %v5321
        %v5497 = vpop.f32.mrb[0].mxu0
        %v5498 = vadd.f32 0.0, %v5497
        %v5499 = vpop.f32.mrb[0].mxu0
        %v5500 = vadd.f32 0.0, %v5499
        %5501 = vmatprep.mubr.f32.mxu0 0.0
        %5502 = vmatmul.mubr.f32.gmra.mrb[0].mxu0 %v5324
        %v5503 = vpop.f32.mrb[0].mxu0
        %v5504 = vadd.f32 0.0, %v5503
        %v5505 = vpop.f32.mrb[0].mxu0
        %v5506 = vadd.f32 0.0, %v5505
        %5507 = vmatprep.mubr.f32.mxu0 0.0
        %5508 = vmatmul.mubr.f32.gmra.mrb[0].mxu0 %v5327
        %v5509 = vpop.f32.mrb[0].mxu0
        %v5510 = vadd.f32 0.0, %v5509
        %v5511 = vpop.f32.mrb[0].mxu0
        %v5512 = vadd.f32 0.0, %v5511
        %5513 = vmatprep.mubr.f32.mxu0 0.0
        %5514 = vmatmul.mubr.f32.gmra.mrb[0].mxu0 %v5330
        %v5515 = vpop.f32.mrb[0].mxu0
        %v5516 = vadd.f32 0.0, %v5515
        %v5517 = vpop.f32.mrb[0].mxu0
        %v5518 = vadd.f32 0.0, %v5517
        %5519 = vmatprep.mubr.f32.mxu0 0.0
        %5520 = vmatmul.mubr.f32.gmra.mrb[0].mxu0 %v5333
        %v5521 = vpop.f32.mrb[0].mxu0
        %v5522 = vadd.f32 0.0, %v5521
        %v5523 = vpop.f32.mrb[0].mxu0
        %v5524 = vadd.f32 0.0, %v5523
        %5525 = vmatprep.mubr.f32.mxu0 0.0
        %5526 = vmatmul.mubr.f32.gmra.mrb[0].mxu0 %v5336
        %v5527 = vpop.f32.mrb[0].mxu0
        %v5528 = vadd.f32 0.0, %v5527
        %v5529 = vpop.f32.mrb[0].mxu0
        %v5530 = vadd.f32 0.0, %v5529
        %5531 = vmatprep.mubr.f32.mxu0 0.0
        %5532 = vmatmul.mubr.f32.gmra.mrb[0].mxu0 %v5339
        %v5533 = vpop.f32.mrb[0].mxu0
        %v5534 = vadd.f32 0.0, %v5533
        %v5535 = vpop.f32.mrb[0].mxu0
        %v5536 = vadd.f32 0.0, %v5535
        %5537 = vmatprep.mubr.f32.mxu0 0.0
        %5538 = vmatmul.mubr.f32.gmra.mrb[0].mxu0 %v5342
        %v5539 = vpop.f32.mrb[0].mxu0
        %v5540 = vadd.f32 0.0, %v5539
        %v5541 = vpop.f32.mrb[0].mxu0
        %v5542 = vadd.f32 0.0, %v5541
        %5543 = vmatprep.mubr.f32.mxu0 0.0
        %5544 = vmatmul.mubr.f32.gmra.mrb[0].mxu0 %v5345
        %v5545 = vpop.f32.mrb[0].mxu0
        %v5546 = vadd.f32 0.0, %v5545
        %v5547 = vpop.f32.mrb[0].mxu0
        %v5548 = vadd.f32 0.0, %v5547
        %5549 = vmatprep.mubr.f32.mxu0 0.0
        %5550 = vmatmul.mubr.f32.gmra.mrb[0].mxu0 %v5348
        %v5551 = vpop.f32.mrb[0].mxu0
        %v5552 = vadd.f32 0.0, %v5551
        %v5553 = vpop.f32.mrb[0].mxu0
        %v5554 = vadd.f32 0.0, %v5553
        %5555 = vmatprep.mubr.f32.mxu0 0.0
        %5556 = vmatmul.mubr.f32.gmra.mrb[0].mxu0 %v5351
        %v5557 = vpop.f32.mrb[0].mxu0
        %v5558 = vadd.f32 0.0, %v5557
        %v5559 = vpop.f32.mrb[0].mxu0
        %v5560 = vadd.f32 0.0, %v5559
        %5561 = vmatprep.mubr.f32.mxu0 0.0
        %5562 = vmatmul.mubr.f32.gmra.mrb[0].mxu0 %v5354
        %v5563 = vpop.f32.mrb[0].mxu0
        %v5564 = vadd.f32 0.0, %v5563
        %v5565 = vpop.f32.mrb[0].mxu0
        %v5566 = vadd.f32 0.0, %v5565
        %5567 = vmatprep.mubr.f32.mxu0 0.0
        %5568 = vmatmul.mubr.f32.gmra.mrb[0].mxu0 %v5357
        %v5569 = vpop.f32.mrb[0].mxu0
        %v5570 = vadd.f32 0.0, %v5569
        %v5571 = vpop.f32.mrb[0].mxu0
        %v5572 = vadd.f32 0.0, %v5571
        %5573 = vmatprep.mubr.f32.mxu0 0.0
        %5574 = vmatmul.mubr.f32.gmra.mrb[0].mxu0 %v5360
        %v5575 = vpop.f32.mrb[0].mxu0
        %v5576 = vadd.f32 0.0, %v5575
        %v5577 = vpop.f32.mrb[0].mxu0
        %v5578 = vadd.f32 0.0, %v5577
        %5579 = vmatprep.mubr.f32.mxu0 0.0
        %5580 = vmatmul.mubr.f32.gmra.mrb[0].mxu0 %v5363
        %v5581 = vpop.f32.mrb[0].mxu0
        %v5582 = vadd.f32 0.0, %v5581
        %v5583 = vpop.f32.mrb[0].mxu0
        %v5584 = vadd.f32 0.0, %v5583
        %5585 = vmatprep.mubr.f32.mxu0 0.0
        %5586 = vmatmul.mubr.f32.gmra.mrb[0].mxu0 %v5366
        %v5587 = vpop.f32.mrb[0].mxu0
        %v5588 = vadd.f32 0.0, %v5587
        %v5589 = vpop.f32.mrb[0].mxu0
        %v5590 = vadd.f32 0.0, %v5589
        %5591 = vmatprep.mubr.f32.mxu0 0.0
        %5592 = vmatmul.mubr.f32.gmra.mrb[0].mxu0 %v5369
        %v5593 = vpop.f32.mrb[0].mxu0
        %v5594 = vadd.f32 0.0, %v5593
        %v5595 = vpop.f32.mrb[0].mxu0
        %v5596 = vadd.f32 0.0, %v5595
        %5597 = vmatprep.mubr.f32.mxu0 0.0
        %5598 = vmatmul.mubr.f32.gmra.mrb[0].mxu0 %v5372
        %v5599 = vpop.f32.mrb[0].mxu0
        %v5600 = vadd.f32 0.0, %v5599
        %v5601 = vpop.f32.mrb[0].mxu0
        %v5602 = vadd.f32 0.0, %v5601
        %5603 = vmatprep.mubr.f32.mxu0 0.0
        %5604 = vmatmul.mubr.f32.gmra.mrb[0].mxu0 %v5375
        %v5605 = vpop.f32.mrb[0].mxu0
        %v5606 = vadd.f32 0.0, %v5605
        %v5607 = vpop.f32.mrb[0].mxu0
        %v5608 = vadd.f32 0.0, %v5607
        %5609 = vmatprep.mubr.f32.mxu0 0.0
        %5610 = vmatmul.mubr.f32.gmra.mrb[0].mxu0 %v5378
        %v5611 = vpop.f32.mrb[0].mxu0
        %v5612 = vadd.f32 0.0, %v5611
        %v5613 = vpop.f32.mrb[0].mxu0
        %v5614 = vadd.f32 0.0, %v5613
        %5615 = vmatprep.mubr.f32.mxu0 0.0
        %5616 = vmatmul.mubr.f32.gmra.mrb[0].mxu0 %v5381
        %v5617 = vpop.f32.mrb[0].mxu0
        %v5618 = vadd.f32 0.0, %v5617
        %v5619 = vpop.f32.mrb[0].mxu0
        %v5620 = vadd.f32 0.0, %v5619
        %5621 = vmatprep.mubr.f32.mxu0 0.0
        %5622 = vmatmul.mubr.f32.gmra.mrb[0].mxu0 %v5384
        %v5623 = vpop.f32.mrb[0].mxu0
        %v5624 = vadd.f32 0.0, %v5623
        %v5625 = vpop.f32.mrb[0].mxu0
        %v5626 = vadd.f32 0.0, %v5625
        %5627 = vmatprep.mubr.f32.mxu0 0.0
        %5628 = vmatmul.mubr.f32.gmra.mrb[0].mxu0 %v5387
        %v5629 = vpop.f32.mrb[0].mxu0
        %v5630 = vadd.f32 0.0, %v5629
        %v5631 = vpop.f32.mrb[0].mxu0
        %v5632 = vadd.f32 0.0, %v5631
        %5633 = vmatprep.mubr.f32.mxu0 0.0
        %5634 = vmatmul.mubr.f32.gmra.mrb[0].mxu0 %v5390
        %v5635 = vpop.f32.mrb[0].mxu0
        %v5636 = vadd.f32 0.0, %v5635
        %v5637 = vpop.f32.mrb[0].mxu0
        %v5638 = vadd.f32 0.0, %v5637
        %5639 = vmatprep.mubr.f32.mxu0 0.0
        %5640 = vmatmul.mubr.f32.gmra.mrb[0].mxu0 %v5393
        %v5641 = vpop.f32.mrb[0].mxu0
        %v5642 = vadd.f32 0.0, %v5641
        %v5643 = vpop.f32.mrb[0].mxu0
        %v5644 = vadd.f32 0.0, %v5643
        %5645 = vmatprep.mubr.f32.mxu0 0.0
        %5646 = vmatmul.mubr.f32.gmra.mrb[0].mxu0 %v5396
        %v5647 = vpop.f32.mrb[0].mxu0
        %v5648 = vadd.f32 0.0, %v5647
        %v5649 = vpop.f32.mrb[0].mxu0
        %v5650 = vadd.f32 0.0, %v5649
        %5651 = vmatprep.mubr.f32.mxu0 0.0
        %5652 = vmatmul.mubr.f32.gmra.mrb[0].mxu0 %v5399
        %v5653 = vpop.f32.mrb[0].mxu0
        %v5654 = vadd.f32 0.0, %v5653
        %v5655 = vpop.f32.mrb[0].mxu0
        %v5656 = vadd.f32 0.0, %v5655
        %5657 = vdwg.mxu0
        %v5658 = vadd.f32 %v1173, %v1175
        %v5659 = vrot.slane %v5658, 4
        %v5660 = vadd.f32 %v5658, %v5659
        %v5661 = vrot.slane %v5660, 2
        %v5662 = vadd.f32 %v5660, %v5661
        %v5663 = vrot.slane %v5662, 1
        %v5664 = vadd.f32 %v5662, %v5663
        %v5665 = vadd.f32 %v1174, %v1176
        %v5666 = vrot.slane %v5665, 4
        %v5667 = vadd.f32 %v5665, %v5666
        %v5668 = vrot.slane %v5667, 2
        %v5669 = vadd.f32 %v5667, %v5668
        %v5670 = vrot.slane %v5669, 1
        %v5671 = vadd.f32 %v5669, %v5670
        %v5672 = vmul.f32 %v5468, %v1181
        %v5673 = vmul.f32 %v5470, %v1182
        %v5674 = vmul.f32 %v5474, %v1183
        %v5675 = vmul.f32 %v5476, %v1184
        %v5676 = vmul.f32 %v5480, %v1185
        %v5677 = vmul.f32 %v5482, %v1186
        %v5678 = vmul.f32 %v5486, %v1187
        %v5679 = vmul.f32 %v5488, %v1188
        %v5680 = vmul.f32 %v5492, %v1189
        %v5681 = vmul.f32 %v5494, %v1190
        %v5682 = vmul.f32 %v5498, %v1191
        %v5683 = vmul.f32 %v5500, %v1192
        %v5684 = vmul.f32 %v5504, %v1193
        %v5685 = vmul.f32 %v5506, %v1194
        %v5686 = vmul.f32 %v5510, %v1195
        %v5687 = vmul.f32 %v5512, %v1196
        %v5688 = vmul.f32 %v5516, %v1197
        %v5689 = vmul.f32 %v5518, %v1198
        %v5690 = vmul.f32 %v5522, %v1199
        %v5691 = vmul.f32 %v5524, %v1200
        %v5692 = vmul.f32 %v5528, %v1201
        %v5693 = vmul.f32 %v5530, %v1202
        %v5694 = vmul.f32 %v5534, %v1203
        %v5695 = vmul.f32 %v5536, %v1204
        %v5696 = vmul.f32 %v5540, %v1205
        %v5697 = vmul.f32 %v5542, %v1206
        %v5698 = vmul.f32 %v5546, %v1207
        %v5699 = vmul.f32 %v5548, %v1208
        %v5700 = vmul.f32 %v5552, %v1209
        %v5701 = vmul.f32 %v5554, %v1210
        %v5702 = vmul.f32 %v5558, %v1211
        %v5703 = vmul.f32 %v5560, %v1212
        %v5704 = vmul.f32 %v5564, %v1213
        %v5705 = vmul.f32 %v5566, %v1214
        %v5706 = vmul.f32 %v5570, %v1215
        %v5707 = vmul.f32 %v5572, %v1216
        %v5708 = vmul.f32 %v5576, %v1217
        %v5709 = vmul.f32 %v5578, %v1218
        %v5710 = vmul.f32 %v5582, %v1219
        %v5711 = vmul.f32 %v5584, %v1220
        %v5712 = vmul.f32 %v5588, %v1221
        %v5713 = vmul.f32 %v5590, %v1222
        %v5714 = vmul.f32 %v5594, %v1223
        %v5715 = vmul.f32 %v5596, %v1224
        %v5716 = vmul.f32 %v5600, %v1225
        %v5717 = vmul.f32 %v5602, %v1226
        %v5718 = vmul.f32 %v5606, %v1227
        %v5719 = vmul.f32 %v5608, %v1228
        %v5720 = vmul.f32 %v5612, %v1229
        %v5721 = vmul.f32 %v5614, %v1230
        %v5722 = vmul.f32 %v5618, %v1231
        %v5723 = vmul.f32 %v5620, %v1232
        %v5724 = vmul.f32 %v5624, %v1233
        %v5725 = vmul.f32 %v5626, %v1234
        %v5726 = vmul.f32 %v5630, %v1235
        %v5727 = vmul.f32 %v5632, %v1236
        %v5728 = vmul.f32 %v5636, %v1237
        %v5729 = vmul.f32 %v5638, %v1238
        %v5730 = vmul.f32 %v5642, %v1239
        %v5731 = vmul.f32 %v5644, %v1240
        %v5732 = vmul.f32 %v5648, %v1241
        %v5733 = vmul.f32 %v5650, %v1242
        %v5734 = vmul.f32 %v5654, %v1243
        %v5735 = vmul.f32 %v5656, %v1244
        %5736 = vmatprep.subr.mxu0 %v5673
        %5737 = vmatpush1.msra.mxu0 %v5672
        %5738 = vmatprep.subr.mxu0 %v5675
        %5739 = vmatpush1.msra.mxu0 %v5674
        %5740 = vmatprep.subr.mxu0 %v5677
        %5741 = vmatpush1.msra.mxu0 %v5676
        %5742 = vmatprep.subr.mxu0 %v5679
        %5743 = vmatpush1.msra.mxu0 %v5678
        %5744 = vmatprep.subr.mxu0 %v5681
        %5745 = vmatpush1.msra.mxu0 %v5680
        %5746 = vmatprep.subr.mxu0 %v5683
        %5747 = vmatpush1.msra.mxu0 %v5682
        %5748 = vmatprep.subr.mxu0 %v5685
        %5749 = vmatpush1.msra.mxu0 %v5684
        %5750 = vmatprep.subr.mxu0 %v5687
        %5751 = vmatpush1.msra.mxu0 %v5686
        %5752 = vmatprep.subr.mxu0 %v5689
        %5753 = vmatpush1.msra.mxu0 %v5688
        %5754 = vmatprep.subr.mxu0 %v5691
        %5755 = vmatpush1.msra.mxu0 %v5690
        %5756 = vmatprep.subr.mxu0 %v5693
        %5757 = vmatpush1.msra.mxu0 %v5692
        %5758 = vmatprep.subr.mxu0 %v5695
        %5759 = vmatpush1.msra.mxu0 %v5694
        %5760 = vmatprep.subr.mxu0 %v5697
        %5761 = vmatpush1.msra.mxu0 %v5696
        %5762 = vmatprep.subr.mxu0 %v5699
        %5763 = vmatpush1.msra.mxu0 %v5698
        %5764 = vmatprep.subr.mxu0 %v5701
        %5765 = vmatpush1.msra.mxu0 %v5700
        %5766 = vmatprep.subr.mxu0 %v5703
        %5767 = vmatpush1.msra.mxu0 %v5702
        %5768 = vmatprep.subr.mxu0 %v5705
        %5769 = vmatpush1.msra.mxu0 %v5704
        %5770 = vmatprep.subr.mxu0 %v5707
        %5771 = vmatpush1.msra.mxu0 %v5706
        %5772 = vmatprep.subr.mxu0 %v5709
        %5773 = vmatpush1.msra.mxu0 %v5708
        %5774 = vmatprep.subr.mxu0 %v5711
        %5775 = vmatpush1.msra.mxu0 %v5710
        %5776 = vmatprep.subr.mxu0 %v5713
        %5777 = vmatpush1.msra.mxu0 %v5712
        %5778 = vmatprep.subr.mxu0 %v5715
        %5779 = vmatpush1.msra.mxu0 %v5714
        %5780 = vmatprep.subr.mxu0 %v5717
        %5781 = vmatpush1.msra.mxu0 %v5716
        %5782 = vmatprep.subr.mxu0 %v5719
        %5783 = vmatpush1.msra.mxu0 %v5718
        %5784 = vmatprep.subr.mxu0 %v5721
        %5785 = vmatpush1.msra.mxu0 %v5720
        %5786 = vmatprep.subr.mxu0 %v5723
        %5787 = vmatpush1.msra.mxu0 %v5722
        %5788 = vmatprep.subr.mxu0 %v5725
        %5789 = vmatpush1.msra.mxu0 %v5724
        %5790 = vmatprep.subr.mxu0 %v5727
        %5791 = vmatpush1.msra.mxu0 %v5726
        %5792 = vmatprep.subr.mxu0 %v5729
        %5793 = vmatpush1.msra.mxu0 %v5728
        %5794 = vmatprep.subr.mxu0 %v5731
        %5795 = vmatpush1.msra.mxu0 %v5730
        %5796 = vmatprep.subr.mxu0 %v5733
        %5797 = vmatpush1.msra.mxu0 %v5732
        %5798 = vmatprep.subr.mxu0 %v5735
        %5799 = vmatpush1.msra.mxu0 %v5734
        %5800 = vmatprep.mubr.f32.mxu0 %v1142
        %5801 = vmatmul.mubr.f32.gmra.mrb[0].mxu0 %v1141
        %v5802 = vpop.f32.mrb[0].mxu0
        %v5803 = vadd.f32 0.0, %v5802
        %v5804 = vpop.f32.mrb[0].mxu0
        %v5805 = vadd.f32 0.0, %v5804
        %5806 = vmatprep.mubr.f32.mxu0 %v1144
        %5807 = vmatmul.mubr.f32.gmra.mrb[0].mxu0 %v1143
        %v5808 = vpop.f32.mrb[0].mxu0
        %v5809 = vadd.f32 0.0, %v5808
        %v5810 = vpop.f32.mrb[0].mxu0
        %v5811 = vadd.f32 0.0, %v5810
        %5812 = vdwg.mxu0
        %v5813 = vmul.f32 %v1141, %v5664
        %v5814 = vmul.f32 %v1142, %v5671
        %v5815 = vmul.f32 %v1143, %v5664
        %v5816 = vmul.f32 %v1144, %v5671
        %5817 = vmatprep.subr.mxu0 %v1182
        %5818 = vmatpush1.msra.mxu0 %v1181
        %5819 = vmatprep.subr.mxu0 %v1184
        %5820 = vmatpush1.msra.mxu0 %v1183
        %5821 = vmatprep.subr.mxu0 %v1186
        %5822 = vmatpush1.msra.mxu0 %v1185
        %5823 = vmatprep.subr.mxu0 %v1188
        %5824 = vmatpush1.msra.mxu0 %v1187
        %5825 = vmatprep.subr.mxu0 %v1190
        %5826 = vmatpush1.msra.mxu0 %v1189
        %5827 = vmatprep.subr.mxu0 %v1192
        %5828 = vmatpush1.msra.mxu0 %v1191
        %5829 = vmatprep.subr.mxu0 %v1194
        %5830 = vmatpush1.msra.mxu0 %v1193
        %5831 = vmatprep.subr.mxu0 %v1196
        %5832 = vmatpush1.msra.mxu0 %v1195
        %5833 = vmatprep.subr.mxu0 %v1198
        %5834 = vmatpush1.msra.mxu0 %v1197
        %5835 = vmatprep.subr.mxu0 %v1200
        %5836 = vmatpush1.msra.mxu0 %v1199
        %5837 = vmatprep.subr.mxu0 %v1202
        %5838 = vmatpush1.msra.mxu0 %v1201
        %5839 = vmatprep.subr.mxu0 %v1204
        %5840 = vmatpush1.msra.mxu0 %v1203
        %5841 = vmatprep.subr.mxu0 %v1206
        %5842 = vmatpush1.msra.mxu0 %v1205
        %5843 = vmatprep.subr.mxu0 %v1208
        %5844 = vmatpush1.msra.mxu0 %v1207
        %5845 = vmatprep.subr.mxu0 %v1210
        %5846 = vmatpush1.msra.mxu0 %v1209
        %5847 = vmatprep.subr.mxu0 %v1212
        %5848 = vmatpush1.msra.mxu0 %v1211
        %5849 = vmatprep.subr.mxu0 %v1214
        %5850 = vmatpush1.msra.mxu0 %v1213
        %5851 = vmatprep.subr.mxu0 %v1216
        %5852 = vmatpush1.msra.mxu0 %v1215
        %5853 = vmatprep.subr.mxu0 %v1218
        %5854 = vmatpush1.msra.mxu0 %v1217
        %5855 = vmatprep.subr.mxu0 %v1220
        %5856 = vmatpush1.msra.mxu0 %v1219
        %5857 = vmatprep.subr.mxu0 %v1222
        %5858 = vmatpush1.msra.mxu0 %v1221
        %5859 = vmatprep.subr.mxu0 %v1224
        %5860 = vmatpush1.msra.mxu0 %v1223
        %5861 = vmatprep.subr.mxu0 %v1226
        %5862 = vmatpush1.msra.mxu0 %v1225
        %5863 = vmatprep.subr.mxu0 %v1228
        %5864 = vmatpush1.msra.mxu0 %v1227
        %5865 = vmatprep.subr.mxu0 %v1230
        %5866 = vmatpush1.msra.mxu0 %v1229
        %5867 = vmatprep.subr.mxu0 %v1232
        %5868 = vmatpush1.msra.mxu0 %v1231
        %5869 = vmatprep.subr.mxu0 %v1234
        %5870 = vmatpush1.msra.mxu0 %v1233
        %5871 = vmatprep.subr.mxu0 %v1236
        %5872 = vmatpush1.msra.mxu0 %v1235
        %5873 = vmatprep.subr.mxu0 %v1238
        %5874 = vmatpush1.msra.mxu0 %v1237
        %5875 = vmatprep.subr.mxu0 %v1240
        %5876 = vmatpush1.msra.mxu0 %v1239
        %5877 = vmatprep.subr.mxu0 %v1242
        %5878 = vmatpush1.msra.mxu0 %v1241
        %5879 = vmatprep.subr.mxu0 %v1244
        %5880 = vmatpush1.msra.mxu0 %v1243
        %5881 = vmatprep.mubr.f32.mxu0 %v5814
        %5882 = vmatmul.mubr.f32.gmra.mrb[0].mxu0 %v5813
        %v5883 = vpop.f32.mrb[0].mxu0
        %v5884 = vadd.f32 1e-06, %v5883
        %v5885 = vpop.f32.mrb[0].mxu0
        %v5886 = vadd.f32 1e-06, %v5885
        %5887 = vmatprep.mubr.f32.mxu0 %v5816
        %5888 = vmatmul.mubr.f32.gmra.mrb[0].mxu0 %v5815
        %v5889 = vpop.f32.mrb[0].mxu0
        %v5890 = vadd.f32 1e-06, %v5889
        %v5891 = vpop.f32.mrb[0].mxu0
        %v5892 = vadd.f32 1e-06, %v5891
        %5893 = vdwg.mxu0
        %v5894 = vrcp.pop %v5884
        %v5895 = vmul.f32 %v5803, %v5894
        %v5896 = vrcp.pop %v5886
        %v5897 = vmul.f32 %v5805, %v5896
        %v5898 = vrcp.pop %v5890
        %v5899 = vmul.f32 %v5809, %v5898
        %v5900 = vrcp.pop %v5892
        %v5901 = vmul.f32 %v5811, %v5900
        %s5902 = scalar_lea.vmem %s256, 192 [#allocation3]
        %5903 = vst [vmem:[%s5902] sm:$0xff] %v5895
        %5904 = vst [vmem:[%s5902 + $0x8] sm:$0xff] %v5897
        %5905 = vst [vmem:[%s5902 + $0x10] sm:$0xff] %v5899
        %5906 = vst [vmem:[%s5902 + $0x18] sm:$0xff] %v5901
        %5907 = vxpose.xlu0.b32.start [1/16] %v1177, 128
        %5908 = vxpose.xlu0.b32.cont [2/16] %v1179, 128
        %5909 = vxpose.xlu0.b32.cont [3/16] 0.0, 128
        %5910 = vxpose.xlu0.b32.cont [4/16] 0.0, 128
        %5911 = vxpose.xlu0.b32.cont [5/16] 0.0, 128
        %5912 = vxpose.xlu0.b32.cont [6/16] 0.0, 128
        %5913 = vxpose.xlu0.b32.cont [7/16] 0.0, 128
        %5914 = vxpose.xlu0.b32.cont [8/16] 0.0, 128
        %5915 = vxpose.xlu0.b32.cont [9/16] 0.0, 128
        %5916 = vxpose.xlu0.b32.cont [10/16] 0.0, 128
        %5917 = vxpose.xlu0.b32.cont [11/16] 0.0, 128
        %5918 = vxpose.xlu0.b32.cont [12/16] 0.0, 128
        %5919 = vxpose.xlu0.b32.cont [13/16] 0.0, 128
        %5920 = vxpose.xlu0.b32.cont [14/16] 0.0, 128
        %5921 = vxpose.xlu0.b32.cont [15/16] 0.0, 128
        %5922 = vxpose.xlu0.b32.end [16/16] 0.0, 128
        %v5923 = vpop.trf.xlu0
        %v5924 = vpop.trf.xlu0
        %v5925 = vpop.trf.xlu0
        %v5926 = vpop.trf.xlu0
        %v5927 = vpop.trf.xlu0
        %v5928 = vpop.trf.xlu0
        %v5929 = vpop.trf.xlu0
        %v5930 = vpop.trf.xlu0
        %v5931 = vpop.trf.xlu0
        %v5932 = vpop.trf.xlu0
        %v5933 = vpop.trf.xlu0
        %v5934 = vpop.trf.xlu0
        %v5935 = vpop.trf.xlu0
        %v5936 = vpop.trf.xlu0
        %v5937 = vpop.trf.xlu0
        %v5938 = vpop.trf.xlu0
        %5939 = vxpose.xlu0.b32.start [1/16] %v1178, 128
        %5940 = vxpose.xlu0.b32.cont [2/16] %v1180, 128
        %5941 = vxpose.xlu0.b32.cont [3/16] 0.0, 128
        %5942 = vxpose.xlu0.b32.cont [4/16] 0.0, 128
        %5943 = vxpose.xlu0.b32.cont [5/16] 0.0, 128
        %5944 = vxpose.xlu0.b32.cont [6/16] 0.0, 128
        %5945 = vxpose.xlu0.b32.cont [7/16] 0.0, 128
        %5946 = vxpose.xlu0.b32.cont [8/16] 0.0, 128
        %5947 = vxpose.xlu0.b32.cont [9/16] 0.0, 128
        %5948 = vxpose.xlu0.b32.cont [10/16] 0.0, 128
        %5949 = vxpose.xlu0.b32.cont [11/16] 0.0, 128
        %5950 = vxpose.xlu0.b32.cont [12/16] 0.0, 128
        %5951 = vxpose.xlu0.b32.cont [13/16] 0.0, 128
        %5952 = vxpose.xlu0.b32.cont [14/16] 0.0, 128
        %5953 = vxpose.xlu0.b32.cont [15/16] 0.0, 128
        %5954 = vxpose.xlu0.b32.end [16/16] 0.0, 128
        %v5955 = vpop.trf.xlu0
        %v5956 = vpop.trf.xlu0
        %v5957 = vpop.trf.xlu0
        %v5958 = vpop.trf.xlu0
        %v5959 = vpop.trf.xlu0
        %v5960 = vpop.trf.xlu0
        %v5961 = vpop.trf.xlu0
        %v5962 = vpop.trf.xlu0
        %v5963 = vpop.trf.xlu0
        %v5964 = vpop.trf.xlu0
        %v5965 = vpop.trf.xlu0
        %v5966 = vpop.trf.xlu0
        %v5967 = vpop.trf.xlu0
        %v5968 = vpop.trf.xlu0
        %v5969 = vpop.trf.xlu0
        %v5970 = vpop.trf.xlu0
        %v5972 = vsel %vm1309, %v5923, 0
        %v5975 = vsel %vm1309, %v5924, 0
        %v5978 = vsel %vm1309, %v5925, 0
        %v5981 = vsel %vm1309, %v5926, 0
        %v5984 = vsel %vm1309, %v5927, 0
        %v5987 = vsel %vm1309, %v5928, 0
        %v5990 = vsel %vm1309, %v5929, 0
        %v5993 = vsel %vm1309, %v5930, 0
        %v5996 = vsel %vm1309, %v5931, 0
        %v5999 = vsel %vm1309, %v5932, 0
        %v6002 = vsel %vm1309, %v5933, 0
        %v6005 = vsel %vm1309, %v5934, 0
        %v6008 = vsel %vm1309, %v5935, 0
        %v6011 = vsel %vm1309, %v5936, 0
        %v6014 = vsel %vm1309, %v5937, 0
        %v6017 = vsel %vm1309, %v5938, 0
        %v6020 = vsel %vm1309, %v5955, 0
        %v6023 = vsel %vm1309, %v5956, 0
        %v6026 = vsel %vm1309, %v5957, 0
        %v6029 = vsel %vm1309, %v5958, 0
        %v6032 = vsel %vm1309, %v5959, 0
        %v6035 = vsel %vm1309, %v5960, 0
        %v6038 = vsel %vm1309, %v5961, 0
        %v6041 = vsel %vm1309, %v5962, 0
        %v6044 = vsel %vm1309, %v5963, 0
        %v6047 = vsel %vm1309, %v5964, 0
        %v6050 = vsel %vm1309, %v5965, 0
        %v6053 = vsel %vm1309, %v5966, 0
        %v6056 = vsel %vm1309, %v5967, 0
        %v6059 = vsel %vm1309, %v5968, 0
        %v6062 = vsel %vm1309, %v5969, 0
        %v6065 = vsel %vm1309, %v5970, 0
        %6067 = vmatprep.subr.mxu0 %v853
        %6068 = vmatpush1.msra.mxu0 %v851
        %6069 = vmatprep.subr.mxu0 %v859
        %6070 = vmatpush1.msra.mxu0 %v857
        %6071 = vmatprep.subr.mxu0 0.0
        %6072 = vmatpush1.msra.mxu0 0.0
        %6073 = vmatprep.subr.mxu0 0.0
        %6074 = vmatpush1.msra.mxu0 0.0
        %6075 = vmatprep.subr.mxu0 0.0
        %6076 = vmatpush1.msra.mxu0 0.0
        %6077 = vmatprep.subr.mxu0 0.0
        %6078 = vmatpush1.msra.mxu0 0.0
        %6079 = vmatprep.subr.mxu0 0.0
        %6080 = vmatpush1.msra.mxu0 0.0
        %6081 = vmatprep.subr.mxu0 0.0
        %6082 = vmatpush1.msra.mxu0 0.0
        %6083 = vmatprep.subr.mxu0 0.0
        %6084 = vmatpush1.msra.mxu0 0.0
        %6085 = vmatprep.subr.mxu0 0.0
        %6086 = vmatpush1.msra.mxu0 0.0
        %6087 = vmatprep.subr.mxu0 0.0
        %6088 = vmatpush1.msra.mxu0 0.0
        %6089 = vmatprep.subr.mxu0 0.0
        %6090 = vmatpush1.msra.mxu0 0.0
        %6091 = vmatprep.subr.mxu0 0.0
        %6092 = vmatpush1.msra.mxu0 0.0
        %6093 = vmatprep.subr.mxu0 0.0
        %6094 = vmatpush1.msra.mxu0 0.0
        %6095 = vmatprep.subr.mxu0 0.0
        %6096 = vmatpush1.msra.mxu0 0.0
        %6097 = vmatprep.subr.mxu0 0.0
        %6098 = vmatpush1.msra.mxu0 0.0
        %6099 = vmatprep.subr.mxu0 0.0
        %6100 = vmatpush1.msra.mxu0 0.0
        %6101 = vmatprep.subr.mxu0 0.0
        %6102 = vmatpush1.msra.mxu0 0.0
        %6103 = vmatprep.subr.mxu0 0.0
        %6104 = vmatpush1.msra.mxu0 0.0
        %6105 = vmatprep.subr.mxu0 0.0
        %6106 = vmatpush1.msra.mxu0 0.0
        %6107 = vmatprep.subr.mxu0 0.0
        %6108 = vmatpush1.msra.mxu0 0.0
        %6109 = vmatprep.subr.mxu0 0.0
        %6110 = vmatpush1.msra.mxu0 0.0
        %6111 = vmatprep.subr.mxu0 0.0
        %6112 = vmatpush1.msra.mxu0 0.0
        %6113 = vmatprep.subr.mxu0 0.0
        %6114 = vmatpush1.msra.mxu0 0.0
        %6115 = vmatprep.subr.mxu0 0.0
        %6116 = vmatpush1.msra.mxu0 0.0
        %6117 = vmatprep.subr.mxu0 0.0
        %6118 = vmatpush1.msra.mxu0 0.0
        %6119 = vmatprep.subr.mxu0 0.0
        %6120 = vmatpush1.msra.mxu0 0.0
        %6121 = vmatprep.subr.mxu0 0.0
        %6122 = vmatpush1.msra.mxu0 0.0
        %6123 = vmatprep.subr.mxu0 0.0
        %6124 = vmatpush1.msra.mxu0 0.0
        %6125 = vmatprep.subr.mxu0 0.0
        %6126 = vmatpush1.msra.mxu0 0.0
        %6127 = vmatprep.subr.mxu0 0.0
        %6128 = vmatpush1.msra.mxu0 0.0
        %6129 = vmatprep.subr.mxu0 0.0
        %6130 = vmatpush1.msra.mxu0 0.0
        %6131 = vmatprep.mubr.f32.mxu0 0.0
        %6132 = vmatmul.mubr.f32.gmra.mrb[0].mxu0 %v5972
        %v6133 = vpop.f32.mrb[0].mxu0
        %v6134 = vadd.f32 0.0, %v6133
        %v6135 = vpop.f32.mrb[0].mxu0
        %v6136 = vadd.f32 0.0, %v6135
        %6137 = vmatprep.mubr.f32.mxu0 0.0
        %6138 = vmatmul.mubr.f32.gmra.mrb[0].mxu0 %v5975
        %v6139 = vpop.f32.mrb[0].mxu0
        %v6140 = vadd.f32 0.0, %v6139
        %v6141 = vpop.f32.mrb[0].mxu0
        %v6142 = vadd.f32 0.0, %v6141
        %6143 = vmatprep.mubr.f32.mxu0 0.0
        %6144 = vmatmul.mubr.f32.gmra.mrb[0].mxu0 %v5978
        %v6145 = vpop.f32.mrb[0].mxu0
        %v6146 = vadd.f32 0.0, %v6145
        %v6147 = vpop.f32.mrb[0].mxu0
        %v6148 = vadd.f32 0.0, %v6147
        %6149 = vmatprep.mubr.f32.mxu0 0.0
        %6150 = vmatmul.mubr.f32.gmra.mrb[0].mxu0 %v5981
        %v6151 = vpop.f32.mrb[0].mxu0
        %v6152 = vadd.f32 0.0, %v6151
        %v6153 = vpop.f32.mrb[0].mxu0
        %v6154 = vadd.f32 0.0, %v6153
        %6155 = vmatprep.mubr.f32.mxu0 0.0
        %6156 = vmatmul.mubr.f32.gmra.mrb[0].mxu0 %v5984
        %v6157 = vpop.f32.mrb[0].mxu0
        %v6158 = vadd.f32 0.0, %v6157
        %v6159 = vpop.f32.mrb[0].mxu0
        %v6160 = vadd.f32 0.0, %v6159
        %6161 = vmatprep.mubr.f32.mxu0 0.0
        %6162 = vmatmul.mubr.f32.gmra.mrb[0].mxu0 %v5987
        %v6163 = vpop.f32.mrb[0].mxu0
        %v6164 = vadd.f32 0.0, %v6163
        %v6165 = vpop.f32.mrb[0].mxu0
        %v6166 = vadd.f32 0.0, %v6165
        %6167 = vmatprep.mubr.f32.mxu0 0.0
        %6168 = vmatmul.mubr.f32.gmra.mrb[0].mxu0 %v5990
        %v6169 = vpop.f32.mrb[0].mxu0
        %v6170 = vadd.f32 0.0, %v6169
        %v6171 = vpop.f32.mrb[0].mxu0
        %v6172 = vadd.f32 0.0, %v6171
        %6173 = vmatprep.mubr.f32.mxu0 0.0
        %6174 = vmatmul.mubr.f32.gmra.mrb[0].mxu0 %v5993
        %v6175 = vpop.f32.mrb[0].mxu0
        %v6176 = vadd.f32 0.0, %v6175
        %v6177 = vpop.f32.mrb[0].mxu0
        %v6178 = vadd.f32 0.0, %v6177
        %6179 = vmatprep.mubr.f32.mxu0 0.0
        %6180 = vmatmul.mubr.f32.gmra.mrb[0].mxu0 %v5996
        %v6181 = vpop.f32.mrb[0].mxu0
        %v6182 = vadd.f32 0.0, %v6181
        %v6183 = vpop.f32.mrb[0].mxu0
        %v6184 = vadd.f32 0.0, %v6183
        %6185 = vmatprep.mubr.f32.mxu0 0.0
        %6186 = vmatmul.mubr.f32.gmra.mrb[0].mxu0 %v5999
        %v6187 = vpop.f32.mrb[0].mxu0
        %v6188 = vadd.f32 0.0, %v6187
        %v6189 = vpop.f32.mrb[0].mxu0
        %v6190 = vadd.f32 0.0, %v6189
        %6191 = vmatprep.mubr.f32.mxu0 0.0
        %6192 = vmatmul.mubr.f32.gmra.mrb[0].mxu0 %v6002
        %v6193 = vpop.f32.mrb[0].mxu0
        %v6194 = vadd.f32 0.0, %v6193
        %v6195 = vpop.f32.mrb[0].mxu0
        %v6196 = vadd.f32 0.0, %v6195
        %6197 = vmatprep.mubr.f32.mxu0 0.0
        %6198 = vmatmul.mubr.f32.gmra.mrb[0].mxu0 %v6005
        %v6199 = vpop.f32.mrb[0].mxu0
        %v6200 = vadd.f32 0.0, %v6199
        %v6201 = vpop.f32.mrb[0].mxu0
        %v6202 = vadd.f32 0.0, %v6201
        %6203 = vmatprep.mubr.f32.mxu0 0.0
        %6204 = vmatmul.mubr.f32.gmra.mrb[0].mxu0 %v6008
        %v6205 = vpop.f32.mrb[0].mxu0
        %v6206 = vadd.f32 0.0, %v6205
        %v6207 = vpop.f32.mrb[0].mxu0
        %v6208 = vadd.f32 0.0, %v6207
        %6209 = vmatprep.mubr.f32.mxu0 0.0
        %6210 = vmatmul.mubr.f32.gmra.mrb[0].mxu0 %v6011
        %v6211 = vpop.f32.mrb[0].mxu0
        %v6212 = vadd.f32 0.0, %v6211
        %v6213 = vpop.f32.mrb[0].mxu0
        %v6214 = vadd.f32 0.0, %v6213
        %6215 = vmatprep.mubr.f32.mxu0 0.0
        %6216 = vmatmul.mubr.f32.gmra.mrb[0].mxu0 %v6014
        %v6217 = vpop.f32.mrb[0].mxu0
        %v6218 = vadd.f32 0.0, %v6217
        %v6219 = vpop.f32.mrb[0].mxu0
        %v6220 = vadd.f32 0.0, %v6219
        %6221 = vmatprep.mubr.f32.mxu0 0.0
        %6222 = vmatmul.mubr.f32.gmra.mrb[0].mxu0 %v6017
        %v6223 = vpop.f32.mrb[0].mxu0
        %v6224 = vadd.f32 0.0, %v6223
        %v6225 = vpop.f32.mrb[0].mxu0
        %v6226 = vadd.f32 0.0, %v6225
        %6227 = vmatprep.mubr.f32.mxu0 0.0
        %6228 = vmatmul.mubr.f32.gmra.mrb[0].mxu0 %v6020
        %v6229 = vpop.f32.mrb[0].mxu0
        %v6230 = vadd.f32 0.0, %v6229
        %v6231 = vpop.f32.mrb[0].mxu0
        %v6232 = vadd.f32 0.0, %v6231
        %6233 = vmatprep.mubr.f32.mxu0 0.0
        %6234 = vmatmul.mubr.f32.gmra.mrb[0].mxu0 %v6023
        %v6235 = vpop.f32.mrb[0].mxu0
        %v6236 = vadd.f32 0.0, %v6235
        %v6237 = vpop.f32.mrb[0].mxu0
        %v6238 = vadd.f32 0.0, %v6237
        %6239 = vmatprep.mubr.f32.mxu0 0.0
        %6240 = vmatmul.mubr.f32.gmra.mrb[0].mxu0 %v6026
        %v6241 = vpop.f32.mrb[0].mxu0
        %v6242 = vadd.f32 0.0, %v6241
        %v6243 = vpop.f32.mrb[0].mxu0
        %v6244 = vadd.f32 0.0, %v6243
        %6245 = vmatprep.mubr.f32.mxu0 0.0
        %6246 = vmatmul.mubr.f32.gmra.mrb[0].mxu0 %v6029
        %v6247 = vpop.f32.mrb[0].mxu0
        %v6248 = vadd.f32 0.0, %v6247
        %v6249 = vpop.f32.mrb[0].mxu0
        %v6250 = vadd.f32 0.0, %v6249
        %6251 = vmatprep.mubr.f32.mxu0 0.0
        %6252 = vmatmul.mubr.f32.gmra.mrb[0].mxu0 %v6032
        %v6253 = vpop.f32.mrb[0].mxu0
        %v6254 = vadd.f32 0.0, %v6253
        %v6255 = vpop.f32.mrb[0].mxu0
        %v6256 = vadd.f32 0.0, %v6255
        %6257 = vmatprep.mubr.f32.mxu0 0.0
        %6258 = vmatmul.mubr.f32.gmra.mrb[0].mxu0 %v6035
        %v6259 = vpop.f32.mrb[0].mxu0
        %v6260 = vadd.f32 0.0, %v6259
        %v6261 = vpop.f32.mrb[0].mxu0
        %v6262 = vadd.f32 0.0, %v6261
        %6263 = vmatprep.mubr.f32.mxu0 0.0
        %6264 = vmatmul.mubr.f32.gmra.mrb[0].mxu0 %v6038
        %v6265 = vpop.f32.mrb[0].mxu0
        %v6266 = vadd.f32 0.0, %v6265
        %v6267 = vpop.f32.mrb[0].mxu0
        %v6268 = vadd.f32 0.0, %v6267
        %6269 = vmatprep.mubr.f32.mxu0 0.0
        %6270 = vmatmul.mubr.f32.gmra.mrb[0].mxu0 %v6041
        %v6271 = vpop.f32.mrb[0].mxu0
        %v6272 = vadd.f32 0.0, %v6271
        %v6273 = vpop.f32.mrb[0].mxu0
        %v6274 = vadd.f32 0.0, %v6273
        %6275 = vmatprep.mubr.f32.mxu0 0.0
        %6276 = vmatmul.mubr.f32.gmra.mrb[0].mxu0 %v6044
        %v6277 = vpop.f32.mrb[0].mxu0
        %v6278 = vadd.f32 0.0, %v6277
        %v6279 = vpop.f32.mrb[0].mxu0
        %v6280 = vadd.f32 0.0, %v6279
        %6281 = vmatprep.mubr.f32.mxu0 0.0
        %6282 = vmatmul.mubr.f32.gmra.mrb[0].mxu0 %v6047
        %v6283 = vpop.f32.mrb[0].mxu0
        %v6284 = vadd.f32 0.0, %v6283
        %v6285 = vpop.f32.mrb[0].mxu0
        %v6286 = vadd.f32 0.0, %v6285
        %6287 = vmatprep.mubr.f32.mxu0 0.0
        %6288 = vmatmul.mubr.f32.gmra.mrb[0].mxu0 %v6050
        %v6289 = vpop.f32.mrb[0].mxu0
        %v6290 = vadd.f32 0.0, %v6289
        %v6291 = vpop.f32.mrb[0].mxu0
        %v6292 = vadd.f32 0.0, %v6291
        %6293 = vmatprep.mubr.f32.mxu0 0.0
        %6294 = vmatmul.mubr.f32.gmra.mrb[0].mxu0 %v6053
        %v6295 = vpop.f32.mrb[0].mxu0
        %v6296 = vadd.f32 0.0, %v6295
        %v6297 = vpop.f32.mrb[0].mxu0
        %v6298 = vadd.f32 0.0, %v6297
        %6299 = vmatprep.mubr.f32.mxu0 0.0
        %6300 = vmatmul.mubr.f32.gmra.mrb[0].mxu0 %v6056
        %v6301 = vpop.f32.mrb[0].mxu0
        %v6302 = vadd.f32 0.0, %v6301
        %v6303 = vpop.f32.mrb[0].mxu0
        %v6304 = vadd.f32 0.0, %v6303
        %6305 = vmatprep.mubr.f32.mxu0 0.0
        %6306 = vmatmul.mubr.f32.gmra.mrb[0].mxu0 %v6059
        %v6307 = vpop.f32.mrb[0].mxu0
        %v6308 = vadd.f32 0.0, %v6307
        %v6309 = vpop.f32.mrb[0].mxu0
        %v6310 = vadd.f32 0.0, %v6309
        %6311 = vmatprep.mubr.f32.mxu0 0.0
        %6312 = vmatmul.mubr.f32.gmra.mrb[0].mxu0 %v6062
        %v6313 = vpop.f32.mrb[0].mxu0
        %v6314 = vadd.f32 0.0, %v6313
        %v6315 = vpop.f32.mrb[0].mxu0
        %v6316 = vadd.f32 0.0, %v6315
        %6317 = vmatprep.mubr.f32.mxu0 0.0
        %6318 = vmatmul.mubr.f32.gmra.mrb[0].mxu0 %v6065
        %v6319 = vpop.f32.mrb[0].mxu0
        %v6320 = vadd.f32 0.0, %v6319
        %v6321 = vpop.f32.mrb[0].mxu0
        %v6322 = vadd.f32 0.0, %v6321
        %6323 = vdwg.mxu0
        %v6324 = vadd.f32 %v1177, %v1179
        %v6325 = vrot.slane %v6324, 4
        %v6326 = vadd.f32 %v6324, %v6325
        %v6327 = vrot.slane %v6326, 2
        %v6328 = vadd.f32 %v6326, %v6327
        %v6329 = vrot.slane %v6328, 1
        %v6330 = vadd.f32 %v6328, %v6329
        %v6331 = vadd.f32 %v1178, %v1180
        %v6332 = vrot.slane %v6331, 4
        %v6333 = vadd.f32 %v6331, %v6332
        %v6334 = vrot.slane %v6333, 2
        %v6335 = vadd.f32 %v6333, %v6334
        %v6336 = vrot.slane %v6335, 1
        %v6337 = vadd.f32 %v6335, %v6336
        %v6338 = vmul.f32 %v6134, %v1181
        %v6339 = vmul.f32 %v6136, %v1182
        %v6340 = vmul.f32 %v6140, %v1183
        %v6341 = vmul.f32 %v6142, %v1184
        %v6342 = vmul.f32 %v6146, %v1185
        %v6343 = vmul.f32 %v6148, %v1186
        %v6344 = vmul.f32 %v6152, %v1187
        %v6345 = vmul.f32 %v6154, %v1188
        %v6346 = vmul.f32 %v6158, %v1189
        %v6347 = vmul.f32 %v6160, %v1190
        %v6348 = vmul.f32 %v6164, %v1191
        %v6349 = vmul.f32 %v6166, %v1192
        %v6350 = vmul.f32 %v6170, %v1193
        %v6351 = vmul.f32 %v6172, %v1194
        %v6352 = vmul.f32 %v6176, %v1195
        %v6353 = vmul.f32 %v6178, %v1196
        %v6354 = vmul.f32 %v6182, %v1197
        %v6355 = vmul.f32 %v6184, %v1198
        %v6356 = vmul.f32 %v6188, %v1199
        %v6357 = vmul.f32 %v6190, %v1200
        %v6358 = vmul.f32 %v6194, %v1201
        %v6359 = vmul.f32 %v6196, %v1202
        %v6360 = vmul.f32 %v6200, %v1203
        %v6361 = vmul.f32 %v6202, %v1204
        %v6362 = vmul.f32 %v6206, %v1205
        %v6363 = vmul.f32 %v6208, %v1206
        %v6364 = vmul.f32 %v6212, %v1207
        %v6365 = vmul.f32 %v6214, %v1208
        %v6366 = vmul.f32 %v6218, %v1209
        %v6367 = vmul.f32 %v6220, %v1210
        %v6368 = vmul.f32 %v6224, %v1211
        %v6369 = vmul.f32 %v6226, %v1212
        %v6370 = vmul.f32 %v6230, %v1213
        %v6371 = vmul.f32 %v6232, %v1214
        %v6372 = vmul.f32 %v6236, %v1215
        %v6373 = vmul.f32 %v6238, %v1216
        %v6374 = vmul.f32 %v6242, %v1217
        %v6375 = vmul.f32 %v6244, %v1218
        %v6376 = vmul.f32 %v6248, %v1219
        %v6377 = vmul.f32 %v6250, %v1220
        %v6378 = vmul.f32 %v6254, %v1221
        %v6379 = vmul.f32 %v6256, %v1222
        %v6380 = vmul.f32 %v6260, %v1223
        %v6381 = vmul.f32 %v6262, %v1224
        %v6382 = vmul.f32 %v6266, %v1225
        %v6383 = vmul.f32 %v6268, %v1226
        %v6384 = vmul.f32 %v6272, %v1227
        %v6385 = vmul.f32 %v6274, %v1228
        %v6386 = vmul.f32 %v6278, %v1229
        %v6387 = vmul.f32 %v6280, %v1230
        %v6388 = vmul.f32 %v6284, %v1231
        %v6389 = vmul.f32 %v6286, %v1232
        %v6390 = vmul.f32 %v6290, %v1233
        %v6391 = vmul.f32 %v6292, %v1234
        %v6392 = vmul.f32 %v6296, %v1235
        %v6393 = vmul.f32 %v6298, %v1236
        %v6394 = vmul.f32 %v6302, %v1237
        %v6395 = vmul.f32 %v6304, %v1238
        %v6396 = vmul.f32 %v6308, %v1239
        %v6397 = vmul.f32 %v6310, %v1240
        %v6398 = vmul.f32 %v6314, %v1241
        %v6399 = vmul.f32 %v6316, %v1242
        %v6400 = vmul.f32 %v6320, %v1243
        %v6401 = vmul.f32 %v6322, %v1244
        %6402 = vmatprep.subr.mxu0 %v6339
        %6403 = vmatpush1.msra.mxu0 %v6338
        %6404 = vmatprep.subr.mxu0 %v6341
        %6405 = vmatpush1.msra.mxu0 %v6340
        %6406 = vmatprep.subr.mxu0 %v6343
        %6407 = vmatpush1.msra.mxu0 %v6342
        %6408 = vmatprep.subr.mxu0 %v6345
        %6409 = vmatpush1.msra.mxu0 %v6344
        %6410 = vmatprep.subr.mxu0 %v6347
        %6411 = vmatpush1.msra.mxu0 %v6346
        %6412 = vmatprep.subr.mxu0 %v6349
        %6413 = vmatpush1.msra.mxu0 %v6348
        %6414 = vmatprep.subr.mxu0 %v6351
        %6415 = vmatpush1.msra.mxu0 %v6350
        %6416 = vmatprep.subr.mxu0 %v6353
        %6417 = vmatpush1.msra.mxu0 %v6352
        %6418 = vmatprep.subr.mxu0 %v6355
        %6419 = vmatpush1.msra.mxu0 %v6354
        %6420 = vmatprep.subr.mxu0 %v6357
        %6421 = vmatpush1.msra.mxu0 %v6356
        %6422 = vmatprep.subr.mxu0 %v6359
        %6423 = vmatpush1.msra.mxu0 %v6358
        %6424 = vmatprep.subr.mxu0 %v6361
        %6425 = vmatpush1.msra.mxu0 %v6360
        %6426 = vmatprep.subr.mxu0 %v6363
        %6427 = vmatpush1.msra.mxu0 %v6362
        %6428 = vmatprep.subr.mxu0 %v6365
        %6429 = vmatpush1.msra.mxu0 %v6364
        %6430 = vmatprep.subr.mxu0 %v6367
        %6431 = vmatpush1.msra.mxu0 %v6366
        %6432 = vmatprep.subr.mxu0 %v6369
        %6433 = vmatpush1.msra.mxu0 %v6368
        %6434 = vmatprep.subr.mxu0 %v6371
        %6435 = vmatpush1.msra.mxu0 %v6370
        %6436 = vmatprep.subr.mxu0 %v6373
        %6437 = vmatpush1.msra.mxu0 %v6372
        %6438 = vmatprep.subr.mxu0 %v6375
        %6439 = vmatpush1.msra.mxu0 %v6374
        %6440 = vmatprep.subr.mxu0 %v6377
        %6441 = vmatpush1.msra.mxu0 %v6376
        %6442 = vmatprep.subr.mxu0 %v6379
        %6443 = vmatpush1.msra.mxu0 %v6378
        %6444 = vmatprep.subr.mxu0 %v6381
        %6445 = vmatpush1.msra.mxu0 %v6380
        %6446 = vmatprep.subr.mxu0 %v6383
        %6447 = vmatpush1.msra.mxu0 %v6382
        %6448 = vmatprep.subr.mxu0 %v6385
        %6449 = vmatpush1.msra.mxu0 %v6384
        %6450 = vmatprep.subr.mxu0 %v6387
        %6451 = vmatpush1.msra.mxu0 %v6386
        %6452 = vmatprep.subr.mxu0 %v6389
        %6453 = vmatpush1.msra.mxu0 %v6388
        %6454 = vmatprep.subr.mxu0 %v6391
        %6455 = vmatpush1.msra.mxu0 %v6390
        %6456 = vmatprep.subr.mxu0 %v6393
        %6457 = vmatpush1.msra.mxu0 %v6392
        %6458 = vmatprep.subr.mxu0 %v6395
        %6459 = vmatpush1.msra.mxu0 %v6394
        %6460 = vmatprep.subr.mxu0 %v6397
        %6461 = vmatpush1.msra.mxu0 %v6396
        %6462 = vmatprep.subr.mxu0 %v6399
        %6463 = vmatpush1.msra.mxu0 %v6398
        %6464 = vmatprep.subr.mxu0 %v6401
        %6465 = vmatpush1.msra.mxu0 %v6400
        %6466 = vmatprep.mubr.f32.mxu0 %v1146
        %6467 = vmatmul.mubr.f32.gmra.mrb[0].mxu0 %v1145
        %v6468 = vpop.f32.mrb[0].mxu0
        %v6469 = vadd.f32 0.0, %v6468
        %v6470 = vpop.f32.mrb[0].mxu0
        %v6471 = vadd.f32 0.0, %v6470
        %6472 = vmatprep.mubr.f32.mxu0 %v1148
        %6473 = vmatmul.mubr.f32.gmra.mrb[0].mxu0 %v1147
        %v6474 = vpop.f32.mrb[0].mxu0
        %v6475 = vadd.f32 0.0, %v6474
        %v6476 = vpop.f32.mrb[0].mxu0
        %v6477 = vadd.f32 0.0, %v6476
        %6478 = vdwg.mxu0
        %v6479 = vmul.f32 %v1145, %v6330
        %v6480 = vmul.f32 %v1146, %v6337
        %v6481 = vmul.f32 %v1147, %v6330
        %v6482 = vmul.f32 %v1148, %v6337
        %6483 = vmatprep.subr.mxu0 %v1182
        %6484 = vmatpush1.msra.mxu0 %v1181
        %6485 = vmatprep.subr.mxu0 %v1184
        %6486 = vmatpush1.msra.mxu0 %v1183
        %6487 = vmatprep.subr.mxu0 %v1186
        %6488 = vmatpush1.msra.mxu0 %v1185
        %6489 = vmatprep.subr.mxu0 %v1188
        %6490 = vmatpush1.msra.mxu0 %v1187
        %6491 = vmatprep.subr.mxu0 %v1190
        %6492 = vmatpush1.msra.mxu0 %v1189
        %6493 = vmatprep.subr.mxu0 %v1192
        %6494 = vmatpush1.msra.mxu0 %v1191
        %6495 = vmatprep.subr.mxu0 %v1194
        %6496 = vmatpush1.msra.mxu0 %v1193
        %6497 = vmatprep.subr.mxu0 %v1196
        %6498 = vmatpush1.msra.mxu0 %v1195
        %6499 = vmatprep.subr.mxu0 %v1198
        %6500 = vmatpush1.msra.mxu0 %v1197
        %6501 = vmatprep.subr.mxu0 %v1200
        %6502 = vmatpush1.msra.mxu0 %v1199
        %6503 = vmatprep.subr.mxu0 %v1202
        %6504 = vmatpush1.msra.mxu0 %v1201
        %6505 = vmatprep.subr.mxu0 %v1204
        %6506 = vmatpush1.msra.mxu0 %v1203
        %6507 = vmatprep.subr.mxu0 %v1206
        %6508 = vmatpush1.msra.mxu0 %v1205
        %6509 = vmatprep.subr.mxu0 %v1208
        %6510 = vmatpush1.msra.mxu0 %v1207
        %6511 = vmatprep.subr.mxu0 %v1210
        %6512 = vmatpush1.msra.mxu0 %v1209
        %6513 = vmatprep.subr.mxu0 %v1212
        %6514 = vmatpush1.msra.mxu0 %v1211
        %6515 = vmatprep.subr.mxu0 %v1214
        %6516 = vmatpush1.msra.mxu0 %v1213
        %6517 = vmatprep.subr.mxu0 %v1216
        %6518 = vmatpush1.msra.mxu0 %v1215
        %6519 = vmatprep.subr.mxu0 %v1218
        %6520 = vmatpush1.msra.mxu0 %v1217
        %6521 = vmatprep.subr.mxu0 %v1220
        %6522 = vmatpush1.msra.mxu0 %v1219
        %6523 = vmatprep.subr.mxu0 %v1222
        %6524 = vmatpush1.msra.mxu0 %v1221
        %6525 = vmatprep.subr.mxu0 %v1224
        %6526 = vmatpush1.msra.mxu0 %v1223
        %6527 = vmatprep.subr.mxu0 %v1226
        %6528 = vmatpush1.msra.mxu0 %v1225
        %6529 = vmatprep.subr.mxu0 %v1228
        %6530 = vmatpush1.msra.mxu0 %v1227
        %6531 = vmatprep.subr.mxu0 %v1230
        %6532 = vmatpush1.msra.mxu0 %v1229
        %6533 = vmatprep.subr.mxu0 %v1232
        %6534 = vmatpush1.msra.mxu0 %v1231
        %6535 = vmatprep.subr.mxu0 %v1234
        %6536 = vmatpush1.msra.mxu0 %v1233
        %6537 = vmatprep.subr.mxu0 %v1236
        %6538 = vmatpush1.msra.mxu0 %v1235
        %6539 = vmatprep.subr.mxu0 %v1238
        %6540 = vmatpush1.msra.mxu0 %v1237
        %6541 = vmatprep.subr.mxu0 %v1240
        %6542 = vmatpush1.msra.mxu0 %v1239
        %6543 = vmatprep.subr.mxu0 %v1242
        %6544 = vmatpush1.msra.mxu0 %v1241
        %6545 = vmatprep.subr.mxu0 %v1244
        %6546 = vmatpush1.msra.mxu0 %v1243
        %6547 = vmatprep.mubr.f32.mxu0 %v6480
        %6548 = vmatmul.mubr.f32.gmra.mrb[0].mxu0 %v6479
        %v6549 = vpop.f32.mrb[0].mxu0
        %v6550 = vadd.f32 1e-06, %v6549
        %v6551 = vpop.f32.mrb[0].mxu0
        %v6552 = vadd.f32 1e-06, %v6551
        %6553 = vmatprep.mubr.f32.mxu0 %v6482
        %6554 = vmatmul.mubr.f32.gmra.mrb[0].mxu0 %v6481
        %v6555 = vpop.f32.mrb[0].mxu0
        %v6556 = vadd.f32 1e-06, %v6555
        %v6557 = vpop.f32.mrb[0].mxu0
        %v6558 = vadd.f32 1e-06, %v6557
        %6559 = vdwg.mxu0
        %v6560 = vrcp.pop %v6550
        %v6561 = vmul.f32 %v6469, %v6560
        %v6562 = vrcp.pop %v6552
        %v6563 = vmul.f32 %v6471, %v6562
        %v6564 = vrcp.pop %v6556
        %v6565 = vmul.f32 %v6475, %v6564
        %v6566 = vrcp.pop %v6558
        %v6567 = vmul.f32 %v6477, %v6566
        %s6568 = scalar_lea.vmem %s256, 224 [#allocation3]
        %6569 = vst [vmem:[%s6568] sm:$0xff] %v6561
        %6570 = vst [vmem:[%s6568 + $0x8] sm:$0xff] %v6563
        %6571 = vst [vmem:[%s6568 + $0x10] sm:$0xff] %v6565
        %6572 = vst [vmem:[%s6568 + $0x18] sm:$0xff] %v6567
        %s6573 = sand.u32 %s147, 1
        %s6574 = scalar_lea.sflag [#allocation4], %s6573
        %s6575 = sand.u32 %s147, 1
        %s6576 = smul.addr %s6575, 256
        %s6577 = scalar_lea.vmem [#allocation3], %s6576
        // Predicated region
        $region41: #{_linear_mha_batched.1} parent=39 // pred_check
          %p6578 = pneg %p157
        $region42: #{_linear_mha_batched.1} parent=39 // pred_check_branch
          %6580 = sbr.rel (%p6578) target = $region44
        $region43: #{_linear_mha_batched.1} parent=39 // pred_region
          %s6581 = smul.u32 8, %s19
          %s6583 = ssub.s32 4096, 4096
          %6584 = vsyncadd %s6574, %s6583
          %s6585 = smul.addr %s6581, 4
          %s6586 = smul.addr %s6585, 128
          %s6587 = scalar_lea.hbm %s5, %s6586
          %s6588 = sshll.u32 %s6577, 4
          %s6589 = int_to_ptr.vmem [resolvable:$true] %s6588
          %6594 = dma.vmem_to_hbm [thread:$0]  %s6589, 4096, %s6587, %s6574, 256, 256, 16
        $region44: #{_linear_mha_batched.1} parent=39 // pred_fallthru
          _
      $region40: #{_linear_mha_batched.1} parent=5 // pred_fallthru
        _
      %p6595 = scmp.le.s32.totalorder 2, %s14
      // Predicated region
      $region45: #{_linear_mha_batched.1} parent=5 // pred_check
        %p6596 = pneg %p6595
      $region46: #{_linear_mha_batched.1} parent=5 // pred_check_branch
        %6598 = sbr.rel (%p6596) target = $region48
      $region47: #{_linear_mha_batched.1} parent=5 // pred_region
        %s6599 = ssub.s32 %s14, 2
        // Predicated region
        $region49: #{_linear_mha_batched.1} parent=47 // pred_check
          %p6600 = pneg %p163
        $region50: #{_linear_mha_batched.1} parent=47 // pred_check_branch
          %6602 = sbr.rel (%p6600) target = $region52
        $region51: #{_linear_mha_batched.1} parent=47 // pred_region
          %s6603 = sand.u32 %s148, 1
          %s6604 = scalar_lea.sflag [#allocation4], %s6603
          %s6605 = sand.u32 %s148, 1
          %s6606 = smul.addr %s6605, 256
          %s6607 = scalar_lea.vmem [#allocation3], %s6606
          %6608 = dma.done %s6604, 4096
        $region52: #{_linear_mha_batched.1} parent=47 // pred_fallthru
          _
      $region48: #{_linear_mha_batched.1} parent=5 // pred_fallthru
        _
    $region6: #{_linear_mha_batched.1} parent=1 // loop_footer
      %s18 = sadd.s32 1, %s14
    $region7: #{_linear_mha_batched.1} parent=1 // loop_footer_branch
      %13 = sbr.rel target = $region3
    $region8: #{_linear_mha_batched.1} parent=1 // loop_exit
      _
    %6609 = vsyncpa [#allocation4], 1
    %s6610 = scalar_lea.sflag [#allocation4], 1
    %6611 = vsyncpa %s6610, 1

</llo_original>
